<compile_context>
chip_gen: v7x
topology: tpu7x:2x2x1
jax: 0.10.0
libtpu: 0.0.40
codegen_flags: <defaults>
</compile_context>

<pallas_src>
import jax
import jax.numpy as jnp
from jax.experimental import pallas as pl
from jax.experimental.pallas import tpu as pltpu

# ----------------------------- model hyper-params ---------------------------
H = 32        # hidden width of the sdf / rgb MLP fields
FEAT = 13     # feature dim produced by the sdf field (sdf output = 1 + FEAT)
S = 8         # samples per ray (uniform between near and far)
TN = 512      # rays per kernel grid step  ->  M = TN * S = 4096 points / step


def renderer_kernel(scal_ref,                    # SMEM (2,) f32: [cos_anneal, b_sdf]
                    rays_ref,                    # (8, TN) f32  [ro; rv; near; far]
                    wpd_ref,                     # (2H, 8) bf16 [[w1t,0,0],[wr1p,wr1d,0]]
                    bpd_ref,                     # (2H, 1) f32  [b1; br1_fold]
                    wh_ref,                      # (H+1, H) bf16 [wf_h; w2_first]
                    wq_ref,                      # (H+3, H) bf16 [wg_h; agrad]
                    wr2_ref,                     # (3, H)  bf16
                    consts_ref,                  # (9, 1)  f32  [grad_const; br2; bck]
                    out_ref):                    # (3, TN) f32
    cos_anneal = scal_ref[0]
    b_sdf = scal_ref[1]

    rays = rays_ref[...]                          # (8, TN)
    ro = rays[0:3, :]
    rv = rays[3:6, :]
    near = rays[6:7, :]
    far = rays[7:8, :]
    dt = (far - near) * (1.0 / S)                 # (1, TN) per-sample interval

    # ---- sample-major lane-dense (pts ; dirs ; pad) slab, column s*TN + r ----
    slabs = []
    for s in range(S):
        t_mid = near + dt * (s + 0.5)                              # (1, TN)
        # rows 0:3 = pts, rows 3:6 = dirs (=rv), rows 6:8 = near/far (zero weight)
        slabs.append(jnp.concatenate([ro + rv * t_mid, rays[3:8, :]], axis=0))
    pd = jnp.concatenate(slabs, axis=1).astype(jnp.bfloat16)       # (8, M)

    # ---- fused geometry matmul: sdf layer-1 + rgb pts/dirs terms ------------
    pre = (jnp.dot(wpd_ref[...], pd, preferred_element_type=jnp.float32)
           + bpd_ref[...])                                          # (2H, M)
    h = jnp.tanh(pre[0:H, :])                                       # (H, M)
    h_bf = h.astype(jnp.bfloat16)
    h2_bf = (h * h).astype(jnp.bfloat16)

    # rows 0:H -> wr1f@feats (folded), row H -> sdf (w2 first column)
    out_h = jnp.dot(wh_ref[...], h_bf, preferred_element_type=jnp.float32)   # (H+1, M)
    # rows 0:H -> wr1g@grads (folded, negated), rows H:H+3 -> grads (negated)
    out_q = jnp.dot(wq_ref[...], h2_bf, preferred_element_type=jnp.float32)  # (H+3, M)

    consts = consts_ref[...]                      # (9, 1)
    grad_c = consts[0:3, :]                       # rowsum(agrad)
    br2 = consts[3:6, :]
    bck = consts[6:9, :]

    sdf_row = out_h[H:H + 1, :] + b_sdf           # (1, M)
    grads = grad_c - out_q[H:H + 3, :]            # (3, M) analytic sdf gradient

    # ---- rgb field (all bias terms pre-folded into bpd bottom rows) ---------
    hr = jax.nn.relu(pre[H:2 * H, :] + out_h[0:H, :] - out_q[0:H, :])         # (H, M)
    rgb = jax.nn.sigmoid(
        jnp.dot(wr2_ref[...], hr.astype(jnp.bfloat16),
                preferred_element_type=jnp.float32) + br2)                    # (3, M)

    # ---- NeuS alpha, re-laid out onto full (S, TN) vregs --------------------
    tc_rows = []
    sdf_rows = []
    for s in range(S):
        g_s = grads[:, s * TN:(s + 1) * TN]                        # (3, TN)
        tc_rows.append(jnp.sum(rv * g_s, axis=0, keepdims=True))   # (1, TN)
        sdf_rows.append(sdf_row[:, s * TN:(s + 1) * TN])
    tc = jnp.concatenate(tc_rows, axis=0)          # (S, TN) true_cos
    sdf_st = jnp.concatenate(sdf_rows, axis=0)     # (S, TN)

    iter_cos = -(jax.nn.relu(-tc * 0.5 + 0.5) * (1.0 - cos_anneal)
                 + jax.nn.relu(-tc) * cos_anneal)                  # (S, TN)
    half = iter_cos * (dt * 0.5)                                   # (S, TN)
    prev_cdf = jax.nn.sigmoid(sdf_st - half)
    next_cdf = jax.nn.sigmoid(sdf_st + half)
    alpha = jnp.clip((prev_cdf - next_cdf + 1e-5) / (prev_cdf + 1e-5),
                     0.0, 1.0)                                     # (S, TN)

    # ---- front-to-back volume composite (inv_s unused, as in the reference) -
    T = jnp.ones((1, TN), jnp.float32)
    acc_rgb = jnp.zeros((3, TN), jnp.float32)
    acc_w = jnp.zeros((1, TN), jnp.float32)
    for s in range(S):
        a = alpha[s:s + 1, :]                                      # (1, TN)
        w = T * a
        acc_rgb = acc_rgb + w * rgb[:, s * TN:(s + 1) * TN]
        acc_w = acc_w + w
        T = T * (1.0 - a)

    out_ref[...] = acc_rgb + (1.0 - acc_w) * bck                   # (3, TN)


def occ_grid_render(rays_o, rays_v, nears, fars, cos_anneal_ratio, bck_color,
                    params):
    """Forward pass: returns composited rgb of shape (N, 3)."""
    N = rays_o.shape[0]
    (w1, b1, w2, b2, wr1, br1, wr2, br2, wv, bv) = params
    f32 = jnp.float32
    bf16 = jnp.bfloat16

    # var_net(zeros(1,3))[:, :1].clip(1e-6, 1e6) — computed (as in the
    # reference) but never used by its alpha formula; kept in plain-JAX glue.
    inv_s = jnp.clip((jnp.zeros((1, 3), f32) @ wv + bv)[:, :1], 1e-6, 1e6)
    del inv_s

    # ---- pack rays into one lane-dense (8, N) slab and pad to TN multiple ---
    Np = ((N + TN - 1) // TN) * TN
    pad = Np - N
    rays_pack = jnp.concatenate(
        [rays_o.T, rays_v.T, nears.T, fars.T], axis=0).astype(f32)   # (8, N)
    if pad:
        rays_pack = jnp.pad(rays_pack, ((0, 0), (0, pad)))

    # ---- offline weight folding (O(H^2) wrapper work, removes small matmuls)
    w1t = w1.T.astype(f32)                         # (H, 3)
    wr1t = wr1.T.astype(f32)                       # (H, 9+FEAT)
    wr1p = wr1t[:, 0:3]
    wr1g = wr1t[:, 3:6]
    wr1d = wr1t[:, 6:9]
    wr1f = wr1t[:, 9:]                             # (H, FEAT)
    w2t = w2.T.astype(f32)                         # (1+FEAT, H)
    w2_first = w2t[0:1, :]                         # (1, H)  sdf output row
    w2_feat = w2t[1:, :]                           # (FEAT, H)
    b2c = b2.T.astype(f32)                         # (1+FEAT, 1)

    agrad = (w1 * w2[:, 0:1].T).astype(f32)        # (3, H): analytic sdf-grad weights
    wg_h = wr1g @ agrad                            # (H, H): grad-term folded onto h^2
    wf_h = wr1f @ w2_feat                          # (H, H): feat-term folded onto h
    br1_fold = (br1.T.astype(f32) + wr1f @ b2c[1:, :]
                + jnp.sum(wg_h, axis=1, keepdims=True))              # (H, 1)

    z3 = jnp.zeros((H, 3), f32)
    z2 = jnp.zeros((H, 2), f32)
    W_pd = jnp.concatenate([
        jnp.concatenate([w1t, z3, z2], axis=1),
        jnp.concatenate([wr1p, wr1d, z2], axis=1)], axis=0)          # (2H, 8)
    b_pd = jnp.concatenate([b1.T.astype(f32), br1_fold], axis=0)     # (2H, 1)
    Wh = jnp.concatenate([wf_h, w2_first], axis=0)                   # (H+1, H)
    Wq = jnp.concatenate([wg_h, agrad], axis=0)                      # (H+3, H)
    wr2t = wr2.T.astype(f32)                                         # (3, H)
    grad_const = jnp.sum(agrad, axis=1, keepdims=True)               # (3, 1)
    consts = jnp.concatenate(
        [grad_const, br2.T.astype(f32), bck_color.T.astype(f32)], axis=0)  # (9, 1)
    scalars = jnp.stack([jnp.asarray(cos_anneal_ratio, f32),
                         b2[0, 0].astype(f32)])                      # SMEM (2,)

    W_pd_bf = W_pd.astype(bf16)
    Wh_bf = Wh.astype(bf16)
    Wq_bf = Wq.astype(bf16)
    wr2t_bf = wr2t.astype(bf16)

    full = lambda i: (0, 0)
    out_t = pl.pallas_call(
        renderer_kernel,
        out_shape=jax.ShapeDtypeStruct((3, Np), jnp.float32),
        grid_spec=pltpu.PrefetchScalarGridSpec(
            num_scalar_prefetch=0,
            grid=(Np // TN,),
            in_specs=[
                pl.BlockSpec(memory_space=pltpu.MemorySpace.SMEM),   # scalars
                pl.BlockSpec((8, TN), lambda i: (0, i)),             # packed rays
                pl.BlockSpec(W_pd_bf.shape, full),
                pl.BlockSpec(b_pd.shape, full),
                pl.BlockSpec(Wh_bf.shape, full),
                pl.BlockSpec(Wq_bf.shape, full),
                pl.BlockSpec(wr2t_bf.shape, full),
                pl.BlockSpec(consts.shape, full),
            ],
            out_specs=pl.BlockSpec((3, TN), lambda i: (0, i)),
        ),
        compiler_params=pltpu.CompilerParams(
            dimension_semantics=("parallel",)),
    )(scalars, rays_pack, W_pd_bf, b_pd, Wh_bf, Wq_bf, wr2t_bf, consts)

    return out_t[:, :N].T                          # (N, 3)


def init_params(key):
    ks = jax.random.split(key, 10)
    sc = 0.3
    w1 = sc * jax.random.normal(ks[0], (3, H), jnp.float32)
    b1 = sc * jax.random.normal(ks[1], (1, H), jnp.float32)
    w2 = sc * jax.random.normal(ks[2], (H, 1 + FEAT), jnp.float32)
    b2 = sc * jax.random.normal(ks[3], (1, 1 + FEAT), jnp.float32)
    wr1 = sc * jax.random.normal(ks[4], (9 + FEAT, H), jnp.float32)
    br1 = sc * jax.random.normal(ks[5], (1, H), jnp.float32)
    wr2 = sc * jax.random.normal(ks[6], (H, 3), jnp.float32)
    br2 = sc * jax.random.normal(ks[7], (1, 3), jnp.float32)
    wv = sc * jax.random.normal(ks[8], (3, 4), jnp.float32)   # var_net (linear)
    bv = sc * jax.random.normal(ks[9], (1, 4), jnp.float32)
    return (w1, b1, w2, b2, wr1, br1, wr2, br2, wv, bv)


if __name__ == "__main__":
    key = jax.random.PRNGKey(0)
    kp, ko, kv, kn = jax.random.split(key, 4)

    N = 200  # number of rays (not a multiple of TN on purpose; wrapper pads)
    params = init_params(kp)

    rays_o = 0.5 * jax.random.normal(ko, (N, 3), jnp.float32)
    rays_v = jax.random.normal(kv, (N, 3), jnp.float32)
    rays_v = rays_v / jnp.linalg.norm(rays_v, axis=-1, keepdims=True)
    nears = 0.1 + 0.1 * jax.random.uniform(kn, (N, 1), jnp.float32)
    fars = nears + 2.0
    bck_color = jnp.array([[1.0, 1.0, 1.0]], jnp.float32)
    cos_anneal_ratio = 0.5

    rgb = occ_grid_render(rays_o, rays_v, nears, fars, cos_anneal_ratio,
                          bck_color, params)
    jax.block_until_ready(rgb)
    assert rgb.shape == (N, 3) and rgb.dtype == jnp.float32
    assert bool(jnp.all(jnp.isfinite(rgb)))
    print("KERNEL_OK")
</pallas_src>

<mosaic_0001>
module attributes {stable_mosaic.version = 11 : i64} {
  func.func @renderer_kernel(%arg0: i32, %arg1: memref<2xf32, #tpu.memory_space<smem>>, %arg2: memref<8x512xf32, #tpu.memory_space<vmem>>, %arg3: memref<64x8xbf16, #tpu.memory_space<vmem>>, %arg4: memref<64x1xf32, #tpu.memory_space<vmem>>, %arg5: memref<33x32xbf16, #tpu.memory_space<vmem>>, %arg6: memref<35x32xbf16, #tpu.memory_space<vmem>>, %arg7: memref<3x32xbf16, #tpu.memory_space<vmem>>, %arg8: memref<9x1xf32, #tpu.memory_space<vmem>>, %arg9: memref<3x512xf32, #tpu.memory_space<vmem>>) attributes {dimension_semantics = [#tpu.dimension_semantics<parallel>], iteration_bounds = array<i64: 1>, scalar_prefetch = 0 : i64, scratch_operands = 0 : i64, tpu.core_type = #tpu.core_type<tc>, window_params = [{transform_indices = @transform_0, window_bounds = array<i64: 2>}, {transform_indices = @transform_1, window_bounds = array<i64: 8, 512>}, {pipeline_mode = #tpu.pipeline_mode<synchronous>, transform_indices = @transform_2, window_bounds = array<i64: 64, 8>}, {pipeline_mode = #tpu.pipeline_mode<synchronous>, transform_indices = @transform_3, window_bounds = array<i64: 64, 1>}, {pipeline_mode = #tpu.pipeline_mode<synchronous>, transform_indices = @transform_4, window_bounds = array<i64: 33, 32>}, {pipeline_mode = #tpu.pipeline_mode<synchronous>, transform_indices = @transform_5, window_bounds = array<i64: 35, 32>}, {pipeline_mode = #tpu.pipeline_mode<synchronous>, transform_indices = @transform_6, window_bounds = array<i64: 3, 32>}, {pipeline_mode = #tpu.pipeline_mode<synchronous>, transform_indices = @transform_7, window_bounds = array<i64: 9, 1>}, {transform_indices = @transform_8, window_bounds = array<i64: 3, 512>}]} {
    %c0 = arith.constant 0 : index
    %0 = memref.load %arg1[%c0] : memref<2xf32, #tpu.memory_space<smem>>
    %c1 = arith.constant 1 : index
    %1 = memref.load %arg1[%c1] : memref<2xf32, #tpu.memory_space<smem>>
    %c0_0 = arith.constant 0 : index
    %c0_1 = arith.constant 0 : index
    %2 = vector.load %arg2[%c0_0, %c0_1] : memref<8x512xf32, #tpu.memory_space<vmem>>, vector<8x512xf32>
    %3 = vector.extract_strided_slice %2 {offsets = [0, 0], sizes = [3, 512], strides = [1, 1]} : vector<8x512xf32> to vector<3x512xf32>
    %4 = vector.extract_strided_slice %2 {offsets = [3, 0], sizes = [3, 512], strides = [1, 1]} : vector<8x512xf32> to vector<3x512xf32>
    %5 = vector.extract_strided_slice %2 {offsets = [6, 0], sizes = [1, 512], strides = [1, 1]} : vector<8x512xf32> to vector<1x512xf32>
    %6 = vector.extract_strided_slice %2 {offsets = [7, 0], sizes = [1, 512], strides = [1, 1]} : vector<8x512xf32> to vector<1x512xf32>
    %7 = arith.subf %6, %5 : vector<1x512xf32>
    %cst = arith.constant 1.250000e-01 : f32
    %8 = vector.broadcast %cst : f32 to vector<1x512xf32>
    %9 = arith.mulf %7, %8 : vector<1x512xf32>
    %cst_2 = arith.constant 5.000000e-01 : f32
    %10 = vector.broadcast %cst_2 : f32 to vector<1x512xf32>
    %11 = arith.mulf %9, %10 : vector<1x512xf32>
    %12 = arith.addf %5, %11 : vector<1x512xf32>
    %13 = vector.broadcast %12 : vector<1x512xf32> to vector<3x512xf32>
    %14 = arith.mulf %4, %13 : vector<3x512xf32>
    %15 = arith.addf %3, %14 : vector<3x512xf32>
    %16 = vector.extract_strided_slice %2 {offsets = [3, 0], sizes = [5, 512], strides = [1, 1]} : vector<8x512xf32> to vector<5x512xf32>
    %17 = tpu.concatenate %15, %16 in 0 : vector<3x512xf32>, vector<5x512xf32> -> vector<8x512xf32>
    %cst_3 = arith.constant 1.500000e+00 : f32
    %18 = vector.broadcast %cst_3 : f32 to vector<1x512xf32>
    %19 = arith.mulf %9, %18 : vector<1x512xf32>
    %20 = arith.addf %5, %19 : vector<1x512xf32>
    %21 = vector.broadcast %20 : vector<1x512xf32> to vector<3x512xf32>
    %22 = arith.mulf %4, %21 : vector<3x512xf32>
    %23 = arith.addf %3, %22 : vector<3x512xf32>
    %24 = vector.extract_strided_slice %2 {offsets = [3, 0], sizes = [5, 512], strides = [1, 1]} : vector<8x512xf32> to vector<5x512xf32>
    %25 = tpu.concatenate %23, %24 in 0 : vector<3x512xf32>, vector<5x512xf32> -> vector<8x512xf32>
    %cst_4 = arith.constant 2.500000e+00 : f32
    %26 = vector.broadcast %cst_4 : f32 to vector<1x512xf32>
    %27 = arith.mulf %9, %26 : vector<1x512xf32>
    %28 = arith.addf %5, %27 : vector<1x512xf32>
    %29 = vector.broadcast %28 : vector<1x512xf32> to vector<3x512xf32>
    %30 = arith.mulf %4, %29 : vector<3x512xf32>
    %31 = arith.addf %3, %30 : vector<3x512xf32>
    %32 = vector.extract_strided_slice %2 {offsets = [3, 0], sizes = [5, 512], strides = [1, 1]} : vector<8x512xf32> to vector<5x512xf32>
    %33 = tpu.concatenate %31, %32 in 0 : vector<3x512xf32>, vector<5x512xf32> -> vector<8x512xf32>
    %cst_5 = arith.constant 3.500000e+00 : f32
    %34 = vector.broadcast %cst_5 : f32 to vector<1x512xf32>
    %35 = arith.mulf %9, %34 : vector<1x512xf32>
    %36 = arith.addf %5, %35 : vector<1x512xf32>
    %37 = vector.broadcast %36 : vector<1x512xf32> to vector<3x512xf32>
    %38 = arith.mulf %4, %37 : vector<3x512xf32>
    %39 = arith.addf %3, %38 : vector<3x512xf32>
    %40 = vector.extract_strided_slice %2 {offsets = [3, 0], sizes = [5, 512], strides = [1, 1]} : vector<8x512xf32> to vector<5x512xf32>
    %41 = tpu.concatenate %39, %40 in 0 : vector<3x512xf32>, vector<5x512xf32> -> vector<8x512xf32>
    %cst_6 = arith.constant 4.500000e+00 : f32
    %42 = vector.broadcast %cst_6 : f32 to vector<1x512xf32>
    %43 = arith.mulf %9, %42 : vector<1x512xf32>
    %44 = arith.addf %5, %43 : vector<1x512xf32>
    %45 = vector.broadcast %44 : vector<1x512xf32> to vector<3x512xf32>
    %46 = arith.mulf %4, %45 : vector<3x512xf32>
    %47 = arith.addf %3, %46 : vector<3x512xf32>
    %48 = vector.extract_strided_slice %2 {offsets = [3, 0], sizes = [5, 512], strides = [1, 1]} : vector<8x512xf32> to vector<5x512xf32>
    %49 = tpu.concatenate %47, %48 in 0 : vector<3x512xf32>, vector<5x512xf32> -> vector<8x512xf32>
    %cst_7 = arith.constant 5.500000e+00 : f32
    %50 = vector.broadcast %cst_7 : f32 to vector<1x512xf32>
    %51 = arith.mulf %9, %50 : vector<1x512xf32>
    %52 = arith.addf %5, %51 : vector<1x512xf32>
    %53 = vector.broadcast %52 : vector<1x512xf32> to vector<3x512xf32>
    %54 = arith.mulf %4, %53 : vector<3x512xf32>
    %55 = arith.addf %3, %54 : vector<3x512xf32>
    %56 = vector.extract_strided_slice %2 {offsets = [3, 0], sizes = [5, 512], strides = [1, 1]} : vector<8x512xf32> to vector<5x512xf32>
    %57 = tpu.concatenate %55, %56 in 0 : vector<3x512xf32>, vector<5x512xf32> -> vector<8x512xf32>
    %cst_8 = arith.constant 6.500000e+00 : f32
    %58 = vector.broadcast %cst_8 : f32 to vector<1x512xf32>
    %59 = arith.mulf %9, %58 : vector<1x512xf32>
    %60 = arith.addf %5, %59 : vector<1x512xf32>
    %61 = vector.broadcast %60 : vector<1x512xf32> to vector<3x512xf32>
    %62 = arith.mulf %4, %61 : vector<3x512xf32>
    %63 = arith.addf %3, %62 : vector<3x512xf32>
    %64 = vector.extract_strided_slice %2 {offsets = [3, 0], sizes = [5, 512], strides = [1, 1]} : vector<8x512xf32> to vector<5x512xf32>
    %65 = tpu.concatenate %63, %64 in 0 : vector<3x512xf32>, vector<5x512xf32> -> vector<8x512xf32>
    %cst_9 = arith.constant 7.500000e+00 : f32
    %66 = vector.broadcast %cst_9 : f32 to vector<1x512xf32>
    %67 = arith.mulf %9, %66 : vector<1x512xf32>
    %68 = arith.addf %5, %67 : vector<1x512xf32>
    %69 = vector.broadcast %68 : vector<1x512xf32> to vector<3x512xf32>
    %70 = arith.mulf %4, %69 : vector<3x512xf32>
    %71 = arith.addf %3, %70 : vector<3x512xf32>
    %72 = vector.extract_strided_slice %2 {offsets = [3, 0], sizes = [5, 512], strides = [1, 1]} : vector<8x512xf32> to vector<5x512xf32>
    %73 = tpu.concatenate %71, %72 in 0 : vector<3x512xf32>, vector<5x512xf32> -> vector<8x512xf32>
    %74 = tpu.concatenate %17, %25, %33, %41, %49, %57, %65, %73 in 1 : vector<8x512xf32>, vector<8x512xf32>, vector<8x512xf32>, vector<8x512xf32>, vector<8x512xf32>, vector<8x512xf32>, vector<8x512xf32>, vector<8x512xf32> -> vector<8x4096xf32>
    %75 = arith.truncf %74 : vector<8x4096xf32> to vector<8x4096xbf16>
    %c0_10 = arith.constant 0 : index
    %c0_11 = arith.constant 0 : index
    %76 = vector.load %arg3[%c0_10, %c0_11] : memref<64x8xbf16, #tpu.memory_space<vmem>>, vector<64x8xbf16>
    %cst_12 = arith.constant dense<0.000000e+00> : vector<64x4096xf32>
    %77 = tpu.matmul %76, %75, %cst_12 {dimension_numbers = #tpu.dot_dimension_numbers<[1], [0], [0], [1], [0, 0, 1, 1], [], []>} : vector<64x8xbf16>, vector<8x4096xbf16>, vector<64x4096xf32> -> vector<64x4096xf32>
    %c0_13 = arith.constant 0 : index
    %c0_14 = arith.constant 0 : index
    %78 = vector.load %arg4[%c0_13, %c0_14] : memref<64x1xf32, #tpu.memory_space<vmem>>, vector<64x1xf32>
    %79 = vector.broadcast %78 : vector<64x1xf32> to vector<64x4096xf32>
    %80 = arith.addf %77, %79 : vector<64x4096xf32>
    %81 = vector.extract_strided_slice %80 {offsets = [0, 0], sizes = [32, 4096], strides = [1, 1]} : vector<64x4096xf32> to vector<32x4096xf32>
    %82 = math.tanh %81 : vector<32x4096xf32>
    %83 = arith.truncf %82 : vector<32x4096xf32> to vector<32x4096xbf16>
    %84 = arith.mulf %82, %82 : vector<32x4096xf32>
    %85 = arith.truncf %84 : vector<32x4096xf32> to vector<32x4096xbf16>
    %c0_15 = arith.constant 0 : index
    %c0_16 = arith.constant 0 : index
    %86 = vector.load %arg5[%c0_15, %c0_16] : memref<33x32xbf16, #tpu.memory_space<vmem>>, vector<33x32xbf16>
    %cst_17 = arith.constant dense<0.000000e+00> : vector<33x4096xf32>
    %87 = tpu.matmul %86, %83, %cst_17 {dimension_numbers = #tpu.dot_dimension_numbers<[1], [0], [0], [1], [0, 0, 1, 1], [], []>} : vector<33x32xbf16>, vector<32x4096xbf16>, vector<33x4096xf32> -> vector<33x4096xf32>
    %c0_18 = arith.constant 0 : index
    %c0_19 = arith.constant 0 : index
    %88 = vector.load %arg6[%c0_18, %c0_19] : memref<35x32xbf16, #tpu.memory_space<vmem>>, vector<35x32xbf16>
    %cst_20 = arith.constant dense<0.000000e+00> : vector<35x4096xf32>
    %89 = tpu.matmul %88, %85, %cst_20 {dimension_numbers = #tpu.dot_dimension_numbers<[1], [0], [0], [1], [0, 0, 1, 1], [], []>} : vector<35x32xbf16>, vector<32x4096xbf16>, vector<35x4096xf32> -> vector<35x4096xf32>
    %c0_21 = arith.constant 0 : index
    %c0_22 = arith.constant 0 : index
    %90 = vector.load %arg8[%c0_21, %c0_22] : memref<9x1xf32, #tpu.memory_space<vmem>>, vector<9x1xf32>
    %91 = vector.extract_strided_slice %90 {offsets = [0, 0], sizes = [3, 1], strides = [1, 1]} : vector<9x1xf32> to vector<3x1xf32>
    %92 = vector.extract_strided_slice %90 {offsets = [3, 0], sizes = [3, 1], strides = [1, 1]} : vector<9x1xf32> to vector<3x1xf32>
    %93 = vector.extract_strided_slice %90 {offsets = [6, 0], sizes = [3, 1], strides = [1, 1]} : vector<9x1xf32> to vector<3x1xf32>
    %94 = vector.extract_strided_slice %87 {offsets = [32, 0], sizes = [1, 4096], strides = [1, 1]} : vector<33x4096xf32> to vector<1x4096xf32>
    %95 = vector.broadcast %1 : f32 to vector<1x4096xf32>
    %96 = arith.addf %94, %95 : vector<1x4096xf32>
    %97 = vector.extract_strided_slice %89 {offsets = [32, 0], sizes = [3, 4096], strides = [1, 1]} : vector<35x4096xf32> to vector<3x4096xf32>
    %98 = vector.broadcast %91 : vector<3x1xf32> to vector<3x4096xf32>
    %99 = arith.subf %98, %97 : vector<3x4096xf32>
    %100 = vector.extract_strided_slice %80 {offsets = [32, 0], sizes = [32, 4096], strides = [1, 1]} : vector<64x4096xf32> to vector<32x4096xf32>
    %101 = vector.extract_strided_slice %87 {offsets = [0, 0], sizes = [32, 4096], strides = [1, 1]} : vector<33x4096xf32> to vector<32x4096xf32>
    %102 = arith.addf %100, %101 : vector<32x4096xf32>
    %103 = vector.extract_strided_slice %89 {offsets = [0, 0], sizes = [32, 4096], strides = [1, 1]} : vector<35x4096xf32> to vector<32x4096xf32>
    %104 = arith.subf %102, %103 : vector<32x4096xf32>
    %cst_23 = arith.constant 0.000000e+00 : f32
    %105 = vector.broadcast %cst_23 : f32 to vector<32x4096xf32>
    %106 = arith.maximumf %104, %105 : vector<32x4096xf32>
    %c0_24 = arith.constant 0 : index
    %c0_25 = arith.constant 0 : index
    %107 = vector.load %arg7[%c0_24, %c0_25] : memref<3x32xbf16, #tpu.memory_space<vmem>>, vector<3x32xbf16>
    %108 = arith.truncf %106 : vector<32x4096xf32> to vector<32x4096xbf16>
    %cst_26 = arith.constant dense<0.000000e+00> : vector<3x4096xf32>
    %109 = tpu.matmul %107, %108, %cst_26 {dimension_numbers = #tpu.dot_dimension_numbers<[1], [0], [0], [1], [0, 0, 1, 1], [], []>} : vector<3x32xbf16>, vector<32x4096xbf16>, vector<3x4096xf32> -> vector<3x4096xf32>
    %110 = vector.broadcast %92 : vector<3x1xf32> to vector<3x4096xf32>
    %111 = arith.addf %109, %110 : vector<3x4096xf32>
    %112 = arith.negf %111 : vector<3x4096xf32>
    %113 = math.exp %112 : vector<3x4096xf32>
    %cst_27 = arith.constant 1.000000e+00 : f32
    %114 = vector.broadcast %cst_27 : f32 to vector<3x4096xf32>
    %115 = arith.addf %114, %113 : vector<3x4096xf32>
    %116 = arith.divf %114, %115 : vector<3x4096xf32>
    %117 = vector.extract_strided_slice %99 {offsets = [0, 0], sizes = [3, 512], strides = [1, 1]} : vector<3x4096xf32> to vector<3x512xf32>
    %118 = arith.mulf %4, %117 : vector<3x512xf32>
    %cst_28 = arith.constant dense<0.000000e+00> : vector<512xf32>
    %119 = vector.multi_reduction <add>, %118, %cst_28 [0] : vector<3x512xf32> to vector<512xf32>
    %120 = vector.shape_cast %119 : vector<512xf32> to vector<1x512xf32>
    %121 = vector.extract_strided_slice %96 {offsets = [0, 0], sizes = [1, 512], strides = [1, 1]} : vector<1x4096xf32> to vector<1x512xf32>
    %122 = vector.extract_strided_slice %99 {offsets = [0, 512], sizes = [3, 512], strides = [1, 1]} : vector<3x4096xf32> to vector<3x512xf32>
    %123 = arith.mulf %4, %122 : vector<3x512xf32>
    %cst_29 = arith.constant dense<0.000000e+00> : vector<512xf32>
    %124 = vector.multi_reduction <add>, %123, %cst_29 [0] : vector<3x512xf32> to vector<512xf32>
    %125 = vector.shape_cast %124 : vector<512xf32> to vector<1x512xf32>
    %126 = vector.extract_strided_slice %96 {offsets = [0, 512], sizes = [1, 512], strides = [1, 1]} : vector<1x4096xf32> to vector<1x512xf32>
    %127 = vector.extract_strided_slice %99 {offsets = [0, 1024], sizes = [3, 512], strides = [1, 1]} : vector<3x4096xf32> to vector<3x512xf32>
    %128 = arith.mulf %4, %127 : vector<3x512xf32>
    %cst_30 = arith.constant dense<0.000000e+00> : vector<512xf32>
    %129 = vector.multi_reduction <add>, %128, %cst_30 [0] : vector<3x512xf32> to vector<512xf32>
    %130 = vector.shape_cast %129 : vector<512xf32> to vector<1x512xf32>
    %131 = vector.extract_strided_slice %96 {offsets = [0, 1024], sizes = [1, 512], strides = [1, 1]} : vector<1x4096xf32> to vector<1x512xf32>
    %132 = vector.extract_strided_slice %99 {offsets = [0, 1536], sizes = [3, 512], strides = [1, 1]} : vector<3x4096xf32> to vector<3x512xf32>
    %133 = arith.mulf %4, %132 : vector<3x512xf32>
    %cst_31 = arith.constant dense<0.000000e+00> : vector<512xf32>
    %134 = vector.multi_reduction <add>, %133, %cst_31 [0] : vector<3x512xf32> to vector<512xf32>
    %135 = vector.shape_cast %134 : vector<512xf32> to vector<1x512xf32>
    %136 = vector.extract_strided_slice %96 {offsets = [0, 1536], sizes = [1, 512], strides = [1, 1]} : vector<1x4096xf32> to vector<1x512xf32>
    %137 = vector.extract_strided_slice %99 {offsets = [0, 2048], sizes = [3, 512], strides = [1, 1]} : vector<3x4096xf32> to vector<3x512xf32>
    %138 = arith.mulf %4, %137 : vector<3x512xf32>
    %cst_32 = arith.constant dense<0.000000e+00> : vector<512xf32>
    %139 = vector.multi_reduction <add>, %138, %cst_32 [0] : vector<3x512xf32> to vector<512xf32>
    %140 = vector.shape_cast %139 : vector<512xf32> to vector<1x512xf32>
    %141 = vector.extract_strided_slice %96 {offsets = [0, 2048], sizes = [1, 512], strides = [1, 1]} : vector<1x4096xf32> to vector<1x512xf32>
    %142 = vector.extract_strided_slice %99 {offsets = [0, 2560], sizes = [3, 512], strides = [1, 1]} : vector<3x4096xf32> to vector<3x512xf32>
    %143 = arith.mulf %4, %142 : vector<3x512xf32>
    %cst_33 = arith.constant dense<0.000000e+00> : vector<512xf32>
    %144 = vector.multi_reduction <add>, %143, %cst_33 [0] : vector<3x512xf32> to vector<512xf32>
    %145 = vector.shape_cast %144 : vector<512xf32> to vector<1x512xf32>
    %146 = vector.extract_strided_slice %96 {offsets = [0, 2560], sizes = [1, 512], strides = [1, 1]} : vector<1x4096xf32> to vector<1x512xf32>
    %147 = vector.extract_strided_slice %99 {offsets = [0, 3072], sizes = [3, 512], strides = [1, 1]} : vector<3x4096xf32> to vector<3x512xf32>
    %148 = arith.mulf %4, %147 : vector<3x512xf32>
    %cst_34 = arith.constant dense<0.000000e+00> : vector<512xf32>
    %149 = vector.multi_reduction <add>, %148, %cst_34 [0] : vector<3x512xf32> to vector<512xf32>
    %150 = vector.shape_cast %149 : vector<512xf32> to vector<1x512xf32>
    %151 = vector.extract_strided_slice %96 {offsets = [0, 3072], sizes = [1, 512], strides = [1, 1]} : vector<1x4096xf32> to vector<1x512xf32>
    %152 = vector.extract_strided_slice %99 {offsets = [0, 3584], sizes = [3, 512], strides = [1, 1]} : vector<3x4096xf32> to vector<3x512xf32>
    %153 = arith.mulf %4, %152 : vector<3x512xf32>
    %cst_35 = arith.constant dense<0.000000e+00> : vector<512xf32>
    %154 = vector.multi_reduction <add>, %153, %cst_35 [0] : vector<3x512xf32> to vector<512xf32>
    %155 = vector.shape_cast %154 : vector<512xf32> to vector<1x512xf32>
    %156 = vector.extract_strided_slice %96 {offsets = [0, 3584], sizes = [1, 512], strides = [1, 1]} : vector<1x4096xf32> to vector<1x512xf32>
    %157 = tpu.concatenate %120, %125, %130, %135, %140, %145, %150, %155 in 0 : vector<1x512xf32>, vector<1x512xf32>, vector<1x512xf32>, vector<1x512xf32>, vector<1x512xf32>, vector<1x512xf32>, vector<1x512xf32>, vector<1x512xf32> -> vector<8x512xf32>
    %158 = tpu.concatenate %121, %126, %131, %136, %141, %146, %151, %156 in 0 : vector<1x512xf32>, vector<1x512xf32>, vector<1x512xf32>, vector<1x512xf32>, vector<1x512xf32>, vector<1x512xf32>, vector<1x512xf32>, vector<1x512xf32> -> vector<8x512xf32>
    %cst_36 = arith.constant 0.000000e+00 : f32
    %159 = vector.broadcast %cst_36 : f32 to vector<8x512xf32>
    %160 = arith.subf %159, %157 : vector<8x512xf32>
    %cst_37 = arith.constant 5.000000e-01 : f32
    %161 = vector.broadcast %cst_37 : f32 to vector<8x512xf32>
    %162 = arith.mulf %160, %161 : vector<8x512xf32>
    %cst_38 = arith.constant 5.000000e-01 : f32
    %163 = vector.broadcast %cst_38 : f32 to vector<8x512xf32>
    %164 = arith.addf %162, %163 : vector<8x512xf32>
    %cst_39 = arith.constant 0.000000e+00 : f32
    %165 = vector.broadcast %cst_39 : f32 to vector<8x512xf32>
    %166 = arith.maximumf %164, %165 : vector<8x512xf32>
    %cst_40 = arith.constant 1.000000e+00 : f32
    %167 = arith.subf %cst_40, %0 : f32
    %168 = vector.broadcast %167 : f32 to vector<8x512xf32>
    %169 = arith.mulf %166, %168 : vector<8x512xf32>
    %cst_41 = arith.constant 0.000000e+00 : f32
    %170 = vector.broadcast %cst_41 : f32 to vector<8x512xf32>
    %171 = arith.subf %170, %157 : vector<8x512xf32>
    %cst_42 = arith.constant 0.000000e+00 : f32
    %172 = vector.broadcast %cst_42 : f32 to vector<8x512xf32>
    %173 = arith.maximumf %171, %172 : vector<8x512xf32>
    %174 = vector.broadcast %0 : f32 to vector<8x512xf32>
    %175 = arith.mulf %173, %174 : vector<8x512xf32>
    %176 = arith.addf %169, %175 : vector<8x512xf32>
    %cst_43 = arith.constant 0.000000e+00 : f32
    %177 = vector.broadcast %cst_43 : f32 to vector<8x512xf32>
    %178 = arith.subf %177, %176 : vector<8x512xf32>
    %cst_44 = arith.constant 5.000000e-01 : f32
    %179 = vector.broadcast %cst_44 : f32 to vector<1x512xf32>
    %180 = arith.mulf %9, %179 : vector<1x512xf32>
    %181 = vector.broadcast %180 : vector<1x512xf32> to vector<8x512xf32>
    %182 = arith.mulf %178, %181 : vector<8x512xf32>
    %183 = arith.subf %158, %182 : vector<8x512xf32>
    %184 = arith.negf %183 : vector<8x512xf32>
    %185 = math.exp %184 : vector<8x512xf32>
    %cst_45 = arith.constant 1.000000e+00 : f32
    %186 = vector.broadcast %cst_45 : f32 to vector<8x512xf32>
    %187 = arith.addf %186, %185 : vector<8x512xf32>
    %188 = arith.divf %186, %187 : vector<8x512xf32>
    %189 = arith.addf %158, %182 : vector<8x512xf32>
    %190 = arith.negf %189 : vector<8x512xf32>
    %191 = math.exp %190 : vector<8x512xf32>
    %cst_46 = arith.constant 1.000000e+00 : f32
    %192 = vector.broadcast %cst_46 : f32 to vector<8x512xf32>
    %193 = arith.addf %192, %191 : vector<8x512xf32>
    %194 = arith.divf %192, %193 : vector<8x512xf32>
    %195 = arith.subf %188, %194 : vector<8x512xf32>
    %cst_47 = arith.constant 9.99999974E-6 : f32
    %196 = vector.broadcast %cst_47 : f32 to vector<8x512xf32>
    %197 = arith.addf %195, %196 : vector<8x512xf32>
    %cst_48 = arith.constant 9.99999974E-6 : f32
    %198 = vector.broadcast %cst_48 : f32 to vector<8x512xf32>
    %199 = arith.addf %188, %198 : vector<8x512xf32>
    %200 = arith.divf %197, %199 : vector<8x512xf32>
    %cst_49 = arith.constant 0.000000e+00 : f32
    %cst_50 = arith.constant 1.000000e+00 : f32
    %201 = vector.broadcast %cst_49 : f32 to vector<8x512xf32>
    %202 = arith.maximumf %201, %200 : vector<8x512xf32>
    %203 = vector.broadcast %cst_50 : f32 to vector<8x512xf32>
    %204 = arith.minimumf %203, %202 : vector<8x512xf32>
    %cst_51 = arith.constant 1.000000e+00 : f32
    %205 = vector.broadcast %cst_51 : f32 to vector<1x512xf32>
    %cst_52 = arith.constant 0.000000e+00 : f32
    %206 = vector.broadcast %cst_52 : f32 to vector<3x512xf32>
    %cst_53 = arith.constant 0.000000e+00 : f32
    %207 = vector.broadcast %cst_53 : f32 to vector<1x512xf32>
    %208 = vector.extract_strided_slice %204 {offsets = [0, 0], sizes = [1, 512], strides = [1, 1]} : vector<8x512xf32> to vector<1x512xf32>
    %209 = arith.mulf %205, %208 : vector<1x512xf32>
    %210 = vector.extract_strided_slice %116 {offsets = [0, 0], sizes = [3, 512], strides = [1, 1]} : vector<3x4096xf32> to vector<3x512xf32>
    %211 = vector.broadcast %209 : vector<1x512xf32> to vector<3x512xf32>
    %212 = arith.mulf %211, %210 : vector<3x512xf32>
    %213 = arith.addf %206, %212 : vector<3x512xf32>
    %214 = arith.addf %207, %209 : vector<1x512xf32>
    %cst_54 = arith.constant 1.000000e+00 : f32
    %215 = vector.broadcast %cst_54 : f32 to vector<1x512xf32>
    %216 = arith.subf %215, %208 : vector<1x512xf32>
    %217 = arith.mulf %205, %216 : vector<1x512xf32>
    %218 = vector.extract_strided_slice %204 {offsets = [1, 0], sizes = [1, 512], strides = [1, 1]} : vector<8x512xf32> to vector<1x512xf32>
    %219 = arith.mulf %217, %218 : vector<1x512xf32>
    %220 = vector.extract_strided_slice %116 {offsets = [0, 512], sizes = [3, 512], strides = [1, 1]} : vector<3x4096xf32> to vector<3x512xf32>
    %221 = vector.broadcast %219 : vector<1x512xf32> to vector<3x512xf32>
    %222 = arith.mulf %221, %220 : vector<3x512xf32>
    %223 = arith.addf %213, %222 : vector<3x512xf32>
    %224 = arith.addf %214, %219 : vector<1x512xf32>
    %cst_55 = arith.constant 1.000000e+00 : f32
    %225 = vector.broadcast %cst_55 : f32 to vector<1x512xf32>
    %226 = arith.subf %225, %218 : vector<1x512xf32>
    %227 = arith.mulf %217, %226 : vector<1x512xf32>
    %228 = vector.extract_strided_slice %204 {offsets = [2, 0], sizes = [1, 512], strides = [1, 1]} : vector<8x512xf32> to vector<1x512xf32>
    %229 = arith.mulf %227, %228 : vector<1x512xf32>
    %230 = vector.extract_strided_slice %116 {offsets = [0, 1024], sizes = [3, 512], strides = [1, 1]} : vector<3x4096xf32> to vector<3x512xf32>
    %231 = vector.broadcast %229 : vector<1x512xf32> to vector<3x512xf32>
    %232 = arith.mulf %231, %230 : vector<3x512xf32>
    %233 = arith.addf %223, %232 : vector<3x512xf32>
    %234 = arith.addf %224, %229 : vector<1x512xf32>
    %cst_56 = arith.constant 1.000000e+00 : f32
    %235 = vector.broadcast %cst_56 : f32 to vector<1x512xf32>
    %236 = arith.subf %235, %228 : vector<1x512xf32>
    %237 = arith.mulf %227, %236 : vector<1x512xf32>
    %238 = vector.extract_strided_slice %204 {offsets = [3, 0], sizes = [1, 512], strides = [1, 1]} : vector<8x512xf32> to vector<1x512xf32>
    %239 = arith.mulf %237, %238 : vector<1x512xf32>
    %240 = vector.extract_strided_slice %116 {offsets = [0, 1536], sizes = [3, 512], strides = [1, 1]} : vector<3x4096xf32> to vector<3x512xf32>
    %241 = vector.broadcast %239 : vector<1x512xf32> to vector<3x512xf32>
    %242 = arith.mulf %241, %240 : vector<3x512xf32>
    %243 = arith.addf %233, %242 : vector<3x512xf32>
    %244 = arith.addf %234, %239 : vector<1x512xf32>
    %cst_57 = arith.constant 1.000000e+00 : f32
    %245 = vector.broadcast %cst_57 : f32 to vector<1x512xf32>
    %246 = arith.subf %245, %238 : vector<1x512xf32>
    %247 = arith.mulf %237, %246 : vector<1x512xf32>
    %248 = vector.extract_strided_slice %204 {offsets = [4, 0], sizes = [1, 512], strides = [1, 1]} : vector<8x512xf32> to vector<1x512xf32>
    %249 = arith.mulf %247, %248 : vector<1x512xf32>
    %250 = vector.extract_strided_slice %116 {offsets = [0, 2048], sizes = [3, 512], strides = [1, 1]} : vector<3x4096xf32> to vector<3x512xf32>
    %251 = vector.broadcast %249 : vector<1x512xf32> to vector<3x512xf32>
    %252 = arith.mulf %251, %250 : vector<3x512xf32>
    %253 = arith.addf %243, %252 : vector<3x512xf32>
    %254 = arith.addf %244, %249 : vector<1x512xf32>
    %cst_58 = arith.constant 1.000000e+00 : f32
    %255 = vector.broadcast %cst_58 : f32 to vector<1x512xf32>
    %256 = arith.subf %255, %248 : vector<1x512xf32>
    %257 = arith.mulf %247, %256 : vector<1x512xf32>
    %258 = vector.extract_strided_slice %204 {offsets = [5, 0], sizes = [1, 512], strides = [1, 1]} : vector<8x512xf32> to vector<1x512xf32>
    %259 = arith.mulf %257, %258 : vector<1x512xf32>
    %260 = vector.extract_strided_slice %116 {offsets = [0, 2560], sizes = [3, 512], strides = [1, 1]} : vector<3x4096xf32> to vector<3x512xf32>
    %261 = vector.broadcast %259 : vector<1x512xf32> to vector<3x512xf32>
    %262 = arith.mulf %261, %260 : vector<3x512xf32>
    %263 = arith.addf %253, %262 : vector<3x512xf32>
    %264 = arith.addf %254, %259 : vector<1x512xf32>
    %cst_59 = arith.constant 1.000000e+00 : f32
    %265 = vector.broadcast %cst_59 : f32 to vector<1x512xf32>
    %266 = arith.subf %265, %258 : vector<1x512xf32>
    %267 = arith.mulf %257, %266 : vector<1x512xf32>
    %268 = vector.extract_strided_slice %204 {offsets = [6, 0], sizes = [1, 512], strides = [1, 1]} : vector<8x512xf32> to vector<1x512xf32>
    %269 = arith.mulf %267, %268 : vector<1x512xf32>
    %270 = vector.extract_strided_slice %116 {offsets = [0, 3072], sizes = [3, 512], strides = [1, 1]} : vector<3x4096xf32> to vector<3x512xf32>
    %271 = vector.broadcast %269 : vector<1x512xf32> to vector<3x512xf32>
    %272 = arith.mulf %271, %270 : vector<3x512xf32>
    %273 = arith.addf %263, %272 : vector<3x512xf32>
    %274 = arith.addf %264, %269 : vector<1x512xf32>
    %cst_60 = arith.constant 1.000000e+00 : f32
    %275 = vector.broadcast %cst_60 : f32 to vector<1x512xf32>
    %276 = arith.subf %275, %268 : vector<1x512xf32>
    %277 = arith.mulf %267, %276 : vector<1x512xf32>
    %278 = vector.extract_strided_slice %204 {offsets = [7, 0], sizes = [1, 512], strides = [1, 1]} : vector<8x512xf32> to vector<1x512xf32>
    %279 = arith.mulf %277, %278 : vector<1x512xf32>
    %280 = vector.extract_strided_slice %116 {offsets = [0, 3584], sizes = [3, 512], strides = [1, 1]} : vector<3x4096xf32> to vector<3x512xf32>
    %281 = vector.broadcast %279 : vector<1x512xf32> to vector<3x512xf32>
    %282 = arith.mulf %281, %280 : vector<3x512xf32>
    %283 = arith.addf %273, %282 : vector<3x512xf32>
    %284 = arith.addf %274, %279 : vector<1x512xf32>
    %cst_61 = arith.constant 1.000000e+00 : f32
    %285 = vector.broadcast %cst_61 : f32 to vector<1x512xf32>
    %286 = arith.subf %285, %284 : vector<1x512xf32>
    %287 = vector.broadcast %286 : vector<1x512xf32> to vector<3x512xf32>
    %288 = vector.broadcast %93 : vector<3x1xf32> to vector<3x512xf32>
    %289 = arith.mulf %287, %288 : vector<3x512xf32>
    %290 = arith.addf %283, %289 : vector<3x512xf32>
    %c0_62 = arith.constant 0 : index
    %c0_63 = arith.constant 0 : index
    %291 = vector.load %arg9[%c0_62, %c0_63] : memref<3x512xf32, #tpu.memory_space<vmem>>, vector<3x512xf32>
    tpu.vector_store %arg9[%c0_62, %c0_63], %290 {strides = array<i32>} : memref<3x512xf32, #tpu.memory_space<vmem>>, vector<3x512xf32>,
    return
  }
  func.func @transform_0(%arg0: i32) -> i32 {
    %c0_i32 = arith.constant 0 : i32
    %c0_i32_0 = arith.constant 0 : i32
    return %c0_i32 : i32
  }
  func.func @transform_1(%arg0: i32) -> (i32, i32) {
    %c0_i32 = arith.constant 0 : i32
    %c0_i32_0 = arith.constant 0 : i32
    return %c0_i32, %arg0 : i32, i32
  }
  func.func @transform_2(%arg0: i32) -> (i32, i32) {
    %c0_i32 = arith.constant 0 : i32
    %c0_i32_0 = arith.constant 0 : i32
    %c0_i32_1 = arith.constant 0 : i32
    return %c0_i32, %c0_i32_0 : i32, i32
  }
  func.func @transform_3(%arg0: i32) -> (i32, i32) {
    %c0_i32 = arith.constant 0 : i32
    %c0_i32_0 = arith.constant 0 : i32
    %c0_i32_1 = arith.constant 0 : i32
    return %c0_i32, %c0_i32_0 : i32, i32
  }
  func.func @transform_4(%arg0: i32) -> (i32, i32) {
    %c0_i32 = arith.constant 0 : i32
    %c0_i32_0 = arith.constant 0 : i32
    %c0_i32_1 = arith.constant 0 : i32
    return %c0_i32, %c0_i32_0 : i32, i32
  }
  func.func @transform_5(%arg0: i32) -> (i32, i32) {
    %c0_i32 = arith.constant 0 : i32
    %c0_i32_0 = arith.constant 0 : i32
    %c0_i32_1 = arith.constant 0 : i32
    return %c0_i32, %c0_i32_0 : i32, i32
  }
  func.func @transform_6(%arg0: i32) -> (i32, i32) {
    %c0_i32 = arith.constant 0 : i32
    %c0_i32_0 = arith.constant 0 : i32
    %c0_i32_1 = arith.constant 0 : i32
    return %c0_i32, %c0_i32_0 : i32, i32
  }
  func.func @transform_7(%arg0: i32) -> (i32, i32) {
    %c0_i32 = arith.constant 0 : i32
    %c0_i32_0 = arith.constant 0 : i32
    %c0_i32_1 = arith.constant 0 : i32
    return %c0_i32, %c0_i32_0 : i32, i32
  }
  func.func @transform_8(%arg0: i32) -> (i32, i32) {
    %c0_i32 = arith.constant 0 : i32
    %c0_i32_0 = arith.constant 0 : i32
    return %c0_i32, %arg0 : i32, i32
  }
}

</mosaic_0001>

<llo_original>
// kernel: tpu_custom_call.1
$region0: #{tpu_custom_call.1}
  #allocation0 [shape = 'u32[]', space=smem, size = 0x4, offset = 0x4, fixed_abs, tag = 'smem constant byte address 0x4 - core index']
  #allocation1 [shape = 'u32[144,128]{1,0:T(1,128)}', space=vmem, size = 0x12000, scoped, tag = 'internal scratch']
  %s0 = inlined_call_operand.vmem [shape: f32[2], index: 0, kind: input, shape index: {}]
  %s1 = inlined_call_operand.vmem [shape: f32[8,512], index: 1, kind: input, shape index: {}]
  %s2 = inlined_call_operand.vmem [shape: bf16[64,8], index: 2, kind: input, shape index: {}]
  %s3 = inlined_call_operand.vmem [shape: f32[64,1], index: 3, kind: input, shape index: {}]
  %s4 = inlined_call_operand.vmem [shape: bf16[33,32], index: 4, kind: input, shape index: {}]
  %s5 = inlined_call_operand.vmem [shape: bf16[35,32], index: 5, kind: input, shape index: {}]
  %s6 = inlined_call_operand.vmem [shape: bf16[3,32], index: 6, kind: input, shape index: {}]
  %s7 = inlined_call_operand.vmem [shape: f32[9,1], index: 7, kind: input, shape index: {}]
  %s8 = inlined_call_operand.hbm [shape: f32[3,512], index: 8, kind: output, shape index: {}]
  %s9 = sld [smem:[#allocation0]]
  $region46: #{tpu_custom_call.1} parent=0
    _
  %s11 = ssub.s32 1, %s9
  %s12 = scalar_select 0, %s11, %s9
  $region1: #{tpu_custom_call.1} parent=0
    #allocation2 [shape = 'u8[512]{0}', space=smem, size = 0x200, scoped, tag = 'input window, operand 0, single buffered']
    #allocation3 [shape = 's32[1]{0}', space=sflag, size = 0x4, scoped, tag = 'scoped memory for tpu_custom_call.1']
    #allocation4 [shape = 's32[1]{0}', space=sflag, size = 0x4, scoped, tag = 'scoped memory for tpu_custom_call.1']
    #allocation5 [shape = 'u8[8192]{0}', space=vmem, size = 0x2000, scoped, tag = 'output window, operand 0, single buffered']
    %13 = vsyncpa [#allocation4], 0
    %14 = vsyncpa [#allocation3], 0
    // Predicated region
    $region2: #{tpu_custom_call.1} parent=1 // pred_check
      _
    $region3: #{tpu_custom_call.1} parent=1 // pred_check_branch
      %16 = sbr.rel (0) target = $region5
    $region4: #{tpu_custom_call.1} parent=1 // pred_region
      %s18 = ssub.s32 16, 16
      %19 = vsyncadd [#allocation4], %s18
      %s21 = sshll.u32 %s0, 4
      %s22 = int_to_ptr.vmem [resolvable:$true] %s21
      %24 = dma.vmem_to_smem %s22, 16, [#allocation2], [#allocation4]
    $region5: #{tpu_custom_call.1} parent=1 // pred_fallthru
      _
    // Predicated region
    $region6: #{tpu_custom_call.1} parent=1 // pred_check
      _
    $region7: #{tpu_custom_call.1} parent=1 // pred_check_branch
      %26 = sbr.rel (0) target = $region9
    $region8: #{tpu_custom_call.1} parent=1 // pred_region
      _
    $region9: #{tpu_custom_call.1} parent=1 // pred_fallthru
      _
    // Predicated region
    $region10: #{tpu_custom_call.1} parent=1 // pred_check
      _
    $region11: #{tpu_custom_call.1} parent=1 // pred_check_branch
      %28 = sbr.rel (0) target = $region13
    $region12: #{tpu_custom_call.1} parent=1 // pred_region
      _
    $region13: #{tpu_custom_call.1} parent=1 // pred_fallthru
      _
    // Predicated region
    $region14: #{tpu_custom_call.1} parent=1 // pred_check
      _
    $region15: #{tpu_custom_call.1} parent=1 // pred_check_branch
      %30 = sbr.rel (0) target = $region17
    $region16: #{tpu_custom_call.1} parent=1 // pred_region
      _
    $region17: #{tpu_custom_call.1} parent=1 // pred_fallthru
      _
    // Predicated region
    $region18: #{tpu_custom_call.1} parent=1 // pred_check
      _
    $region19: #{tpu_custom_call.1} parent=1 // pred_check_branch
      %32 = sbr.rel (0) target = $region21
    $region20: #{tpu_custom_call.1} parent=1 // pred_region
      _
    $region21: #{tpu_custom_call.1} parent=1 // pred_fallthru
      _
    // Predicated region
    $region22: #{tpu_custom_call.1} parent=1 // pred_check
      _
    $region23: #{tpu_custom_call.1} parent=1 // pred_check_branch
      %34 = sbr.rel (0) target = $region25
    $region24: #{tpu_custom_call.1} parent=1 // pred_region
      _
    $region25: #{tpu_custom_call.1} parent=1 // pred_fallthru
      _
    // Predicated region
    $region26: #{tpu_custom_call.1} parent=1 // pred_check
      _
    $region27: #{tpu_custom_call.1} parent=1 // pred_check_branch
      %36 = sbr.rel (0) target = $region29
    $region28: #{tpu_custom_call.1} parent=1 // pred_region
      _
    $region29: #{tpu_custom_call.1} parent=1 // pred_fallthru
      _
    // Predicated region
    $region30: #{tpu_custom_call.1} parent=1 // pred_check
      _
    $region31: #{tpu_custom_call.1} parent=1 // pred_check_branch
      %38 = sbr.rel (0) target = $region33
    $region32: #{tpu_custom_call.1} parent=1 // pred_region
      _
    $region33: #{tpu_custom_call.1} parent=1 // pred_fallthru
      _
    // Predicated region
    $region34: #{tpu_custom_call.1} parent=1 // pred_check
      _
    $region35: #{tpu_custom_call.1} parent=1 // pred_check_branch
      %40 = sbr.rel (0) target = $region37
    $region36: #{tpu_custom_call.1} parent=1 // pred_region
      %41 = dma.done [#allocation4], 16
    $region37: #{tpu_custom_call.1} parent=1 // pred_fallthru
      _
    %42 = sfence
    %s44 = sld [smem:[#allocation2]]
    %s45 = sld [smem:[#allocation2 + $0x1]]
    %v46 = vld [vmem:[%s1] sm:$0xff]
    %v47 = vld [vmem:[%s1 + $0x8] sm:$0xff]
    %v48 = vld [vmem:[%s1 + $0x10] sm:$0xff]
    %v49 = vld [vmem:[%s1 + $0x18] sm:$0xff]
    %v54 = vrot.slane %v46, 7
    %v55 = vrot.slane %v47, 7
    %v56 = vrot.slane %v48, 7
    %v57 = vrot.slane %v49, 7
    %v62 = vsub.f32 %v46, %v54
    %v63 = vsub.f32 %v47, %v55
    %v64 = vsub.f32 %v48, %v56
    %v65 = vsub.f32 %v49, %v57
    %v66 = vmul.f32 %v62, 0.125
    %v67 = vmul.f32 %v63, 0.125
    %v68 = vmul.f32 %v64, 0.125
    %v69 = vmul.f32 %v65, 0.125
    %v70 = vmul.f32 %v66, 0.5
    %v71 = vmul.f32 %v67, 0.5
    %v72 = vmul.f32 %v68, 0.5
    %v73 = vmul.f32 %v69, 0.5
    %v78 = vrot.slane %v70, 1
    %v79 = vrot.slane %v71, 1
    %v80 = vrot.slane %v72, 1
    %v81 = vrot.slane %v73, 1
    %v86 = vadd.f32 %v46, %v78
    %v87 = vadd.f32 %v47, %v79
    %v88 = vadd.f32 %v48, %v80
    %v89 = vadd.f32 %v49, %v81
    %v90 = vlaneseq
    %v91 = vshrl.u32 %v90, 7
    %v92 = vsub.s32 6, %v91
    %v93 = vrot.slane %v86, %v92
    %v94 = vlaneseq
    %v95 = vshrl.u32 %v94, 7
    %v96 = vsub.s32 6, %v95
    %v97 = vrot.slane %v87, %v96
    %v98 = vlaneseq
    %v99 = vshrl.u32 %v98, 7
    %v100 = vsub.s32 6, %v99
    %v101 = vrot.slane %v88, %v100
    %v102 = vlaneseq
    %v103 = vshrl.u32 %v102, 7
    %v104 = vsub.s32 6, %v103
    %v105 = vrot.slane %v89, %v104
    %v106 = vmul.f32 %v46, %v93
    %v107 = vmul.f32 %v47, %v97
    %v108 = vmul.f32 %v48, %v101
    %v109 = vmul.f32 %v49, %v105
    %v114 = vrot.slane %v106, 3
    %v115 = vrot.slane %v107, 3
    %v116 = vrot.slane %v108, 3
    %v117 = vrot.slane %v109, 3
    %v122 = vadd.f32 %v46, %v114
    %v123 = vadd.f32 %v47, %v115
    %v124 = vadd.f32 %v48, %v116
    %v125 = vadd.f32 %v49, %v117
    %vm126 = vcmask 1042432
    %v127 = vsel %vm126, %v122, %v46
    %v128 = vsel %vm126, %v123, %v47
    %v129 = vsel %vm126, %v124, %v48
    %v130 = vsel %vm126, %v125, %v49
    %v131 = vmul.f32 %v66, 1.5
    %v132 = vmul.f32 %v67, 1.5
    %v133 = vmul.f32 %v68, 1.5
    %v134 = vmul.f32 %v69, 1.5
    %v139 = vrot.slane %v131, 1
    %v140 = vrot.slane %v132, 1
    %v141 = vrot.slane %v133, 1
    %v142 = vrot.slane %v134, 1
    %v147 = vadd.f32 %v46, %v139
    %v148 = vadd.f32 %v47, %v140
    %v149 = vadd.f32 %v48, %v141
    %v150 = vadd.f32 %v49, %v142
    %v151 = vlaneseq
    %v152 = vshrl.u32 %v151, 7
    %v153 = vsub.s32 6, %v152
    %v154 = vrot.slane %v147, %v153
    %v155 = vlaneseq
    %v156 = vshrl.u32 %v155, 7
    %v157 = vsub.s32 6, %v156
    %v158 = vrot.slane %v148, %v157
    %v159 = vlaneseq
    %v160 = vshrl.u32 %v159, 7
    %v161 = vsub.s32 6, %v160
    %v162 = vrot.slane %v149, %v161
    %v163 = vlaneseq
    %v164 = vshrl.u32 %v163, 7
    %v165 = vsub.s32 6, %v164
    %v166 = vrot.slane %v150, %v165
    %v167 = vmul.f32 %v46, %v154
    %v168 = vmul.f32 %v47, %v158
    %v169 = vmul.f32 %v48, %v162
    %v170 = vmul.f32 %v49, %v166
    %v175 = vrot.slane %v167, 3
    %v176 = vrot.slane %v168, 3
    %v177 = vrot.slane %v169, 3
    %v178 = vrot.slane %v170, 3
    %v183 = vadd.f32 %v46, %v175
    %v184 = vadd.f32 %v47, %v176
    %v185 = vadd.f32 %v48, %v177
    %v186 = vadd.f32 %v49, %v178
    %v187 = vsel %vm126, %v183, %v46
    %v188 = vsel %vm126, %v184, %v47
    %v189 = vsel %vm126, %v185, %v48
    %v190 = vsel %vm126, %v186, %v49
    %v191 = vmul.f32 %v66, 2.5
    %v192 = vmul.f32 %v67, 2.5
    %v193 = vmul.f32 %v68, 2.5
    %v194 = vmul.f32 %v69, 2.5
    %v199 = vrot.slane %v191, 1
    %v200 = vrot.slane %v192, 1
    %v201 = vrot.slane %v193, 1
    %v202 = vrot.slane %v194, 1
    %v207 = vadd.f32 %v46, %v199
    %v208 = vadd.f32 %v47, %v200
    %v209 = vadd.f32 %v48, %v201
    %v210 = vadd.f32 %v49, %v202
    %v211 = vlaneseq
    %v212 = vshrl.u32 %v211, 7
    %v213 = vsub.s32 6, %v212
    %v214 = vrot.slane %v207, %v213
    %v215 = vlaneseq
    %v216 = vshrl.u32 %v215, 7
    %v217 = vsub.s32 6, %v216
    %v218 = vrot.slane %v208, %v217
    %v219 = vlaneseq
    %v220 = vshrl.u32 %v219, 7
    %v221 = vsub.s32 6, %v220
    %v222 = vrot.slane %v209, %v221
    %v223 = vlaneseq
    %v224 = vshrl.u32 %v223, 7
    %v225 = vsub.s32 6, %v224
    %v226 = vrot.slane %v210, %v225
    %v227 = vmul.f32 %v46, %v214
    %v228 = vmul.f32 %v47, %v218
    %v229 = vmul.f32 %v48, %v222
    %v230 = vmul.f32 %v49, %v226
    %v235 = vrot.slane %v227, 3
    %v236 = vrot.slane %v228, 3
    %v237 = vrot.slane %v229, 3
    %v238 = vrot.slane %v230, 3
    %v243 = vadd.f32 %v46, %v235
    %v244 = vadd.f32 %v47, %v236
    %v245 = vadd.f32 %v48, %v237
    %v246 = vadd.f32 %v49, %v238
    %v247 = vsel %vm126, %v243, %v46
    %v248 = vsel %vm126, %v244, %v47
    %v249 = vsel %vm126, %v245, %v48
    %v250 = vsel %vm126, %v246, %v49
    %v251 = vmul.f32 %v66, 3.5
    %v252 = vmul.f32 %v67, 3.5
    %v253 = vmul.f32 %v68, 3.5
    %v254 = vmul.f32 %v69, 3.5
    %v259 = vrot.slane %v251, 1
    %v260 = vrot.slane %v252, 1
    %v261 = vrot.slane %v253, 1
    %v262 = vrot.slane %v254, 1
    %v267 = vadd.f32 %v46, %v259
    %v268 = vadd.f32 %v47, %v260
    %v269 = vadd.f32 %v48, %v261
    %v270 = vadd.f32 %v49, %v262
    %v271 = vlaneseq
    %v272 = vshrl.u32 %v271, 7
    %v273 = vsub.s32 6, %v272
    %v274 = vrot.slane %v267, %v273
    %v275 = vlaneseq
    %v276 = vshrl.u32 %v275, 7
    %v277 = vsub.s32 6, %v276
    %v278 = vrot.slane %v268, %v277
    %v279 = vlaneseq
    %v280 = vshrl.u32 %v279, 7
    %v281 = vsub.s32 6, %v280
    %v282 = vrot.slane %v269, %v281
    %v283 = vlaneseq
    %v284 = vshrl.u32 %v283, 7
    %v285 = vsub.s32 6, %v284
    %v286 = vrot.slane %v270, %v285
    %v287 = vmul.f32 %v46, %v274
    %v288 = vmul.f32 %v47, %v278
    %v289 = vmul.f32 %v48, %v282
    %v290 = vmul.f32 %v49, %v286
    %v295 = vrot.slane %v287, 3
    %v296 = vrot.slane %v288, 3
    %v297 = vrot.slane %v289, 3
    %v298 = vrot.slane %v290, 3
    %v303 = vadd.f32 %v46, %v295
    %v304 = vadd.f32 %v47, %v296
    %v305 = vadd.f32 %v48, %v297
    %v306 = vadd.f32 %v49, %v298
    %v307 = vsel %vm126, %v303, %v46
    %v308 = vsel %vm126, %v304, %v47
    %v309 = vsel %vm126, %v305, %v48
    %v310 = vsel %vm126, %v306, %v49
    %v311 = vmul.f32 %v66, 4.5
    %v312 = vmul.f32 %v67, 4.5
    %v313 = vmul.f32 %v68, 4.5
    %v314 = vmul.f32 %v69, 4.5
    %v319 = vrot.slane %v311, 1
    %v320 = vrot.slane %v312, 1
    %v321 = vrot.slane %v313, 1
    %v322 = vrot.slane %v314, 1
    %v327 = vadd.f32 %v46, %v319
    %v328 = vadd.f32 %v47, %v320
    %v329 = vadd.f32 %v48, %v321
    %v330 = vadd.f32 %v49, %v322
    %v331 = vlaneseq
    %v332 = vshrl.u32 %v331, 7
    %v333 = vsub.s32 6, %v332
    %v334 = vrot.slane %v327, %v333
    %v335 = vlaneseq
    %v336 = vshrl.u32 %v335, 7
    %v337 = vsub.s32 6, %v336
    %v338 = vrot.slane %v328, %v337
    %v339 = vlaneseq
    %v340 = vshrl.u32 %v339, 7
    %v341 = vsub.s32 6, %v340
    %v342 = vrot.slane %v329, %v341
    %v343 = vlaneseq
    %v344 = vshrl.u32 %v343, 7
    %v345 = vsub.s32 6, %v344
    %v346 = vrot.slane %v330, %v345
    %v347 = vmul.f32 %v46, %v334
    %v348 = vmul.f32 %v47, %v338
    %v349 = vmul.f32 %v48, %v342
    %v350 = vmul.f32 %v49, %v346
    %v355 = vrot.slane %v347, 3
    %v356 = vrot.slane %v348, 3
    %v357 = vrot.slane %v349, 3
    %v358 = vrot.slane %v350, 3
    %v363 = vadd.f32 %v46, %v355
    %v364 = vadd.f32 %v47, %v356
    %v365 = vadd.f32 %v48, %v357
    %v366 = vadd.f32 %v49, %v358
    %v367 = vsel %vm126, %v363, %v46
    %v368 = vsel %vm126, %v364, %v47
    %v369 = vsel %vm126, %v365, %v48
    %v370 = vsel %vm126, %v366, %v49
    %v371 = vmul.f32 %v66, 5.5
    %v372 = vmul.f32 %v67, 5.5
    %v373 = vmul.f32 %v68, 5.5
    %v374 = vmul.f32 %v69, 5.5
    %v379 = vrot.slane %v371, 1
    %v380 = vrot.slane %v372, 1
    %v381 = vrot.slane %v373, 1
    %v382 = vrot.slane %v374, 1
    %v387 = vadd.f32 %v46, %v379
    %v388 = vadd.f32 %v47, %v380
    %v389 = vadd.f32 %v48, %v381
    %v390 = vadd.f32 %v49, %v382
    %v391 = vlaneseq
    %v392 = vshrl.u32 %v391, 7
    %v393 = vsub.s32 6, %v392
    %v394 = vrot.slane %v387, %v393
    %v395 = vlaneseq
    %v396 = vshrl.u32 %v395, 7
    %v397 = vsub.s32 6, %v396
    %v398 = vrot.slane %v388, %v397
    %v399 = vlaneseq
    %v400 = vshrl.u32 %v399, 7
    %v401 = vsub.s32 6, %v400
    %v402 = vrot.slane %v389, %v401
    %v403 = vlaneseq
    %v404 = vshrl.u32 %v403, 7
    %v405 = vsub.s32 6, %v404
    %v406 = vrot.slane %v390, %v405
    %v407 = vmul.f32 %v46, %v394
    %v408 = vmul.f32 %v47, %v398
    %v409 = vmul.f32 %v48, %v402
    %v410 = vmul.f32 %v49, %v406
    %v415 = vrot.slane %v407, 3
    %v416 = vrot.slane %v408, 3
    %v417 = vrot.slane %v409, 3
    %v418 = vrot.slane %v410, 3
    %v423 = vadd.f32 %v46, %v415
    %v424 = vadd.f32 %v47, %v416
    %v425 = vadd.f32 %v48, %v417
    %v426 = vadd.f32 %v49, %v418
    %v427 = vsel %vm126, %v423, %v46
    %v428 = vsel %vm126, %v424, %v47
    %v429 = vsel %vm126, %v425, %v48
    %v430 = vsel %vm126, %v426, %v49
    %v431 = vmul.f32 %v66, 6.5
    %v432 = vmul.f32 %v67, 6.5
    %v433 = vmul.f32 %v68, 6.5
    %v434 = vmul.f32 %v69, 6.5
    %v439 = vrot.slane %v431, 1
    %v440 = vrot.slane %v432, 1
    %v441 = vrot.slane %v433, 1
    %v442 = vrot.slane %v434, 1
    %v447 = vadd.f32 %v46, %v439
    %v448 = vadd.f32 %v47, %v440
    %v449 = vadd.f32 %v48, %v441
    %v450 = vadd.f32 %v49, %v442
    %v451 = vlaneseq
    %v452 = vshrl.u32 %v451, 7
    %v453 = vsub.s32 6, %v452
    %v454 = vrot.slane %v447, %v453
    %v455 = vlaneseq
    %v456 = vshrl.u32 %v455, 7
    %v457 = vsub.s32 6, %v456
    %v458 = vrot.slane %v448, %v457
    %v459 = vlaneseq
    %v460 = vshrl.u32 %v459, 7
    %v461 = vsub.s32 6, %v460
    %v462 = vrot.slane %v449, %v461
    %v463 = vlaneseq
    %v464 = vshrl.u32 %v463, 7
    %v465 = vsub.s32 6, %v464
    %v466 = vrot.slane %v450, %v465
    %v467 = vmul.f32 %v46, %v454
    %v468 = vmul.f32 %v47, %v458
    %v469 = vmul.f32 %v48, %v462
    %v470 = vmul.f32 %v49, %v466
    %v475 = vrot.slane %v467, 3
    %v476 = vrot.slane %v468, 3
    %v477 = vrot.slane %v469, 3
    %v478 = vrot.slane %v470, 3
    %v483 = vadd.f32 %v46, %v475
    %v484 = vadd.f32 %v47, %v476
    %v485 = vadd.f32 %v48, %v477
    %v486 = vadd.f32 %v49, %v478
    %v487 = vsel %vm126, %v483, %v46
    %v488 = vsel %vm126, %v484, %v47
    %v489 = vsel %vm126, %v485, %v48
    %v490 = vsel %vm126, %v486, %v49
    %v491 = vmul.f32 %v66, 7.5
    %v492 = vmul.f32 %v67, 7.5
    %v493 = vmul.f32 %v68, 7.5
    %v494 = vmul.f32 %v69, 7.5
    %v499 = vrot.slane %v491, 1
    %v500 = vrot.slane %v492, 1
    %v501 = vrot.slane %v493, 1
    %v502 = vrot.slane %v494, 1
    %v507 = vadd.f32 %v46, %v499
    %v508 = vadd.f32 %v47, %v500
    %v509 = vadd.f32 %v48, %v501
    %v510 = vadd.f32 %v49, %v502
    %v511 = vlaneseq
    %v512 = vshrl.u32 %v511, 7
    %v513 = vsub.s32 6, %v512
    %v514 = vrot.slane %v507, %v513
    %v515 = vlaneseq
    %v516 = vshrl.u32 %v515, 7
    %v517 = vsub.s32 6, %v516
    %v518 = vrot.slane %v508, %v517
    %v519 = vlaneseq
    %v520 = vshrl.u32 %v519, 7
    %v521 = vsub.s32 6, %v520
    %v522 = vrot.slane %v509, %v521
    %v523 = vlaneseq
    %v524 = vshrl.u32 %v523, 7
    %v525 = vsub.s32 6, %v524
    %v526 = vrot.slane %v510, %v525
    %v527 = vmul.f32 %v46, %v514
    %v528 = vmul.f32 %v47, %v518
    %v529 = vmul.f32 %v48, %v522
    %v530 = vmul.f32 %v49, %v526
    %v535 = vrot.slane %v527, 3
    %v536 = vrot.slane %v528, 3
    %v537 = vrot.slane %v529, 3
    %v538 = vrot.slane %v530, 3
    %v543 = vadd.f32 %v46, %v535
    %v544 = vadd.f32 %v47, %v536
    %v545 = vadd.f32 %v48, %v537
    %v546 = vadd.f32 %v49, %v538
    %v547 = vsel %vm126, %v543, %v46
    %v548 = vsel %vm126, %v544, %v47
    %v549 = vsel %vm126, %v545, %v48
    %v550 = vsel %vm126, %v546, %v49
    %v551 = vpack.c.bf16 %v127, %v127
    %v552 = vpack.c.bf16 %v128, %v128
    %v553 = vpack.c.bf16 %v129, %v129
    %v554 = vpack.c.bf16 %v130, %v130
    %v555 = vpack.c.bf16 %v187, %v187
    %v556 = vpack.c.bf16 %v188, %v188
    %v557 = vpack.c.bf16 %v189, %v189
    %v558 = vpack.c.bf16 %v190, %v190
    %v559 = vpack.c.bf16 %v247, %v247
    %v560 = vpack.c.bf16 %v248, %v248
    %v561 = vpack.c.bf16 %v249, %v249
    %v562 = vpack.c.bf16 %v250, %v250
    %v563 = vpack.c.bf16 %v307, %v307
    %v564 = vpack.c.bf16 %v308, %v308
    %v565 = vpack.c.bf16 %v309, %v309
    %v566 = vpack.c.bf16 %v310, %v310
    %v567 = vpack.c.bf16 %v367, %v367
    %v568 = vpack.c.bf16 %v368, %v368
    %v569 = vpack.c.bf16 %v369, %v369
    %v570 = vpack.c.bf16 %v370, %v370
    %v571 = vpack.c.bf16 %v427, %v427
    %v572 = vpack.c.bf16 %v428, %v428
    %v573 = vpack.c.bf16 %v429, %v429
    %v574 = vpack.c.bf16 %v430, %v430
    %v575 = vpack.c.bf16 %v487, %v487
    %v576 = vpack.c.bf16 %v488, %v488
    %v577 = vpack.c.bf16 %v489, %v489
    %v578 = vpack.c.bf16 %v490, %v490
    %v579 = vpack.c.bf16 %v547, %v547
    %v580 = vpack.c.bf16 %v548, %v548
    %v581 = vpack.c.bf16 %v549, %v549
    %v582 = vpack.c.bf16 %v550, %v550
    %v583 = vld [vmem:[%s2] sm:$0xf]
    %v584 = vld [vmem:[%s2 + $0x4] sm:$0xf]
    %v585 = vld [vmem:[%s2 + $0x8] sm:$0xf]
    %v586 = vld [vmem:[%s2 + $0xc] sm:$0xf]
    %v587 = vld [vmem:[%s2 + $0x10] sm:$0xf]
    %v588 = vld [vmem:[%s2 + $0x14] sm:$0xf]
    %v589 = vld [vmem:[%s2 + $0x18] sm:$0xf]
    %v590 = vld [vmem:[%s2 + $0x1c] sm:$0xf]
    %v591 = vld [vmem:[%s3] sm:$0xff]
    %v592 = vld [vmem:[%s3 + $0x8] sm:$0xff]
    %v593 = vld [vmem:[%s3 + $0x10] sm:$0xff]
    %v594 = vld [vmem:[%s3 + $0x18] sm:$0xff]
    %v595 = vld [vmem:[%s3 + $0x20] sm:$0xff]
    %v596 = vld [vmem:[%s3 + $0x28] sm:$0xff]
    %v597 = vld [vmem:[%s3 + $0x30] sm:$0xff]
    %v598 = vld [vmem:[%s3 + $0x38] sm:$0xff]
    %600 = vset.pattern.permute.xlu0 0
    %601 = vperm.xlu0 %600, %v591
    %v602 = vpop.permute.xlu0 %601
    %605 = vset.pattern.permute.xlu0 0
    %606 = vperm.xlu0 %605, %v592
    %v607 = vpop.permute.xlu0 %606
    %610 = vset.pattern.permute.xlu0 0
    %611 = vperm.xlu0 %610, %v593
    %v612 = vpop.permute.xlu0 %611
    %615 = vset.pattern.permute.xlu0 0
    %616 = vperm.xlu0 %615, %v594
    %v617 = vpop.permute.xlu0 %616
    %620 = vset.pattern.permute.xlu0 0
    %621 = vperm.xlu0 %620, %v595
    %v622 = vpop.permute.xlu0 %621
    %625 = vset.pattern.permute.xlu0 0
    %626 = vperm.xlu0 %625, %v596
    %v627 = vpop.permute.xlu0 %626
    %630 = vset.pattern.permute.xlu0 0
    %631 = vperm.xlu0 %630, %v597
    %v632 = vpop.permute.xlu0 %631
    %635 = vset.pattern.permute.xlu0 0
    %636 = vperm.xlu0 %635, %v598
    %v637 = vpop.permute.xlu0 %636
    %v647 = vunpack.c.l.b16 %v583
    %v648 = vunpack.c.l.b16 %v584
    %v649 = vunpack.c.l.b16 %v585
    %v650 = vunpack.c.l.b16 %v586
    %v651 = vunpack.c.l.b16 %v587
    %v652 = vunpack.c.l.b16 %v588
    %v653 = vunpack.c.l.b16 %v589
    %v654 = vunpack.c.l.b16 %v590
    %v655 = vpack.c.b16 %v648, %v647
    %v656 = vpack.c.b16 %v650, %v649
    %v657 = vpack.c.b16 %v652, %v651
    %v658 = vpack.c.b16 %v654, %v653
    %vm659 = vcmask 64512
    %v661 = vsel %vm659, %v655, 0
    %v664 = vsel %vm659, %v656, 0
    %v667 = vsel %vm659, %v657, 0
    %v670 = vsel %vm659, %v658, 0
    %vm672 = vcmask 1043456
    %v674 = vsel %vm672, %v551, 0
    %v677 = vsel %vm672, %v552, 0
    %v680 = vsel %vm672, %v553, 0
    %v683 = vsel %vm672, %v554, 0
    %v686 = vsel %vm672, %v555, 0
    %v689 = vsel %vm672, %v556, 0
    %v692 = vsel %vm672, %v557, 0
    %v695 = vsel %vm672, %v558, 0
    %v698 = vsel %vm672, %v559, 0
    %v701 = vsel %vm672, %v560, 0
    %v704 = vsel %vm672, %v561, 0
    %v707 = vsel %vm672, %v562, 0
    %v710 = vsel %vm672, %v563, 0
    %v713 = vsel %vm672, %v564, 0
    %v716 = vsel %vm672, %v565, 0
    %v719 = vsel %vm672, %v566, 0
    %v722 = vsel %vm672, %v567, 0
    %v725 = vsel %vm672, %v568, 0
    %v728 = vsel %vm672, %v569, 0
    %v731 = vsel %vm672, %v570, 0
    %v734 = vsel %vm672, %v571, 0
    %v737 = vsel %vm672, %v572, 0
    %v740 = vsel %vm672, %v573, 0
    %v743 = vsel %vm672, %v574, 0
    %v746 = vsel %vm672, %v575, 0
    %v749 = vsel %vm672, %v576, 0
    %v752 = vsel %vm672, %v577, 0
    %v755 = vsel %vm672, %v578, 0
    %v758 = vsel %vm672, %v579, 0
    %v761 = vsel %vm672, %v580, 0
    %v764 = vsel %vm672, %v581, 0
    %v767 = vsel %vm672, %v582, 0
    %769 = vmatprep.subr.bf16.mxu0 %v677
    %770 = vmatpush1.bf16.msra.mxu0 %v674
    %771 = vmatprep.subr.bf16.mxu0 0
    %772 = vmatpush1.bf16.msra.mxu0 0
    %773 = vmatprep.subr.bf16.mxu0 0
    %774 = vmatpush1.bf16.msra.mxu0 0
    %775 = vmatprep.subr.bf16.mxu0 0
    %776 = vmatpush1.bf16.msra.mxu0 0
    %777 = vmatprep.subr.bf16.mxu0 0
    %778 = vmatpush1.bf16.msra.mxu0 0
    %779 = vmatprep.subr.bf16.mxu0 0
    %780 = vmatpush1.bf16.msra.mxu0 0
    %781 = vmatprep.subr.bf16.mxu0 0
    %782 = vmatpush1.bf16.msra.mxu0 0
    %783 = vmatprep.subr.bf16.mxu0 0
    %784 = vmatpush1.bf16.msra.mxu0 0
    %785 = vmatprep.subr.bf16.mxu0 0
    %786 = vmatpush1.bf16.msra.mxu0 0
    %787 = vmatprep.subr.bf16.mxu0 0
    %788 = vmatpush1.bf16.msra.mxu0 0
    %789 = vmatprep.subr.bf16.mxu0 0
    %790 = vmatpush1.bf16.msra.mxu0 0
    %791 = vmatprep.subr.bf16.mxu0 0
    %792 = vmatpush1.bf16.msra.mxu0 0
    %793 = vmatprep.subr.bf16.mxu0 0
    %794 = vmatpush1.bf16.msra.mxu0 0
    %795 = vmatprep.subr.bf16.mxu0 0
    %796 = vmatpush1.bf16.msra.mxu0 0
    %797 = vmatprep.subr.bf16.mxu0 0
    %798 = vmatpush1.bf16.msra.mxu0 0
    %799 = vmatprep.subr.bf16.mxu0 0
    %800 = vmatpush1.bf16.msra.mxu0 0
    %801 = vmatprep.mubr.bf16.mxu0 0
    %802 = vmatmul.mubr.bf16.gmra.mrb[0].mxu0 %v661
    %v803 = vpop.f32.mrb[0].mxu0
    %v804 = vadd.f32 %v602, %v803
    %v805 = vpop.f32.mrb[0].mxu0
    %v806 = vadd.f32 %v602, %v805
    %v807 = vpop.f32.mrb[0].mxu0
    %v808 = vadd.f32 %v607, %v807
    %v809 = vpop.f32.mrb[0].mxu0
    %v810 = vadd.f32 %v607, %v809
    %811 = vmatprep.mubr.bf16.mxu0 0
    %812 = vmatmul.mubr.bf16.gmra.mrb[0].mxu0 %v664
    %v813 = vpop.f32.mrb[0].mxu0
    %v814 = vadd.f32 %v612, %v813
    %v815 = vpop.f32.mrb[0].mxu0
    %v816 = vadd.f32 %v612, %v815
    %v817 = vpop.f32.mrb[0].mxu0
    %v818 = vadd.f32 %v617, %v817
    %v819 = vpop.f32.mrb[0].mxu0
    %v820 = vadd.f32 %v617, %v819
    %821 = vmatprep.mubr.bf16.mxu0 0
    %822 = vmatmul.mubr.bf16.gmra.mrb[0].mxu0 %v667
    %v823 = vpop.f32.mrb[0].mxu0
    %v824 = vadd.f32 %v622, %v823
    %v825 = vpop.f32.mrb[0].mxu0
    %v826 = vadd.f32 %v622, %v825
    %v827 = vpop.f32.mrb[0].mxu0
    %v828 = vadd.f32 %v627, %v827
    %v829 = vpop.f32.mrb[0].mxu0
    %v830 = vadd.f32 %v627, %v829
    %831 = vmatprep.mubr.bf16.mxu0 0
    %832 = vmatmul.mubr.bf16.gmra.mrb[0].mxu0 %v670
    %v833 = vpop.f32.mrb[0].mxu0
    %v834 = vadd.f32 %v632, %v833
    %v835 = vpop.f32.mrb[0].mxu0
    %v836 = vadd.f32 %v632, %v835
    %v837 = vpop.f32.mrb[0].mxu0
    %v838 = vadd.f32 %v637, %v837
    %v839 = vpop.f32.mrb[0].mxu0
    %v840 = vadd.f32 %v637, %v839
    %841 = vdwg.mxu0
    %842 = vmatprep.subr.bf16.mxu0 %v683
    %843 = vmatpush1.bf16.msra.mxu0 %v680
    %844 = vmatprep.subr.bf16.mxu0 0
    %845 = vmatpush1.bf16.msra.mxu0 0
    %846 = vmatprep.subr.bf16.mxu0 0
    %847 = vmatpush1.bf16.msra.mxu0 0
    %848 = vmatprep.subr.bf16.mxu0 0
    %849 = vmatpush1.bf16.msra.mxu0 0
    %850 = vmatprep.subr.bf16.mxu0 0
    %851 = vmatpush1.bf16.msra.mxu0 0
    %852 = vmatprep.subr.bf16.mxu0 0
    %853 = vmatpush1.bf16.msra.mxu0 0
    %854 = vmatprep.subr.bf16.mxu0 0
    %855 = vmatpush1.bf16.msra.mxu0 0
    %856 = vmatprep.subr.bf16.mxu0 0
    %857 = vmatpush1.bf16.msra.mxu0 0
    %858 = vmatprep.subr.bf16.mxu0 0
    %859 = vmatpush1.bf16.msra.mxu0 0
    %860 = vmatprep.subr.bf16.mxu0 0
    %861 = vmatpush1.bf16.msra.mxu0 0
    %862 = vmatprep.subr.bf16.mxu0 0
    %863 = vmatpush1.bf16.msra.mxu0 0
    %864 = vmatprep.subr.bf16.mxu0 0
    %865 = vmatpush1.bf16.msra.mxu0 0
    %866 = vmatprep.subr.bf16.mxu0 0
    %867 = vmatpush1.bf16.msra.mxu0 0
    %868 = vmatprep.subr.bf16.mxu0 0
    %869 = vmatpush1.bf16.msra.mxu0 0
    %870 = vmatprep.subr.bf16.mxu0 0
    %871 = vmatpush1.bf16.msra.mxu0 0
    %872 = vmatprep.subr.bf16.mxu0 0
    %873 = vmatpush1.bf16.msra.mxu0 0
    %874 = vmatprep.mubr.bf16.mxu0 0
    %875 = vmatmul.mubr.bf16.gmra.mrb[0].mxu0 %v661
    %v876 = vpop.f32.mrb[0].mxu0
    %v877 = vadd.f32 %v602, %v876
    %v878 = vpop.f32.mrb[0].mxu0
    %v879 = vadd.f32 %v602, %v878
    %v880 = vpop.f32.mrb[0].mxu0
    %v881 = vadd.f32 %v607, %v880
    %v882 = vpop.f32.mrb[0].mxu0
    %v883 = vadd.f32 %v607, %v882
    %884 = vmatprep.mubr.bf16.mxu0 0
    %885 = vmatmul.mubr.bf16.gmra.mrb[0].mxu0 %v664
    %v886 = vpop.f32.mrb[0].mxu0
    %v887 = vadd.f32 %v612, %v886
    %v888 = vpop.f32.mrb[0].mxu0
    %v889 = vadd.f32 %v612, %v888
    %v890 = vpop.f32.mrb[0].mxu0
    %v891 = vadd.f32 %v617, %v890
    %v892 = vpop.f32.mrb[0].mxu0
    %v893 = vadd.f32 %v617, %v892
    %894 = vmatprep.mubr.bf16.mxu0 0
    %895 = vmatmul.mubr.bf16.gmra.mrb[0].mxu0 %v667
    %v896 = vpop.f32.mrb[0].mxu0
    %v897 = vadd.f32 %v622, %v896
    %v898 = vpop.f32.mrb[0].mxu0
    %v899 = vadd.f32 %v622, %v898
    %v900 = vpop.f32.mrb[0].mxu0
    %v901 = vadd.f32 %v627, %v900
    %v902 = vpop.f32.mrb[0].mxu0
    %v903 = vadd.f32 %v627, %v902
    %904 = vmatprep.mubr.bf16.mxu0 0
    %905 = vmatmul.mubr.bf16.gmra.mrb[0].mxu0 %v670
    %v906 = vpop.f32.mrb[0].mxu0
    %v907 = vadd.f32 %v632, %v906
    %v908 = vpop.f32.mrb[0].mxu0
    %v909 = vadd.f32 %v632, %v908
    %v910 = vpop.f32.mrb[0].mxu0
    %v911 = vadd.f32 %v637, %v910
    %v912 = vpop.f32.mrb[0].mxu0
    %v913 = vadd.f32 %v637, %v912
    %914 = vdwg.mxu0
    %915 = vmatprep.subr.bf16.mxu0 %v689
    %916 = vmatpush1.bf16.msra.mxu0 %v686
    %917 = vmatprep.subr.bf16.mxu0 0
    %918 = vmatpush1.bf16.msra.mxu0 0
    %919 = vmatprep.subr.bf16.mxu0 0
    %920 = vmatpush1.bf16.msra.mxu0 0
    %921 = vmatprep.subr.bf16.mxu0 0
    %922 = vmatpush1.bf16.msra.mxu0 0
    %923 = vmatprep.subr.bf16.mxu0 0
    %924 = vmatpush1.bf16.msra.mxu0 0
    %925 = vmatprep.subr.bf16.mxu0 0
    %926 = vmatpush1.bf16.msra.mxu0 0
    %927 = vmatprep.subr.bf16.mxu0 0
    %928 = vmatpush1.bf16.msra.mxu0 0
    %929 = vmatprep.subr.bf16.mxu0 0
    %930 = vmatpush1.bf16.msra.mxu0 0
    %931 = vmatprep.subr.bf16.mxu0 0
    %932 = vmatpush1.bf16.msra.mxu0 0
    %933 = vmatprep.subr.bf16.mxu0 0
    %934 = vmatpush1.bf16.msra.mxu0 0
    %935 = vmatprep.subr.bf16.mxu0 0
    %936 = vmatpush1.bf16.msra.mxu0 0
    %937 = vmatprep.subr.bf16.mxu0 0
    %938 = vmatpush1.bf16.msra.mxu0 0
    %939 = vmatprep.subr.bf16.mxu0 0
    %940 = vmatpush1.bf16.msra.mxu0 0
    %941 = vmatprep.subr.bf16.mxu0 0
    %942 = vmatpush1.bf16.msra.mxu0 0
    %943 = vmatprep.subr.bf16.mxu0 0
    %944 = vmatpush1.bf16.msra.mxu0 0
    %945 = vmatprep.subr.bf16.mxu0 0
    %946 = vmatpush1.bf16.msra.mxu0 0
    %947 = vmatprep.mubr.bf16.mxu0 0
    %948 = vmatmul.mubr.bf16.gmra.mrb[0].mxu0 %v661
    %v949 = vpop.f32.mrb[0].mxu0
    %v950 = vadd.f32 %v602, %v949
    %v951 = vpop.f32.mrb[0].mxu0
    %v952 = vadd.f32 %v602, %v951
    %v953 = vpop.f32.mrb[0].mxu0
    %v954 = vadd.f32 %v607, %v953
    %v955 = vpop.f32.mrb[0].mxu0
    %v956 = vadd.f32 %v607, %v955
    %957 = vmatprep.mubr.bf16.mxu0 0
    %958 = vmatmul.mubr.bf16.gmra.mrb[0].mxu0 %v664
    %v959 = vpop.f32.mrb[0].mxu0
    %v960 = vadd.f32 %v612, %v959
    %v961 = vpop.f32.mrb[0].mxu0
    %v962 = vadd.f32 %v612, %v961
    %v963 = vpop.f32.mrb[0].mxu0
    %v964 = vadd.f32 %v617, %v963
    %v965 = vpop.f32.mrb[0].mxu0
    %v966 = vadd.f32 %v617, %v965
    %967 = vmatprep.mubr.bf16.mxu0 0
    %968 = vmatmul.mubr.bf16.gmra.mrb[0].mxu0 %v667
    %v969 = vpop.f32.mrb[0].mxu0
    %v970 = vadd.f32 %v622, %v969
    %v971 = vpop.f32.mrb[0].mxu0
    %v972 = vadd.f32 %v622, %v971
    %v973 = vpop.f32.mrb[0].mxu0
    %v974 = vadd.f32 %v627, %v973
    %v975 = vpop.f32.mrb[0].mxu0
    %v976 = vadd.f32 %v627, %v975
    %977 = vmatprep.mubr.bf16.mxu0 0
    %978 = vmatmul.mubr.bf16.gmra.mrb[0].mxu0 %v670
    %v979 = vpop.f32.mrb[0].mxu0
    %v980 = vadd.f32 %v632, %v979
    %v981 = vpop.f32.mrb[0].mxu0
    %v982 = vadd.f32 %v632, %v981
    %v983 = vpop.f32.mrb[0].mxu0
    %v984 = vadd.f32 %v637, %v983
    %v985 = vpop.f32.mrb[0].mxu0
    %v986 = vadd.f32 %v637, %v985
    %987 = vdwg.mxu0
    %988 = vmatprep.subr.bf16.mxu0 %v695
    %989 = vmatpush1.bf16.msra.mxu0 %v692
    %990 = vmatprep.subr.bf16.mxu0 0
    %991 = vmatpush1.bf16.msra.mxu0 0
    %992 = vmatprep.subr.bf16.mxu0 0
    %993 = vmatpush1.bf16.msra.mxu0 0
    %994 = vmatprep.subr.bf16.mxu0 0
    %995 = vmatpush1.bf16.msra.mxu0 0
    %996 = vmatprep.subr.bf16.mxu0 0
    %997 = vmatpush1.bf16.msra.mxu0 0
    %998 = vmatprep.subr.bf16.mxu0 0
    %999 = vmatpush1.bf16.msra.mxu0 0
    %1000 = vmatprep.subr.bf16.mxu0 0
    %1001 = vmatpush1.bf16.msra.mxu0 0
    %1002 = vmatprep.subr.bf16.mxu0 0
    %1003 = vmatpush1.bf16.msra.mxu0 0
    %1004 = vmatprep.subr.bf16.mxu0 0
    %1005 = vmatpush1.bf16.msra.mxu0 0
    %1006 = vmatprep.subr.bf16.mxu0 0
    %1007 = vmatpush1.bf16.msra.mxu0 0
    %1008 = vmatprep.subr.bf16.mxu0 0
    %1009 = vmatpush1.bf16.msra.mxu0 0
    %1010 = vmatprep.subr.bf16.mxu0 0
    %1011 = vmatpush1.bf16.msra.mxu0 0
    %1012 = vmatprep.subr.bf16.mxu0 0
    %1013 = vmatpush1.bf16.msra.mxu0 0
    %1014 = vmatprep.subr.bf16.mxu0 0
    %1015 = vmatpush1.bf16.msra.mxu0 0
    %1016 = vmatprep.subr.bf16.mxu0 0
    %1017 = vmatpush1.bf16.msra.mxu0 0
    %1018 = vmatprep.subr.bf16.mxu0 0
    %1019 = vmatpush1.bf16.msra.mxu0 0
    %1020 = vmatprep.mubr.bf16.mxu0 0
    %1021 = vmatmul.mubr.bf16.gmra.mrb[0].mxu0 %v661
    %v1022 = vpop.f32.mrb[0].mxu0
    %v1023 = vadd.f32 %v602, %v1022
    %v1024 = vpop.f32.mrb[0].mxu0
    %v1025 = vadd.f32 %v602, %v1024
    %v1026 = vpop.f32.mrb[0].mxu0
    %v1027 = vadd.f32 %v607, %v1026
    %v1028 = vpop.f32.mrb[0].mxu0
    %v1029 = vadd.f32 %v607, %v1028
    %1030 = vmatprep.mubr.bf16.mxu0 0
    %1031 = vmatmul.mubr.bf16.gmra.mrb[0].mxu0 %v664
    %v1032 = vpop.f32.mrb[0].mxu0
    %v1033 = vadd.f32 %v612, %v1032
    %v1034 = vpop.f32.mrb[0].mxu0
    %v1035 = vadd.f32 %v612, %v1034
    %v1036 = vpop.f32.mrb[0].mxu0
    %v1037 = vadd.f32 %v617, %v1036
    %v1038 = vpop.f32.mrb[0].mxu0
    %v1039 = vadd.f32 %v617, %v1038
    %1040 = vmatprep.mubr.bf16.mxu0 0
    %1041 = vmatmul.mubr.bf16.gmra.mrb[0].mxu0 %v667
    %v1042 = vpop.f32.mrb[0].mxu0
    %v1043 = vadd.f32 %v622, %v1042
    %v1044 = vpop.f32.mrb[0].mxu0
    %v1045 = vadd.f32 %v622, %v1044
    %v1046 = vpop.f32.mrb[0].mxu0
    %v1047 = vadd.f32 %v627, %v1046
    %v1048 = vpop.f32.mrb[0].mxu0
    %v1049 = vadd.f32 %v627, %v1048
    %1050 = vmatprep.mubr.bf16.mxu0 0
    %1051 = vmatmul.mubr.bf16.gmra.mrb[0].mxu0 %v670
    %v1052 = vpop.f32.mrb[0].mxu0
    %v1053 = vadd.f32 %v632, %v1052
    %v1054 = vpop.f32.mrb[0].mxu0
    %v1055 = vadd.f32 %v632, %v1054
    %v1056 = vpop.f32.mrb[0].mxu0
    %v1057 = vadd.f32 %v637, %v1056
    %v1058 = vpop.f32.mrb[0].mxu0
    %v1059 = vadd.f32 %v637, %v1058
    %1060 = vdwg.mxu0
    %1061 = vmatprep.subr.bf16.mxu0 %v701
    %1062 = vmatpush1.bf16.msra.mxu0 %v698
    %1063 = vmatprep.subr.bf16.mxu0 0
    %1064 = vmatpush1.bf16.msra.mxu0 0
    %1065 = vmatprep.subr.bf16.mxu0 0
    %1066 = vmatpush1.bf16.msra.mxu0 0
    %1067 = vmatprep.subr.bf16.mxu0 0
    %1068 = vmatpush1.bf16.msra.mxu0 0
    %1069 = vmatprep.subr.bf16.mxu0 0
    %1070 = vmatpush1.bf16.msra.mxu0 0
    %1071 = vmatprep.subr.bf16.mxu0 0
    %1072 = vmatpush1.bf16.msra.mxu0 0
    %1073 = vmatprep.subr.bf16.mxu0 0
    %1074 = vmatpush1.bf16.msra.mxu0 0
    %1075 = vmatprep.subr.bf16.mxu0 0
    %1076 = vmatpush1.bf16.msra.mxu0 0
    %1077 = vmatprep.subr.bf16.mxu0 0
    %1078 = vmatpush1.bf16.msra.mxu0 0
    %1079 = vmatprep.subr.bf16.mxu0 0
    %1080 = vmatpush1.bf16.msra.mxu0 0
    %1081 = vmatprep.subr.bf16.mxu0 0
    %1082 = vmatpush1.bf16.msra.mxu0 0
    %1083 = vmatprep.subr.bf16.mxu0 0
    %1084 = vmatpush1.bf16.msra.mxu0 0
    %1085 = vmatprep.subr.bf16.mxu0 0
    %1086 = vmatpush1.bf16.msra.mxu0 0
    %1087 = vmatprep.subr.bf16.mxu0 0
    %1088 = vmatpush1.bf16.msra.mxu0 0
    %1089 = vmatprep.subr.bf16.mxu0 0
    %1090 = vmatpush1.bf16.msra.mxu0 0
    %1091 = vmatprep.subr.bf16.mxu0 0
    %1092 = vmatpush1.bf16.msra.mxu0 0
    %1093 = vmatprep.mubr.bf16.mxu0 0
    %1094 = vmatmul.mubr.bf16.gmra.mrb[0].mxu0 %v661
    %v1095 = vpop.f32.mrb[0].mxu0
    %v1096 = vadd.f32 %v602, %v1095
    %v1097 = vpop.f32.mrb[0].mxu0
    %v1098 = vadd.f32 %v602, %v1097
    %v1099 = vpop.f32.mrb[0].mxu0
    %v1100 = vadd.f32 %v607, %v1099
    %v1101 = vpop.f32.mrb[0].mxu0
    %v1102 = vadd.f32 %v607, %v1101
    %1103 = vmatprep.mubr.bf16.mxu0 0
    %1104 = vmatmul.mubr.bf16.gmra.mrb[0].mxu0 %v664
    %v1105 = vpop.f32.mrb[0].mxu0
    %v1106 = vadd.f32 %v612, %v1105
    %v1107 = vpop.f32.mrb[0].mxu0
    %v1108 = vadd.f32 %v612, %v1107
    %v1109 = vpop.f32.mrb[0].mxu0
    %v1110 = vadd.f32 %v617, %v1109
    %v1111 = vpop.f32.mrb[0].mxu0
    %v1112 = vadd.f32 %v617, %v1111
    %1113 = vmatprep.mubr.bf16.mxu0 0
    %1114 = vmatmul.mubr.bf16.gmra.mrb[0].mxu0 %v667
    %v1115 = vpop.f32.mrb[0].mxu0
    %v1116 = vadd.f32 %v622, %v1115
    %v1117 = vpop.f32.mrb[0].mxu0
    %v1118 = vadd.f32 %v622, %v1117
    %v1119 = vpop.f32.mrb[0].mxu0
    %v1120 = vadd.f32 %v627, %v1119
    %v1121 = vpop.f32.mrb[0].mxu0
    %v1122 = vadd.f32 %v627, %v1121
    %1123 = vmatprep.mubr.bf16.mxu0 0
    %1124 = vmatmul.mubr.bf16.gmra.mrb[0].mxu0 %v670
    %v1125 = vpop.f32.mrb[0].mxu0
    %v1126 = vadd.f32 %v632, %v1125
    %v1127 = vpop.f32.mrb[0].mxu0
    %v1128 = vadd.f32 %v632, %v1127
    %v1129 = vpop.f32.mrb[0].mxu0
    %v1130 = vadd.f32 %v637, %v1129
    %v1131 = vpop.f32.mrb[0].mxu0
    %v1132 = vadd.f32 %v637, %v1131
    %1133 = vdwg.mxu0
    %1134 = vmatprep.subr.bf16.mxu0 %v707
    %1135 = vmatpush1.bf16.msra.mxu0 %v704
    %1136 = vmatprep.subr.bf16.mxu0 0
    %1137 = vmatpush1.bf16.msra.mxu0 0
    %1138 = vmatprep.subr.bf16.mxu0 0
    %1139 = vmatpush1.bf16.msra.mxu0 0
    %1140 = vmatprep.subr.bf16.mxu0 0
    %1141 = vmatpush1.bf16.msra.mxu0 0
    %1142 = vmatprep.subr.bf16.mxu0 0
    %1143 = vmatpush1.bf16.msra.mxu0 0
    %1144 = vmatprep.subr.bf16.mxu0 0
    %1145 = vmatpush1.bf16.msra.mxu0 0
    %1146 = vmatprep.subr.bf16.mxu0 0
    %1147 = vmatpush1.bf16.msra.mxu0 0
    %1148 = vmatprep.subr.bf16.mxu0 0
    %1149 = vmatpush1.bf16.msra.mxu0 0
    %1150 = vmatprep.subr.bf16.mxu0 0
    %1151 = vmatpush1.bf16.msra.mxu0 0
    %1152 = vmatprep.subr.bf16.mxu0 0
    %1153 = vmatpush1.bf16.msra.mxu0 0
    %1154 = vmatprep.subr.bf16.mxu0 0
    %1155 = vmatpush1.bf16.msra.mxu0 0
    %1156 = vmatprep.subr.bf16.mxu0 0
    %1157 = vmatpush1.bf16.msra.mxu0 0
    %1158 = vmatprep.subr.bf16.mxu0 0
    %1159 = vmatpush1.bf16.msra.mxu0 0
    %1160 = vmatprep.subr.bf16.mxu0 0
    %1161 = vmatpush1.bf16.msra.mxu0 0
    %1162 = vmatprep.subr.bf16.mxu0 0
    %1163 = vmatpush1.bf16.msra.mxu0 0
    %1164 = vmatprep.subr.bf16.mxu0 0
    %1165 = vmatpush1.bf16.msra.mxu0 0
    %1166 = vmatprep.mubr.bf16.mxu0 0
    %1167 = vmatmul.mubr.bf16.gmra.mrb[0].mxu0 %v661
    %v1168 = vpop.f32.mrb[0].mxu0
    %v1169 = vadd.f32 %v602, %v1168
    %v1170 = vpop.f32.mrb[0].mxu0
    %v1171 = vadd.f32 %v602, %v1170
    %v1172 = vpop.f32.mrb[0].mxu0
    %v1173 = vadd.f32 %v607, %v1172
    %v1174 = vpop.f32.mrb[0].mxu0
    %v1175 = vadd.f32 %v607, %v1174
    %1176 = vmatprep.mubr.bf16.mxu0 0
    %1177 = vmatmul.mubr.bf16.gmra.mrb[0].mxu0 %v664
    %v1178 = vpop.f32.mrb[0].mxu0
    %v1179 = vadd.f32 %v612, %v1178
    %v1180 = vpop.f32.mrb[0].mxu0
    %v1181 = vadd.f32 %v612, %v1180
    %v1182 = vpop.f32.mrb[0].mxu0
    %v1183 = vadd.f32 %v617, %v1182
    %v1184 = vpop.f32.mrb[0].mxu0
    %v1185 = vadd.f32 %v617, %v1184
    %1186 = vmatprep.mubr.bf16.mxu0 0
    %1187 = vmatmul.mubr.bf16.gmra.mrb[0].mxu0 %v667
    %v1188 = vpop.f32.mrb[0].mxu0
    %v1189 = vadd.f32 %v622, %v1188
    %v1190 = vpop.f32.mrb[0].mxu0
    %v1191 = vadd.f32 %v622, %v1190
    %v1192 = vpop.f32.mrb[0].mxu0
    %v1193 = vadd.f32 %v627, %v1192
    %v1194 = vpop.f32.mrb[0].mxu0
    %v1195 = vadd.f32 %v627, %v1194
    %1196 = vmatprep.mubr.bf16.mxu0 0
    %1197 = vmatmul.mubr.bf16.gmra.mrb[0].mxu0 %v670
    %v1198 = vpop.f32.mrb[0].mxu0
    %v1199 = vadd.f32 %v632, %v1198
    %v1200 = vpop.f32.mrb[0].mxu0
    %v1201 = vadd.f32 %v632, %v1200
    %v1202 = vpop.f32.mrb[0].mxu0
    %v1203 = vadd.f32 %v637, %v1202
    %v1204 = vpop.f32.mrb[0].mxu0
    %v1205 = vadd.f32 %v637, %v1204
    %1206 = vdwg.mxu0
    %1207 = vmatprep.subr.bf16.mxu0 %v713
    %1208 = vmatpush1.bf16.msra.mxu0 %v710
    %1209 = vmatprep.subr.bf16.mxu0 0
    %1210 = vmatpush1.bf16.msra.mxu0 0
    %1211 = vmatprep.subr.bf16.mxu0 0
    %1212 = vmatpush1.bf16.msra.mxu0 0
    %1213 = vmatprep.subr.bf16.mxu0 0
    %1214 = vmatpush1.bf16.msra.mxu0 0
    %1215 = vmatprep.subr.bf16.mxu0 0
    %1216 = vmatpush1.bf16.msra.mxu0 0
    %1217 = vmatprep.subr.bf16.mxu0 0
    %1218 = vmatpush1.bf16.msra.mxu0 0
    %1219 = vmatprep.subr.bf16.mxu0 0
    %1220 = vmatpush1.bf16.msra.mxu0 0
    %1221 = vmatprep.subr.bf16.mxu0 0
    %1222 = vmatpush1.bf16.msra.mxu0 0
    %1223 = vmatprep.subr.bf16.mxu0 0
    %1224 = vmatpush1.bf16.msra.mxu0 0
    %1225 = vmatprep.subr.bf16.mxu0 0
    %1226 = vmatpush1.bf16.msra.mxu0 0
    %1227 = vmatprep.subr.bf16.mxu0 0
    %1228 = vmatpush1.bf16.msra.mxu0 0
    %1229 = vmatprep.subr.bf16.mxu0 0
    %1230 = vmatpush1.bf16.msra.mxu0 0
    %1231 = vmatprep.subr.bf16.mxu0 0
    %1232 = vmatpush1.bf16.msra.mxu0 0
    %1233 = vmatprep.subr.bf16.mxu0 0
    %1234 = vmatpush1.bf16.msra.mxu0 0
    %1235 = vmatprep.subr.bf16.mxu0 0
    %1236 = vmatpush1.bf16.msra.mxu0 0
    %1237 = vmatprep.subr.bf16.mxu0 0
    %1238 = vmatpush1.bf16.msra.mxu0 0
    %1239 = vmatprep.mubr.bf16.mxu0 0
    %1240 = vmatmul.mubr.bf16.gmra.mrb[0].mxu0 %v661
    %v1241 = vpop.f32.mrb[0].mxu0
    %v1242 = vadd.f32 %v602, %v1241
    %v1243 = vpop.f32.mrb[0].mxu0
    %v1244 = vadd.f32 %v602, %v1243
    %v1245 = vpop.f32.mrb[0].mxu0
    %v1246 = vadd.f32 %v607, %v1245
    %v1247 = vpop.f32.mrb[0].mxu0
    %v1248 = vadd.f32 %v607, %v1247
    %1249 = vmatprep.mubr.bf16.mxu0 0
    %1250 = vmatmul.mubr.bf16.gmra.mrb[0].mxu0 %v664
    %v1251 = vpop.f32.mrb[0].mxu0
    %v1252 = vadd.f32 %v612, %v1251
    %v1253 = vpop.f32.mrb[0].mxu0
    %v1254 = vadd.f32 %v612, %v1253
    %v1255 = vpop.f32.mrb[0].mxu0
    %v1256 = vadd.f32 %v617, %v1255
    %v1257 = vpop.f32.mrb[0].mxu0
    %v1258 = vadd.f32 %v617, %v1257
    %1259 = vmatprep.mubr.bf16.mxu0 0
    %1260 = vmatmul.mubr.bf16.gmra.mrb[0].mxu0 %v667
    %v1261 = vpop.f32.mrb[0].mxu0
    %v1262 = vadd.f32 %v622, %v1261
    %v1263 = vpop.f32.mrb[0].mxu0
    %v1264 = vadd.f32 %v622, %v1263
    %v1265 = vpop.f32.mrb[0].mxu0
    %v1266 = vadd.f32 %v627, %v1265
    %v1267 = vpop.f32.mrb[0].mxu0
    %v1268 = vadd.f32 %v627, %v1267
    %1269 = vmatprep.mubr.bf16.mxu0 0
    %1270 = vmatmul.mubr.bf16.gmra.mrb[0].mxu0 %v670
    %v1271 = vpop.f32.mrb[0].mxu0
    %v1272 = vadd.f32 %v632, %v1271
    %v1273 = vpop.f32.mrb[0].mxu0
    %v1274 = vadd.f32 %v632, %v1273
    %v1275 = vpop.f32.mrb[0].mxu0
    %v1276 = vadd.f32 %v637, %v1275
    %v1277 = vpop.f32.mrb[0].mxu0
    %v1278 = vadd.f32 %v637, %v1277
    %1279 = vdwg.mxu0
    %1280 = vmatprep.subr.bf16.mxu0 %v719
    %1281 = vmatpush1.bf16.msra.mxu0 %v716
    %1282 = vmatprep.subr.bf16.mxu0 0
    %1283 = vmatpush1.bf16.msra.mxu0 0
    %1284 = vmatprep.subr.bf16.mxu0 0
    %1285 = vmatpush1.bf16.msra.mxu0 0
    %1286 = vmatprep.subr.bf16.mxu0 0
    %1287 = vmatpush1.bf16.msra.mxu0 0
    %1288 = vmatprep.subr.bf16.mxu0 0
    %1289 = vmatpush1.bf16.msra.mxu0 0
    %1290 = vmatprep.subr.bf16.mxu0 0
    %1291 = vmatpush1.bf16.msra.mxu0 0
    %1292 = vmatprep.subr.bf16.mxu0 0
    %1293 = vmatpush1.bf16.msra.mxu0 0
    %1294 = vmatprep.subr.bf16.mxu0 0
    %1295 = vmatpush1.bf16.msra.mxu0 0
    %1296 = vmatprep.subr.bf16.mxu0 0
    %1297 = vmatpush1.bf16.msra.mxu0 0
    %1298 = vmatprep.subr.bf16.mxu0 0
    %1299 = vmatpush1.bf16.msra.mxu0 0
    %1300 = vmatprep.subr.bf16.mxu0 0
    %1301 = vmatpush1.bf16.msra.mxu0 0
    %1302 = vmatprep.subr.bf16.mxu0 0
    %1303 = vmatpush1.bf16.msra.mxu0 0
    %1304 = vmatprep.subr.bf16.mxu0 0
    %1305 = vmatpush1.bf16.msra.mxu0 0
    %1306 = vmatprep.subr.bf16.mxu0 0
    %1307 = vmatpush1.bf16.msra.mxu0 0
    %1308 = vmatprep.subr.bf16.mxu0 0
    %1309 = vmatpush1.bf16.msra.mxu0 0
    %1310 = vmatprep.subr.bf16.mxu0 0
    %1311 = vmatpush1.bf16.msra.mxu0 0
    %1312 = vmatprep.mubr.bf16.mxu0 0
    %1313 = vmatmul.mubr.bf16.gmra.mrb[0].mxu0 %v661
    %v1314 = vpop.f32.mrb[0].mxu0
    %v1315 = vadd.f32 %v602, %v1314
    %v1316 = vpop.f32.mrb[0].mxu0
    %v1317 = vadd.f32 %v602, %v1316
    %v1318 = vpop.f32.mrb[0].mxu0
    %v1319 = vadd.f32 %v607, %v1318
    %v1320 = vpop.f32.mrb[0].mxu0
    %v1321 = vadd.f32 %v607, %v1320
    %1322 = vmatprep.mubr.bf16.mxu0 0
    %1323 = vmatmul.mubr.bf16.gmra.mrb[0].mxu0 %v664
    %v1324 = vpop.f32.mrb[0].mxu0
    %v1325 = vadd.f32 %v612, %v1324
    %v1326 = vpop.f32.mrb[0].mxu0
    %v1327 = vadd.f32 %v612, %v1326
    %v1328 = vpop.f32.mrb[0].mxu0
    %v1329 = vadd.f32 %v617, %v1328
    %v1330 = vpop.f32.mrb[0].mxu0
    %v1331 = vadd.f32 %v617, %v1330
    %1332 = vmatprep.mubr.bf16.mxu0 0
    %1333 = vmatmul.mubr.bf16.gmra.mrb[0].mxu0 %v667
    %v1334 = vpop.f32.mrb[0].mxu0
    %v1335 = vadd.f32 %v622, %v1334
    %v1336 = vpop.f32.mrb[0].mxu0
    %v1337 = vadd.f32 %v622, %v1336
    %v1338 = vpop.f32.mrb[0].mxu0
    %v1339 = vadd.f32 %v627, %v1338
    %v1340 = vpop.f32.mrb[0].mxu0
    %v1341 = vadd.f32 %v627, %v1340
    %1342 = vmatprep.mubr.bf16.mxu0 0
    %1343 = vmatmul.mubr.bf16.gmra.mrb[0].mxu0 %v670
    %v1344 = vpop.f32.mrb[0].mxu0
    %v1345 = vadd.f32 %v632, %v1344
    %v1346 = vpop.f32.mrb[0].mxu0
    %v1347 = vadd.f32 %v632, %v1346
    %v1348 = vpop.f32.mrb[0].mxu0
    %v1349 = vadd.f32 %v637, %v1348
    %v1350 = vpop.f32.mrb[0].mxu0
    %v1351 = vadd.f32 %v637, %v1350
    %1352 = vdwg.mxu0
    %1353 = vmatprep.subr.bf16.mxu0 %v725
    %1354 = vmatpush1.bf16.msra.mxu0 %v722
    %1355 = vmatprep.subr.bf16.mxu0 0
    %1356 = vmatpush1.bf16.msra.mxu0 0
    %1357 = vmatprep.subr.bf16.mxu0 0
    %1358 = vmatpush1.bf16.msra.mxu0 0
    %1359 = vmatprep.subr.bf16.mxu0 0
    %1360 = vmatpush1.bf16.msra.mxu0 0
    %1361 = vmatprep.subr.bf16.mxu0 0
    %1362 = vmatpush1.bf16.msra.mxu0 0
    %1363 = vmatprep.subr.bf16.mxu0 0
    %1364 = vmatpush1.bf16.msra.mxu0 0
    %1365 = vmatprep.subr.bf16.mxu0 0
    %1366 = vmatpush1.bf16.msra.mxu0 0
    %1367 = vmatprep.subr.bf16.mxu0 0
    %1368 = vmatpush1.bf16.msra.mxu0 0
    %1369 = vmatprep.subr.bf16.mxu0 0
    %1370 = vmatpush1.bf16.msra.mxu0 0
    %1371 = vmatprep.subr.bf16.mxu0 0
    %1372 = vmatpush1.bf16.msra.mxu0 0
    %1373 = vmatprep.subr.bf16.mxu0 0
    %1374 = vmatpush1.bf16.msra.mxu0 0
    %1375 = vmatprep.subr.bf16.mxu0 0
    %1376 = vmatpush1.bf16.msra.mxu0 0
    %1377 = vmatprep.subr.bf16.mxu0 0
    %1378 = vmatpush1.bf16.msra.mxu0 0
    %1379 = vmatprep.subr.bf16.mxu0 0
    %1380 = vmatpush1.bf16.msra.mxu0 0
    %1381 = vmatprep.subr.bf16.mxu0 0
    %1382 = vmatpush1.bf16.msra.mxu0 0
    %1383 = vmatprep.subr.bf16.mxu0 0
    %1384 = vmatpush1.bf16.msra.mxu0 0
    %1385 = vmatprep.mubr.bf16.mxu0 0
    %1386 = vmatmul.mubr.bf16.gmra.mrb[0].mxu0 %v661
    %v1387 = vpop.f32.mrb[0].mxu0
    %v1388 = vadd.f32 %v602, %v1387
    %v1389 = vpop.f32.mrb[0].mxu0
    %v1390 = vadd.f32 %v602, %v1389
    %v1391 = vpop.f32.mrb[0].mxu0
    %v1392 = vadd.f32 %v607, %v1391
    %v1393 = vpop.f32.mrb[0].mxu0
    %v1394 = vadd.f32 %v607, %v1393
    %1395 = vmatprep.mubr.bf16.mxu0 0
    %1396 = vmatmul.mubr.bf16.gmra.mrb[0].mxu0 %v664
    %v1397 = vpop.f32.mrb[0].mxu0
    %v1398 = vadd.f32 %v612, %v1397
    %v1399 = vpop.f32.mrb[0].mxu0
    %v1400 = vadd.f32 %v612, %v1399
    %v1401 = vpop.f32.mrb[0].mxu0
    %v1402 = vadd.f32 %v617, %v1401
    %v1403 = vpop.f32.mrb[0].mxu0
    %v1404 = vadd.f32 %v617, %v1403
    %1405 = vmatprep.mubr.bf16.mxu0 0
    %1406 = vmatmul.mubr.bf16.gmra.mrb[0].mxu0 %v667
    %v1407 = vpop.f32.mrb[0].mxu0
    %v1408 = vadd.f32 %v622, %v1407
    %v1409 = vpop.f32.mrb[0].mxu0
    %v1410 = vadd.f32 %v622, %v1409
    %v1411 = vpop.f32.mrb[0].mxu0
    %v1412 = vadd.f32 %v627, %v1411
    %v1413 = vpop.f32.mrb[0].mxu0
    %v1414 = vadd.f32 %v627, %v1413
    %1415 = vmatprep.mubr.bf16.mxu0 0
    %1416 = vmatmul.mubr.bf16.gmra.mrb[0].mxu0 %v670
    %v1417 = vpop.f32.mrb[0].mxu0
    %v1418 = vadd.f32 %v632, %v1417
    %v1419 = vpop.f32.mrb[0].mxu0
    %v1420 = vadd.f32 %v632, %v1419
    %v1421 = vpop.f32.mrb[0].mxu0
    %v1422 = vadd.f32 %v637, %v1421
    %v1423 = vpop.f32.mrb[0].mxu0
    %v1424 = vadd.f32 %v637, %v1423
    %1425 = vdwg.mxu0
    %1426 = vmatprep.subr.bf16.mxu0 %v731
    %1427 = vmatpush1.bf16.msra.mxu0 %v728
    %1428 = vmatprep.subr.bf16.mxu0 0
    %1429 = vmatpush1.bf16.msra.mxu0 0
    %1430 = vmatprep.subr.bf16.mxu0 0
    %1431 = vmatpush1.bf16.msra.mxu0 0
    %1432 = vmatprep.subr.bf16.mxu0 0
    %1433 = vmatpush1.bf16.msra.mxu0 0
    %1434 = vmatprep.subr.bf16.mxu0 0
    %1435 = vmatpush1.bf16.msra.mxu0 0
    %1436 = vmatprep.subr.bf16.mxu0 0
    %1437 = vmatpush1.bf16.msra.mxu0 0
    %1438 = vmatprep.subr.bf16.mxu0 0
    %1439 = vmatpush1.bf16.msra.mxu0 0
    %1440 = vmatprep.subr.bf16.mxu0 0
    %1441 = vmatpush1.bf16.msra.mxu0 0
    %1442 = vmatprep.subr.bf16.mxu0 0
    %1443 = vmatpush1.bf16.msra.mxu0 0
    %1444 = vmatprep.subr.bf16.mxu0 0
    %1445 = vmatpush1.bf16.msra.mxu0 0
    %1446 = vmatprep.subr.bf16.mxu0 0
    %1447 = vmatpush1.bf16.msra.mxu0 0
    %1448 = vmatprep.subr.bf16.mxu0 0
    %1449 = vmatpush1.bf16.msra.mxu0 0
    %1450 = vmatprep.subr.bf16.mxu0 0
    %1451 = vmatpush1.bf16.msra.mxu0 0
    %1452 = vmatprep.subr.bf16.mxu0 0
    %1453 = vmatpush1.bf16.msra.mxu0 0
    %1454 = vmatprep.subr.bf16.mxu0 0
    %1455 = vmatpush1.bf16.msra.mxu0 0
    %1456 = vmatprep.subr.bf16.mxu0 0
    %1457 = vmatpush1.bf16.msra.mxu0 0
    %1458 = vmatprep.mubr.bf16.mxu0 0
    %1459 = vmatmul.mubr.bf16.gmra.mrb[0].mxu0 %v661
    %v1460 = vpop.f32.mrb[0].mxu0
    %v1461 = vadd.f32 %v602, %v1460
    %v1462 = vpop.f32.mrb[0].mxu0
    %v1463 = vadd.f32 %v602, %v1462
    %v1464 = vpop.f32.mrb[0].mxu0
    %v1465 = vadd.f32 %v607, %v1464
    %v1466 = vpop.f32.mrb[0].mxu0
    %v1467 = vadd.f32 %v607, %v1466
    %1468 = vmatprep.mubr.bf16.mxu0 0
    %1469 = vmatmul.mubr.bf16.gmra.mrb[0].mxu0 %v664
    %v1470 = vpop.f32.mrb[0].mxu0
    %v1471 = vadd.f32 %v612, %v1470
    %v1472 = vpop.f32.mrb[0].mxu0
    %v1473 = vadd.f32 %v612, %v1472
    %v1474 = vpop.f32.mrb[0].mxu0
    %v1475 = vadd.f32 %v617, %v1474
    %v1476 = vpop.f32.mrb[0].mxu0
    %v1477 = vadd.f32 %v617, %v1476
    %1478 = vmatprep.mubr.bf16.mxu0 0
    %1479 = vmatmul.mubr.bf16.gmra.mrb[0].mxu0 %v667
    %v1480 = vpop.f32.mrb[0].mxu0
    %v1481 = vadd.f32 %v622, %v1480
    %v1482 = vpop.f32.mrb[0].mxu0
    %v1483 = vadd.f32 %v622, %v1482
    %v1484 = vpop.f32.mrb[0].mxu0
    %v1485 = vadd.f32 %v627, %v1484
    %v1486 = vpop.f32.mrb[0].mxu0
    %v1487 = vadd.f32 %v627, %v1486
    %1488 = vmatprep.mubr.bf16.mxu0 0
    %1489 = vmatmul.mubr.bf16.gmra.mrb[0].mxu0 %v670
    %v1490 = vpop.f32.mrb[0].mxu0
    %v1491 = vadd.f32 %v632, %v1490
    %v1492 = vpop.f32.mrb[0].mxu0
    %v1493 = vadd.f32 %v632, %v1492
    %v1494 = vpop.f32.mrb[0].mxu0
    %v1495 = vadd.f32 %v637, %v1494
    %v1496 = vpop.f32.mrb[0].mxu0
    %v1497 = vadd.f32 %v637, %v1496
    %1498 = vdwg.mxu0
    %1499 = vmatprep.subr.bf16.mxu0 %v737
    %1500 = vmatpush1.bf16.msra.mxu0 %v734
    %1501 = vmatprep.subr.bf16.mxu0 0
    %1502 = vmatpush1.bf16.msra.mxu0 0
    %1503 = vmatprep.subr.bf16.mxu0 0
    %1504 = vmatpush1.bf16.msra.mxu0 0
    %1505 = vmatprep.subr.bf16.mxu0 0
    %1506 = vmatpush1.bf16.msra.mxu0 0
    %1507 = vmatprep.subr.bf16.mxu0 0
    %1508 = vmatpush1.bf16.msra.mxu0 0
    %1509 = vmatprep.subr.bf16.mxu0 0
    %1510 = vmatpush1.bf16.msra.mxu0 0
    %1511 = vmatprep.subr.bf16.mxu0 0
    %1512 = vmatpush1.bf16.msra.mxu0 0
    %1513 = vmatprep.subr.bf16.mxu0 0
    %1514 = vmatpush1.bf16.msra.mxu0 0
    %1515 = vmatprep.subr.bf16.mxu0 0
    %1516 = vmatpush1.bf16.msra.mxu0 0
    %1517 = vmatprep.subr.bf16.mxu0 0
    %1518 = vmatpush1.bf16.msra.mxu0 0
    %1519 = vmatprep.subr.bf16.mxu0 0
    %1520 = vmatpush1.bf16.msra.mxu0 0
    %1521 = vmatprep.subr.bf16.mxu0 0
    %1522 = vmatpush1.bf16.msra.mxu0 0
    %1523 = vmatprep.subr.bf16.mxu0 0
    %1524 = vmatpush1.bf16.msra.mxu0 0
    %1525 = vmatprep.subr.bf16.mxu0 0
    %1526 = vmatpush1.bf16.msra.mxu0 0
    %1527 = vmatprep.subr.bf16.mxu0 0
    %1528 = vmatpush1.bf16.msra.mxu0 0
    %1529 = vmatprep.subr.bf16.mxu0 0
    %1530 = vmatpush1.bf16.msra.mxu0 0
    %1531 = vmatprep.mubr.bf16.mxu0 0
    %1532 = vmatmul.mubr.bf16.gmra.mrb[0].mxu0 %v661
    %v1533 = vpop.f32.mrb[0].mxu0
    %v1534 = vadd.f32 %v602, %v1533
    %v1535 = vpop.f32.mrb[0].mxu0
    %v1536 = vadd.f32 %v602, %v1535
    %v1537 = vpop.f32.mrb[0].mxu0
    %v1538 = vadd.f32 %v607, %v1537
    %v1539 = vpop.f32.mrb[0].mxu0
    %v1540 = vadd.f32 %v607, %v1539
    %1541 = vmatprep.mubr.bf16.mxu0 0
    %1542 = vmatmul.mubr.bf16.gmra.mrb[0].mxu0 %v664
    %v1543 = vpop.f32.mrb[0].mxu0
    %v1544 = vadd.f32 %v612, %v1543
    %v1545 = vpop.f32.mrb[0].mxu0
    %v1546 = vadd.f32 %v612, %v1545
    %v1547 = vpop.f32.mrb[0].mxu0
    %v1548 = vadd.f32 %v617, %v1547
    %v1549 = vpop.f32.mrb[0].mxu0
    %v1550 = vadd.f32 %v617, %v1549
    %1551 = vmatprep.mubr.bf16.mxu0 0
    %1552 = vmatmul.mubr.bf16.gmra.mrb[0].mxu0 %v667
    %v1553 = vpop.f32.mrb[0].mxu0
    %v1554 = vadd.f32 %v622, %v1553
    %v1555 = vpop.f32.mrb[0].mxu0
    %v1556 = vadd.f32 %v622, %v1555
    %v1557 = vpop.f32.mrb[0].mxu0
    %v1558 = vadd.f32 %v627, %v1557
    %v1559 = vpop.f32.mrb[0].mxu0
    %v1560 = vadd.f32 %v627, %v1559
    %1561 = vmatprep.mubr.bf16.mxu0 0
    %1562 = vmatmul.mubr.bf16.gmra.mrb[0].mxu0 %v670
    %v1563 = vpop.f32.mrb[0].mxu0
    %v1564 = vadd.f32 %v632, %v1563
    %v1565 = vpop.f32.mrb[0].mxu0
    %v1566 = vadd.f32 %v632, %v1565
    %v1567 = vpop.f32.mrb[0].mxu0
    %v1568 = vadd.f32 %v637, %v1567
    %v1569 = vpop.f32.mrb[0].mxu0
    %v1570 = vadd.f32 %v637, %v1569
    %1571 = vdwg.mxu0
    %1572 = vmatprep.subr.bf16.mxu0 %v743
    %1573 = vmatpush1.bf16.msra.mxu0 %v740
    %1574 = vmatprep.subr.bf16.mxu0 0
    %1575 = vmatpush1.bf16.msra.mxu0 0
    %1576 = vmatprep.subr.bf16.mxu0 0
    %1577 = vmatpush1.bf16.msra.mxu0 0
    %1578 = vmatprep.subr.bf16.mxu0 0
    %1579 = vmatpush1.bf16.msra.mxu0 0
    %1580 = vmatprep.subr.bf16.mxu0 0
    %1581 = vmatpush1.bf16.msra.mxu0 0
    %1582 = vmatprep.subr.bf16.mxu0 0
    %1583 = vmatpush1.bf16.msra.mxu0 0
    %1584 = vmatprep.subr.bf16.mxu0 0
    %1585 = vmatpush1.bf16.msra.mxu0 0
    %1586 = vmatprep.subr.bf16.mxu0 0
    %1587 = vmatpush1.bf16.msra.mxu0 0
    %1588 = vmatprep.subr.bf16.mxu0 0
    %1589 = vmatpush1.bf16.msra.mxu0 0
    %1590 = vmatprep.subr.bf16.mxu0 0
    %1591 = vmatpush1.bf16.msra.mxu0 0
    %1592 = vmatprep.subr.bf16.mxu0 0
    %1593 = vmatpush1.bf16.msra.mxu0 0
    %1594 = vmatprep.subr.bf16.mxu0 0
    %1595 = vmatpush1.bf16.msra.mxu0 0
    %1596 = vmatprep.subr.bf16.mxu0 0
    %1597 = vmatpush1.bf16.msra.mxu0 0
    %1598 = vmatprep.subr.bf16.mxu0 0
    %1599 = vmatpush1.bf16.msra.mxu0 0
    %1600 = vmatprep.subr.bf16.mxu0 0
    %1601 = vmatpush1.bf16.msra.mxu0 0
    %1602 = vmatprep.subr.bf16.mxu0 0
    %1603 = vmatpush1.bf16.msra.mxu0 0
    %1604 = vmatprep.mubr.bf16.mxu0 0
    %1605 = vmatmul.mubr.bf16.gmra.mrb[0].mxu0 %v661
    %v1606 = vpop.f32.mrb[0].mxu0
    %v1607 = vadd.f32 %v602, %v1606
    %v1608 = vpop.f32.mrb[0].mxu0
    %v1609 = vadd.f32 %v602, %v1608
    %v1610 = vpop.f32.mrb[0].mxu0
    %v1611 = vadd.f32 %v607, %v1610
    %v1612 = vpop.f32.mrb[0].mxu0
    %v1613 = vadd.f32 %v607, %v1612
    %1614 = vmatprep.mubr.bf16.mxu0 0
    %1615 = vmatmul.mubr.bf16.gmra.mrb[0].mxu0 %v664
    %v1616 = vpop.f32.mrb[0].mxu0
    %v1617 = vadd.f32 %v612, %v1616
    %v1618 = vpop.f32.mrb[0].mxu0
    %v1619 = vadd.f32 %v612, %v1618
    %v1620 = vpop.f32.mrb[0].mxu0
    %v1621 = vadd.f32 %v617, %v1620
    %v1622 = vpop.f32.mrb[0].mxu0
    %v1623 = vadd.f32 %v617, %v1622
    %1624 = vmatprep.mubr.bf16.mxu0 0
    %1625 = vmatmul.mubr.bf16.gmra.mrb[0].mxu0 %v667
    %v1626 = vpop.f32.mrb[0].mxu0
    %v1627 = vadd.f32 %v622, %v1626
    %v1628 = vpop.f32.mrb[0].mxu0
    %v1629 = vadd.f32 %v622, %v1628
    %v1630 = vpop.f32.mrb[0].mxu0
    %v1631 = vadd.f32 %v627, %v1630
    %v1632 = vpop.f32.mrb[0].mxu0
    %v1633 = vadd.f32 %v627, %v1632
    %1634 = vmatprep.mubr.bf16.mxu0 0
    %1635 = vmatmul.mubr.bf16.gmra.mrb[0].mxu0 %v670
    %v1636 = vpop.f32.mrb[0].mxu0
    %v1637 = vadd.f32 %v632, %v1636
    %v1638 = vpop.f32.mrb[0].mxu0
    %v1639 = vadd.f32 %v632, %v1638
    %v1640 = vpop.f32.mrb[0].mxu0
    %v1641 = vadd.f32 %v637, %v1640
    %v1642 = vpop.f32.mrb[0].mxu0
    %v1643 = vadd.f32 %v637, %v1642
    %1644 = vdwg.mxu0
    %1645 = vmatprep.subr.bf16.mxu0 %v749
    %1646 = vmatpush1.bf16.msra.mxu0 %v746
    %1647 = vmatprep.subr.bf16.mxu0 0
    %1648 = vmatpush1.bf16.msra.mxu0 0
    %1649 = vmatprep.subr.bf16.mxu0 0
    %1650 = vmatpush1.bf16.msra.mxu0 0
    %1651 = vmatprep.subr.bf16.mxu0 0
    %1652 = vmatpush1.bf16.msra.mxu0 0
    %1653 = vmatprep.subr.bf16.mxu0 0
    %1654 = vmatpush1.bf16.msra.mxu0 0
    %1655 = vmatprep.subr.bf16.mxu0 0
    %1656 = vmatpush1.bf16.msra.mxu0 0
    %1657 = vmatprep.subr.bf16.mxu0 0
    %1658 = vmatpush1.bf16.msra.mxu0 0
    %1659 = vmatprep.subr.bf16.mxu0 0
    %1660 = vmatpush1.bf16.msra.mxu0 0
    %1661 = vmatprep.subr.bf16.mxu0 0
    %1662 = vmatpush1.bf16.msra.mxu0 0
    %1663 = vmatprep.subr.bf16.mxu0 0
    %1664 = vmatpush1.bf16.msra.mxu0 0
    %1665 = vmatprep.subr.bf16.mxu0 0
    %1666 = vmatpush1.bf16.msra.mxu0 0
    %1667 = vmatprep.subr.bf16.mxu0 0
    %1668 = vmatpush1.bf16.msra.mxu0 0
    %1669 = vmatprep.subr.bf16.mxu0 0
    %1670 = vmatpush1.bf16.msra.mxu0 0
    %1671 = vmatprep.subr.bf16.mxu0 0
    %1672 = vmatpush1.bf16.msra.mxu0 0
    %1673 = vmatprep.subr.bf16.mxu0 0
    %1674 = vmatpush1.bf16.msra.mxu0 0
    %1675 = vmatprep.subr.bf16.mxu0 0
    %1676 = vmatpush1.bf16.msra.mxu0 0
    %1677 = vmatprep.mubr.bf16.mxu0 0
    %1678 = vmatmul.mubr.bf16.gmra.mrb[0].mxu0 %v661
    %v1679 = vpop.f32.mrb[0].mxu0
    %v1680 = vadd.f32 %v602, %v1679
    %v1681 = vpop.f32.mrb[0].mxu0
    %v1682 = vadd.f32 %v602, %v1681
    %v1683 = vpop.f32.mrb[0].mxu0
    %v1684 = vadd.f32 %v607, %v1683
    %v1685 = vpop.f32.mrb[0].mxu0
    %v1686 = vadd.f32 %v607, %v1685
    %1687 = vmatprep.mubr.bf16.mxu0 0
    %1688 = vmatmul.mubr.bf16.gmra.mrb[0].mxu0 %v664
    %v1689 = vpop.f32.mrb[0].mxu0
    %v1690 = vadd.f32 %v612, %v1689
    %v1691 = vpop.f32.mrb[0].mxu0
    %v1692 = vadd.f32 %v612, %v1691
    %v1693 = vpop.f32.mrb[0].mxu0
    %v1694 = vadd.f32 %v617, %v1693
    %v1695 = vpop.f32.mrb[0].mxu0
    %v1696 = vadd.f32 %v617, %v1695
    %1697 = vmatprep.mubr.bf16.mxu0 0
    %1698 = vmatmul.mubr.bf16.gmra.mrb[0].mxu0 %v667
    %v1699 = vpop.f32.mrb[0].mxu0
    %v1700 = vadd.f32 %v622, %v1699
    %v1701 = vpop.f32.mrb[0].mxu0
    %v1702 = vadd.f32 %v622, %v1701
    %v1703 = vpop.f32.mrb[0].mxu0
    %v1704 = vadd.f32 %v627, %v1703
    %v1705 = vpop.f32.mrb[0].mxu0
    %v1706 = vadd.f32 %v627, %v1705
    %1707 = vmatprep.mubr.bf16.mxu0 0
    %1708 = vmatmul.mubr.bf16.gmra.mrb[0].mxu0 %v670
    %v1709 = vpop.f32.mrb[0].mxu0
    %v1710 = vadd.f32 %v632, %v1709
    %v1711 = vpop.f32.mrb[0].mxu0
    %v1712 = vadd.f32 %v632, %v1711
    %v1713 = vpop.f32.mrb[0].mxu0
    %v1714 = vadd.f32 %v637, %v1713
    %v1715 = vpop.f32.mrb[0].mxu0
    %v1716 = vadd.f32 %v637, %v1715
    %1717 = vdwg.mxu0
    %1718 = vmatprep.subr.bf16.mxu0 %v755
    %1719 = vmatpush1.bf16.msra.mxu0 %v752
    %1720 = vmatprep.subr.bf16.mxu0 0
    %1721 = vmatpush1.bf16.msra.mxu0 0
    %1722 = vmatprep.subr.bf16.mxu0 0
    %1723 = vmatpush1.bf16.msra.mxu0 0
    %1724 = vmatprep.subr.bf16.mxu0 0
    %1725 = vmatpush1.bf16.msra.mxu0 0
    %1726 = vmatprep.subr.bf16.mxu0 0
    %1727 = vmatpush1.bf16.msra.mxu0 0
    %1728 = vmatprep.subr.bf16.mxu0 0
    %1729 = vmatpush1.bf16.msra.mxu0 0
    %1730 = vmatprep.subr.bf16.mxu0 0
    %1731 = vmatpush1.bf16.msra.mxu0 0
    %1732 = vmatprep.subr.bf16.mxu0 0
    %1733 = vmatpush1.bf16.msra.mxu0 0
    %1734 = vmatprep.subr.bf16.mxu0 0
    %1735 = vmatpush1.bf16.msra.mxu0 0
    %1736 = vmatprep.subr.bf16.mxu0 0
    %1737 = vmatpush1.bf16.msra.mxu0 0
    %1738 = vmatprep.subr.bf16.mxu0 0
    %1739 = vmatpush1.bf16.msra.mxu0 0
    %1740 = vmatprep.subr.bf16.mxu0 0
    %1741 = vmatpush1.bf16.msra.mxu0 0
    %1742 = vmatprep.subr.bf16.mxu0 0
    %1743 = vmatpush1.bf16.msra.mxu0 0
    %1744 = vmatprep.subr.bf16.mxu0 0
    %1745 = vmatpush1.bf16.msra.mxu0 0
    %1746 = vmatprep.subr.bf16.mxu0 0
    %1747 = vmatpush1.bf16.msra.mxu0 0
    %1748 = vmatprep.subr.bf16.mxu0 0
    %1749 = vmatpush1.bf16.msra.mxu0 0
    %1750 = vmatprep.mubr.bf16.mxu0 0
    %1751 = vmatmul.mubr.bf16.gmra.mrb[0].mxu0 %v661
    %v1752 = vpop.f32.mrb[0].mxu0
    %v1753 = vadd.f32 %v602, %v1752
    %v1754 = vpop.f32.mrb[0].mxu0
    %v1755 = vadd.f32 %v602, %v1754
    %v1756 = vpop.f32.mrb[0].mxu0
    %v1757 = vadd.f32 %v607, %v1756
    %v1758 = vpop.f32.mrb[0].mxu0
    %v1759 = vadd.f32 %v607, %v1758
    %1760 = vmatprep.mubr.bf16.mxu0 0
    %1761 = vmatmul.mubr.bf16.gmra.mrb[0].mxu0 %v664
    %v1762 = vpop.f32.mrb[0].mxu0
    %v1763 = vadd.f32 %v612, %v1762
    %v1764 = vpop.f32.mrb[0].mxu0
    %v1765 = vadd.f32 %v612, %v1764
    %v1766 = vpop.f32.mrb[0].mxu0
    %v1767 = vadd.f32 %v617, %v1766
    %v1768 = vpop.f32.mrb[0].mxu0
    %v1769 = vadd.f32 %v617, %v1768
    %1770 = vmatprep.mubr.bf16.mxu0 0
    %1771 = vmatmul.mubr.bf16.gmra.mrb[0].mxu0 %v667
    %v1772 = vpop.f32.mrb[0].mxu0
    %v1773 = vadd.f32 %v622, %v1772
    %v1774 = vpop.f32.mrb[0].mxu0
    %v1775 = vadd.f32 %v622, %v1774
    %v1776 = vpop.f32.mrb[0].mxu0
    %v1777 = vadd.f32 %v627, %v1776
    %v1778 = vpop.f32.mrb[0].mxu0
    %v1779 = vadd.f32 %v627, %v1778
    %1780 = vmatprep.mubr.bf16.mxu0 0
    %1781 = vmatmul.mubr.bf16.gmra.mrb[0].mxu0 %v670
    %v1782 = vpop.f32.mrb[0].mxu0
    %v1783 = vadd.f32 %v632, %v1782
    %v1784 = vpop.f32.mrb[0].mxu0
    %v1785 = vadd.f32 %v632, %v1784
    %v1786 = vpop.f32.mrb[0].mxu0
    %v1787 = vadd.f32 %v637, %v1786
    %v1788 = vpop.f32.mrb[0].mxu0
    %v1789 = vadd.f32 %v637, %v1788
    %1790 = vdwg.mxu0
    %1791 = vmatprep.subr.bf16.mxu0 %v761
    %1792 = vmatpush1.bf16.msra.mxu0 %v758
    %1793 = vmatprep.subr.bf16.mxu0 0
    %1794 = vmatpush1.bf16.msra.mxu0 0
    %1795 = vmatprep.subr.bf16.mxu0 0
    %1796 = vmatpush1.bf16.msra.mxu0 0
    %1797 = vmatprep.subr.bf16.mxu0 0
    %1798 = vmatpush1.bf16.msra.mxu0 0
    %1799 = vmatprep.subr.bf16.mxu0 0
    %1800 = vmatpush1.bf16.msra.mxu0 0
    %1801 = vmatprep.subr.bf16.mxu0 0
    %1802 = vmatpush1.bf16.msra.mxu0 0
    %1803 = vmatprep.subr.bf16.mxu0 0
    %1804 = vmatpush1.bf16.msra.mxu0 0
    %1805 = vmatprep.subr.bf16.mxu0 0
    %1806 = vmatpush1.bf16.msra.mxu0 0
    %1807 = vmatprep.subr.bf16.mxu0 0
    %1808 = vmatpush1.bf16.msra.mxu0 0
    %1809 = vmatprep.subr.bf16.mxu0 0
    %1810 = vmatpush1.bf16.msra.mxu0 0
    %1811 = vmatprep.subr.bf16.mxu0 0
    %1812 = vmatpush1.bf16.msra.mxu0 0
    %1813 = vmatprep.subr.bf16.mxu0 0
    %1814 = vmatpush1.bf16.msra.mxu0 0
    %1815 = vmatprep.subr.bf16.mxu0 0
    %1816 = vmatpush1.bf16.msra.mxu0 0
    %1817 = vmatprep.subr.bf16.mxu0 0
    %1818 = vmatpush1.bf16.msra.mxu0 0
    %1819 = vmatprep.subr.bf16.mxu0 0
    %1820 = vmatpush1.bf16.msra.mxu0 0
    %1821 = vmatprep.subr.bf16.mxu0 0
    %1822 = vmatpush1.bf16.msra.mxu0 0
    %1823 = vmatprep.mubr.bf16.mxu0 0
    %1824 = vmatmul.mubr.bf16.gmra.mrb[0].mxu0 %v661
    %v1825 = vpop.f32.mrb[0].mxu0
    %v1826 = vadd.f32 %v602, %v1825
    %v1827 = vpop.f32.mrb[0].mxu0
    %v1828 = vadd.f32 %v602, %v1827
    %v1829 = vpop.f32.mrb[0].mxu0
    %v1830 = vadd.f32 %v607, %v1829
    %v1831 = vpop.f32.mrb[0].mxu0
    %v1832 = vadd.f32 %v607, %v1831
    %1833 = vmatprep.mubr.bf16.mxu0 0
    %1834 = vmatmul.mubr.bf16.gmra.mrb[0].mxu0 %v664
    %v1835 = vpop.f32.mrb[0].mxu0
    %v1836 = vadd.f32 %v612, %v1835
    %v1837 = vpop.f32.mrb[0].mxu0
    %v1838 = vadd.f32 %v612, %v1837
    %v1839 = vpop.f32.mrb[0].mxu0
    %v1840 = vadd.f32 %v617, %v1839
    %v1841 = vpop.f32.mrb[0].mxu0
    %v1842 = vadd.f32 %v617, %v1841
    %1843 = vmatprep.mubr.bf16.mxu0 0
    %1844 = vmatmul.mubr.bf16.gmra.mrb[0].mxu0 %v667
    %v1845 = vpop.f32.mrb[0].mxu0
    %v1846 = vadd.f32 %v622, %v1845
    %v1847 = vpop.f32.mrb[0].mxu0
    %v1848 = vadd.f32 %v622, %v1847
    %v1849 = vpop.f32.mrb[0].mxu0
    %v1850 = vadd.f32 %v627, %v1849
    %v1851 = vpop.f32.mrb[0].mxu0
    %v1852 = vadd.f32 %v627, %v1851
    %1853 = vmatprep.mubr.bf16.mxu0 0
    %1854 = vmatmul.mubr.bf16.gmra.mrb[0].mxu0 %v670
    %v1855 = vpop.f32.mrb[0].mxu0
    %v1856 = vadd.f32 %v632, %v1855
    %v1857 = vpop.f32.mrb[0].mxu0
    %v1858 = vadd.f32 %v632, %v1857
    %v1859 = vpop.f32.mrb[0].mxu0
    %v1860 = vadd.f32 %v637, %v1859
    %v1861 = vpop.f32.mrb[0].mxu0
    %v1862 = vadd.f32 %v637, %v1861
    %1863 = vdwg.mxu0
    %1864 = vmatprep.subr.bf16.mxu0 %v767
    %1865 = vmatpush1.bf16.msra.mxu0 %v764
    %1866 = vmatprep.subr.bf16.mxu0 0
    %1867 = vmatpush1.bf16.msra.mxu0 0
    %1868 = vmatprep.subr.bf16.mxu0 0
    %1869 = vmatpush1.bf16.msra.mxu0 0
    %1870 = vmatprep.subr.bf16.mxu0 0
    %1871 = vmatpush1.bf16.msra.mxu0 0
    %1872 = vmatprep.subr.bf16.mxu0 0
    %1873 = vmatpush1.bf16.msra.mxu0 0
    %1874 = vmatprep.subr.bf16.mxu0 0
    %1875 = vmatpush1.bf16.msra.mxu0 0
    %1876 = vmatprep.subr.bf16.mxu0 0
    %1877 = vmatpush1.bf16.msra.mxu0 0
    %1878 = vmatprep.subr.bf16.mxu0 0
    %1879 = vmatpush1.bf16.msra.mxu0 0
    %1880 = vmatprep.subr.bf16.mxu0 0
    %1881 = vmatpush1.bf16.msra.mxu0 0
    %1882 = vmatprep.subr.bf16.mxu0 0
    %1883 = vmatpush1.bf16.msra.mxu0 0
    %1884 = vmatprep.subr.bf16.mxu0 0
    %1885 = vmatpush1.bf16.msra.mxu0 0
    %1886 = vmatprep.subr.bf16.mxu0 0
    %1887 = vmatpush1.bf16.msra.mxu0 0
    %1888 = vmatprep.subr.bf16.mxu0 0
    %1889 = vmatpush1.bf16.msra.mxu0 0
    %1890 = vmatprep.subr.bf16.mxu0 0
    %1891 = vmatpush1.bf16.msra.mxu0 0
    %1892 = vmatprep.subr.bf16.mxu0 0
    %1893 = vmatpush1.bf16.msra.mxu0 0
    %1894 = vmatprep.subr.bf16.mxu0 0
    %1895 = vmatpush1.bf16.msra.mxu0 0
    %1896 = vmatprep.mubr.bf16.mxu0 0
    %1897 = vmatmul.mubr.bf16.gmra.mrb[0].mxu0 %v661
    %v1898 = vpop.f32.mrb[0].mxu0
    %v1899 = vadd.f32 %v602, %v1898
    %v1900 = vpop.f32.mrb[0].mxu0
    %v1901 = vadd.f32 %v602, %v1900
    %v1902 = vpop.f32.mrb[0].mxu0
    %v1903 = vadd.f32 %v607, %v1902
    %v1904 = vpop.f32.mrb[0].mxu0
    %v1905 = vadd.f32 %v607, %v1904
    %1906 = vmatprep.mubr.bf16.mxu0 0
    %1907 = vmatmul.mubr.bf16.gmra.mrb[0].mxu0 %v664
    %v1908 = vpop.f32.mrb[0].mxu0
    %v1909 = vadd.f32 %v612, %v1908
    %v1910 = vpop.f32.mrb[0].mxu0
    %v1911 = vadd.f32 %v612, %v1910
    %v1912 = vpop.f32.mrb[0].mxu0
    %v1913 = vadd.f32 %v617, %v1912
    %v1914 = vpop.f32.mrb[0].mxu0
    %v1915 = vadd.f32 %v617, %v1914
    %1916 = vmatprep.mubr.bf16.mxu0 0
    %1917 = vmatmul.mubr.bf16.gmra.mrb[0].mxu0 %v667
    %v1918 = vpop.f32.mrb[0].mxu0
    %v1919 = vadd.f32 %v622, %v1918
    %v1920 = vpop.f32.mrb[0].mxu0
    %v1921 = vadd.f32 %v622, %v1920
    %v1922 = vpop.f32.mrb[0].mxu0
    %v1923 = vadd.f32 %v627, %v1922
    %v1924 = vpop.f32.mrb[0].mxu0
    %v1925 = vadd.f32 %v627, %v1924
    %1926 = vmatprep.mubr.bf16.mxu0 0
    %1927 = vmatmul.mubr.bf16.gmra.mrb[0].mxu0 %v670
    %v1928 = vpop.f32.mrb[0].mxu0
    %v1929 = vadd.f32 %v632, %v1928
    %v1930 = vpop.f32.mrb[0].mxu0
    %v1931 = vadd.f32 %v632, %v1930
    %v1932 = vpop.f32.mrb[0].mxu0
    %v1933 = vadd.f32 %v637, %v1932
    %v1934 = vpop.f32.mrb[0].mxu0
    %v1935 = vadd.f32 %v637, %v1934
    %1936 = vdwg.mxu0
    %v1937 = vtanh.pop %v804
    %v1938 = vtanh.pop %v806
    %v1939 = vtanh.pop %v877
    %v1940 = vtanh.pop %v879
    %v1941 = vtanh.pop %v950
    %v1942 = vtanh.pop %v952
    %v1943 = vtanh.pop %v1023
    %v1944 = vtanh.pop %v1025
    %v1945 = vtanh.pop %v1096
    %v1946 = vtanh.pop %v1098
    %v1947 = vtanh.pop %v1169
    %v1948 = vtanh.pop %v1171
    %v1949 = vtanh.pop %v1242
    %v1950 = vtanh.pop %v1244
    %v1951 = vtanh.pop %v1315
    %v1952 = vtanh.pop %v1317
    %v1953 = vtanh.pop %v1388
    %v1954 = vtanh.pop %v1390
    %v1955 = vtanh.pop %v1461
    %v1956 = vtanh.pop %v1463
    %v1957 = vtanh.pop %v1534
    %v1958 = vtanh.pop %v1536
    %v1959 = vtanh.pop %v1607
    %v1960 = vtanh.pop %v1609
    %v1961 = vtanh.pop %v1680
    %v1962 = vtanh.pop %v1682
    %v1963 = vtanh.pop %v1753
    %v1964 = vtanh.pop %v1755
    %v1965 = vtanh.pop %v1826
    %v1966 = vtanh.pop %v1828
    %v1967 = vtanh.pop %v1899
    %v1968 = vtanh.pop %v1901
    %v1969 = vtanh.pop %v808
    %v1970 = vtanh.pop %v810
    %v1971 = vtanh.pop %v881
    %v1972 = vtanh.pop %v883
    %v1973 = vtanh.pop %v954
    %v1974 = vtanh.pop %v956
    %v1975 = vtanh.pop %v1027
    %v1976 = vtanh.pop %v1029
    %v1977 = vtanh.pop %v1100
    %v1978 = vtanh.pop %v1102
    %v1979 = vtanh.pop %v1173
    %v1980 = vtanh.pop %v1175
    %v1981 = vtanh.pop %v1246
    %v1982 = vtanh.pop %v1248
    %v1983 = vtanh.pop %v1319
    %v1984 = vtanh.pop %v1321
    %v1985 = vtanh.pop %v1392
    %v1986 = vtanh.pop %v1394
    %v1987 = vtanh.pop %v1465
    %v1988 = vtanh.pop %v1467
    %v1989 = vtanh.pop %v1538
    %v1990 = vtanh.pop %v1540
    %v1991 = vtanh.pop %v1611
    %v1992 = vtanh.pop %v1613
    %v1993 = vtanh.pop %v1684
    %v1994 = vtanh.pop %v1686
    %v1995 = vtanh.pop %v1757
    %v1996 = vtanh.pop %v1759
    %v1997 = vtanh.pop %v1830
    %v1998 = vtanh.pop %v1832
    %v1999 = vtanh.pop %v1903
    %v2000 = vtanh.pop %v1905
    %v2001 = vtanh.pop %v814
    %v2002 = vtanh.pop %v816
    %v2003 = vtanh.pop %v887
    %v2004 = vtanh.pop %v889
    %v2005 = vtanh.pop %v960
    %v2006 = vtanh.pop %v962
    %v2007 = vtanh.pop %v1033
    %v2008 = vtanh.pop %v1035
    %v2009 = vtanh.pop %v1106
    %v2010 = vtanh.pop %v1108
    %v2011 = vtanh.pop %v1179
    %v2012 = vtanh.pop %v1181
    %v2013 = vtanh.pop %v1252
    %v2014 = vtanh.pop %v1254
    %v2015 = vtanh.pop %v1325
    %v2016 = vtanh.pop %v1327
    %v2017 = vtanh.pop %v1398
    %v2018 = vtanh.pop %v1400
    %v2019 = vtanh.pop %v1471
    %v2020 = vtanh.pop %v1473
    %v2021 = vtanh.pop %v1544
    %v2022 = vtanh.pop %v1546
    %v2023 = vtanh.pop %v1617
    %v2024 = vtanh.pop %v1619
    %v2025 = vtanh.pop %v1690
    %v2026 = vtanh.pop %v1692
    %v2027 = vtanh.pop %v1763
    %v2028 = vtanh.pop %v1765
    %v2029 = vtanh.pop %v1836
    %v2030 = vtanh.pop %v1838
    %v2031 = vtanh.pop %v1909
    %v2032 = vtanh.pop %v1911
    %v2033 = vtanh.pop %v818
    %v2034 = vtanh.pop %v820
    %v2035 = vtanh.pop %v891
    %v2036 = vtanh.pop %v893
    %v2037 = vtanh.pop %v964
    %v2038 = vtanh.pop %v966
    %v2039 = vtanh.pop %v1037
    %v2040 = vtanh.pop %v1039
    %v2041 = vtanh.pop %v1110
    %v2042 = vtanh.pop %v1112
    %v2043 = vtanh.pop %v1183
    %v2044 = vtanh.pop %v1185
    %v2045 = vtanh.pop %v1256
    %v2046 = vtanh.pop %v1258
    %v2047 = vtanh.pop %v1329
    %v2048 = vtanh.pop %v1331
    %v2049 = vtanh.pop %v1402
    %v2050 = vtanh.pop %v1404
    %v2051 = vtanh.pop %v1475
    %v2052 = vtanh.pop %v1477
    %v2053 = vtanh.pop %v1548
    %v2054 = vtanh.pop %v1550
    %v2055 = vtanh.pop %v1621
    %v2056 = vtanh.pop %v1623
    %v2057 = vtanh.pop %v1694
    %v2058 = vtanh.pop %v1696
    %v2059 = vtanh.pop %v1767
    %v2060 = vtanh.pop %v1769
    %v2061 = vtanh.pop %v1840
    %v2062 = vtanh.pop %v1842
    %v2063 = vtanh.pop %v1913
    %v2064 = vtanh.pop %v1915
    %v2065 = vpack.c.bf16 %v1969, %v1937
    %v2066 = vpack.c.bf16 %v1970, %v1938
    %v2067 = vpack.c.bf16 %v1971, %v1939
    %v2068 = vpack.c.bf16 %v1972, %v1940
    %v2069 = vpack.c.bf16 %v1973, %v1941
    %v2070 = vpack.c.bf16 %v1974, %v1942
    %v2071 = vpack.c.bf16 %v1975, %v1943
    %v2072 = vpack.c.bf16 %v1976, %v1944
    %v2073 = vpack.c.bf16 %v1977, %v1945
    %v2074 = vpack.c.bf16 %v1978, %v1946
    %v2075 = vpack.c.bf16 %v1979, %v1947
    %v2076 = vpack.c.bf16 %v1980, %v1948
    %v2077 = vpack.c.bf16 %v1981, %v1949
    %v2078 = vpack.c.bf16 %v1982, %v1950
    %v2079 = vpack.c.bf16 %v1983, %v1951
    %v2080 = vpack.c.bf16 %v1984, %v1952
    %v2081 = vpack.c.bf16 %v1985, %v1953
    %v2082 = vpack.c.bf16 %v1986, %v1954
    %v2083 = vpack.c.bf16 %v1987, %v1955
    %v2084 = vpack.c.bf16 %v1988, %v1956
    %v2085 = vpack.c.bf16 %v1989, %v1957
    %v2086 = vpack.c.bf16 %v1990, %v1958
    %v2087 = vpack.c.bf16 %v1991, %v1959
    %v2088 = vpack.c.bf16 %v1992, %v1960
    %v2089 = vpack.c.bf16 %v1993, %v1961
    %v2090 = vpack.c.bf16 %v1994, %v1962
    %v2091 = vpack.c.bf16 %v1995, %v1963
    %v2092 = vpack.c.bf16 %v1996, %v1964
    %v2093 = vpack.c.bf16 %v1997, %v1965
    %v2094 = vpack.c.bf16 %v1998, %v1966
    %v2095 = vpack.c.bf16 %v1999, %v1967
    %v2096 = vpack.c.bf16 %v2000, %v1968
    %v2097 = vpack.c.bf16 %v2033, %v2001
    %v2098 = vpack.c.bf16 %v2034, %v2002
    %v2099 = vpack.c.bf16 %v2035, %v2003
    %v2100 = vpack.c.bf16 %v2036, %v2004
    %v2101 = vpack.c.bf16 %v2037, %v2005
    %v2102 = vpack.c.bf16 %v2038, %v2006
    %v2103 = vpack.c.bf16 %v2039, %v2007
    %v2104 = vpack.c.bf16 %v2040, %v2008
    %v2105 = vpack.c.bf16 %v2041, %v2009
    %v2106 = vpack.c.bf16 %v2042, %v2010
    %v2107 = vpack.c.bf16 %v2043, %v2011
    %v2108 = vpack.c.bf16 %v2044, %v2012
    %v2109 = vpack.c.bf16 %v2045, %v2013
    %v2110 = vpack.c.bf16 %v2046, %v2014
    %v2111 = vpack.c.bf16 %v2047, %v2015
    %v2112 = vpack.c.bf16 %v2048, %v2016
    %v2113 = vpack.c.bf16 %v2049, %v2017
    %v2114 = vpack.c.bf16 %v2050, %v2018
    %v2115 = vpack.c.bf16 %v2051, %v2019
    %v2116 = vpack.c.bf16 %v2052, %v2020
    %v2117 = vpack.c.bf16 %v2053, %v2021
    %v2118 = vpack.c.bf16 %v2054, %v2022
    %v2119 = vpack.c.bf16 %v2055, %v2023
    %v2120 = vpack.c.bf16 %v2056, %v2024
    %v2121 = vpack.c.bf16 %v2057, %v2025
    %v2122 = vpack.c.bf16 %v2058, %v2026
    %v2123 = vpack.c.bf16 %v2059, %v2027
    %v2124 = vpack.c.bf16 %v2060, %v2028
    %v2125 = vpack.c.bf16 %v2061, %v2029
    %v2126 = vpack.c.bf16 %v2062, %v2030
    %v2127 = vpack.c.bf16 %v2063, %v2031
    %v2128 = vpack.c.bf16 %v2064, %v2032
    %v2129 = vmul.f32 %v1937, %v1937
    %v2130 = vmul.f32 %v1938, %v1938
    %v2131 = vmul.f32 %v1939, %v1939
    %v2132 = vmul.f32 %v1940, %v1940
    %v2133 = vmul.f32 %v1941, %v1941
    %v2134 = vmul.f32 %v1942, %v1942
    %v2135 = vmul.f32 %v1943, %v1943
    %v2136 = vmul.f32 %v1944, %v1944
    %v2137 = vmul.f32 %v1945, %v1945
    %v2138 = vmul.f32 %v1946, %v1946
    %v2139 = vmul.f32 %v1947, %v1947
    %v2140 = vmul.f32 %v1948, %v1948
    %v2141 = vmul.f32 %v1949, %v1949
    %v2142 = vmul.f32 %v1950, %v1950
    %v2143 = vmul.f32 %v1951, %v1951
    %v2144 = vmul.f32 %v1952, %v1952
    %v2145 = vmul.f32 %v1953, %v1953
    %v2146 = vmul.f32 %v1954, %v1954
    %v2147 = vmul.f32 %v1955, %v1955
    %v2148 = vmul.f32 %v1956, %v1956
    %v2149 = vmul.f32 %v1957, %v1957
    %v2150 = vmul.f32 %v1958, %v1958
    %v2151 = vmul.f32 %v1959, %v1959
    %v2152 = vmul.f32 %v1960, %v1960
    %v2153 = vmul.f32 %v1961, %v1961
    %v2154 = vmul.f32 %v1962, %v1962
    %v2155 = vmul.f32 %v1963, %v1963
    %v2156 = vmul.f32 %v1964, %v1964
    %v2157 = vmul.f32 %v1965, %v1965
    %v2158 = vmul.f32 %v1966, %v1966
    %v2159 = vmul.f32 %v1967, %v1967
    %v2160 = vmul.f32 %v1968, %v1968
    %v2161 = vmul.f32 %v1969, %v1969
    %v2162 = vmul.f32 %v1970, %v1970
    %v2163 = vmul.f32 %v1971, %v1971
    %v2164 = vmul.f32 %v1972, %v1972
    %v2165 = vmul.f32 %v1973, %v1973
    %v2166 = vmul.f32 %v1974, %v1974
    %v2167 = vmul.f32 %v1975, %v1975
    %v2168 = vmul.f32 %v1976, %v1976
    %v2169 = vmul.f32 %v1977, %v1977
    %v2170 = vmul.f32 %v1978, %v1978
    %v2171 = vmul.f32 %v1979, %v1979
    %v2172 = vmul.f32 %v1980, %v1980
    %v2173 = vmul.f32 %v1981, %v1981
    %v2174 = vmul.f32 %v1982, %v1982
    %v2175 = vmul.f32 %v1983, %v1983
    %v2176 = vmul.f32 %v1984, %v1984
    %v2177 = vmul.f32 %v1985, %v1985
    %v2178 = vmul.f32 %v1986, %v1986
    %v2179 = vmul.f32 %v1987, %v1987
    %v2180 = vmul.f32 %v1988, %v1988
    %v2181 = vmul.f32 %v1989, %v1989
    %v2182 = vmul.f32 %v1990, %v1990
    %v2183 = vmul.f32 %v1991, %v1991
    %v2184 = vmul.f32 %v1992, %v1992
    %v2185 = vmul.f32 %v1993, %v1993
    %v2186 = vmul.f32 %v1994, %v1994
    %v2187 = vmul.f32 %v1995, %v1995
    %v2188 = vmul.f32 %v1996, %v1996
    %v2189 = vmul.f32 %v1997, %v1997
    %v2190 = vmul.f32 %v1998, %v1998
    %v2191 = vmul.f32 %v1999, %v1999
    %v2192 = vmul.f32 %v2000, %v2000
    %v2193 = vmul.f32 %v2001, %v2001
    %v2194 = vmul.f32 %v2002, %v2002
    %v2195 = vmul.f32 %v2003, %v2003
    %v2196 = vmul.f32 %v2004, %v2004
    %v2197 = vmul.f32 %v2005, %v2005
    %v2198 = vmul.f32 %v2006, %v2006
    %v2199 = vmul.f32 %v2007, %v2007
    %v2200 = vmul.f32 %v2008, %v2008
    %v2201 = vmul.f32 %v2009, %v2009
    %v2202 = vmul.f32 %v2010, %v2010
    %v2203 = vmul.f32 %v2011, %v2011
    %v2204 = vmul.f32 %v2012, %v2012
    %v2205 = vmul.f32 %v2013, %v2013
    %v2206 = vmul.f32 %v2014, %v2014
    %v2207 = vmul.f32 %v2015, %v2015
    %v2208 = vmul.f32 %v2016, %v2016
    %v2209 = vmul.f32 %v2017, %v2017
    %v2210 = vmul.f32 %v2018, %v2018
    %v2211 = vmul.f32 %v2019, %v2019
    %v2212 = vmul.f32 %v2020, %v2020
    %v2213 = vmul.f32 %v2021, %v2021
    %v2214 = vmul.f32 %v2022, %v2022
    %v2215 = vmul.f32 %v2023, %v2023
    %v2216 = vmul.f32 %v2024, %v2024
    %v2217 = vmul.f32 %v2025, %v2025
    %v2218 = vmul.f32 %v2026, %v2026
    %v2219 = vmul.f32 %v2027, %v2027
    %v2220 = vmul.f32 %v2028, %v2028
    %v2221 = vmul.f32 %v2029, %v2029
    %v2222 = vmul.f32 %v2030, %v2030
    %v2223 = vmul.f32 %v2031, %v2031
    %v2224 = vmul.f32 %v2032, %v2032
    %v2225 = vmul.f32 %v2033, %v2033
    %v2226 = vmul.f32 %v2034, %v2034
    %v2227 = vmul.f32 %v2035, %v2035
    %v2228 = vmul.f32 %v2036, %v2036
    %v2229 = vmul.f32 %v2037, %v2037
    %v2230 = vmul.f32 %v2038, %v2038
    %v2231 = vmul.f32 %v2039, %v2039
    %v2232 = vmul.f32 %v2040, %v2040
    %v2233 = vmul.f32 %v2041, %v2041
    %v2234 = vmul.f32 %v2042, %v2042
    %v2235 = vmul.f32 %v2043, %v2043
    %v2236 = vmul.f32 %v2044, %v2044
    %v2237 = vmul.f32 %v2045, %v2045
    %v2238 = vmul.f32 %v2046, %v2046
    %v2239 = vmul.f32 %v2047, %v2047
    %v2240 = vmul.f32 %v2048, %v2048
    %v2241 = vmul.f32 %v2049, %v2049
    %v2242 = vmul.f32 %v2050, %v2050
    %v2243 = vmul.f32 %v2051, %v2051
    %v2244 = vmul.f32 %v2052, %v2052
    %v2245 = vmul.f32 %v2053, %v2053
    %v2246 = vmul.f32 %v2054, %v2054
    %v2247 = vmul.f32 %v2055, %v2055
    %v2248 = vmul.f32 %v2056, %v2056
    %v2249 = vmul.f32 %v2057, %v2057
    %v2250 = vmul.f32 %v2058, %v2058
    %v2251 = vmul.f32 %v2059, %v2059
    %v2252 = vmul.f32 %v2060, %v2060
    %v2253 = vmul.f32 %v2061, %v2061
    %v2254 = vmul.f32 %v2062, %v2062
    %v2255 = vmul.f32 %v2063, %v2063
    %v2256 = vmul.f32 %v2064, %v2064
    %v2257 = vpack.c.bf16 %v2161, %v2129
    %v2258 = vpack.c.bf16 %v2162, %v2130
    %v2259 = vpack.c.bf16 %v2163, %v2131
    %v2260 = vpack.c.bf16 %v2164, %v2132
    %v2261 = vpack.c.bf16 %v2165, %v2133
    %v2262 = vpack.c.bf16 %v2166, %v2134
    %v2263 = vpack.c.bf16 %v2167, %v2135
    %v2264 = vpack.c.bf16 %v2168, %v2136
    %v2265 = vpack.c.bf16 %v2169, %v2137
    %v2266 = vpack.c.bf16 %v2170, %v2138
    %v2267 = vpack.c.bf16 %v2171, %v2139
    %v2268 = vpack.c.bf16 %v2172, %v2140
    %v2269 = vpack.c.bf16 %v2173, %v2141
    %v2270 = vpack.c.bf16 %v2174, %v2142
    %v2271 = vpack.c.bf16 %v2175, %v2143
    %v2272 = vpack.c.bf16 %v2176, %v2144
    %v2273 = vpack.c.bf16 %v2177, %v2145
    %v2274 = vpack.c.bf16 %v2178, %v2146
    %v2275 = vpack.c.bf16 %v2179, %v2147
    %v2276 = vpack.c.bf16 %v2180, %v2148
    %v2277 = vpack.c.bf16 %v2181, %v2149
    %v2278 = vpack.c.bf16 %v2182, %v2150
    %v2279 = vpack.c.bf16 %v2183, %v2151
    %v2280 = vpack.c.bf16 %v2184, %v2152
    %v2281 = vpack.c.bf16 %v2185, %v2153
    %v2282 = vpack.c.bf16 %v2186, %v2154
    %v2283 = vpack.c.bf16 %v2187, %v2155
    %v2284 = vpack.c.bf16 %v2188, %v2156
    %v2285 = vpack.c.bf16 %v2189, %v2157
    %v2286 = vpack.c.bf16 %v2190, %v2158
    %v2287 = vpack.c.bf16 %v2191, %v2159
    %v2288 = vpack.c.bf16 %v2192, %v2160
    %v2289 = vpack.c.bf16 %v2225, %v2193
    %v2290 = vpack.c.bf16 %v2226, %v2194
    %v2291 = vpack.c.bf16 %v2227, %v2195
    %v2292 = vpack.c.bf16 %v2228, %v2196
    %v2293 = vpack.c.bf16 %v2229, %v2197
    %v2294 = vpack.c.bf16 %v2230, %v2198
    %v2295 = vpack.c.bf16 %v2231, %v2199
    %v2296 = vpack.c.bf16 %v2232, %v2200
    %v2297 = vpack.c.bf16 %v2233, %v2201
    %v2298 = vpack.c.bf16 %v2234, %v2202
    %v2299 = vpack.c.bf16 %v2235, %v2203
    %v2300 = vpack.c.bf16 %v2236, %v2204
    %v2301 = vpack.c.bf16 %v2237, %v2205
    %v2302 = vpack.c.bf16 %v2238, %v2206
    %v2303 = vpack.c.bf16 %v2239, %v2207
    %v2304 = vpack.c.bf16 %v2240, %v2208
    %v2305 = vpack.c.bf16 %v2241, %v2209
    %v2306 = vpack.c.bf16 %v2242, %v2210
    %v2307 = vpack.c.bf16 %v2243, %v2211
    %v2308 = vpack.c.bf16 %v2244, %v2212
    %v2309 = vpack.c.bf16 %v2245, %v2213
    %v2310 = vpack.c.bf16 %v2246, %v2214
    %v2311 = vpack.c.bf16 %v2247, %v2215
    %v2312 = vpack.c.bf16 %v2248, %v2216
    %v2313 = vpack.c.bf16 %v2249, %v2217
    %v2314 = vpack.c.bf16 %v2250, %v2218
    %v2315 = vpack.c.bf16 %v2251, %v2219
    %v2316 = vpack.c.bf16 %v2252, %v2220
    %v2317 = vpack.c.bf16 %v2253, %v2221
    %v2318 = vpack.c.bf16 %v2254, %v2222
    %v2319 = vpack.c.bf16 %v2255, %v2223
    %v2320 = vpack.c.bf16 %v2256, %v2224
    %v2321 = vld [vmem:[%s4] sm:$0xf]
    %v2322 = vld [vmem:[%s4 + $0x4] sm:$0xf]
    %v2323 = vld [vmem:[%s4 + $0x8] sm:$0xf]
    %v2324 = vld [vmem:[%s4 + $0xc] sm:$0xf]
    %v2325 = vld [vmem:[%s4 + $0x10] sm:$0x1]
    %v2331 = vunpack.c.l.b16 %v2321
    %v2332 = vunpack.c.l.b16 %v2322
    %v2333 = vunpack.c.l.b16 %v2323
    %v2334 = vunpack.c.l.b16 %v2324
    %v2335 = vunpack.c.l.b16 %v2325
    %v2336 = vpack.c.b16 %v2332, %v2331
    %v2337 = vpack.c.b16 %v2334, %v2333
    %v2338 = vpack.c.b16 %v2335, %v2335
    %vm2339 = vcmask 261120
    %v2341 = vsel %vm2339, %v2336, 0
    %v2344 = vsel %vm2339, %v2337, 0
    %v2347 = vsel %vm2339, %v2338, 0
    %2349 = vmatprep.subr.bf16.mxu0 %v2066
    %2350 = vmatpush1.bf16.msra.mxu0 %v2065
    %2351 = vmatprep.subr.bf16.mxu0 %v2098
    %2352 = vmatpush1.bf16.msra.mxu0 %v2097
    %2353 = vmatprep.subr.bf16.mxu0 0
    %2354 = vmatpush1.bf16.msra.mxu0 0
    %2355 = vmatprep.subr.bf16.mxu0 0
    %2356 = vmatpush1.bf16.msra.mxu0 0
    %2357 = vmatprep.subr.bf16.mxu0 0
    %2358 = vmatpush1.bf16.msra.mxu0 0
    %2359 = vmatprep.subr.bf16.mxu0 0
    %2360 = vmatpush1.bf16.msra.mxu0 0
    %2361 = vmatprep.subr.bf16.mxu0 0
    %2362 = vmatpush1.bf16.msra.mxu0 0
    %2363 = vmatprep.subr.bf16.mxu0 0
    %2364 = vmatpush1.bf16.msra.mxu0 0
    %2365 = vmatprep.subr.bf16.mxu0 0
    %2366 = vmatpush1.bf16.msra.mxu0 0
    %2367 = vmatprep.subr.bf16.mxu0 0
    %2368 = vmatpush1.bf16.msra.mxu0 0
    %2369 = vmatprep.subr.bf16.mxu0 0
    %2370 = vmatpush1.bf16.msra.mxu0 0
    %2371 = vmatprep.subr.bf16.mxu0 0
    %2372 = vmatpush1.bf16.msra.mxu0 0
    %2373 = vmatprep.subr.bf16.mxu0 0
    %2374 = vmatpush1.bf16.msra.mxu0 0
    %2375 = vmatprep.subr.bf16.mxu0 0
    %2376 = vmatpush1.bf16.msra.mxu0 0
    %2377 = vmatprep.subr.bf16.mxu0 0
    %2378 = vmatpush1.bf16.msra.mxu0 0
    %2379 = vmatprep.subr.bf16.mxu0 0
    %2380 = vmatpush1.bf16.msra.mxu0 0
    %2381 = vmatprep.mubr.bf16.mxu0 0
    %2382 = vmatmul.mubr.bf16.gmra.mrb[0].mxu0 %v2341
    %v2383 = vpop.f32.mrb[0].mxu0
    %v2384 = vadd.f32 0.0, %v2383
    %v2385 = vpop.f32.mrb[0].mxu0
    %v2386 = vadd.f32 0.0, %v2385
    %v2387 = vpop.f32.mrb[0].mxu0
    %v2388 = vadd.f32 0.0, %v2387
    %v2389 = vpop.f32.mrb[0].mxu0
    %v2390 = vadd.f32 0.0, %v2389
    %2391 = vmatprep.mubr.bf16.mxu0 0
    %2392 = vmatmul.mubr.bf16.gmra.mrb[0].mxu0 %v2344
    %v2393 = vpop.f32.mrb[0].mxu0
    %v2394 = vadd.f32 0.0, %v2393
    %v2395 = vpop.f32.mrb[0].mxu0
    %v2396 = vadd.f32 0.0, %v2395
    %v2397 = vpop.f32.mrb[0].mxu0
    %v2398 = vadd.f32 0.0, %v2397
    %v2399 = vpop.f32.mrb[0].mxu0
    %v2400 = vadd.f32 0.0, %v2399
    %2401 = vmatprep.mubr.bf16.mxu0 0
    %2402 = vmatmul.mubr.bf16.gmra.mrb[0].mxu0 %v2347
    %v2403 = vpop.f32.mrb[0].mxu0
    %v2404 = vadd.f32 0.0, %v2403
    %v2405 = vpop.f32.mrb[0].mxu0
    %v2406 = vadd.f32 0.0, %v2405
    %v2407 = vpop.f32.mrb[0].mxu0
    %v2408 = vpop.f32.mrb[0].mxu0
    %2409 = vdwg.mxu0
    %2410 = vmatprep.subr.bf16.mxu0 %v2068
    %2411 = vmatpush1.bf16.msra.mxu0 %v2067
    %2412 = vmatprep.subr.bf16.mxu0 %v2100
    %2413 = vmatpush1.bf16.msra.mxu0 %v2099
    %2414 = vmatprep.subr.bf16.mxu0 0
    %2415 = vmatpush1.bf16.msra.mxu0 0
    %2416 = vmatprep.subr.bf16.mxu0 0
    %2417 = vmatpush1.bf16.msra.mxu0 0
    %2418 = vmatprep.subr.bf16.mxu0 0
    %2419 = vmatpush1.bf16.msra.mxu0 0
    %2420 = vmatprep.subr.bf16.mxu0 0
    %2421 = vmatpush1.bf16.msra.mxu0 0
    %2422 = vmatprep.subr.bf16.mxu0 0
    %2423 = vmatpush1.bf16.msra.mxu0 0
    %2424 = vmatprep.subr.bf16.mxu0 0
    %2425 = vmatpush1.bf16.msra.mxu0 0
    %2426 = vmatprep.subr.bf16.mxu0 0
    %2427 = vmatpush1.bf16.msra.mxu0 0
    %2428 = vmatprep.subr.bf16.mxu0 0
    %2429 = vmatpush1.bf16.msra.mxu0 0
    %2430 = vmatprep.subr.bf16.mxu0 0
    %2431 = vmatpush1.bf16.msra.mxu0 0
    %2432 = vmatprep.subr.bf16.mxu0 0
    %2433 = vmatpush1.bf16.msra.mxu0 0
    %2434 = vmatprep.subr.bf16.mxu0 0
    %2435 = vmatpush1.bf16.msra.mxu0 0
    %2436 = vmatprep.subr.bf16.mxu0 0
    %2437 = vmatpush1.bf16.msra.mxu0 0
    %2438 = vmatprep.subr.bf16.mxu0 0
    %2439 = vmatpush1.bf16.msra.mxu0 0
    %2440 = vmatprep.subr.bf16.mxu0 0
    %2441 = vmatpush1.bf16.msra.mxu0 0
    %2442 = vmatprep.mubr.bf16.mxu0 0
    %2443 = vmatmul.mubr.bf16.gmra.mrb[0].mxu0 %v2341
    %v2444 = vpop.f32.mrb[0].mxu0
    %v2445 = vadd.f32 0.0, %v2444
    %v2446 = vpop.f32.mrb[0].mxu0
    %v2447 = vadd.f32 0.0, %v2446
    %v2448 = vpop.f32.mrb[0].mxu0
    %v2449 = vadd.f32 0.0, %v2448
    %v2450 = vpop.f32.mrb[0].mxu0
    %v2451 = vadd.f32 0.0, %v2450
    %2452 = vmatprep.mubr.bf16.mxu0 0
    %2453 = vmatmul.mubr.bf16.gmra.mrb[0].mxu0 %v2344
    %v2454 = vpop.f32.mrb[0].mxu0
    %v2455 = vadd.f32 0.0, %v2454
    %v2456 = vpop.f32.mrb[0].mxu0
    %v2457 = vadd.f32 0.0, %v2456
    %v2458 = vpop.f32.mrb[0].mxu0
    %v2459 = vadd.f32 0.0, %v2458
    %v2460 = vpop.f32.mrb[0].mxu0
    %v2461 = vadd.f32 0.0, %v2460
    %2462 = vmatprep.mubr.bf16.mxu0 0
    %2463 = vmatmul.mubr.bf16.gmra.mrb[0].mxu0 %v2347
    %v2464 = vpop.f32.mrb[0].mxu0
    %v2465 = vadd.f32 0.0, %v2464
    %v2466 = vpop.f32.mrb[0].mxu0
    %v2467 = vadd.f32 0.0, %v2466
    %v2468 = vpop.f32.mrb[0].mxu0
    %v2469 = vpop.f32.mrb[0].mxu0
    %2470 = vdwg.mxu0
    %2471 = vmatprep.subr.bf16.mxu0 %v2070
    %2472 = vmatpush1.bf16.msra.mxu0 %v2069
    %2473 = vmatprep.subr.bf16.mxu0 %v2102
    %2474 = vmatpush1.bf16.msra.mxu0 %v2101
    %2475 = vmatprep.subr.bf16.mxu0 0
    %2476 = vmatpush1.bf16.msra.mxu0 0
    %2477 = vmatprep.subr.bf16.mxu0 0
    %2478 = vmatpush1.bf16.msra.mxu0 0
    %2479 = vmatprep.subr.bf16.mxu0 0
    %2480 = vmatpush1.bf16.msra.mxu0 0
    %2481 = vmatprep.subr.bf16.mxu0 0
    %2482 = vmatpush1.bf16.msra.mxu0 0
    %2483 = vmatprep.subr.bf16.mxu0 0
    %2484 = vmatpush1.bf16.msra.mxu0 0
    %2485 = vmatprep.subr.bf16.mxu0 0
    %2486 = vmatpush1.bf16.msra.mxu0 0
    %2487 = vmatprep.subr.bf16.mxu0 0
    %2488 = vmatpush1.bf16.msra.mxu0 0
    %2489 = vmatprep.subr.bf16.mxu0 0
    %2490 = vmatpush1.bf16.msra.mxu0 0
    %2491 = vmatprep.subr.bf16.mxu0 0
    %2492 = vmatpush1.bf16.msra.mxu0 0
    %2493 = vmatprep.subr.bf16.mxu0 0
    %2494 = vmatpush1.bf16.msra.mxu0 0
    %2495 = vmatprep.subr.bf16.mxu0 0
    %2496 = vmatpush1.bf16.msra.mxu0 0
    %2497 = vmatprep.subr.bf16.mxu0 0
    %2498 = vmatpush1.bf16.msra.mxu0 0
    %2499 = vmatprep.subr.bf16.mxu0 0
    %2500 = vmatpush1.bf16.msra.mxu0 0
    %2501 = vmatprep.subr.bf16.mxu0 0
    %2502 = vmatpush1.bf16.msra.mxu0 0
    %2503 = vmatprep.mubr.bf16.mxu0 0
    %2504 = vmatmul.mubr.bf16.gmra.mrb[0].mxu0 %v2341
    %v2505 = vpop.f32.mrb[0].mxu0
    %v2506 = vadd.f32 0.0, %v2505
    %v2507 = vpop.f32.mrb[0].mxu0
    %v2508 = vadd.f32 0.0, %v2507
    %v2509 = vpop.f32.mrb[0].mxu0
    %v2510 = vadd.f32 0.0, %v2509
    %v2511 = vpop.f32.mrb[0].mxu0
    %v2512 = vadd.f32 0.0, %v2511
    %2513 = vmatprep.mubr.bf16.mxu0 0
    %2514 = vmatmul.mubr.bf16.gmra.mrb[0].mxu0 %v2344
    %v2515 = vpop.f32.mrb[0].mxu0
    %v2516 = vadd.f32 0.0, %v2515
    %v2517 = vpop.f32.mrb[0].mxu0
    %v2518 = vadd.f32 0.0, %v2517
    %v2519 = vpop.f32.mrb[0].mxu0
    %v2520 = vadd.f32 0.0, %v2519
    %v2521 = vpop.f32.mrb[0].mxu0
    %v2522 = vadd.f32 0.0, %v2521
    %2523 = vmatprep.mubr.bf16.mxu0 0
    %2524 = vmatmul.mubr.bf16.gmra.mrb[0].mxu0 %v2347
    %v2525 = vpop.f32.mrb[0].mxu0
    %v2526 = vadd.f32 0.0, %v2525
    %v2527 = vpop.f32.mrb[0].mxu0
    %v2528 = vadd.f32 0.0, %v2527
    %v2529 = vpop.f32.mrb[0].mxu0
    %v2530 = vpop.f32.mrb[0].mxu0
    %2531 = vdwg.mxu0
    %2532 = vmatprep.subr.bf16.mxu0 %v2072
    %2533 = vmatpush1.bf16.msra.mxu0 %v2071
    %2534 = vmatprep.subr.bf16.mxu0 %v2104
    %2535 = vmatpush1.bf16.msra.mxu0 %v2103
    %2536 = vmatprep.subr.bf16.mxu0 0
    %2537 = vmatpush1.bf16.msra.mxu0 0
    %2538 = vmatprep.subr.bf16.mxu0 0
    %2539 = vmatpush1.bf16.msra.mxu0 0
    %2540 = vmatprep.subr.bf16.mxu0 0
    %2541 = vmatpush1.bf16.msra.mxu0 0
    %2542 = vmatprep.subr.bf16.mxu0 0
    %2543 = vmatpush1.bf16.msra.mxu0 0
    %2544 = vmatprep.subr.bf16.mxu0 0
    %2545 = vmatpush1.bf16.msra.mxu0 0
    %2546 = vmatprep.subr.bf16.mxu0 0
    %2547 = vmatpush1.bf16.msra.mxu0 0
    %2548 = vmatprep.subr.bf16.mxu0 0
    %2549 = vmatpush1.bf16.msra.mxu0 0
    %2550 = vmatprep.subr.bf16.mxu0 0
    %2551 = vmatpush1.bf16.msra.mxu0 0
    %2552 = vmatprep.subr.bf16.mxu0 0
    %2553 = vmatpush1.bf16.msra.mxu0 0
    %2554 = vmatprep.subr.bf16.mxu0 0
    %2555 = vmatpush1.bf16.msra.mxu0 0
    %2556 = vmatprep.subr.bf16.mxu0 0
    %2557 = vmatpush1.bf16.msra.mxu0 0
    %2558 = vmatprep.subr.bf16.mxu0 0
    %2559 = vmatpush1.bf16.msra.mxu0 0
    %2560 = vmatprep.subr.bf16.mxu0 0
    %2561 = vmatpush1.bf16.msra.mxu0 0
    %2562 = vmatprep.subr.bf16.mxu0 0
    %2563 = vmatpush1.bf16.msra.mxu0 0
    %2564 = vmatprep.mubr.bf16.mxu0 0
    %2565 = vmatmul.mubr.bf16.gmra.mrb[0].mxu0 %v2341
    %v2566 = vpop.f32.mrb[0].mxu0
    %v2567 = vadd.f32 0.0, %v2566
    %v2568 = vpop.f32.mrb[0].mxu0
    %v2569 = vadd.f32 0.0, %v2568
    %v2570 = vpop.f32.mrb[0].mxu0
    %v2571 = vadd.f32 0.0, %v2570
    %v2572 = vpop.f32.mrb[0].mxu0
    %v2573 = vadd.f32 0.0, %v2572
    %2574 = vmatprep.mubr.bf16.mxu0 0
    %2575 = vmatmul.mubr.bf16.gmra.mrb[0].mxu0 %v2344
    %v2576 = vpop.f32.mrb[0].mxu0
    %v2577 = vadd.f32 0.0, %v2576
    %v2578 = vpop.f32.mrb[0].mxu0
    %v2579 = vadd.f32 0.0, %v2578
    %v2580 = vpop.f32.mrb[0].mxu0
    %v2581 = vadd.f32 0.0, %v2580
    %v2582 = vpop.f32.mrb[0].mxu0
    %v2583 = vadd.f32 0.0, %v2582
    %2584 = vmatprep.mubr.bf16.mxu0 0
    %2585 = vmatmul.mubr.bf16.gmra.mrb[0].mxu0 %v2347
    %v2586 = vpop.f32.mrb[0].mxu0
    %v2587 = vadd.f32 0.0, %v2586
    %v2588 = vpop.f32.mrb[0].mxu0
    %v2589 = vadd.f32 0.0, %v2588
    %v2590 = vpop.f32.mrb[0].mxu0
    %v2591 = vpop.f32.mrb[0].mxu0
    %2592 = vdwg.mxu0
    %2593 = vmatprep.subr.bf16.mxu0 %v2074
    %2594 = vmatpush1.bf16.msra.mxu0 %v2073
    %2595 = vmatprep.subr.bf16.mxu0 %v2106
    %2596 = vmatpush1.bf16.msra.mxu0 %v2105
    %2597 = vmatprep.subr.bf16.mxu0 0
    %2598 = vmatpush1.bf16.msra.mxu0 0
    %2599 = vmatprep.subr.bf16.mxu0 0
    %2600 = vmatpush1.bf16.msra.mxu0 0
    %2601 = vmatprep.subr.bf16.mxu0 0
    %2602 = vmatpush1.bf16.msra.mxu0 0
    %2603 = vmatprep.subr.bf16.mxu0 0
    %2604 = vmatpush1.bf16.msra.mxu0 0
    %2605 = vmatprep.subr.bf16.mxu0 0
    %2606 = vmatpush1.bf16.msra.mxu0 0
    %2607 = vmatprep.subr.bf16.mxu0 0
    %2608 = vmatpush1.bf16.msra.mxu0 0
    %2609 = vmatprep.subr.bf16.mxu0 0
    %2610 = vmatpush1.bf16.msra.mxu0 0
    %2611 = vmatprep.subr.bf16.mxu0 0
    %2612 = vmatpush1.bf16.msra.mxu0 0
    %2613 = vmatprep.subr.bf16.mxu0 0
    %2614 = vmatpush1.bf16.msra.mxu0 0
    %2615 = vmatprep.subr.bf16.mxu0 0
    %2616 = vmatpush1.bf16.msra.mxu0 0
    %2617 = vmatprep.subr.bf16.mxu0 0
    %2618 = vmatpush1.bf16.msra.mxu0 0
    %2619 = vmatprep.subr.bf16.mxu0 0
    %2620 = vmatpush1.bf16.msra.mxu0 0
    %2621 = vmatprep.subr.bf16.mxu0 0
    %2622 = vmatpush1.bf16.msra.mxu0 0
    %2623 = vmatprep.subr.bf16.mxu0 0
    %2624 = vmatpush1.bf16.msra.mxu0 0
    %2625 = vmatprep.mubr.bf16.mxu0 0
    %2626 = vmatmul.mubr.bf16.gmra.mrb[0].mxu0 %v2341
    %v2627 = vpop.f32.mrb[0].mxu0
    %v2628 = vadd.f32 0.0, %v2627
    %v2629 = vpop.f32.mrb[0].mxu0
    %v2630 = vadd.f32 0.0, %v2629
    %v2631 = vpop.f32.mrb[0].mxu0
    %v2632 = vadd.f32 0.0, %v2631
    %v2633 = vpop.f32.mrb[0].mxu0
    %v2634 = vadd.f32 0.0, %v2633
    %2635 = vmatprep.mubr.bf16.mxu0 0
    %2636 = vmatmul.mubr.bf16.gmra.mrb[0].mxu0 %v2344
    %v2637 = vpop.f32.mrb[0].mxu0
    %v2638 = vadd.f32 0.0, %v2637
    %v2639 = vpop.f32.mrb[0].mxu0
    %v2640 = vadd.f32 0.0, %v2639
    %v2641 = vpop.f32.mrb[0].mxu0
    %v2642 = vadd.f32 0.0, %v2641
    %v2643 = vpop.f32.mrb[0].mxu0
    %v2644 = vadd.f32 0.0, %v2643
    %2645 = vmatprep.mubr.bf16.mxu0 0
    %2646 = vmatmul.mubr.bf16.gmra.mrb[0].mxu0 %v2347
    %v2647 = vpop.f32.mrb[0].mxu0
    %v2648 = vadd.f32 0.0, %v2647
    %v2649 = vpop.f32.mrb[0].mxu0
    %v2650 = vadd.f32 0.0, %v2649
    %v2651 = vpop.f32.mrb[0].mxu0
    %v2652 = vpop.f32.mrb[0].mxu0
    %2653 = vdwg.mxu0
    %2654 = vmatprep.subr.bf16.mxu0 %v2076
    %2655 = vmatpush1.bf16.msra.mxu0 %v2075
    %2656 = vmatprep.subr.bf16.mxu0 %v2108
    %2657 = vmatpush1.bf16.msra.mxu0 %v2107
    %2658 = vmatprep.subr.bf16.mxu0 0
    %2659 = vmatpush1.bf16.msra.mxu0 0
    %2660 = vmatprep.subr.bf16.mxu0 0
    %2661 = vmatpush1.bf16.msra.mxu0 0
    %2662 = vmatprep.subr.bf16.mxu0 0
    %2663 = vmatpush1.bf16.msra.mxu0 0
    %2664 = vmatprep.subr.bf16.mxu0 0
    %2665 = vmatpush1.bf16.msra.mxu0 0
    %2666 = vmatprep.subr.bf16.mxu0 0
    %2667 = vmatpush1.bf16.msra.mxu0 0
    %2668 = vmatprep.subr.bf16.mxu0 0
    %2669 = vmatpush1.bf16.msra.mxu0 0
    %2670 = vmatprep.subr.bf16.mxu0 0
    %2671 = vmatpush1.bf16.msra.mxu0 0
    %2672 = vmatprep.subr.bf16.mxu0 0
    %2673 = vmatpush1.bf16.msra.mxu0 0
    %2674 = vmatprep.subr.bf16.mxu0 0
    %2675 = vmatpush1.bf16.msra.mxu0 0
    %2676 = vmatprep.subr.bf16.mxu0 0
    %2677 = vmatpush1.bf16.msra.mxu0 0
    %2678 = vmatprep.subr.bf16.mxu0 0
    %2679 = vmatpush1.bf16.msra.mxu0 0
    %2680 = vmatprep.subr.bf16.mxu0 0
    %2681 = vmatpush1.bf16.msra.mxu0 0
    %2682 = vmatprep.subr.bf16.mxu0 0
    %2683 = vmatpush1.bf16.msra.mxu0 0
    %2684 = vmatprep.subr.bf16.mxu0 0
    %2685 = vmatpush1.bf16.msra.mxu0 0
    %2686 = vmatprep.mubr.bf16.mxu0 0
    %2687 = vmatmul.mubr.bf16.gmra.mrb[0].mxu0 %v2341
    %v2688 = vpop.f32.mrb[0].mxu0
    %v2689 = vadd.f32 0.0, %v2688
    %v2690 = vpop.f32.mrb[0].mxu0
    %v2691 = vadd.f32 0.0, %v2690
    %v2692 = vpop.f32.mrb[0].mxu0
    %v2693 = vadd.f32 0.0, %v2692
    %v2694 = vpop.f32.mrb[0].mxu0
    %v2695 = vadd.f32 0.0, %v2694
    %2696 = vmatprep.mubr.bf16.mxu0 0
    %2697 = vmatmul.mubr.bf16.gmra.mrb[0].mxu0 %v2344
    %v2698 = vpop.f32.mrb[0].mxu0
    %v2699 = vadd.f32 0.0, %v2698
    %v2700 = vpop.f32.mrb[0].mxu0
    %v2701 = vadd.f32 0.0, %v2700
    %v2702 = vpop.f32.mrb[0].mxu0
    %v2703 = vadd.f32 0.0, %v2702
    %v2704 = vpop.f32.mrb[0].mxu0
    %v2705 = vadd.f32 0.0, %v2704
    %2706 = vmatprep.mubr.bf16.mxu0 0
    %2707 = vmatmul.mubr.bf16.gmra.mrb[0].mxu0 %v2347
    %v2708 = vpop.f32.mrb[0].mxu0
    %v2709 = vadd.f32 0.0, %v2708
    %v2710 = vpop.f32.mrb[0].mxu0
    %v2711 = vadd.f32 0.0, %v2710
    %v2712 = vpop.f32.mrb[0].mxu0
    %v2713 = vpop.f32.mrb[0].mxu0
    %2714 = vdwg.mxu0
    %2715 = vmatprep.subr.bf16.mxu0 %v2078
    %2716 = vmatpush1.bf16.msra.mxu0 %v2077
    %2717 = vmatprep.subr.bf16.mxu0 %v2110
    %2718 = vmatpush1.bf16.msra.mxu0 %v2109
    %2719 = vmatprep.subr.bf16.mxu0 0
    %2720 = vmatpush1.bf16.msra.mxu0 0
    %2721 = vmatprep.subr.bf16.mxu0 0
    %2722 = vmatpush1.bf16.msra.mxu0 0
    %2723 = vmatprep.subr.bf16.mxu0 0
    %2724 = vmatpush1.bf16.msra.mxu0 0
    %2725 = vmatprep.subr.bf16.mxu0 0
    %2726 = vmatpush1.bf16.msra.mxu0 0
    %2727 = vmatprep.subr.bf16.mxu0 0
    %2728 = vmatpush1.bf16.msra.mxu0 0
    %2729 = vmatprep.subr.bf16.mxu0 0
    %2730 = vmatpush1.bf16.msra.mxu0 0
    %2731 = vmatprep.subr.bf16.mxu0 0
    %2732 = vmatpush1.bf16.msra.mxu0 0
    %2733 = vmatprep.subr.bf16.mxu0 0
    %2734 = vmatpush1.bf16.msra.mxu0 0
    %2735 = vmatprep.subr.bf16.mxu0 0
    %2736 = vmatpush1.bf16.msra.mxu0 0
    %2737 = vmatprep.subr.bf16.mxu0 0
    %2738 = vmatpush1.bf16.msra.mxu0 0
    %2739 = vmatprep.subr.bf16.mxu0 0
    %2740 = vmatpush1.bf16.msra.mxu0 0
    %2741 = vmatprep.subr.bf16.mxu0 0
    %2742 = vmatpush1.bf16.msra.mxu0 0
    %2743 = vmatprep.subr.bf16.mxu0 0
    %2744 = vmatpush1.bf16.msra.mxu0 0
    %2745 = vmatprep.subr.bf16.mxu0 0
    %2746 = vmatpush1.bf16.msra.mxu0 0
    %2747 = vmatprep.mubr.bf16.mxu0 0
    %2748 = vmatmul.mubr.bf16.gmra.mrb[0].mxu0 %v2341
    %v2749 = vpop.f32.mrb[0].mxu0
    %v2750 = vadd.f32 0.0, %v2749
    %v2751 = vpop.f32.mrb[0].mxu0
    %v2752 = vadd.f32 0.0, %v2751
    %v2753 = vpop.f32.mrb[0].mxu0
    %v2754 = vadd.f32 0.0, %v2753
    %v2755 = vpop.f32.mrb[0].mxu0
    %v2756 = vadd.f32 0.0, %v2755
    %2757 = vmatprep.mubr.bf16.mxu0 0
    %2758 = vmatmul.mubr.bf16.gmra.mrb[0].mxu0 %v2344
    %v2759 = vpop.f32.mrb[0].mxu0
    %v2760 = vadd.f32 0.0, %v2759
    %v2761 = vpop.f32.mrb[0].mxu0
    %v2762 = vadd.f32 0.0, %v2761
    %v2763 = vpop.f32.mrb[0].mxu0
    %v2764 = vadd.f32 0.0, %v2763
    %v2765 = vpop.f32.mrb[0].mxu0
    %v2766 = vadd.f32 0.0, %v2765
    %2767 = vmatprep.mubr.bf16.mxu0 0
    %2768 = vmatmul.mubr.bf16.gmra.mrb[0].mxu0 %v2347
    %v2769 = vpop.f32.mrb[0].mxu0
    %v2770 = vadd.f32 0.0, %v2769
    %v2771 = vpop.f32.mrb[0].mxu0
    %v2772 = vadd.f32 0.0, %v2771
    %v2773 = vpop.f32.mrb[0].mxu0
    %v2774 = vpop.f32.mrb[0].mxu0
    %2775 = vdwg.mxu0
    %2776 = vmatprep.subr.bf16.mxu0 %v2080
    %2777 = vmatpush1.bf16.msra.mxu0 %v2079
    %2778 = vmatprep.subr.bf16.mxu0 %v2112
    %2779 = vmatpush1.bf16.msra.mxu0 %v2111
    %2780 = vmatprep.subr.bf16.mxu0 0
    %2781 = vmatpush1.bf16.msra.mxu0 0
    %2782 = vmatprep.subr.bf16.mxu0 0
    %2783 = vmatpush1.bf16.msra.mxu0 0
    %2784 = vmatprep.subr.bf16.mxu0 0
    %2785 = vmatpush1.bf16.msra.mxu0 0
    %2786 = vmatprep.subr.bf16.mxu0 0
    %2787 = vmatpush1.bf16.msra.mxu0 0
    %2788 = vmatprep.subr.bf16.mxu0 0
    %2789 = vmatpush1.bf16.msra.mxu0 0
    %2790 = vmatprep.subr.bf16.mxu0 0
    %2791 = vmatpush1.bf16.msra.mxu0 0
    %2792 = vmatprep.subr.bf16.mxu0 0
    %2793 = vmatpush1.bf16.msra.mxu0 0
    %2794 = vmatprep.subr.bf16.mxu0 0
    %2795 = vmatpush1.bf16.msra.mxu0 0
    %2796 = vmatprep.subr.bf16.mxu0 0
    %2797 = vmatpush1.bf16.msra.mxu0 0
    %2798 = vmatprep.subr.bf16.mxu0 0
    %2799 = vmatpush1.bf16.msra.mxu0 0
    %2800 = vmatprep.subr.bf16.mxu0 0
    %2801 = vmatpush1.bf16.msra.mxu0 0
    %2802 = vmatprep.subr.bf16.mxu0 0
    %2803 = vmatpush1.bf16.msra.mxu0 0
    %2804 = vmatprep.subr.bf16.mxu0 0
    %2805 = vmatpush1.bf16.msra.mxu0 0
    %2806 = vmatprep.subr.bf16.mxu0 0
    %2807 = vmatpush1.bf16.msra.mxu0 0
    %2808 = vmatprep.mubr.bf16.mxu0 0
    %2809 = vmatmul.mubr.bf16.gmra.mrb[0].mxu0 %v2341
    %v2810 = vpop.f32.mrb[0].mxu0
    %v2811 = vadd.f32 0.0, %v2810
    %v2812 = vpop.f32.mrb[0].mxu0
    %v2813 = vadd.f32 0.0, %v2812
    %v2814 = vpop.f32.mrb[0].mxu0
    %v2815 = vadd.f32 0.0, %v2814
    %v2816 = vpop.f32.mrb[0].mxu0
    %v2817 = vadd.f32 0.0, %v2816
    %2818 = vmatprep.mubr.bf16.mxu0 0
    %2819 = vmatmul.mubr.bf16.gmra.mrb[0].mxu0 %v2344
    %v2820 = vpop.f32.mrb[0].mxu0
    %v2821 = vadd.f32 0.0, %v2820
    %v2822 = vpop.f32.mrb[0].mxu0
    %v2823 = vadd.f32 0.0, %v2822
    %v2824 = vpop.f32.mrb[0].mxu0
    %v2825 = vadd.f32 0.0, %v2824
    %v2826 = vpop.f32.mrb[0].mxu0
    %v2827 = vadd.f32 0.0, %v2826
    %2828 = vmatprep.mubr.bf16.mxu0 0
    %2829 = vmatmul.mubr.bf16.gmra.mrb[0].mxu0 %v2347
    %v2830 = vpop.f32.mrb[0].mxu0
    %v2831 = vadd.f32 0.0, %v2830
    %v2832 = vpop.f32.mrb[0].mxu0
    %v2833 = vadd.f32 0.0, %v2832
    %v2834 = vpop.f32.mrb[0].mxu0
    %v2835 = vpop.f32.mrb[0].mxu0
    %2836 = vdwg.mxu0
    %2837 = vmatprep.subr.bf16.mxu0 %v2082
    %2838 = vmatpush1.bf16.msra.mxu0 %v2081
    %2839 = vmatprep.subr.bf16.mxu0 %v2114
    %2840 = vmatpush1.bf16.msra.mxu0 %v2113
    %2841 = vmatprep.subr.bf16.mxu0 0
    %2842 = vmatpush1.bf16.msra.mxu0 0
    %2843 = vmatprep.subr.bf16.mxu0 0
    %2844 = vmatpush1.bf16.msra.mxu0 0
    %2845 = vmatprep.subr.bf16.mxu0 0
    %2846 = vmatpush1.bf16.msra.mxu0 0
    %2847 = vmatprep.subr.bf16.mxu0 0
    %2848 = vmatpush1.bf16.msra.mxu0 0
    %2849 = vmatprep.subr.bf16.mxu0 0
    %2850 = vmatpush1.bf16.msra.mxu0 0
    %2851 = vmatprep.subr.bf16.mxu0 0
    %2852 = vmatpush1.bf16.msra.mxu0 0
    %2853 = vmatprep.subr.bf16.mxu0 0
    %2854 = vmatpush1.bf16.msra.mxu0 0
    %2855 = vmatprep.subr.bf16.mxu0 0
    %2856 = vmatpush1.bf16.msra.mxu0 0
    %2857 = vmatprep.subr.bf16.mxu0 0
    %2858 = vmatpush1.bf16.msra.mxu0 0
    %2859 = vmatprep.subr.bf16.mxu0 0
    %2860 = vmatpush1.bf16.msra.mxu0 0
    %2861 = vmatprep.subr.bf16.mxu0 0
    %2862 = vmatpush1.bf16.msra.mxu0 0
    %2863 = vmatprep.subr.bf16.mxu0 0
    %2864 = vmatpush1.bf16.msra.mxu0 0
    %2865 = vmatprep.subr.bf16.mxu0 0
    %2866 = vmatpush1.bf16.msra.mxu0 0
    %2867 = vmatprep.subr.bf16.mxu0 0
    %2868 = vmatpush1.bf16.msra.mxu0 0
    %2869 = vmatprep.mubr.bf16.mxu0 0
    %2870 = vmatmul.mubr.bf16.gmra.mrb[0].mxu0 %v2341
    %v2871 = vpop.f32.mrb[0].mxu0
    %v2872 = vadd.f32 0.0, %v2871
    %v2873 = vpop.f32.mrb[0].mxu0
    %v2874 = vadd.f32 0.0, %v2873
    %v2875 = vpop.f32.mrb[0].mxu0
    %v2876 = vadd.f32 0.0, %v2875
    %v2877 = vpop.f32.mrb[0].mxu0
    %v2878 = vadd.f32 0.0, %v2877
    %2879 = vmatprep.mubr.bf16.mxu0 0
    %2880 = vmatmul.mubr.bf16.gmra.mrb[0].mxu0 %v2344
    %v2881 = vpop.f32.mrb[0].mxu0
    %v2882 = vadd.f32 0.0, %v2881
    %v2883 = vpop.f32.mrb[0].mxu0
    %v2884 = vadd.f32 0.0, %v2883
    %v2885 = vpop.f32.mrb[0].mxu0
    %v2886 = vadd.f32 0.0, %v2885
    %v2887 = vpop.f32.mrb[0].mxu0
    %v2888 = vadd.f32 0.0, %v2887
    %2889 = vmatprep.mubr.bf16.mxu0 0
    %2890 = vmatmul.mubr.bf16.gmra.mrb[0].mxu0 %v2347
    %v2891 = vpop.f32.mrb[0].mxu0
    %v2892 = vadd.f32 0.0, %v2891
    %v2893 = vpop.f32.mrb[0].mxu0
    %v2894 = vadd.f32 0.0, %v2893
    %v2895 = vpop.f32.mrb[0].mxu0
    %v2896 = vpop.f32.mrb[0].mxu0
    %2897 = vdwg.mxu0
    %2898 = vmatprep.subr.bf16.mxu0 %v2084
    %2899 = vmatpush1.bf16.msra.mxu0 %v2083
    %2900 = vmatprep.subr.bf16.mxu0 %v2116
    %2901 = vmatpush1.bf16.msra.mxu0 %v2115
    %2902 = vmatprep.subr.bf16.mxu0 0
    %2903 = vmatpush1.bf16.msra.mxu0 0
    %2904 = vmatprep.subr.bf16.mxu0 0
    %2905 = vmatpush1.bf16.msra.mxu0 0
    %2906 = vmatprep.subr.bf16.mxu0 0
    %2907 = vmatpush1.bf16.msra.mxu0 0
    %2908 = vmatprep.subr.bf16.mxu0 0
    %2909 = vmatpush1.bf16.msra.mxu0 0
    %2910 = vmatprep.subr.bf16.mxu0 0
    %2911 = vmatpush1.bf16.msra.mxu0 0
    %2912 = vmatprep.subr.bf16.mxu0 0
    %2913 = vmatpush1.bf16.msra.mxu0 0
    %2914 = vmatprep.subr.bf16.mxu0 0
    %2915 = vmatpush1.bf16.msra.mxu0 0
    %2916 = vmatprep.subr.bf16.mxu0 0
    %2917 = vmatpush1.bf16.msra.mxu0 0
    %2918 = vmatprep.subr.bf16.mxu0 0
    %2919 = vmatpush1.bf16.msra.mxu0 0
    %2920 = vmatprep.subr.bf16.mxu0 0
    %2921 = vmatpush1.bf16.msra.mxu0 0
    %2922 = vmatprep.subr.bf16.mxu0 0
    %2923 = vmatpush1.bf16.msra.mxu0 0
    %2924 = vmatprep.subr.bf16.mxu0 0
    %2925 = vmatpush1.bf16.msra.mxu0 0
    %2926 = vmatprep.subr.bf16.mxu0 0
    %2927 = vmatpush1.bf16.msra.mxu0 0
    %2928 = vmatprep.subr.bf16.mxu0 0
    %2929 = vmatpush1.bf16.msra.mxu0 0
    %2930 = vmatprep.mubr.bf16.mxu0 0
    %2931 = vmatmul.mubr.bf16.gmra.mrb[0].mxu0 %v2341
    %v2932 = vpop.f32.mrb[0].mxu0
    %v2933 = vadd.f32 0.0, %v2932
    %v2934 = vpop.f32.mrb[0].mxu0
    %v2935 = vadd.f32 0.0, %v2934
    %v2936 = vpop.f32.mrb[0].mxu0
    %v2937 = vadd.f32 0.0, %v2936
    %v2938 = vpop.f32.mrb[0].mxu0
    %v2939 = vadd.f32 0.0, %v2938
    %2940 = vmatprep.mubr.bf16.mxu0 0
    %2941 = vmatmul.mubr.bf16.gmra.mrb[0].mxu0 %v2344
    %v2942 = vpop.f32.mrb[0].mxu0
    %v2943 = vadd.f32 0.0, %v2942
    %v2944 = vpop.f32.mrb[0].mxu0
    %v2945 = vadd.f32 0.0, %v2944
    %v2946 = vpop.f32.mrb[0].mxu0
    %v2947 = vadd.f32 0.0, %v2946
    %v2948 = vpop.f32.mrb[0].mxu0
    %v2949 = vadd.f32 0.0, %v2948
    %2950 = vmatprep.mubr.bf16.mxu0 0
    %2951 = vmatmul.mubr.bf16.gmra.mrb[0].mxu0 %v2347
    %v2952 = vpop.f32.mrb[0].mxu0
    %v2953 = vadd.f32 0.0, %v2952
    %v2954 = vpop.f32.mrb[0].mxu0
    %v2955 = vadd.f32 0.0, %v2954
    %v2956 = vpop.f32.mrb[0].mxu0
    %v2957 = vpop.f32.mrb[0].mxu0
    %2958 = vdwg.mxu0
    %2959 = vmatprep.subr.bf16.mxu0 %v2086
    %2960 = vmatpush1.bf16.msra.mxu0 %v2085
    %2961 = vmatprep.subr.bf16.mxu0 %v2118
    %2962 = vmatpush1.bf16.msra.mxu0 %v2117
    %2963 = vmatprep.subr.bf16.mxu0 0
    %2964 = vmatpush1.bf16.msra.mxu0 0
    %2965 = vmatprep.subr.bf16.mxu0 0
    %2966 = vmatpush1.bf16.msra.mxu0 0
    %2967 = vmatprep.subr.bf16.mxu0 0
    %2968 = vmatpush1.bf16.msra.mxu0 0
    %2969 = vmatprep.subr.bf16.mxu0 0
    %2970 = vmatpush1.bf16.msra.mxu0 0
    %2971 = vmatprep.subr.bf16.mxu0 0
    %2972 = vmatpush1.bf16.msra.mxu0 0
    %2973 = vmatprep.subr.bf16.mxu0 0
    %2974 = vmatpush1.bf16.msra.mxu0 0
    %2975 = vmatprep.subr.bf16.mxu0 0
    %2976 = vmatpush1.bf16.msra.mxu0 0
    %2977 = vmatprep.subr.bf16.mxu0 0
    %2978 = vmatpush1.bf16.msra.mxu0 0
    %2979 = vmatprep.subr.bf16.mxu0 0
    %2980 = vmatpush1.bf16.msra.mxu0 0
    %2981 = vmatprep.subr.bf16.mxu0 0
    %2982 = vmatpush1.bf16.msra.mxu0 0
    %2983 = vmatprep.subr.bf16.mxu0 0
    %2984 = vmatpush1.bf16.msra.mxu0 0
    %2985 = vmatprep.subr.bf16.mxu0 0
    %2986 = vmatpush1.bf16.msra.mxu0 0
    %2987 = vmatprep.subr.bf16.mxu0 0
    %2988 = vmatpush1.bf16.msra.mxu0 0
    %2989 = vmatprep.subr.bf16.mxu0 0
    %2990 = vmatpush1.bf16.msra.mxu0 0
    %2991 = vmatprep.mubr.bf16.mxu0 0
    %2992 = vmatmul.mubr.bf16.gmra.mrb[0].mxu0 %v2341
    %v2993 = vpop.f32.mrb[0].mxu0
    %v2994 = vadd.f32 0.0, %v2993
    %v2995 = vpop.f32.mrb[0].mxu0
    %v2996 = vadd.f32 0.0, %v2995
    %v2997 = vpop.f32.mrb[0].mxu0
    %v2998 = vadd.f32 0.0, %v2997
    %v2999 = vpop.f32.mrb[0].mxu0
    %v3000 = vadd.f32 0.0, %v2999
    %3001 = vmatprep.mubr.bf16.mxu0 0
    %3002 = vmatmul.mubr.bf16.gmra.mrb[0].mxu0 %v2344
    %v3003 = vpop.f32.mrb[0].mxu0
    %v3004 = vadd.f32 0.0, %v3003
    %v3005 = vpop.f32.mrb[0].mxu0
    %v3006 = vadd.f32 0.0, %v3005
    %v3007 = vpop.f32.mrb[0].mxu0
    %v3008 = vadd.f32 0.0, %v3007
    %v3009 = vpop.f32.mrb[0].mxu0
    %v3010 = vadd.f32 0.0, %v3009
    %3011 = vmatprep.mubr.bf16.mxu0 0
    %3012 = vmatmul.mubr.bf16.gmra.mrb[0].mxu0 %v2347
    %v3013 = vpop.f32.mrb[0].mxu0
    %v3014 = vadd.f32 0.0, %v3013
    %v3015 = vpop.f32.mrb[0].mxu0
    %v3016 = vadd.f32 0.0, %v3015
    %v3017 = vpop.f32.mrb[0].mxu0
    %v3018 = vpop.f32.mrb[0].mxu0
    %3019 = vdwg.mxu0
    %3020 = vmatprep.subr.bf16.mxu0 %v2088
    %3021 = vmatpush1.bf16.msra.mxu0 %v2087
    %3022 = vmatprep.subr.bf16.mxu0 %v2120
    %3023 = vmatpush1.bf16.msra.mxu0 %v2119
    %3024 = vmatprep.subr.bf16.mxu0 0
    %3025 = vmatpush1.bf16.msra.mxu0 0
    %3026 = vmatprep.subr.bf16.mxu0 0
    %3027 = vmatpush1.bf16.msra.mxu0 0
    %3028 = vmatprep.subr.bf16.mxu0 0
    %3029 = vmatpush1.bf16.msra.mxu0 0
    %3030 = vmatprep.subr.bf16.mxu0 0
    %3031 = vmatpush1.bf16.msra.mxu0 0
    %3032 = vmatprep.subr.bf16.mxu0 0
    %3033 = vmatpush1.bf16.msra.mxu0 0
    %3034 = vmatprep.subr.bf16.mxu0 0
    %3035 = vmatpush1.bf16.msra.mxu0 0
    %3036 = vmatprep.subr.bf16.mxu0 0
    %3037 = vmatpush1.bf16.msra.mxu0 0
    %3038 = vmatprep.subr.bf16.mxu0 0
    %3039 = vmatpush1.bf16.msra.mxu0 0
    %3040 = vmatprep.subr.bf16.mxu0 0
    %3041 = vmatpush1.bf16.msra.mxu0 0
    %3042 = vmatprep.subr.bf16.mxu0 0
    %3043 = vmatpush1.bf16.msra.mxu0 0
    %3044 = vmatprep.subr.bf16.mxu0 0
    %3045 = vmatpush1.bf16.msra.mxu0 0
    %3046 = vmatprep.subr.bf16.mxu0 0
    %3047 = vmatpush1.bf16.msra.mxu0 0
    %3048 = vmatprep.subr.bf16.mxu0 0
    %3049 = vmatpush1.bf16.msra.mxu0 0
    %3050 = vmatprep.subr.bf16.mxu0 0
    %3051 = vmatpush1.bf16.msra.mxu0 0
    %3052 = vmatprep.mubr.bf16.mxu0 0
    %3053 = vmatmul.mubr.bf16.gmra.mrb[0].mxu0 %v2341
    %v3054 = vpop.f32.mrb[0].mxu0
    %v3055 = vadd.f32 0.0, %v3054
    %v3056 = vpop.f32.mrb[0].mxu0
    %v3057 = vadd.f32 0.0, %v3056
    %v3058 = vpop.f32.mrb[0].mxu0
    %v3059 = vadd.f32 0.0, %v3058
    %v3060 = vpop.f32.mrb[0].mxu0
    %v3061 = vadd.f32 0.0, %v3060
    %3062 = vmatprep.mubr.bf16.mxu0 0
    %3063 = vmatmul.mubr.bf16.gmra.mrb[0].mxu0 %v2344
    %v3064 = vpop.f32.mrb[0].mxu0
    %v3065 = vadd.f32 0.0, %v3064
    %v3066 = vpop.f32.mrb[0].mxu0
    %v3067 = vadd.f32 0.0, %v3066
    %v3068 = vpop.f32.mrb[0].mxu0
    %v3069 = vadd.f32 0.0, %v3068
    %v3070 = vpop.f32.mrb[0].mxu0
    %v3071 = vadd.f32 0.0, %v3070
    %3072 = vmatprep.mubr.bf16.mxu0 0
    %3073 = vmatmul.mubr.bf16.gmra.mrb[0].mxu0 %v2347
    %v3074 = vpop.f32.mrb[0].mxu0
    %v3075 = vadd.f32 0.0, %v3074
    %v3076 = vpop.f32.mrb[0].mxu0
    %v3077 = vadd.f32 0.0, %v3076
    %v3078 = vpop.f32.mrb[0].mxu0
    %v3079 = vpop.f32.mrb[0].mxu0
    %3080 = vdwg.mxu0
    %3081 = vmatprep.subr.bf16.mxu0 %v2090
    %3082 = vmatpush1.bf16.msra.mxu0 %v2089
    %3083 = vmatprep.subr.bf16.mxu0 %v2122
    %3084 = vmatpush1.bf16.msra.mxu0 %v2121
    %3085 = vmatprep.subr.bf16.mxu0 0
    %3086 = vmatpush1.bf16.msra.mxu0 0
    %3087 = vmatprep.subr.bf16.mxu0 0
    %3088 = vmatpush1.bf16.msra.mxu0 0
    %3089 = vmatprep.subr.bf16.mxu0 0
    %3090 = vmatpush1.bf16.msra.mxu0 0
    %3091 = vmatprep.subr.bf16.mxu0 0
    %3092 = vmatpush1.bf16.msra.mxu0 0
    %3093 = vmatprep.subr.bf16.mxu0 0
    %3094 = vmatpush1.bf16.msra.mxu0 0
    %3095 = vmatprep.subr.bf16.mxu0 0
    %3096 = vmatpush1.bf16.msra.mxu0 0
    %3097 = vmatprep.subr.bf16.mxu0 0
    %3098 = vmatpush1.bf16.msra.mxu0 0
    %3099 = vmatprep.subr.bf16.mxu0 0
    %3100 = vmatpush1.bf16.msra.mxu0 0
    %3101 = vmatprep.subr.bf16.mxu0 0
    %3102 = vmatpush1.bf16.msra.mxu0 0
    %3103 = vmatprep.subr.bf16.mxu0 0
    %3104 = vmatpush1.bf16.msra.mxu0 0
    %3105 = vmatprep.subr.bf16.mxu0 0
    %3106 = vmatpush1.bf16.msra.mxu0 0
    %3107 = vmatprep.subr.bf16.mxu0 0
    %3108 = vmatpush1.bf16.msra.mxu0 0
    %3109 = vmatprep.subr.bf16.mxu0 0
    %3110 = vmatpush1.bf16.msra.mxu0 0
    %3111 = vmatprep.subr.bf16.mxu0 0
    %3112 = vmatpush1.bf16.msra.mxu0 0
    %3113 = vmatprep.mubr.bf16.mxu0 0
    %3114 = vmatmul.mubr.bf16.gmra.mrb[0].mxu0 %v2341
    %v3115 = vpop.f32.mrb[0].mxu0
    %v3116 = vadd.f32 0.0, %v3115
    %v3117 = vpop.f32.mrb[0].mxu0
    %v3118 = vadd.f32 0.0, %v3117
    %v3119 = vpop.f32.mrb[0].mxu0
    %v3120 = vadd.f32 0.0, %v3119
    %v3121 = vpop.f32.mrb[0].mxu0
    %v3122 = vadd.f32 0.0, %v3121
    %3123 = vmatprep.mubr.bf16.mxu0 0
    %3124 = vmatmul.mubr.bf16.gmra.mrb[0].mxu0 %v2344
    %v3125 = vpop.f32.mrb[0].mxu0
    %v3126 = vadd.f32 0.0, %v3125
    %v3127 = vpop.f32.mrb[0].mxu0
    %v3128 = vadd.f32 0.0, %v3127
    %v3129 = vpop.f32.mrb[0].mxu0
    %v3130 = vadd.f32 0.0, %v3129
    %v3131 = vpop.f32.mrb[0].mxu0
    %v3132 = vadd.f32 0.0, %v3131
    %3133 = vmatprep.mubr.bf16.mxu0 0
    %3134 = vmatmul.mubr.bf16.gmra.mrb[0].mxu0 %v2347
    %v3135 = vpop.f32.mrb[0].mxu0
    %v3136 = vadd.f32 0.0, %v3135
    %v3137 = vpop.f32.mrb[0].mxu0
    %v3138 = vadd.f32 0.0, %v3137
    %v3139 = vpop.f32.mrb[0].mxu0
    %v3140 = vpop.f32.mrb[0].mxu0
    %3141 = vdwg.mxu0
    %3142 = vmatprep.subr.bf16.mxu0 %v2092
    %3143 = vmatpush1.bf16.msra.mxu0 %v2091
    %3144 = vmatprep.subr.bf16.mxu0 %v2124
    %3145 = vmatpush1.bf16.msra.mxu0 %v2123
    %3146 = vmatprep.subr.bf16.mxu0 0
    %3147 = vmatpush1.bf16.msra.mxu0 0
    %3148 = vmatprep.subr.bf16.mxu0 0
    %3149 = vmatpush1.bf16.msra.mxu0 0
    %3150 = vmatprep.subr.bf16.mxu0 0
    %3151 = vmatpush1.bf16.msra.mxu0 0
    %3152 = vmatprep.subr.bf16.mxu0 0
    %3153 = vmatpush1.bf16.msra.mxu0 0
    %3154 = vmatprep.subr.bf16.mxu0 0
    %3155 = vmatpush1.bf16.msra.mxu0 0
    %3156 = vmatprep.subr.bf16.mxu0 0
    %3157 = vmatpush1.bf16.msra.mxu0 0
    %3158 = vmatprep.subr.bf16.mxu0 0
    %3159 = vmatpush1.bf16.msra.mxu0 0
    %3160 = vmatprep.subr.bf16.mxu0 0
    %3161 = vmatpush1.bf16.msra.mxu0 0
    %3162 = vmatprep.subr.bf16.mxu0 0
    %3163 = vmatpush1.bf16.msra.mxu0 0
    %3164 = vmatprep.subr.bf16.mxu0 0
    %3165 = vmatpush1.bf16.msra.mxu0 0
    %3166 = vmatprep.subr.bf16.mxu0 0
    %3167 = vmatpush1.bf16.msra.mxu0 0
    %3168 = vmatprep.subr.bf16.mxu0 0
    %3169 = vmatpush1.bf16.msra.mxu0 0
    %3170 = vmatprep.subr.bf16.mxu0 0
    %3171 = vmatpush1.bf16.msra.mxu0 0
    %3172 = vmatprep.subr.bf16.mxu0 0
    %3173 = vmatpush1.bf16.msra.mxu0 0
    %3174 = vmatprep.mubr.bf16.mxu0 0
    %3175 = vmatmul.mubr.bf16.gmra.mrb[0].mxu0 %v2341
    %v3176 = vpop.f32.mrb[0].mxu0
    %v3177 = vadd.f32 0.0, %v3176
    %v3178 = vpop.f32.mrb[0].mxu0
    %v3179 = vadd.f32 0.0, %v3178
    %v3180 = vpop.f32.mrb[0].mxu0
    %v3181 = vadd.f32 0.0, %v3180
    %v3182 = vpop.f32.mrb[0].mxu0
    %v3183 = vadd.f32 0.0, %v3182
    %3184 = vmatprep.mubr.bf16.mxu0 0
    %3185 = vmatmul.mubr.bf16.gmra.mrb[0].mxu0 %v2344
    %v3186 = vpop.f32.mrb[0].mxu0
    %v3187 = vadd.f32 0.0, %v3186
    %v3188 = vpop.f32.mrb[0].mxu0
    %v3189 = vadd.f32 0.0, %v3188
    %v3190 = vpop.f32.mrb[0].mxu0
    %v3191 = vadd.f32 0.0, %v3190
    %v3192 = vpop.f32.mrb[0].mxu0
    %v3193 = vadd.f32 0.0, %v3192
    %3194 = vmatprep.mubr.bf16.mxu0 0
    %3195 = vmatmul.mubr.bf16.gmra.mrb[0].mxu0 %v2347
    %v3196 = vpop.f32.mrb[0].mxu0
    %v3197 = vadd.f32 0.0, %v3196
    %v3198 = vpop.f32.mrb[0].mxu0
    %v3199 = vadd.f32 0.0, %v3198
    %v3200 = vpop.f32.mrb[0].mxu0
    %v3201 = vpop.f32.mrb[0].mxu0
    %3202 = vdwg.mxu0
    %3203 = vmatprep.subr.bf16.mxu0 %v2094
    %3204 = vmatpush1.bf16.msra.mxu0 %v2093
    %3205 = vmatprep.subr.bf16.mxu0 %v2126
    %3206 = vmatpush1.bf16.msra.mxu0 %v2125
    %3207 = vmatprep.subr.bf16.mxu0 0
    %3208 = vmatpush1.bf16.msra.mxu0 0
    %3209 = vmatprep.subr.bf16.mxu0 0
    %3210 = vmatpush1.bf16.msra.mxu0 0
    %3211 = vmatprep.subr.bf16.mxu0 0
    %3212 = vmatpush1.bf16.msra.mxu0 0
    %3213 = vmatprep.subr.bf16.mxu0 0
    %3214 = vmatpush1.bf16.msra.mxu0 0
    %3215 = vmatprep.subr.bf16.mxu0 0
    %3216 = vmatpush1.bf16.msra.mxu0 0
    %3217 = vmatprep.subr.bf16.mxu0 0
    %3218 = vmatpush1.bf16.msra.mxu0 0
    %3219 = vmatprep.subr.bf16.mxu0 0
    %3220 = vmatpush1.bf16.msra.mxu0 0
    %3221 = vmatprep.subr.bf16.mxu0 0
    %3222 = vmatpush1.bf16.msra.mxu0 0
    %3223 = vmatprep.subr.bf16.mxu0 0
    %3224 = vmatpush1.bf16.msra.mxu0 0
    %3225 = vmatprep.subr.bf16.mxu0 0
    %3226 = vmatpush1.bf16.msra.mxu0 0
    %3227 = vmatprep.subr.bf16.mxu0 0
    %3228 = vmatpush1.bf16.msra.mxu0 0
    %3229 = vmatprep.subr.bf16.mxu0 0
    %3230 = vmatpush1.bf16.msra.mxu0 0
    %3231 = vmatprep.subr.bf16.mxu0 0
    %3232 = vmatpush1.bf16.msra.mxu0 0
    %3233 = vmatprep.subr.bf16.mxu0 0
    %3234 = vmatpush1.bf16.msra.mxu0 0
    %3235 = vmatprep.mubr.bf16.mxu0 0
    %3236 = vmatmul.mubr.bf16.gmra.mrb[0].mxu0 %v2341
    %v3237 = vpop.f32.mrb[0].mxu0
    %v3238 = vadd.f32 0.0, %v3237
    %v3239 = vpop.f32.mrb[0].mxu0
    %v3240 = vadd.f32 0.0, %v3239
    %v3241 = vpop.f32.mrb[0].mxu0
    %v3242 = vadd.f32 0.0, %v3241
    %v3243 = vpop.f32.mrb[0].mxu0
    %v3244 = vadd.f32 0.0, %v3243
    %3245 = vmatprep.mubr.bf16.mxu0 0
    %3246 = vmatmul.mubr.bf16.gmra.mrb[0].mxu0 %v2344
    %v3247 = vpop.f32.mrb[0].mxu0
    %v3248 = vadd.f32 0.0, %v3247
    %v3249 = vpop.f32.mrb[0].mxu0
    %v3250 = vadd.f32 0.0, %v3249
    %v3251 = vpop.f32.mrb[0].mxu0
    %v3252 = vadd.f32 0.0, %v3251
    %v3253 = vpop.f32.mrb[0].mxu0
    %v3254 = vadd.f32 0.0, %v3253
    %3255 = vmatprep.mubr.bf16.mxu0 0
    %3256 = vmatmul.mubr.bf16.gmra.mrb[0].mxu0 %v2347
    %v3257 = vpop.f32.mrb[0].mxu0
    %v3258 = vadd.f32 0.0, %v3257
    %v3259 = vpop.f32.mrb[0].mxu0
    %v3260 = vadd.f32 0.0, %v3259
    %v3261 = vpop.f32.mrb[0].mxu0
    %v3262 = vpop.f32.mrb[0].mxu0
    %3263 = vdwg.mxu0
    %3264 = vmatprep.subr.bf16.mxu0 %v2096
    %3265 = vmatpush1.bf16.msra.mxu0 %v2095
    %3266 = vmatprep.subr.bf16.mxu0 %v2128
    %3267 = vmatpush1.bf16.msra.mxu0 %v2127
    %3268 = vmatprep.subr.bf16.mxu0 0
    %3269 = vmatpush1.bf16.msra.mxu0 0
    %3270 = vmatprep.subr.bf16.mxu0 0
    %3271 = vmatpush1.bf16.msra.mxu0 0
    %3272 = vmatprep.subr.bf16.mxu0 0
    %3273 = vmatpush1.bf16.msra.mxu0 0
    %3274 = vmatprep.subr.bf16.mxu0 0
    %3275 = vmatpush1.bf16.msra.mxu0 0
    %3276 = vmatprep.subr.bf16.mxu0 0
    %3277 = vmatpush1.bf16.msra.mxu0 0
    %3278 = vmatprep.subr.bf16.mxu0 0
    %3279 = vmatpush1.bf16.msra.mxu0 0
    %3280 = vmatprep.subr.bf16.mxu0 0
    %3281 = vmatpush1.bf16.msra.mxu0 0
    %3282 = vmatprep.subr.bf16.mxu0 0
    %3283 = vmatpush1.bf16.msra.mxu0 0
    %3284 = vmatprep.subr.bf16.mxu0 0
    %3285 = vmatpush1.bf16.msra.mxu0 0
    %3286 = vmatprep.subr.bf16.mxu0 0
    %3287 = vmatpush1.bf16.msra.mxu0 0
    %3288 = vmatprep.subr.bf16.mxu0 0
    %3289 = vmatpush1.bf16.msra.mxu0 0
    %3290 = vmatprep.subr.bf16.mxu0 0
    %3291 = vmatpush1.bf16.msra.mxu0 0
    %3292 = vmatprep.subr.bf16.mxu0 0
    %3293 = vmatpush1.bf16.msra.mxu0 0
    %3294 = vmatprep.subr.bf16.mxu0 0
    %3295 = vmatpush1.bf16.msra.mxu0 0
    %3296 = vmatprep.mubr.bf16.mxu0 0
    %3297 = vmatmul.mubr.bf16.gmra.mrb[0].mxu0 %v2341
    %v3298 = vpop.f32.mrb[0].mxu0
    %v3299 = vadd.f32 0.0, %v3298
    %v3300 = vpop.f32.mrb[0].mxu0
    %v3301 = vadd.f32 0.0, %v3300
    %v3302 = vpop.f32.mrb[0].mxu0
    %v3303 = vadd.f32 0.0, %v3302
    %v3304 = vpop.f32.mrb[0].mxu0
    %v3305 = vadd.f32 0.0, %v3304
    %3306 = vmatprep.mubr.bf16.mxu0 0
    %3307 = vmatmul.mubr.bf16.gmra.mrb[0].mxu0 %v2344
    %v3308 = vpop.f32.mrb[0].mxu0
    %v3309 = vadd.f32 0.0, %v3308
    %v3310 = vpop.f32.mrb[0].mxu0
    %v3311 = vadd.f32 0.0, %v3310
    %v3312 = vpop.f32.mrb[0].mxu0
    %v3313 = vadd.f32 0.0, %v3312
    %v3314 = vpop.f32.mrb[0].mxu0
    %v3315 = vadd.f32 0.0, %v3314
    %3316 = vmatprep.mubr.bf16.mxu0 0
    %3317 = vmatmul.mubr.bf16.gmra.mrb[0].mxu0 %v2347
    %v3318 = vpop.f32.mrb[0].mxu0
    %v3319 = vadd.f32 0.0, %v3318
    %v3320 = vpop.f32.mrb[0].mxu0
    %v3321 = vadd.f32 0.0, %v3320
    %v3322 = vpop.f32.mrb[0].mxu0
    %v3323 = vpop.f32.mrb[0].mxu0
    %3324 = vdwg.mxu0
    %v3325 = vld [vmem:[%s5] sm:$0xf]
    %v3326 = vld [vmem:[%s5 + $0x4] sm:$0xf]
    %v3327 = vld [vmem:[%s5 + $0x8] sm:$0xf]
    %v3328 = vld [vmem:[%s5 + $0xc] sm:$0xf]
    %v3329 = vld [vmem:[%s5 + $0x10] sm:$0x3]
    %v3335 = vunpack.c.l.b16 %v3325
    %v3336 = vunpack.c.l.b16 %v3326
    %v3337 = vunpack.c.l.b16 %v3327
    %v3338 = vunpack.c.l.b16 %v3328
    %v3339 = vunpack.c.l.b16 %v3329
    %v3340 = vpack.c.b16 %v3336, %v3335
    %v3341 = vpack.c.b16 %v3338, %v3337
    %v3342 = vpack.c.b16 %v3339, %v3339
    %v3344 = vsel %vm2339, %v3340, 0
    %v3347 = vsel %vm2339, %v3341, 0
    %v3350 = vsel %vm2339, %v3342, 0
    %3352 = vmatprep.subr.bf16.mxu0 %v2258
    %3353 = vmatpush1.bf16.msra.mxu0 %v2257
    %3354 = vmatprep.subr.bf16.mxu0 %v2290
    %3355 = vmatpush1.bf16.msra.mxu0 %v2289
    %3356 = vmatprep.subr.bf16.mxu0 0
    %3357 = vmatpush1.bf16.msra.mxu0 0
    %3358 = vmatprep.subr.bf16.mxu0 0
    %3359 = vmatpush1.bf16.msra.mxu0 0
    %3360 = vmatprep.subr.bf16.mxu0 0
    %3361 = vmatpush1.bf16.msra.mxu0 0
    %3362 = vmatprep.subr.bf16.mxu0 0
    %3363 = vmatpush1.bf16.msra.mxu0 0
    %3364 = vmatprep.subr.bf16.mxu0 0
    %3365 = vmatpush1.bf16.msra.mxu0 0
    %3366 = vmatprep.subr.bf16.mxu0 0
    %3367 = vmatpush1.bf16.msra.mxu0 0
    %3368 = vmatprep.subr.bf16.mxu0 0
    %3369 = vmatpush1.bf16.msra.mxu0 0
    %3370 = vmatprep.subr.bf16.mxu0 0
    %3371 = vmatpush1.bf16.msra.mxu0 0
    %3372 = vmatprep.subr.bf16.mxu0 0
    %3373 = vmatpush1.bf16.msra.mxu0 0
    %3374 = vmatprep.subr.bf16.mxu0 0
    %3375 = vmatpush1.bf16.msra.mxu0 0
    %3376 = vmatprep.subr.bf16.mxu0 0
    %3377 = vmatpush1.bf16.msra.mxu0 0
    %3378 = vmatprep.subr.bf16.mxu0 0
    %3379 = vmatpush1.bf16.msra.mxu0 0
    %3380 = vmatprep.subr.bf16.mxu0 0
    %3381 = vmatpush1.bf16.msra.mxu0 0
    %3382 = vmatprep.subr.bf16.mxu0 0
    %3383 = vmatpush1.bf16.msra.mxu0 0
    %3384 = vmatprep.mubr.bf16.mxu0 0
    %3385 = vmatmul.mubr.bf16.gmra.mrb[0].mxu0 %v3344
    %v3386 = vpop.f32.mrb[0].mxu0
    %v3387 = vadd.f32 0.0, %v3386
    %v3388 = vpop.f32.mrb[0].mxu0
    %v3389 = vadd.f32 0.0, %v3388
    %v3390 = vpop.f32.mrb[0].mxu0
    %v3391 = vadd.f32 0.0, %v3390
    %v3392 = vpop.f32.mrb[0].mxu0
    %v3393 = vadd.f32 0.0, %v3392
    %3394 = vmatprep.mubr.bf16.mxu0 0
    %3395 = vmatmul.mubr.bf16.gmra.mrb[0].mxu0 %v3347
    %v3396 = vpop.f32.mrb[0].mxu0
    %v3397 = vadd.f32 0.0, %v3396
    %v3398 = vpop.f32.mrb[0].mxu0
    %v3399 = vadd.f32 0.0, %v3398
    %v3400 = vpop.f32.mrb[0].mxu0
    %v3401 = vadd.f32 0.0, %v3400
    %v3402 = vpop.f32.mrb[0].mxu0
    %v3403 = vadd.f32 0.0, %v3402
    %3404 = vmatprep.mubr.bf16.mxu0 0
    %3405 = vmatmul.mubr.bf16.gmra.mrb[0].mxu0 %v3350
    %v3406 = vpop.f32.mrb[0].mxu0
    %v3407 = vadd.f32 0.0, %v3406
    %v3408 = vpop.f32.mrb[0].mxu0
    %v3409 = vadd.f32 0.0, %v3408
    %v3410 = vpop.f32.mrb[0].mxu0
    %v3411 = vpop.f32.mrb[0].mxu0
    %3412 = vdwg.mxu0
    %3413 = vmatprep.subr.bf16.mxu0 %v2260
    %3414 = vmatpush1.bf16.msra.mxu0 %v2259
    %3415 = vmatprep.subr.bf16.mxu0 %v2292
    %3416 = vmatpush1.bf16.msra.mxu0 %v2291
    %3417 = vmatprep.subr.bf16.mxu0 0
    %3418 = vmatpush1.bf16.msra.mxu0 0
    %3419 = vmatprep.subr.bf16.mxu0 0
    %3420 = vmatpush1.bf16.msra.mxu0 0
    %3421 = vmatprep.subr.bf16.mxu0 0
    %3422 = vmatpush1.bf16.msra.mxu0 0
    %3423 = vmatprep.subr.bf16.mxu0 0
    %3424 = vmatpush1.bf16.msra.mxu0 0
    %3425 = vmatprep.subr.bf16.mxu0 0
    %3426 = vmatpush1.bf16.msra.mxu0 0
    %3427 = vmatprep.subr.bf16.mxu0 0
    %3428 = vmatpush1.bf16.msra.mxu0 0
    %3429 = vmatprep.subr.bf16.mxu0 0
    %3430 = vmatpush1.bf16.msra.mxu0 0
    %3431 = vmatprep.subr.bf16.mxu0 0
    %3432 = vmatpush1.bf16.msra.mxu0 0
    %3433 = vmatprep.subr.bf16.mxu0 0
    %3434 = vmatpush1.bf16.msra.mxu0 0
    %3435 = vmatprep.subr.bf16.mxu0 0
    %3436 = vmatpush1.bf16.msra.mxu0 0
    %3437 = vmatprep.subr.bf16.mxu0 0
    %3438 = vmatpush1.bf16.msra.mxu0 0
    %3439 = vmatprep.subr.bf16.mxu0 0
    %3440 = vmatpush1.bf16.msra.mxu0 0
    %3441 = vmatprep.subr.bf16.mxu0 0
    %3442 = vmatpush1.bf16.msra.mxu0 0
    %3443 = vmatprep.subr.bf16.mxu0 0
    %3444 = vmatpush1.bf16.msra.mxu0 0
    %3445 = vmatprep.mubr.bf16.mxu0 0
    %3446 = vmatmul.mubr.bf16.gmra.mrb[0].mxu0 %v3344
    %v3447 = vpop.f32.mrb[0].mxu0
    %v3448 = vadd.f32 0.0, %v3447
    %v3449 = vpop.f32.mrb[0].mxu0
    %v3450 = vadd.f32 0.0, %v3449
    %v3451 = vpop.f32.mrb[0].mxu0
    %v3452 = vadd.f32 0.0, %v3451
    %v3453 = vpop.f32.mrb[0].mxu0
    %v3454 = vadd.f32 0.0, %v3453
    %3455 = vmatprep.mubr.bf16.mxu0 0
    %3456 = vmatmul.mubr.bf16.gmra.mrb[0].mxu0 %v3347
    %v3457 = vpop.f32.mrb[0].mxu0
    %v3458 = vadd.f32 0.0, %v3457
    %v3459 = vpop.f32.mrb[0].mxu0
    %v3460 = vadd.f32 0.0, %v3459
    %v3461 = vpop.f32.mrb[0].mxu0
    %v3462 = vadd.f32 0.0, %v3461
    %v3463 = vpop.f32.mrb[0].mxu0
    %v3464 = vadd.f32 0.0, %v3463
    %3465 = vmatprep.mubr.bf16.mxu0 0
    %3466 = vmatmul.mubr.bf16.gmra.mrb[0].mxu0 %v3350
    %v3467 = vpop.f32.mrb[0].mxu0
    %v3468 = vadd.f32 0.0, %v3467
    %v3469 = vpop.f32.mrb[0].mxu0
    %v3470 = vadd.f32 0.0, %v3469
    %v3471 = vpop.f32.mrb[0].mxu0
    %v3472 = vpop.f32.mrb[0].mxu0
    %3473 = vdwg.mxu0
    %3474 = vmatprep.subr.bf16.mxu0 %v2262
    %3475 = vmatpush1.bf16.msra.mxu0 %v2261
    %3476 = vmatprep.subr.bf16.mxu0 %v2294
    %3477 = vmatpush1.bf16.msra.mxu0 %v2293
    %3478 = vmatprep.subr.bf16.mxu0 0
    %3479 = vmatpush1.bf16.msra.mxu0 0
    %3480 = vmatprep.subr.bf16.mxu0 0
    %3481 = vmatpush1.bf16.msra.mxu0 0
    %3482 = vmatprep.subr.bf16.mxu0 0
    %3483 = vmatpush1.bf16.msra.mxu0 0
    %3484 = vmatprep.subr.bf16.mxu0 0
    %3485 = vmatpush1.bf16.msra.mxu0 0
    %3486 = vmatprep.subr.bf16.mxu0 0
    %3487 = vmatpush1.bf16.msra.mxu0 0
    %3488 = vmatprep.subr.bf16.mxu0 0
    %3489 = vmatpush1.bf16.msra.mxu0 0
    %3490 = vmatprep.subr.bf16.mxu0 0
    %3491 = vmatpush1.bf16.msra.mxu0 0
    %3492 = vmatprep.subr.bf16.mxu0 0
    %3493 = vmatpush1.bf16.msra.mxu0 0
    %3494 = vmatprep.subr.bf16.mxu0 0
    %3495 = vmatpush1.bf16.msra.mxu0 0
    %3496 = vmatprep.subr.bf16.mxu0 0
    %3497 = vmatpush1.bf16.msra.mxu0 0
    %3498 = vmatprep.subr.bf16.mxu0 0
    %3499 = vmatpush1.bf16.msra.mxu0 0
    %3500 = vmatprep.subr.bf16.mxu0 0
    %3501 = vmatpush1.bf16.msra.mxu0 0
    %3502 = vmatprep.subr.bf16.mxu0 0
    %3503 = vmatpush1.bf16.msra.mxu0 0
    %3504 = vmatprep.subr.bf16.mxu0 0
    %3505 = vmatpush1.bf16.msra.mxu0 0
    %3506 = vmatprep.mubr.bf16.mxu0 0
    %3507 = vmatmul.mubr.bf16.gmra.mrb[0].mxu0 %v3344
    %v3508 = vpop.f32.mrb[0].mxu0
    %v3509 = vadd.f32 0.0, %v3508
    %v3510 = vpop.f32.mrb[0].mxu0
    %v3511 = vadd.f32 0.0, %v3510
    %v3512 = vpop.f32.mrb[0].mxu0
    %v3513 = vadd.f32 0.0, %v3512
    %v3514 = vpop.f32.mrb[0].mxu0
    %v3515 = vadd.f32 0.0, %v3514
    %3516 = vmatprep.mubr.bf16.mxu0 0
    %3517 = vmatmul.mubr.bf16.gmra.mrb[0].mxu0 %v3347
    %v3518 = vpop.f32.mrb[0].mxu0
    %v3519 = vadd.f32 0.0, %v3518
    %v3520 = vpop.f32.mrb[0].mxu0
    %v3521 = vadd.f32 0.0, %v3520
    %v3522 = vpop.f32.mrb[0].mxu0
    %v3523 = vadd.f32 0.0, %v3522
    %v3524 = vpop.f32.mrb[0].mxu0
    %v3525 = vadd.f32 0.0, %v3524
    %3526 = vmatprep.mubr.bf16.mxu0 0
    %3527 = vmatmul.mubr.bf16.gmra.mrb[0].mxu0 %v3350
    %v3528 = vpop.f32.mrb[0].mxu0
    %v3529 = vadd.f32 0.0, %v3528
    %v3530 = vpop.f32.mrb[0].mxu0
    %v3531 = vadd.f32 0.0, %v3530
    %v3532 = vpop.f32.mrb[0].mxu0
    %v3533 = vpop.f32.mrb[0].mxu0
    %3534 = vdwg.mxu0
    %3535 = vmatprep.subr.bf16.mxu0 %v2264
    %3536 = vmatpush1.bf16.msra.mxu0 %v2263
    %3537 = vmatprep.subr.bf16.mxu0 %v2296
    %3538 = vmatpush1.bf16.msra.mxu0 %v2295
    %3539 = vmatprep.subr.bf16.mxu0 0
    %3540 = vmatpush1.bf16.msra.mxu0 0
    %3541 = vmatprep.subr.bf16.mxu0 0
    %3542 = vmatpush1.bf16.msra.mxu0 0
    %3543 = vmatprep.subr.bf16.mxu0 0
    %3544 = vmatpush1.bf16.msra.mxu0 0
    %3545 = vmatprep.subr.bf16.mxu0 0
    %3546 = vmatpush1.bf16.msra.mxu0 0
    %3547 = vmatprep.subr.bf16.mxu0 0
    %3548 = vmatpush1.bf16.msra.mxu0 0
    %3549 = vmatprep.subr.bf16.mxu0 0
    %3550 = vmatpush1.bf16.msra.mxu0 0
    %3551 = vmatprep.subr.bf16.mxu0 0
    %3552 = vmatpush1.bf16.msra.mxu0 0
    %3553 = vmatprep.subr.bf16.mxu0 0
    %3554 = vmatpush1.bf16.msra.mxu0 0
    %3555 = vmatprep.subr.bf16.mxu0 0
    %3556 = vmatpush1.bf16.msra.mxu0 0
    %3557 = vmatprep.subr.bf16.mxu0 0
    %3558 = vmatpush1.bf16.msra.mxu0 0
    %3559 = vmatprep.subr.bf16.mxu0 0
    %3560 = vmatpush1.bf16.msra.mxu0 0
    %3561 = vmatprep.subr.bf16.mxu0 0
    %3562 = vmatpush1.bf16.msra.mxu0 0
    %3563 = vmatprep.subr.bf16.mxu0 0
    %3564 = vmatpush1.bf16.msra.mxu0 0
    %3565 = vmatprep.subr.bf16.mxu0 0
    %3566 = vmatpush1.bf16.msra.mxu0 0
    %3567 = vmatprep.mubr.bf16.mxu0 0
    %3568 = vmatmul.mubr.bf16.gmra.mrb[0].mxu0 %v3344
    %v3569 = vpop.f32.mrb[0].mxu0
    %v3570 = vadd.f32 0.0, %v3569
    %v3571 = vpop.f32.mrb[0].mxu0
    %v3572 = vadd.f32 0.0, %v3571
    %v3573 = vpop.f32.mrb[0].mxu0
    %v3574 = vadd.f32 0.0, %v3573
    %v3575 = vpop.f32.mrb[0].mxu0
    %v3576 = vadd.f32 0.0, %v3575
    %3577 = vmatprep.mubr.bf16.mxu0 0
    %3578 = vmatmul.mubr.bf16.gmra.mrb[0].mxu0 %v3347
    %v3579 = vpop.f32.mrb[0].mxu0
    %v3580 = vadd.f32 0.0, %v3579
    %v3581 = vpop.f32.mrb[0].mxu0
    %v3582 = vadd.f32 0.0, %v3581
    %v3583 = vpop.f32.mrb[0].mxu0
    %v3584 = vadd.f32 0.0, %v3583
    %v3585 = vpop.f32.mrb[0].mxu0
    %v3586 = vadd.f32 0.0, %v3585
    %3587 = vmatprep.mubr.bf16.mxu0 0
    %3588 = vmatmul.mubr.bf16.gmra.mrb[0].mxu0 %v3350
    %v3589 = vpop.f32.mrb[0].mxu0
    %v3590 = vadd.f32 0.0, %v3589
    %v3591 = vpop.f32.mrb[0].mxu0
    %v3592 = vadd.f32 0.0, %v3591
    %v3593 = vpop.f32.mrb[0].mxu0
    %v3594 = vpop.f32.mrb[0].mxu0
    %3595 = vdwg.mxu0
    %3596 = vmatprep.subr.bf16.mxu0 %v2266
    %3597 = vmatpush1.bf16.msra.mxu0 %v2265
    %3598 = vmatprep.subr.bf16.mxu0 %v2298
    %3599 = vmatpush1.bf16.msra.mxu0 %v2297
    %3600 = vmatprep.subr.bf16.mxu0 0
    %3601 = vmatpush1.bf16.msra.mxu0 0
    %3602 = vmatprep.subr.bf16.mxu0 0
    %3603 = vmatpush1.bf16.msra.mxu0 0
    %3604 = vmatprep.subr.bf16.mxu0 0
    %3605 = vmatpush1.bf16.msra.mxu0 0
    %3606 = vmatprep.subr.bf16.mxu0 0
    %3607 = vmatpush1.bf16.msra.mxu0 0
    %3608 = vmatprep.subr.bf16.mxu0 0
    %3609 = vmatpush1.bf16.msra.mxu0 0
    %3610 = vmatprep.subr.bf16.mxu0 0
    %3611 = vmatpush1.bf16.msra.mxu0 0
    %3612 = vmatprep.subr.bf16.mxu0 0
    %3613 = vmatpush1.bf16.msra.mxu0 0
    %3614 = vmatprep.subr.bf16.mxu0 0
    %3615 = vmatpush1.bf16.msra.mxu0 0
    %3616 = vmatprep.subr.bf16.mxu0 0
    %3617 = vmatpush1.bf16.msra.mxu0 0
    %3618 = vmatprep.subr.bf16.mxu0 0
    %3619 = vmatpush1.bf16.msra.mxu0 0
    %3620 = vmatprep.subr.bf16.mxu0 0
    %3621 = vmatpush1.bf16.msra.mxu0 0
    %3622 = vmatprep.subr.bf16.mxu0 0
    %3623 = vmatpush1.bf16.msra.mxu0 0
    %3624 = vmatprep.subr.bf16.mxu0 0
    %3625 = vmatpush1.bf16.msra.mxu0 0
    %3626 = vmatprep.subr.bf16.mxu0 0
    %3627 = vmatpush1.bf16.msra.mxu0 0
    %3628 = vmatprep.mubr.bf16.mxu0 0
    %3629 = vmatmul.mubr.bf16.gmra.mrb[0].mxu0 %v3344
    %v3630 = vpop.f32.mrb[0].mxu0
    %v3631 = vadd.f32 0.0, %v3630
    %v3632 = vpop.f32.mrb[0].mxu0
    %v3633 = vadd.f32 0.0, %v3632
    %v3634 = vpop.f32.mrb[0].mxu0
    %v3635 = vadd.f32 0.0, %v3634
    %v3636 = vpop.f32.mrb[0].mxu0
    %v3637 = vadd.f32 0.0, %v3636
    %3638 = vmatprep.mubr.bf16.mxu0 0
    %3639 = vmatmul.mubr.bf16.gmra.mrb[0].mxu0 %v3347
    %v3640 = vpop.f32.mrb[0].mxu0
    %v3641 = vadd.f32 0.0, %v3640
    %v3642 = vpop.f32.mrb[0].mxu0
    %v3643 = vadd.f32 0.0, %v3642
    %v3644 = vpop.f32.mrb[0].mxu0
    %v3645 = vadd.f32 0.0, %v3644
    %v3646 = vpop.f32.mrb[0].mxu0
    %v3647 = vadd.f32 0.0, %v3646
    %3648 = vmatprep.mubr.bf16.mxu0 0
    %3649 = vmatmul.mubr.bf16.gmra.mrb[0].mxu0 %v3350
    %v3650 = vpop.f32.mrb[0].mxu0
    %v3651 = vadd.f32 0.0, %v3650
    %v3652 = vpop.f32.mrb[0].mxu0
    %v3653 = vadd.f32 0.0, %v3652
    %v3654 = vpop.f32.mrb[0].mxu0
    %v3655 = vpop.f32.mrb[0].mxu0
    %3656 = vdwg.mxu0
    %3657 = vmatprep.subr.bf16.mxu0 %v2268
    %3658 = vmatpush1.bf16.msra.mxu0 %v2267
    %3659 = vmatprep.subr.bf16.mxu0 %v2300
    %3660 = vmatpush1.bf16.msra.mxu0 %v2299
    %3661 = vmatprep.subr.bf16.mxu0 0
    %3662 = vmatpush1.bf16.msra.mxu0 0
    %3663 = vmatprep.subr.bf16.mxu0 0
    %3664 = vmatpush1.bf16.msra.mxu0 0
    %3665 = vmatprep.subr.bf16.mxu0 0
    %3666 = vmatpush1.bf16.msra.mxu0 0
    %3667 = vmatprep.subr.bf16.mxu0 0
    %3668 = vmatpush1.bf16.msra.mxu0 0
    %3669 = vmatprep.subr.bf16.mxu0 0
    %3670 = vmatpush1.bf16.msra.mxu0 0
    %3671 = vmatprep.subr.bf16.mxu0 0
    %3672 = vmatpush1.bf16.msra.mxu0 0
    %3673 = vmatprep.subr.bf16.mxu0 0
    %3674 = vmatpush1.bf16.msra.mxu0 0
    %3675 = vmatprep.subr.bf16.mxu0 0
    %3676 = vmatpush1.bf16.msra.mxu0 0
    %3677 = vmatprep.subr.bf16.mxu0 0
    %3678 = vmatpush1.bf16.msra.mxu0 0
    %3679 = vmatprep.subr.bf16.mxu0 0
    %3680 = vmatpush1.bf16.msra.mxu0 0
    %3681 = vmatprep.subr.bf16.mxu0 0
    %3682 = vmatpush1.bf16.msra.mxu0 0
    %3683 = vmatprep.subr.bf16.mxu0 0
    %3684 = vmatpush1.bf16.msra.mxu0 0
    %3685 = vmatprep.subr.bf16.mxu0 0
    %3686 = vmatpush1.bf16.msra.mxu0 0
    %3687 = vmatprep.subr.bf16.mxu0 0
    %3688 = vmatpush1.bf16.msra.mxu0 0
    %3689 = vmatprep.mubr.bf16.mxu0 0
    %3690 = vmatmul.mubr.bf16.gmra.mrb[0].mxu0 %v3344
    %v3691 = vpop.f32.mrb[0].mxu0
    %v3692 = vadd.f32 0.0, %v3691
    %v3693 = vpop.f32.mrb[0].mxu0
    %v3694 = vadd.f32 0.0, %v3693
    %v3695 = vpop.f32.mrb[0].mxu0
    %v3696 = vadd.f32 0.0, %v3695
    %v3697 = vpop.f32.mrb[0].mxu0
    %v3698 = vadd.f32 0.0, %v3697
    %3699 = vmatprep.mubr.bf16.mxu0 0
    %3700 = vmatmul.mubr.bf16.gmra.mrb[0].mxu0 %v3347
    %v3701 = vpop.f32.mrb[0].mxu0
    %v3702 = vadd.f32 0.0, %v3701
    %v3703 = vpop.f32.mrb[0].mxu0
    %v3704 = vadd.f32 0.0, %v3703
    %v3705 = vpop.f32.mrb[0].mxu0
    %v3706 = vadd.f32 0.0, %v3705
    %v3707 = vpop.f32.mrb[0].mxu0
    %v3708 = vadd.f32 0.0, %v3707
    %3709 = vmatprep.mubr.bf16.mxu0 0
    %3710 = vmatmul.mubr.bf16.gmra.mrb[0].mxu0 %v3350
    %v3711 = vpop.f32.mrb[0].mxu0
    %v3712 = vadd.f32 0.0, %v3711
    %v3713 = vpop.f32.mrb[0].mxu0
    %v3714 = vadd.f32 0.0, %v3713
    %v3715 = vpop.f32.mrb[0].mxu0
    %v3716 = vpop.f32.mrb[0].mxu0
    %3717 = vdwg.mxu0
    %3718 = vmatprep.subr.bf16.mxu0 %v2270
    %3719 = vmatpush1.bf16.msra.mxu0 %v2269
    %3720 = vmatprep.subr.bf16.mxu0 %v2302
    %3721 = vmatpush1.bf16.msra.mxu0 %v2301
    %3722 = vmatprep.subr.bf16.mxu0 0
    %3723 = vmatpush1.bf16.msra.mxu0 0
    %3724 = vmatprep.subr.bf16.mxu0 0
    %3725 = vmatpush1.bf16.msra.mxu0 0
    %3726 = vmatprep.subr.bf16.mxu0 0
    %3727 = vmatpush1.bf16.msra.mxu0 0
    %3728 = vmatprep.subr.bf16.mxu0 0
    %3729 = vmatpush1.bf16.msra.mxu0 0
    %3730 = vmatprep.subr.bf16.mxu0 0
    %3731 = vmatpush1.bf16.msra.mxu0 0
    %3732 = vmatprep.subr.bf16.mxu0 0
    %3733 = vmatpush1.bf16.msra.mxu0 0
    %3734 = vmatprep.subr.bf16.mxu0 0
    %3735 = vmatpush1.bf16.msra.mxu0 0
    %3736 = vmatprep.subr.bf16.mxu0 0
    %3737 = vmatpush1.bf16.msra.mxu0 0
    %3738 = vmatprep.subr.bf16.mxu0 0
    %3739 = vmatpush1.bf16.msra.mxu0 0
    %3740 = vmatprep.subr.bf16.mxu0 0
    %3741 = vmatpush1.bf16.msra.mxu0 0
    %3742 = vmatprep.subr.bf16.mxu0 0
    %3743 = vmatpush1.bf16.msra.mxu0 0
    %3744 = vmatprep.subr.bf16.mxu0 0
    %3745 = vmatpush1.bf16.msra.mxu0 0
    %3746 = vmatprep.subr.bf16.mxu0 0
    %3747 = vmatpush1.bf16.msra.mxu0 0
    %3748 = vmatprep.subr.bf16.mxu0 0
    %3749 = vmatpush1.bf16.msra.mxu0 0
    %3750 = vmatprep.mubr.bf16.mxu0 0
    %3751 = vmatmul.mubr.bf16.gmra.mrb[0].mxu0 %v3344
    %v3752 = vpop.f32.mrb[0].mxu0
    %v3753 = vadd.f32 0.0, %v3752
    %v3754 = vpop.f32.mrb[0].mxu0
    %v3755 = vadd.f32 0.0, %v3754
    %v3756 = vpop.f32.mrb[0].mxu0
    %v3757 = vadd.f32 0.0, %v3756
    %v3758 = vpop.f32.mrb[0].mxu0
    %v3759 = vadd.f32 0.0, %v3758
    %3760 = vmatprep.mubr.bf16.mxu0 0
    %3761 = vmatmul.mubr.bf16.gmra.mrb[0].mxu0 %v3347
    %v3762 = vpop.f32.mrb[0].mxu0
    %v3763 = vadd.f32 0.0, %v3762
    %v3764 = vpop.f32.mrb[0].mxu0
    %v3765 = vadd.f32 0.0, %v3764
    %v3766 = vpop.f32.mrb[0].mxu0
    %v3767 = vadd.f32 0.0, %v3766
    %v3768 = vpop.f32.mrb[0].mxu0
    %v3769 = vadd.f32 0.0, %v3768
    %3770 = vmatprep.mubr.bf16.mxu0 0
    %3771 = vmatmul.mubr.bf16.gmra.mrb[0].mxu0 %v3350
    %v3772 = vpop.f32.mrb[0].mxu0
    %v3773 = vadd.f32 0.0, %v3772
    %v3774 = vpop.f32.mrb[0].mxu0
    %v3775 = vadd.f32 0.0, %v3774
    %v3776 = vpop.f32.mrb[0].mxu0
    %v3777 = vpop.f32.mrb[0].mxu0
    %3778 = vdwg.mxu0
    %3779 = vmatprep.subr.bf16.mxu0 %v2272
    %3780 = vmatpush1.bf16.msra.mxu0 %v2271
    %3781 = vmatprep.subr.bf16.mxu0 %v2304
    %3782 = vmatpush1.bf16.msra.mxu0 %v2303
    %3783 = vmatprep.subr.bf16.mxu0 0
    %3784 = vmatpush1.bf16.msra.mxu0 0
    %3785 = vmatprep.subr.bf16.mxu0 0
    %3786 = vmatpush1.bf16.msra.mxu0 0
    %3787 = vmatprep.subr.bf16.mxu0 0
    %3788 = vmatpush1.bf16.msra.mxu0 0
    %3789 = vmatprep.subr.bf16.mxu0 0
    %3790 = vmatpush1.bf16.msra.mxu0 0
    %3791 = vmatprep.subr.bf16.mxu0 0
    %3792 = vmatpush1.bf16.msra.mxu0 0
    %3793 = vmatprep.subr.bf16.mxu0 0
    %3794 = vmatpush1.bf16.msra.mxu0 0
    %3795 = vmatprep.subr.bf16.mxu0 0
    %3796 = vmatpush1.bf16.msra.mxu0 0
    %3797 = vmatprep.subr.bf16.mxu0 0
    %3798 = vmatpush1.bf16.msra.mxu0 0
    %3799 = vmatprep.subr.bf16.mxu0 0
    %3800 = vmatpush1.bf16.msra.mxu0 0
    %3801 = vmatprep.subr.bf16.mxu0 0
    %3802 = vmatpush1.bf16.msra.mxu0 0
    %3803 = vmatprep.subr.bf16.mxu0 0
    %3804 = vmatpush1.bf16.msra.mxu0 0
    %3805 = vmatprep.subr.bf16.mxu0 0
    %3806 = vmatpush1.bf16.msra.mxu0 0
    %3807 = vmatprep.subr.bf16.mxu0 0
    %3808 = vmatpush1.bf16.msra.mxu0 0
    %3809 = vmatprep.subr.bf16.mxu0 0
    %3810 = vmatpush1.bf16.msra.mxu0 0
    %3811 = vmatprep.mubr.bf16.mxu0 0
    %3812 = vmatmul.mubr.bf16.gmra.mrb[0].mxu0 %v3344
    %v3813 = vpop.f32.mrb[0].mxu0
    %v3814 = vadd.f32 0.0, %v3813
    %v3815 = vpop.f32.mrb[0].mxu0
    %v3816 = vadd.f32 0.0, %v3815
    %v3817 = vpop.f32.mrb[0].mxu0
    %v3818 = vadd.f32 0.0, %v3817
    %v3819 = vpop.f32.mrb[0].mxu0
    %v3820 = vadd.f32 0.0, %v3819
    %3821 = vmatprep.mubr.bf16.mxu0 0
    %3822 = vmatmul.mubr.bf16.gmra.mrb[0].mxu0 %v3347
    %v3823 = vpop.f32.mrb[0].mxu0
    %v3824 = vadd.f32 0.0, %v3823
    %v3825 = vpop.f32.mrb[0].mxu0
    %v3826 = vadd.f32 0.0, %v3825
    %v3827 = vpop.f32.mrb[0].mxu0
    %v3828 = vadd.f32 0.0, %v3827
    %v3829 = vpop.f32.mrb[0].mxu0
    %v3830 = vadd.f32 0.0, %v3829
    %3831 = vmatprep.mubr.bf16.mxu0 0
    %3832 = vmatmul.mubr.bf16.gmra.mrb[0].mxu0 %v3350
    %v3833 = vpop.f32.mrb[0].mxu0
    %v3834 = vadd.f32 0.0, %v3833
    %v3835 = vpop.f32.mrb[0].mxu0
    %v3836 = vadd.f32 0.0, %v3835
    %v3837 = vpop.f32.mrb[0].mxu0
    %v3838 = vpop.f32.mrb[0].mxu0
    %3839 = vdwg.mxu0
    %3840 = vmatprep.subr.bf16.mxu0 %v2274
    %3841 = vmatpush1.bf16.msra.mxu0 %v2273
    %3842 = vmatprep.subr.bf16.mxu0 %v2306
    %3843 = vmatpush1.bf16.msra.mxu0 %v2305
    %3844 = vmatprep.subr.bf16.mxu0 0
    %3845 = vmatpush1.bf16.msra.mxu0 0
    %3846 = vmatprep.subr.bf16.mxu0 0
    %3847 = vmatpush1.bf16.msra.mxu0 0
    %3848 = vmatprep.subr.bf16.mxu0 0
    %3849 = vmatpush1.bf16.msra.mxu0 0
    %3850 = vmatprep.subr.bf16.mxu0 0
    %3851 = vmatpush1.bf16.msra.mxu0 0
    %3852 = vmatprep.subr.bf16.mxu0 0
    %3853 = vmatpush1.bf16.msra.mxu0 0
    %3854 = vmatprep.subr.bf16.mxu0 0
    %3855 = vmatpush1.bf16.msra.mxu0 0
    %3856 = vmatprep.subr.bf16.mxu0 0
    %3857 = vmatpush1.bf16.msra.mxu0 0
    %3858 = vmatprep.subr.bf16.mxu0 0
    %3859 = vmatpush1.bf16.msra.mxu0 0
    %3860 = vmatprep.subr.bf16.mxu0 0
    %3861 = vmatpush1.bf16.msra.mxu0 0
    %3862 = vmatprep.subr.bf16.mxu0 0
    %3863 = vmatpush1.bf16.msra.mxu0 0
    %3864 = vmatprep.subr.bf16.mxu0 0
    %3865 = vmatpush1.bf16.msra.mxu0 0
    %3866 = vmatprep.subr.bf16.mxu0 0
    %3867 = vmatpush1.bf16.msra.mxu0 0
    %3868 = vmatprep.subr.bf16.mxu0 0
    %3869 = vmatpush1.bf16.msra.mxu0 0
    %3870 = vmatprep.subr.bf16.mxu0 0
    %3871 = vmatpush1.bf16.msra.mxu0 0
    %3872 = vmatprep.mubr.bf16.mxu0 0
    %3873 = vmatmul.mubr.bf16.gmra.mrb[0].mxu0 %v3344
    %v3874 = vpop.f32.mrb[0].mxu0
    %v3875 = vadd.f32 0.0, %v3874
    %v3876 = vpop.f32.mrb[0].mxu0
    %v3877 = vadd.f32 0.0, %v3876
    %v3878 = vpop.f32.mrb[0].mxu0
    %v3879 = vadd.f32 0.0, %v3878
    %v3880 = vpop.f32.mrb[0].mxu0
    %v3881 = vadd.f32 0.0, %v3880
    %3882 = vmatprep.mubr.bf16.mxu0 0
    %3883 = vmatmul.mubr.bf16.gmra.mrb[0].mxu0 %v3347
    %v3884 = vpop.f32.mrb[0].mxu0
    %v3885 = vadd.f32 0.0, %v3884
    %v3886 = vpop.f32.mrb[0].mxu0
    %v3887 = vadd.f32 0.0, %v3886
    %v3888 = vpop.f32.mrb[0].mxu0
    %v3889 = vadd.f32 0.0, %v3888
    %v3890 = vpop.f32.mrb[0].mxu0
    %v3891 = vadd.f32 0.0, %v3890
    %3892 = vmatprep.mubr.bf16.mxu0 0
    %3893 = vmatmul.mubr.bf16.gmra.mrb[0].mxu0 %v3350
    %v3894 = vpop.f32.mrb[0].mxu0
    %v3895 = vadd.f32 0.0, %v3894
    %v3896 = vpop.f32.mrb[0].mxu0
    %v3897 = vadd.f32 0.0, %v3896
    %v3898 = vpop.f32.mrb[0].mxu0
    %v3899 = vpop.f32.mrb[0].mxu0
    %3900 = vdwg.mxu0
    %3901 = vmatprep.subr.bf16.mxu0 %v2276
    %3902 = vmatpush1.bf16.msra.mxu0 %v2275
    %3903 = vmatprep.subr.bf16.mxu0 %v2308
    %3904 = vmatpush1.bf16.msra.mxu0 %v2307
    %3905 = vmatprep.subr.bf16.mxu0 0
    %3906 = vmatpush1.bf16.msra.mxu0 0
    %3907 = vmatprep.subr.bf16.mxu0 0
    %3908 = vmatpush1.bf16.msra.mxu0 0
    %3909 = vmatprep.subr.bf16.mxu0 0
    %3910 = vmatpush1.bf16.msra.mxu0 0
    %3911 = vmatprep.subr.bf16.mxu0 0
    %3912 = vmatpush1.bf16.msra.mxu0 0
    %3913 = vmatprep.subr.bf16.mxu0 0
    %3914 = vmatpush1.bf16.msra.mxu0 0
    %3915 = vmatprep.subr.bf16.mxu0 0
    %3916 = vmatpush1.bf16.msra.mxu0 0
    %3917 = vmatprep.subr.bf16.mxu0 0
    %3918 = vmatpush1.bf16.msra.mxu0 0
    %3919 = vmatprep.subr.bf16.mxu0 0
    %3920 = vmatpush1.bf16.msra.mxu0 0
    %3921 = vmatprep.subr.bf16.mxu0 0
    %3922 = vmatpush1.bf16.msra.mxu0 0
    %3923 = vmatprep.subr.bf16.mxu0 0
    %3924 = vmatpush1.bf16.msra.mxu0 0
    %3925 = vmatprep.subr.bf16.mxu0 0
    %3926 = vmatpush1.bf16.msra.mxu0 0
    %3927 = vmatprep.subr.bf16.mxu0 0
    %3928 = vmatpush1.bf16.msra.mxu0 0
    %3929 = vmatprep.subr.bf16.mxu0 0
    %3930 = vmatpush1.bf16.msra.mxu0 0
    %3931 = vmatprep.subr.bf16.mxu0 0
    %3932 = vmatpush1.bf16.msra.mxu0 0
    %3933 = vmatprep.mubr.bf16.mxu0 0
    %3934 = vmatmul.mubr.bf16.gmra.mrb[0].mxu0 %v3344
    %v3935 = vpop.f32.mrb[0].mxu0
    %v3936 = vadd.f32 0.0, %v3935
    %v3937 = vpop.f32.mrb[0].mxu0
    %v3938 = vadd.f32 0.0, %v3937
    %v3939 = vpop.f32.mrb[0].mxu0
    %v3940 = vadd.f32 0.0, %v3939
    %v3941 = vpop.f32.mrb[0].mxu0
    %v3942 = vadd.f32 0.0, %v3941
    %3943 = vmatprep.mubr.bf16.mxu0 0
    %3944 = vmatmul.mubr.bf16.gmra.mrb[0].mxu0 %v3347
    %v3945 = vpop.f32.mrb[0].mxu0
    %v3946 = vadd.f32 0.0, %v3945
    %v3947 = vpop.f32.mrb[0].mxu0
    %v3948 = vadd.f32 0.0, %v3947
    %v3949 = vpop.f32.mrb[0].mxu0
    %v3950 = vadd.f32 0.0, %v3949
    %v3951 = vpop.f32.mrb[0].mxu0
    %v3952 = vadd.f32 0.0, %v3951
    %3953 = vmatprep.mubr.bf16.mxu0 0
    %3954 = vmatmul.mubr.bf16.gmra.mrb[0].mxu0 %v3350
    %v3955 = vpop.f32.mrb[0].mxu0
    %v3956 = vadd.f32 0.0, %v3955
    %v3957 = vpop.f32.mrb[0].mxu0
    %v3958 = vadd.f32 0.0, %v3957
    %v3959 = vpop.f32.mrb[0].mxu0
    %v3960 = vpop.f32.mrb[0].mxu0
    %3961 = vdwg.mxu0
    %3962 = vmatprep.subr.bf16.mxu0 %v2278
    %3963 = vmatpush1.bf16.msra.mxu0 %v2277
    %3964 = vmatprep.subr.bf16.mxu0 %v2310
    %3965 = vmatpush1.bf16.msra.mxu0 %v2309
    %3966 = vmatprep.subr.bf16.mxu0 0
    %3967 = vmatpush1.bf16.msra.mxu0 0
    %3968 = vmatprep.subr.bf16.mxu0 0
    %3969 = vmatpush1.bf16.msra.mxu0 0
    %3970 = vmatprep.subr.bf16.mxu0 0
    %3971 = vmatpush1.bf16.msra.mxu0 0
    %3972 = vmatprep.subr.bf16.mxu0 0
    %3973 = vmatpush1.bf16.msra.mxu0 0
    %3974 = vmatprep.subr.bf16.mxu0 0
    %3975 = vmatpush1.bf16.msra.mxu0 0
    %3976 = vmatprep.subr.bf16.mxu0 0
    %3977 = vmatpush1.bf16.msra.mxu0 0
    %3978 = vmatprep.subr.bf16.mxu0 0
    %3979 = vmatpush1.bf16.msra.mxu0 0
    %3980 = vmatprep.subr.bf16.mxu0 0
    %3981 = vmatpush1.bf16.msra.mxu0 0
    %3982 = vmatprep.subr.bf16.mxu0 0
    %3983 = vmatpush1.bf16.msra.mxu0 0
    %3984 = vmatprep.subr.bf16.mxu0 0
    %3985 = vmatpush1.bf16.msra.mxu0 0
    %3986 = vmatprep.subr.bf16.mxu0 0
    %3987 = vmatpush1.bf16.msra.mxu0 0
    %3988 = vmatprep.subr.bf16.mxu0 0
    %3989 = vmatpush1.bf16.msra.mxu0 0
    %3990 = vmatprep.subr.bf16.mxu0 0
    %3991 = vmatpush1.bf16.msra.mxu0 0
    %3992 = vmatprep.subr.bf16.mxu0 0
    %3993 = vmatpush1.bf16.msra.mxu0 0
    %3994 = vmatprep.mubr.bf16.mxu0 0
    %3995 = vmatmul.mubr.bf16.gmra.mrb[0].mxu0 %v3344
    %v3996 = vpop.f32.mrb[0].mxu0
    %v3997 = vadd.f32 0.0, %v3996
    %v3998 = vpop.f32.mrb[0].mxu0
    %v3999 = vadd.f32 0.0, %v3998
    %v4000 = vpop.f32.mrb[0].mxu0
    %v4001 = vadd.f32 0.0, %v4000
    %v4002 = vpop.f32.mrb[0].mxu0
    %v4003 = vadd.f32 0.0, %v4002
    %4004 = vmatprep.mubr.bf16.mxu0 0
    %4005 = vmatmul.mubr.bf16.gmra.mrb[0].mxu0 %v3347
    %v4006 = vpop.f32.mrb[0].mxu0
    %v4007 = vadd.f32 0.0, %v4006
    %v4008 = vpop.f32.mrb[0].mxu0
    %v4009 = vadd.f32 0.0, %v4008
    %v4010 = vpop.f32.mrb[0].mxu0
    %v4011 = vadd.f32 0.0, %v4010
    %v4012 = vpop.f32.mrb[0].mxu0
    %v4013 = vadd.f32 0.0, %v4012
    %4014 = vmatprep.mubr.bf16.mxu0 0
    %4015 = vmatmul.mubr.bf16.gmra.mrb[0].mxu0 %v3350
    %v4016 = vpop.f32.mrb[0].mxu0
    %v4017 = vadd.f32 0.0, %v4016
    %v4018 = vpop.f32.mrb[0].mxu0
    %v4019 = vadd.f32 0.0, %v4018
    %v4020 = vpop.f32.mrb[0].mxu0
    %v4021 = vpop.f32.mrb[0].mxu0
    %4022 = vdwg.mxu0
    %4023 = vmatprep.subr.bf16.mxu0 %v2280
    %4024 = vmatpush1.bf16.msra.mxu0 %v2279
    %4025 = vmatprep.subr.bf16.mxu0 %v2312
    %4026 = vmatpush1.bf16.msra.mxu0 %v2311
    %4027 = vmatprep.subr.bf16.mxu0 0
    %4028 = vmatpush1.bf16.msra.mxu0 0
    %4029 = vmatprep.subr.bf16.mxu0 0
    %4030 = vmatpush1.bf16.msra.mxu0 0
    %4031 = vmatprep.subr.bf16.mxu0 0
    %4032 = vmatpush1.bf16.msra.mxu0 0
    %4033 = vmatprep.subr.bf16.mxu0 0
    %4034 = vmatpush1.bf16.msra.mxu0 0
    %4035 = vmatprep.subr.bf16.mxu0 0
    %4036 = vmatpush1.bf16.msra.mxu0 0
    %4037 = vmatprep.subr.bf16.mxu0 0
    %4038 = vmatpush1.bf16.msra.mxu0 0
    %4039 = vmatprep.subr.bf16.mxu0 0
    %4040 = vmatpush1.bf16.msra.mxu0 0
    %4041 = vmatprep.subr.bf16.mxu0 0
    %4042 = vmatpush1.bf16.msra.mxu0 0
    %4043 = vmatprep.subr.bf16.mxu0 0
    %4044 = vmatpush1.bf16.msra.mxu0 0
    %4045 = vmatprep.subr.bf16.mxu0 0
    %4046 = vmatpush1.bf16.msra.mxu0 0
    %4047 = vmatprep.subr.bf16.mxu0 0
    %4048 = vmatpush1.bf16.msra.mxu0 0
    %4049 = vmatprep.subr.bf16.mxu0 0
    %4050 = vmatpush1.bf16.msra.mxu0 0
    %4051 = vmatprep.subr.bf16.mxu0 0
    %4052 = vmatpush1.bf16.msra.mxu0 0
    %4053 = vmatprep.subr.bf16.mxu0 0
    %4054 = vmatpush1.bf16.msra.mxu0 0
    %4055 = vmatprep.mubr.bf16.mxu0 0
    %4056 = vmatmul.mubr.bf16.gmra.mrb[0].mxu0 %v3344
    %v4057 = vpop.f32.mrb[0].mxu0
    %v4058 = vadd.f32 0.0, %v4057
    %v4059 = vpop.f32.mrb[0].mxu0
    %v4060 = vadd.f32 0.0, %v4059
    %v4061 = vpop.f32.mrb[0].mxu0
    %v4062 = vadd.f32 0.0, %v4061
    %v4063 = vpop.f32.mrb[0].mxu0
    %v4064 = vadd.f32 0.0, %v4063
    %4065 = vmatprep.mubr.bf16.mxu0 0
    %4066 = vmatmul.mubr.bf16.gmra.mrb[0].mxu0 %v3347
    %v4067 = vpop.f32.mrb[0].mxu0
    %v4068 = vadd.f32 0.0, %v4067
    %v4069 = vpop.f32.mrb[0].mxu0
    %v4070 = vadd.f32 0.0, %v4069
    %v4071 = vpop.f32.mrb[0].mxu0
    %v4072 = vadd.f32 0.0, %v4071
    %v4073 = vpop.f32.mrb[0].mxu0
    %v4074 = vadd.f32 0.0, %v4073
    %4075 = vmatprep.mubr.bf16.mxu0 0
    %4076 = vmatmul.mubr.bf16.gmra.mrb[0].mxu0 %v3350
    %v4077 = vpop.f32.mrb[0].mxu0
    %v4078 = vadd.f32 0.0, %v4077
    %v4079 = vpop.f32.mrb[0].mxu0
    %v4080 = vadd.f32 0.0, %v4079
    %v4081 = vpop.f32.mrb[0].mxu0
    %v4082 = vpop.f32.mrb[0].mxu0
    %4083 = vdwg.mxu0
    %4084 = vmatprep.subr.bf16.mxu0 %v2282
    %4085 = vmatpush1.bf16.msra.mxu0 %v2281
    %4086 = vmatprep.subr.bf16.mxu0 %v2314
    %4087 = vmatpush1.bf16.msra.mxu0 %v2313
    %4088 = vmatprep.subr.bf16.mxu0 0
    %4089 = vmatpush1.bf16.msra.mxu0 0
    %4090 = vmatprep.subr.bf16.mxu0 0
    %4091 = vmatpush1.bf16.msra.mxu0 0
    %4092 = vmatprep.subr.bf16.mxu0 0
    %4093 = vmatpush1.bf16.msra.mxu0 0
    %4094 = vmatprep.subr.bf16.mxu0 0
    %4095 = vmatpush1.bf16.msra.mxu0 0
    %4096 = vmatprep.subr.bf16.mxu0 0
    %4097 = vmatpush1.bf16.msra.mxu0 0
    %4098 = vmatprep.subr.bf16.mxu0 0
    %4099 = vmatpush1.bf16.msra.mxu0 0
    %4100 = vmatprep.subr.bf16.mxu0 0
    %4101 = vmatpush1.bf16.msra.mxu0 0
    %4102 = vmatprep.subr.bf16.mxu0 0
    %4103 = vmatpush1.bf16.msra.mxu0 0
    %4104 = vmatprep.subr.bf16.mxu0 0
    %4105 = vmatpush1.bf16.msra.mxu0 0
    %4106 = vmatprep.subr.bf16.mxu0 0
    %4107 = vmatpush1.bf16.msra.mxu0 0
    %4108 = vmatprep.subr.bf16.mxu0 0
    %4109 = vmatpush1.bf16.msra.mxu0 0
    %4110 = vmatprep.subr.bf16.mxu0 0
    %4111 = vmatpush1.bf16.msra.mxu0 0
    %4112 = vmatprep.subr.bf16.mxu0 0
    %4113 = vmatpush1.bf16.msra.mxu0 0
    %4114 = vmatprep.subr.bf16.mxu0 0
    %4115 = vmatpush1.bf16.msra.mxu0 0
    %4116 = vmatprep.mubr.bf16.mxu0 0
    %4117 = vmatmul.mubr.bf16.gmra.mrb[0].mxu0 %v3344
    %v4118 = vpop.f32.mrb[0].mxu0
    %v4119 = vadd.f32 0.0, %v4118
    %v4120 = vpop.f32.mrb[0].mxu0
    %v4121 = vadd.f32 0.0, %v4120
    %v4122 = vpop.f32.mrb[0].mxu0
    %v4123 = vadd.f32 0.0, %v4122
    %v4124 = vpop.f32.mrb[0].mxu0
    %v4125 = vadd.f32 0.0, %v4124
    %4126 = vmatprep.mubr.bf16.mxu0 0
    %4127 = vmatmul.mubr.bf16.gmra.mrb[0].mxu0 %v3347
    %v4128 = vpop.f32.mrb[0].mxu0
    %v4129 = vadd.f32 0.0, %v4128
    %v4130 = vpop.f32.mrb[0].mxu0
    %v4131 = vadd.f32 0.0, %v4130
    %v4132 = vpop.f32.mrb[0].mxu0
    %v4133 = vadd.f32 0.0, %v4132
    %v4134 = vpop.f32.mrb[0].mxu0
    %v4135 = vadd.f32 0.0, %v4134
    %4136 = vmatprep.mubr.bf16.mxu0 0
    %4137 = vmatmul.mubr.bf16.gmra.mrb[0].mxu0 %v3350
    %v4138 = vpop.f32.mrb[0].mxu0
    %v4139 = vadd.f32 0.0, %v4138
    %v4140 = vpop.f32.mrb[0].mxu0
    %v4141 = vadd.f32 0.0, %v4140
    %v4142 = vpop.f32.mrb[0].mxu0
    %v4143 = vpop.f32.mrb[0].mxu0
    %4144 = vdwg.mxu0
    %4145 = vmatprep.subr.bf16.mxu0 %v2284
    %4146 = vmatpush1.bf16.msra.mxu0 %v2283
    %4147 = vmatprep.subr.bf16.mxu0 %v2316
    %4148 = vmatpush1.bf16.msra.mxu0 %v2315
    %4149 = vmatprep.subr.bf16.mxu0 0
    %4150 = vmatpush1.bf16.msra.mxu0 0
    %4151 = vmatprep.subr.bf16.mxu0 0
    %4152 = vmatpush1.bf16.msra.mxu0 0
    %4153 = vmatprep.subr.bf16.mxu0 0
    %4154 = vmatpush1.bf16.msra.mxu0 0
    %4155 = vmatprep.subr.bf16.mxu0 0
    %4156 = vmatpush1.bf16.msra.mxu0 0
    %4157 = vmatprep.subr.bf16.mxu0 0
    %4158 = vmatpush1.bf16.msra.mxu0 0
    %4159 = vmatprep.subr.bf16.mxu0 0
    %4160 = vmatpush1.bf16.msra.mxu0 0
    %4161 = vmatprep.subr.bf16.mxu0 0
    %4162 = vmatpush1.bf16.msra.mxu0 0
    %4163 = vmatprep.subr.bf16.mxu0 0
    %4164 = vmatpush1.bf16.msra.mxu0 0
    %4165 = vmatprep.subr.bf16.mxu0 0
    %4166 = vmatpush1.bf16.msra.mxu0 0
    %4167 = vmatprep.subr.bf16.mxu0 0
    %4168 = vmatpush1.bf16.msra.mxu0 0
    %4169 = vmatprep.subr.bf16.mxu0 0
    %4170 = vmatpush1.bf16.msra.mxu0 0
    %4171 = vmatprep.subr.bf16.mxu0 0
    %4172 = vmatpush1.bf16.msra.mxu0 0
    %4173 = vmatprep.subr.bf16.mxu0 0
    %4174 = vmatpush1.bf16.msra.mxu0 0
    %4175 = vmatprep.subr.bf16.mxu0 0
    %4176 = vmatpush1.bf16.msra.mxu0 0
    %4177 = vmatprep.mubr.bf16.mxu0 0
    %4178 = vmatmul.mubr.bf16.gmra.mrb[0].mxu0 %v3344
    %v4179 = vpop.f32.mrb[0].mxu0
    %v4180 = vadd.f32 0.0, %v4179
    %v4181 = vpop.f32.mrb[0].mxu0
    %v4182 = vadd.f32 0.0, %v4181
    %v4183 = vpop.f32.mrb[0].mxu0
    %v4184 = vadd.f32 0.0, %v4183
    %v4185 = vpop.f32.mrb[0].mxu0
    %v4186 = vadd.f32 0.0, %v4185
    %4187 = vmatprep.mubr.bf16.mxu0 0
    %4188 = vmatmul.mubr.bf16.gmra.mrb[0].mxu0 %v3347
    %v4189 = vpop.f32.mrb[0].mxu0
    %v4190 = vadd.f32 0.0, %v4189
    %v4191 = vpop.f32.mrb[0].mxu0
    %v4192 = vadd.f32 0.0, %v4191
    %v4193 = vpop.f32.mrb[0].mxu0
    %v4194 = vadd.f32 0.0, %v4193
    %v4195 = vpop.f32.mrb[0].mxu0
    %v4196 = vadd.f32 0.0, %v4195
    %4197 = vmatprep.mubr.bf16.mxu0 0
    %4198 = vmatmul.mubr.bf16.gmra.mrb[0].mxu0 %v3350
    %v4199 = vpop.f32.mrb[0].mxu0
    %v4200 = vadd.f32 0.0, %v4199
    %v4201 = vpop.f32.mrb[0].mxu0
    %v4202 = vadd.f32 0.0, %v4201
    %v4203 = vpop.f32.mrb[0].mxu0
    %v4204 = vpop.f32.mrb[0].mxu0
    %4205 = vdwg.mxu0
    %4206 = vmatprep.subr.bf16.mxu0 %v2286
    %4207 = vmatpush1.bf16.msra.mxu0 %v2285
    %4208 = vmatprep.subr.bf16.mxu0 %v2318
    %4209 = vmatpush1.bf16.msra.mxu0 %v2317
    %4210 = vmatprep.subr.bf16.mxu0 0
    %4211 = vmatpush1.bf16.msra.mxu0 0
    %4212 = vmatprep.subr.bf16.mxu0 0
    %4213 = vmatpush1.bf16.msra.mxu0 0
    %4214 = vmatprep.subr.bf16.mxu0 0
    %4215 = vmatpush1.bf16.msra.mxu0 0
    %4216 = vmatprep.subr.bf16.mxu0 0
    %4217 = vmatpush1.bf16.msra.mxu0 0
    %4218 = vmatprep.subr.bf16.mxu0 0
    %4219 = vmatpush1.bf16.msra.mxu0 0
    %4220 = vmatprep.subr.bf16.mxu0 0
    %4221 = vmatpush1.bf16.msra.mxu0 0
    %4222 = vmatprep.subr.bf16.mxu0 0
    %4223 = vmatpush1.bf16.msra.mxu0 0
    %4224 = vmatprep.subr.bf16.mxu0 0
    %4225 = vmatpush1.bf16.msra.mxu0 0
    %4226 = vmatprep.subr.bf16.mxu0 0
    %4227 = vmatpush1.bf16.msra.mxu0 0
    %4228 = vmatprep.subr.bf16.mxu0 0
    %4229 = vmatpush1.bf16.msra.mxu0 0
    %4230 = vmatprep.subr.bf16.mxu0 0
    %4231 = vmatpush1.bf16.msra.mxu0 0
    %4232 = vmatprep.subr.bf16.mxu0 0
    %4233 = vmatpush1.bf16.msra.mxu0 0
    %4234 = vmatprep.subr.bf16.mxu0 0
    %4235 = vmatpush1.bf16.msra.mxu0 0
    %4236 = vmatprep.subr.bf16.mxu0 0
    %4237 = vmatpush1.bf16.msra.mxu0 0
    %4238 = vmatprep.mubr.bf16.mxu0 0
    %4239 = vmatmul.mubr.bf16.gmra.mrb[0].mxu0 %v3344
    %v4240 = vpop.f32.mrb[0].mxu0
    %v4241 = vadd.f32 0.0, %v4240
    %v4242 = vpop.f32.mrb[0].mxu0
    %v4243 = vadd.f32 0.0, %v4242
    %v4244 = vpop.f32.mrb[0].mxu0
    %v4245 = vadd.f32 0.0, %v4244
    %v4246 = vpop.f32.mrb[0].mxu0
    %v4247 = vadd.f32 0.0, %v4246
    %4248 = vmatprep.mubr.bf16.mxu0 0
    %4249 = vmatmul.mubr.bf16.gmra.mrb[0].mxu0 %v3347
    %v4250 = vpop.f32.mrb[0].mxu0
    %v4251 = vadd.f32 0.0, %v4250
    %v4252 = vpop.f32.mrb[0].mxu0
    %v4253 = vadd.f32 0.0, %v4252
    %v4254 = vpop.f32.mrb[0].mxu0
    %v4255 = vadd.f32 0.0, %v4254
    %v4256 = vpop.f32.mrb[0].mxu0
    %v4257 = vadd.f32 0.0, %v4256
    %4258 = vmatprep.mubr.bf16.mxu0 0
    %4259 = vmatmul.mubr.bf16.gmra.mrb[0].mxu0 %v3350
    %v4260 = vpop.f32.mrb[0].mxu0
    %v4261 = vadd.f32 0.0, %v4260
    %v4262 = vpop.f32.mrb[0].mxu0
    %v4263 = vadd.f32 0.0, %v4262
    %v4264 = vpop.f32.mrb[0].mxu0
    %v4265 = vpop.f32.mrb[0].mxu0
    %4266 = vdwg.mxu0
    %4267 = vmatprep.subr.bf16.mxu0 %v2288
    %4268 = vmatpush1.bf16.msra.mxu0 %v2287
    %4269 = vmatprep.subr.bf16.mxu0 %v2320
    %4270 = vmatpush1.bf16.msra.mxu0 %v2319
    %4271 = vmatprep.subr.bf16.mxu0 0
    %4272 = vmatpush1.bf16.msra.mxu0 0
    %4273 = vmatprep.subr.bf16.mxu0 0
    %4274 = vmatpush1.bf16.msra.mxu0 0
    %4275 = vmatprep.subr.bf16.mxu0 0
    %4276 = vmatpush1.bf16.msra.mxu0 0
    %4277 = vmatprep.subr.bf16.mxu0 0
    %4278 = vmatpush1.bf16.msra.mxu0 0
    %4279 = vmatprep.subr.bf16.mxu0 0
    %4280 = vmatpush1.bf16.msra.mxu0 0
    %4281 = vmatprep.subr.bf16.mxu0 0
    %4282 = vmatpush1.bf16.msra.mxu0 0
    %4283 = vmatprep.subr.bf16.mxu0 0
    %4284 = vmatpush1.bf16.msra.mxu0 0
    %4285 = vmatprep.subr.bf16.mxu0 0
    %4286 = vmatpush1.bf16.msra.mxu0 0
    %4287 = vmatprep.subr.bf16.mxu0 0
    %4288 = vmatpush1.bf16.msra.mxu0 0
    %4289 = vmatprep.subr.bf16.mxu0 0
    %4290 = vmatpush1.bf16.msra.mxu0 0
    %4291 = vmatprep.subr.bf16.mxu0 0
    %4292 = vmatpush1.bf16.msra.mxu0 0
    %4293 = vmatprep.subr.bf16.mxu0 0
    %4294 = vmatpush1.bf16.msra.mxu0 0
    %4295 = vmatprep.subr.bf16.mxu0 0
    %4296 = vmatpush1.bf16.msra.mxu0 0
    %4297 = vmatprep.subr.bf16.mxu0 0
    %4298 = vmatpush1.bf16.msra.mxu0 0
    %4299 = vmatprep.mubr.bf16.mxu0 0
    %4300 = vmatmul.mubr.bf16.gmra.mrb[0].mxu0 %v3344
    %v4301 = vpop.f32.mrb[0].mxu0
    %v4302 = vadd.f32 0.0, %v4301
    %v4303 = vpop.f32.mrb[0].mxu0
    %v4304 = vadd.f32 0.0, %v4303
    %v4305 = vpop.f32.mrb[0].mxu0
    %v4306 = vadd.f32 0.0, %v4305
    %v4307 = vpop.f32.mrb[0].mxu0
    %v4308 = vadd.f32 0.0, %v4307
    %4309 = vmatprep.mubr.bf16.mxu0 0
    %4310 = vmatmul.mubr.bf16.gmra.mrb[0].mxu0 %v3347
    %v4311 = vpop.f32.mrb[0].mxu0
    %v4312 = vadd.f32 0.0, %v4311
    %v4313 = vpop.f32.mrb[0].mxu0
    %v4314 = vadd.f32 0.0, %v4313
    %v4315 = vpop.f32.mrb[0].mxu0
    %v4316 = vadd.f32 0.0, %v4315
    %v4317 = vpop.f32.mrb[0].mxu0
    %v4318 = vadd.f32 0.0, %v4317
    %4319 = vmatprep.mubr.bf16.mxu0 0
    %4320 = vmatmul.mubr.bf16.gmra.mrb[0].mxu0 %v3350
    %v4321 = vpop.f32.mrb[0].mxu0
    %v4322 = vadd.f32 0.0, %v4321
    %v4323 = vpop.f32.mrb[0].mxu0
    %v4324 = vadd.f32 0.0, %v4323
    %v4325 = vpop.f32.mrb[0].mxu0
    %v4326 = vpop.f32.mrb[0].mxu0
    %4327 = vdwg.mxu0
    %v4328 = vld [vmem:[%s7] sm:$0xff]
    %v4329 = vld [vmem:[%s7 + $0x8] sm:$0x1]
    %v4330 = vstv %s45
    %v4331 = vadd.f32 %v2404, %v4330
    %v4332 = vadd.f32 %v2406, %v4330
    %v4333 = vadd.f32 %v2465, %v4330
    %v4334 = vadd.f32 %v2467, %v4330
    %v4335 = vadd.f32 %v2526, %v4330
    %v4336 = vadd.f32 %v2528, %v4330
    %v4337 = vadd.f32 %v2587, %v4330
    %v4338 = vadd.f32 %v2589, %v4330
    %v4339 = vadd.f32 %v2648, %v4330
    %v4340 = vadd.f32 %v2650, %v4330
    %v4341 = vadd.f32 %v2709, %v4330
    %v4342 = vadd.f32 %v2711, %v4330
    %v4343 = vadd.f32 %v2770, %v4330
    %v4344 = vadd.f32 %v2772, %v4330
    %v4345 = vadd.f32 %v2831, %v4330
    %v4346 = vadd.f32 %v2833, %v4330
    %v4347 = vadd.f32 %v2892, %v4330
    %v4348 = vadd.f32 %v2894, %v4330
    %v4349 = vadd.f32 %v2953, %v4330
    %v4350 = vadd.f32 %v2955, %v4330
    %v4351 = vadd.f32 %v3014, %v4330
    %v4352 = vadd.f32 %v3016, %v4330
    %v4353 = vadd.f32 %v3075, %v4330
    %v4354 = vadd.f32 %v3077, %v4330
    %v4355 = vadd.f32 %v3136, %v4330
    %v4356 = vadd.f32 %v3138, %v4330
    %v4357 = vadd.f32 %v3197, %v4330
    %v4358 = vadd.f32 %v3199, %v4330
    %v4359 = vadd.f32 %v3258, %v4330
    %v4360 = vadd.f32 %v3260, %v4330
    %v4361 = vadd.f32 %v3319, %v4330
    %v4362 = vadd.f32 %v3321, %v4330
    %4364 = vset.pattern.permute.xlu0 0
    %4365 = vperm.xlu0 %4364, %v4328
    %v4366 = vpop.permute.xlu0 %4365
    %v4368 = vsub.f32 %v4366, %v3407
    %v4369 = vsub.f32 %v4366, %v3409
    %v4370 = vsub.f32 %v4366, %v3468
    %v4371 = vsub.f32 %v4366, %v3470
    %v4372 = vsub.f32 %v4366, %v3529
    %v4373 = vsub.f32 %v4366, %v3531
    %v4374 = vsub.f32 %v4366, %v3590
    %v4375 = vsub.f32 %v4366, %v3592
    %v4376 = vsub.f32 %v4366, %v3651
    %v4377 = vsub.f32 %v4366, %v3653
    %v4378 = vsub.f32 %v4366, %v3712
    %v4379 = vsub.f32 %v4366, %v3714
    %v4380 = vsub.f32 %v4366, %v3773
    %v4381 = vsub.f32 %v4366, %v3775
    %v4382 = vsub.f32 %v4366, %v3834
    %v4383 = vsub.f32 %v4366, %v3836
    %v4384 = vsub.f32 %v4366, %v3895
    %v4385 = vsub.f32 %v4366, %v3897
    %v4386 = vsub.f32 %v4366, %v3956
    %v4387 = vsub.f32 %v4366, %v3958
    %v4388 = vsub.f32 %v4366, %v4017
    %v4389 = vsub.f32 %v4366, %v4019
    %v4390 = vsub.f32 %v4366, %v4078
    %v4391 = vsub.f32 %v4366, %v4080
    %v4392 = vsub.f32 %v4366, %v4139
    %v4393 = vsub.f32 %v4366, %v4141
    %v4394 = vsub.f32 %v4366, %v4200
    %v4395 = vsub.f32 %v4366, %v4202
    %v4396 = vsub.f32 %v4366, %v4261
    %v4397 = vsub.f32 %v4366, %v4263
    %v4398 = vsub.f32 %v4366, %v4322
    %v4399 = vsub.f32 %v4366, %v4324
    %v4400 = vadd.f32 %v824, %v2384
    %v4401 = vadd.f32 %v826, %v2386
    %v4402 = vadd.f32 %v897, %v2445
    %v4403 = vadd.f32 %v899, %v2447
    %v4404 = vadd.f32 %v970, %v2506
    %v4405 = vadd.f32 %v972, %v2508
    %v4406 = vadd.f32 %v1043, %v2567
    %v4407 = vadd.f32 %v1045, %v2569
    %v4408 = vadd.f32 %v1116, %v2628
    %v4409 = vadd.f32 %v1118, %v2630
    %v4410 = vadd.f32 %v1189, %v2689
    %v4411 = vadd.f32 %v1191, %v2691
    %v4412 = vadd.f32 %v1262, %v2750
    %v4413 = vadd.f32 %v1264, %v2752
    %v4414 = vadd.f32 %v1335, %v2811
    %v4415 = vadd.f32 %v1337, %v2813
    %v4416 = vadd.f32 %v1408, %v2872
    %v4417 = vadd.f32 %v1410, %v2874
    %v4418 = vadd.f32 %v1481, %v2933
    %v4419 = vadd.f32 %v1483, %v2935
    %v4420 = vadd.f32 %v1554, %v2994
    %v4421 = vadd.f32 %v1556, %v2996
    %v4422 = vadd.f32 %v1627, %v3055
    %v4423 = vadd.f32 %v1629, %v3057
    %v4424 = vadd.f32 %v1700, %v3116
    %v4425 = vadd.f32 %v1702, %v3118
    %v4426 = vadd.f32 %v1773, %v3177
    %v4427 = vadd.f32 %v1775, %v3179
    %v4428 = vadd.f32 %v1846, %v3238
    %v4429 = vadd.f32 %v1848, %v3240
    %v4430 = vadd.f32 %v1919, %v3299
    %v4431 = vadd.f32 %v1921, %v3301
    %v4432 = vadd.f32 %v828, %v2388
    %v4433 = vadd.f32 %v830, %v2390
    %v4434 = vadd.f32 %v901, %v2449
    %v4435 = vadd.f32 %v903, %v2451
    %v4436 = vadd.f32 %v974, %v2510
    %v4437 = vadd.f32 %v976, %v2512
    %v4438 = vadd.f32 %v1047, %v2571
    %v4439 = vadd.f32 %v1049, %v2573
    %v4440 = vadd.f32 %v1120, %v2632
    %v4441 = vadd.f32 %v1122, %v2634
    %v4442 = vadd.f32 %v1193, %v2693
    %v4443 = vadd.f32 %v1195, %v2695
    %v4444 = vadd.f32 %v1266, %v2754
    %v4445 = vadd.f32 %v1268, %v2756
    %v4446 = vadd.f32 %v1339, %v2815
    %v4447 = vadd.f32 %v1341, %v2817
    %v4448 = vadd.f32 %v1412, %v2876
    %v4449 = vadd.f32 %v1414, %v2878
    %v4450 = vadd.f32 %v1485, %v2937
    %v4451 = vadd.f32 %v1487, %v2939
    %v4452 = vadd.f32 %v1558, %v2998
    %v4453 = vadd.f32 %v1560, %v3000
    %v4454 = vadd.f32 %v1631, %v3059
    %v4455 = vadd.f32 %v1633, %v3061
    %v4456 = vadd.f32 %v1704, %v3120
    %v4457 = vadd.f32 %v1706, %v3122
    %v4458 = vadd.f32 %v1777, %v3181
    %v4459 = vadd.f32 %v1779, %v3183
    %v4460 = vadd.f32 %v1850, %v3242
    %v4461 = vadd.f32 %v1852, %v3244
    %v4462 = vadd.f32 %v1923, %v3303
    %v4463 = vadd.f32 %v1925, %v3305
    %v4464 = vadd.f32 %v834, %v2394
    %v4465 = vadd.f32 %v836, %v2396
    %v4466 = vadd.f32 %v907, %v2455
    %v4467 = vadd.f32 %v909, %v2457
    %v4468 = vadd.f32 %v980, %v2516
    %v4469 = vadd.f32 %v982, %v2518
    %v4470 = vadd.f32 %v1053, %v2577
    %v4471 = vadd.f32 %v1055, %v2579
    %v4472 = vadd.f32 %v1126, %v2638
    %v4473 = vadd.f32 %v1128, %v2640
    %v4474 = vadd.f32 %v1199, %v2699
    %v4475 = vadd.f32 %v1201, %v2701
    %v4476 = vadd.f32 %v1272, %v2760
    %v4477 = vadd.f32 %v1274, %v2762
    %v4478 = vadd.f32 %v1345, %v2821
    %v4479 = vadd.f32 %v1347, %v2823
    %v4480 = vadd.f32 %v1418, %v2882
    %v4481 = vadd.f32 %v1420, %v2884
    %v4482 = vadd.f32 %v1491, %v2943
    %v4483 = vadd.f32 %v1493, %v2945
    %v4484 = vadd.f32 %v1564, %v3004
    %v4485 = vadd.f32 %v1566, %v3006
    %v4486 = vadd.f32 %v1637, %v3065
    %v4487 = vadd.f32 %v1639, %v3067
    %v4488 = vadd.f32 %v1710, %v3126
    %v4489 = vadd.f32 %v1712, %v3128
    %v4490 = vadd.f32 %v1783, %v3187
    %v4491 = vadd.f32 %v1785, %v3189
    %v4492 = vadd.f32 %v1856, %v3248
    %v4493 = vadd.f32 %v1858, %v3250
    %v4494 = vadd.f32 %v1929, %v3309
    %v4495 = vadd.f32 %v1931, %v3311
    %v4496 = vadd.f32 %v838, %v2398
    %v4497 = vadd.f32 %v840, %v2400
    %v4498 = vadd.f32 %v911, %v2459
    %v4499 = vadd.f32 %v913, %v2461
    %v4500 = vadd.f32 %v984, %v2520
    %v4501 = vadd.f32 %v986, %v2522
    %v4502 = vadd.f32 %v1057, %v2581
    %v4503 = vadd.f32 %v1059, %v2583
    %v4504 = vadd.f32 %v1130, %v2642
    %v4505 = vadd.f32 %v1132, %v2644
    %v4506 = vadd.f32 %v1203, %v2703
    %v4507 = vadd.f32 %v1205, %v2705
    %v4508 = vadd.f32 %v1276, %v2764
    %v4509 = vadd.f32 %v1278, %v2766
    %v4510 = vadd.f32 %v1349, %v2825
    %v4511 = vadd.f32 %v1351, %v2827
    %v4512 = vadd.f32 %v1422, %v2886
    %v4513 = vadd.f32 %v1424, %v2888
    %v4514 = vadd.f32 %v1495, %v2947
    %v4515 = vadd.f32 %v1497, %v2949
    %v4516 = vadd.f32 %v1568, %v3008
    %v4517 = vadd.f32 %v1570, %v3010
    %v4518 = vadd.f32 %v1641, %v3069
    %v4519 = vadd.f32 %v1643, %v3071
    %v4520 = vadd.f32 %v1714, %v3130
    %v4521 = vadd.f32 %v1716, %v3132
    %v4522 = vadd.f32 %v1787, %v3191
    %v4523 = vadd.f32 %v1789, %v3193
    %v4524 = vadd.f32 %v1860, %v3252
    %v4525 = vadd.f32 %v1862, %v3254
    %v4526 = vadd.f32 %v1933, %v3313
    %v4527 = vadd.f32 %v1935, %v3315
    %v4528 = vsub.f32 %v4400, %v3387
    %v4529 = vsub.f32 %v4401, %v3389
    %v4530 = vsub.f32 %v4402, %v3448
    %v4531 = vsub.f32 %v4403, %v3450
    %v4532 = vsub.f32 %v4404, %v3509
    %v4533 = vsub.f32 %v4405, %v3511
    %v4534 = vsub.f32 %v4406, %v3570
    %v4535 = vsub.f32 %v4407, %v3572
    %v4536 = vsub.f32 %v4408, %v3631
    %v4537 = vsub.f32 %v4409, %v3633
    %v4538 = vsub.f32 %v4410, %v3692
    %v4539 = vsub.f32 %v4411, %v3694
    %v4540 = vsub.f32 %v4412, %v3753
    %v4541 = vsub.f32 %v4413, %v3755
    %v4542 = vsub.f32 %v4414, %v3814
    %v4543 = vsub.f32 %v4415, %v3816
    %v4544 = vsub.f32 %v4416, %v3875
    %v4545 = vsub.f32 %v4417, %v3877
    %v4546 = vsub.f32 %v4418, %v3936
    %v4547 = vsub.f32 %v4419, %v3938
    %v4548 = vsub.f32 %v4420, %v3997
    %v4549 = vsub.f32 %v4421, %v3999
    %v4550 = vsub.f32 %v4422, %v4058
    %v4551 = vsub.f32 %v4423, %v4060
    %v4552 = vsub.f32 %v4424, %v4119
    %v4553 = vsub.f32 %v4425, %v4121
    %v4554 = vsub.f32 %v4426, %v4180
    %v4555 = vsub.f32 %v4427, %v4182
    %v4556 = vsub.f32 %v4428, %v4241
    %v4557 = vsub.f32 %v4429, %v4243
    %v4558 = vsub.f32 %v4430, %v4302
    %v4559 = vsub.f32 %v4431, %v4304
    %v4560 = vsub.f32 %v4432, %v3391
    %v4561 = vsub.f32 %v4433, %v3393
    %v4562 = vsub.f32 %v4434, %v3452
    %v4563 = vsub.f32 %v4435, %v3454
    %v4564 = vsub.f32 %v4436, %v3513
    %v4565 = vsub.f32 %v4437, %v3515
    %v4566 = vsub.f32 %v4438, %v3574
    %v4567 = vsub.f32 %v4439, %v3576
    %v4568 = vsub.f32 %v4440, %v3635
    %v4569 = vsub.f32 %v4441, %v3637
    %v4570 = vsub.f32 %v4442, %v3696
    %v4571 = vsub.f32 %v4443, %v3698
    %v4572 = vsub.f32 %v4444, %v3757
    %v4573 = vsub.f32 %v4445, %v3759
    %v4574 = vsub.f32 %v4446, %v3818
    %v4575 = vsub.f32 %v4447, %v3820
    %v4576 = vsub.f32 %v4448, %v3879
    %v4577 = vsub.f32 %v4449, %v3881
    %v4578 = vsub.f32 %v4450, %v3940
    %v4579 = vsub.f32 %v4451, %v3942
    %v4580 = vsub.f32 %v4452, %v4001
    %v4581 = vsub.f32 %v4453, %v4003
    %v4582 = vsub.f32 %v4454, %v4062
    %v4583 = vsub.f32 %v4455, %v4064
    %v4584 = vsub.f32 %v4456, %v4123
    %v4585 = vsub.f32 %v4457, %v4125
    %v4586 = vsub.f32 %v4458, %v4184
    %v4587 = vsub.f32 %v4459, %v4186
    %v4588 = vsub.f32 %v4460, %v4245
    %v4589 = vsub.f32 %v4461, %v4247
    %v4590 = vsub.f32 %v4462, %v4306
    %v4591 = vsub.f32 %v4463, %v4308
    %v4592 = vsub.f32 %v4464, %v3397
    %v4593 = vsub.f32 %v4465, %v3399
    %v4594 = vsub.f32 %v4466, %v3458
    %v4595 = vsub.f32 %v4467, %v3460
    %v4596 = vsub.f32 %v4468, %v3519
    %v4597 = vsub.f32 %v4469, %v3521
    %v4598 = vsub.f32 %v4470, %v3580
    %v4599 = vsub.f32 %v4471, %v3582
    %v4600 = vsub.f32 %v4472, %v3641
    %v4601 = vsub.f32 %v4473, %v3643
    %v4602 = vsub.f32 %v4474, %v3702
    %v4603 = vsub.f32 %v4475, %v3704
    %v4604 = vsub.f32 %v4476, %v3763
    %v4605 = vsub.f32 %v4477, %v3765
    %v4606 = vsub.f32 %v4478, %v3824
    %v4607 = vsub.f32 %v4479, %v3826
    %v4608 = vsub.f32 %v4480, %v3885
    %v4609 = vsub.f32 %v4481, %v3887
    %v4610 = vsub.f32 %v4482, %v3946
    %v4611 = vsub.f32 %v4483, %v3948
    %v4612 = vsub.f32 %v4484, %v4007
    %v4613 = vsub.f32 %v4485, %v4009
    %v4614 = vsub.f32 %v4486, %v4068
    %v4615 = vsub.f32 %v4487, %v4070
    %v4616 = vsub.f32 %v4488, %v4129
    %v4617 = vsub.f32 %v4489, %v4131
    %v4618 = vsub.f32 %v4490, %v4190
    %v4619 = vsub.f32 %v4491, %v4192
    %v4620 = vsub.f32 %v4492, %v4251
    %v4621 = vsub.f32 %v4493, %v4253
    %v4622 = vsub.f32 %v4494, %v4312
    %v4623 = vsub.f32 %v4495, %v4314
    %v4624 = vsub.f32 %v4496, %v3401
    %v4625 = vsub.f32 %v4497, %v3403
    %v4626 = vsub.f32 %v4498, %v3462
    %v4627 = vsub.f32 %v4499, %v3464
    %v4628 = vsub.f32 %v4500, %v3523
    %v4629 = vsub.f32 %v4501, %v3525
    %v4630 = vsub.f32 %v4502, %v3584
    %v4631 = vsub.f32 %v4503, %v3586
    %v4632 = vsub.f32 %v4504, %v3645
    %v4633 = vsub.f32 %v4505, %v3647
    %v4634 = vsub.f32 %v4506, %v3706
    %v4635 = vsub.f32 %v4507, %v3708
    %v4636 = vsub.f32 %v4508, %v3767
    %v4637 = vsub.f32 %v4509, %v3769
    %v4638 = vsub.f32 %v4510, %v3828
    %v4639 = vsub.f32 %v4511, %v3830
    %v4640 = vsub.f32 %v4512, %v3889
    %v4641 = vsub.f32 %v4513, %v3891
    %v4642 = vsub.f32 %v4514, %v3950
    %v4643 = vsub.f32 %v4515, %v3952
    %v4644 = vsub.f32 %v4516, %v4011
    %v4645 = vsub.f32 %v4517, %v4013
    %v4646 = vsub.f32 %v4518, %v4072
    %v4647 = vsub.f32 %v4519, %v4074
    %v4648 = vsub.f32 %v4520, %v4133
    %v4649 = vsub.f32 %v4521, %v4135
    %v4650 = vsub.f32 %v4522, %v4194
    %v4651 = vsub.f32 %v4523, %v4196
    %v4652 = vsub.f32 %v4524, %v4255
    %v4653 = vsub.f32 %v4525, %v4257
    %v4654 = vsub.f32 %v4526, %v4316
    %v4655 = vsub.f32 %v4527, %v4318
    %v4656 = vmax.f32 %v4528, 0.0
    %v4657 = vmax.f32 %v4529, 0.0
    %v4658 = vmax.f32 %v4530, 0.0
    %v4659 = vmax.f32 %v4531, 0.0
    %v4660 = vmax.f32 %v4532, 0.0
    %v4661 = vmax.f32 %v4533, 0.0
    %v4662 = vmax.f32 %v4534, 0.0
    %v4663 = vmax.f32 %v4535, 0.0
    %v4664 = vmax.f32 %v4536, 0.0
    %v4665 = vmax.f32 %v4537, 0.0
    %v4666 = vmax.f32 %v4538, 0.0
    %v4667 = vmax.f32 %v4539, 0.0
    %v4668 = vmax.f32 %v4540, 0.0
    %v4669 = vmax.f32 %v4541, 0.0
    %v4670 = vmax.f32 %v4542, 0.0
    %v4671 = vmax.f32 %v4543, 0.0
    %v4672 = vmax.f32 %v4544, 0.0
    %v4673 = vmax.f32 %v4545, 0.0
    %v4674 = vmax.f32 %v4546, 0.0
    %v4675 = vmax.f32 %v4547, 0.0
    %v4676 = vmax.f32 %v4548, 0.0
    %v4677 = vmax.f32 %v4549, 0.0
    %v4678 = vmax.f32 %v4550, 0.0
    %v4679 = vmax.f32 %v4551, 0.0
    %v4680 = vmax.f32 %v4552, 0.0
    %v4681 = vmax.f32 %v4553, 0.0
    %v4682 = vmax.f32 %v4554, 0.0
    %v4683 = vmax.f32 %v4555, 0.0
    %v4684 = vmax.f32 %v4556, 0.0
    %v4685 = vmax.f32 %v4557, 0.0
    %v4686 = vmax.f32 %v4558, 0.0
    %v4687 = vmax.f32 %v4559, 0.0
    %v4688 = vmax.f32 %v4560, 0.0
    %v4689 = vmax.f32 %v4561, 0.0
    %v4690 = vmax.f32 %v4562, 0.0
    %v4691 = vmax.f32 %v4563, 0.0
    %v4692 = vmax.f32 %v4564, 0.0
    %v4693 = vmax.f32 %v4565, 0.0
    %v4694 = vmax.f32 %v4566, 0.0
    %v4695 = vmax.f32 %v4567, 0.0
    %v4696 = vmax.f32 %v4568, 0.0
    %v4697 = vmax.f32 %v4569, 0.0
    %v4698 = vmax.f32 %v4570, 0.0
    %v4699 = vmax.f32 %v4571, 0.0
    %v4700 = vmax.f32 %v4572, 0.0
    %v4701 = vmax.f32 %v4573, 0.0
    %v4702 = vmax.f32 %v4574, 0.0
    %v4703 = vmax.f32 %v4575, 0.0
    %v4704 = vmax.f32 %v4576, 0.0
    %v4705 = vmax.f32 %v4577, 0.0
    %v4706 = vmax.f32 %v4578, 0.0
    %v4707 = vmax.f32 %v4579, 0.0
    %v4708 = vmax.f32 %v4580, 0.0
    %v4709 = vmax.f32 %v4581, 0.0
    %v4710 = vmax.f32 %v4582, 0.0
    %v4711 = vmax.f32 %v4583, 0.0
    %v4712 = vmax.f32 %v4584, 0.0
    %v4713 = vmax.f32 %v4585, 0.0
    %v4714 = vmax.f32 %v4586, 0.0
    %v4715 = vmax.f32 %v4587, 0.0
    %v4716 = vmax.f32 %v4588, 0.0
    %v4717 = vmax.f32 %v4589, 0.0
    %v4718 = vmax.f32 %v4590, 0.0
    %v4719 = vmax.f32 %v4591, 0.0
    %v4720 = vmax.f32 %v4592, 0.0
    %v4721 = vmax.f32 %v4593, 0.0
    %v4722 = vmax.f32 %v4594, 0.0
    %v4723 = vmax.f32 %v4595, 0.0
    %v4724 = vmax.f32 %v4596, 0.0
    %v4725 = vmax.f32 %v4597, 0.0
    %v4726 = vmax.f32 %v4598, 0.0
    %v4727 = vmax.f32 %v4599, 0.0
    %v4728 = vmax.f32 %v4600, 0.0
    %v4729 = vmax.f32 %v4601, 0.0
    %v4730 = vmax.f32 %v4602, 0.0
    %v4731 = vmax.f32 %v4603, 0.0
    %v4732 = vmax.f32 %v4604, 0.0
    %v4733 = vmax.f32 %v4605, 0.0
    %v4734 = vmax.f32 %v4606, 0.0
    %v4735 = vmax.f32 %v4607, 0.0
    %v4736 = vmax.f32 %v4608, 0.0
    %v4737 = vmax.f32 %v4609, 0.0
    %v4738 = vmax.f32 %v4610, 0.0
    %v4739 = vmax.f32 %v4611, 0.0
    %v4740 = vmax.f32 %v4612, 0.0
    %v4741 = vmax.f32 %v4613, 0.0
    %v4742 = vmax.f32 %v4614, 0.0
    %v4743 = vmax.f32 %v4615, 0.0
    %v4744 = vmax.f32 %v4616, 0.0
    %v4745 = vmax.f32 %v4617, 0.0
    %v4746 = vmax.f32 %v4618, 0.0
    %v4747 = vmax.f32 %v4619, 0.0
    %v4748 = vmax.f32 %v4620, 0.0
    %v4749 = vmax.f32 %v4621, 0.0
    %v4750 = vmax.f32 %v4622, 0.0
    %v4751 = vmax.f32 %v4623, 0.0
    %v4752 = vmax.f32 %v4624, 0.0
    %v4753 = vmax.f32 %v4625, 0.0
    %v4754 = vmax.f32 %v4626, 0.0
    %v4755 = vmax.f32 %v4627, 0.0
    %v4756 = vmax.f32 %v4628, 0.0
    %v4757 = vmax.f32 %v4629, 0.0
    %v4758 = vmax.f32 %v4630, 0.0
    %v4759 = vmax.f32 %v4631, 0.0
    %v4760 = vmax.f32 %v4632, 0.0
    %v4761 = vmax.f32 %v4633, 0.0
    %v4762 = vmax.f32 %v4634, 0.0
    %v4763 = vmax.f32 %v4635, 0.0
    %v4764 = vmax.f32 %v4636, 0.0
    %v4765 = vmax.f32 %v4637, 0.0
    %v4766 = vmax.f32 %v4638, 0.0
    %v4767 = vmax.f32 %v4639, 0.0
    %v4768 = vmax.f32 %v4640, 0.0
    %v4769 = vmax.f32 %v4641, 0.0
    %v4770 = vmax.f32 %v4642, 0.0
    %v4771 = vmax.f32 %v4643, 0.0
    %v4772 = vmax.f32 %v4644, 0.0
    %v4773 = vmax.f32 %v4645, 0.0
    %v4774 = vmax.f32 %v4646, 0.0
    %v4775 = vmax.f32 %v4647, 0.0
    %v4776 = vmax.f32 %v4648, 0.0
    %v4777 = vmax.f32 %v4649, 0.0
    %v4778 = vmax.f32 %v4650, 0.0
    %v4779 = vmax.f32 %v4651, 0.0
    %v4780 = vmax.f32 %v4652, 0.0
    %v4781 = vmax.f32 %v4653, 0.0
    %v4782 = vmax.f32 %v4654, 0.0
    %v4783 = vmax.f32 %v4655, 0.0
    %v4784 = vld [vmem:[%s6] sm:$0x3]
    %v4785 = vpack.c.bf16 %v4688, %v4656
    %v4786 = vpack.c.bf16 %v4689, %v4657
    %v4787 = vpack.c.bf16 %v4690, %v4658
    %v4788 = vpack.c.bf16 %v4691, %v4659
    %v4789 = vpack.c.bf16 %v4692, %v4660
    %v4790 = vpack.c.bf16 %v4693, %v4661
    %v4791 = vpack.c.bf16 %v4694, %v4662
    %v4792 = vpack.c.bf16 %v4695, %v4663
    %v4793 = vpack.c.bf16 %v4696, %v4664
    %v4794 = vpack.c.bf16 %v4697, %v4665
    %v4795 = vpack.c.bf16 %v4698, %v4666
    %v4796 = vpack.c.bf16 %v4699, %v4667
    %v4797 = vpack.c.bf16 %v4700, %v4668
    %v4798 = vpack.c.bf16 %v4701, %v4669
    %v4799 = vpack.c.bf16 %v4702, %v4670
    %v4800 = vpack.c.bf16 %v4703, %v4671
    %v4801 = vpack.c.bf16 %v4704, %v4672
    %v4802 = vpack.c.bf16 %v4705, %v4673
    %v4803 = vpack.c.bf16 %v4706, %v4674
    %v4804 = vpack.c.bf16 %v4707, %v4675
    %v4805 = vpack.c.bf16 %v4708, %v4676
    %v4806 = vpack.c.bf16 %v4709, %v4677
    %v4807 = vpack.c.bf16 %v4710, %v4678
    %v4808 = vpack.c.bf16 %v4711, %v4679
    %v4809 = vpack.c.bf16 %v4712, %v4680
    %v4810 = vpack.c.bf16 %v4713, %v4681
    %v4811 = vpack.c.bf16 %v4714, %v4682
    %v4812 = vpack.c.bf16 %v4715, %v4683
    %v4813 = vpack.c.bf16 %v4716, %v4684
    %v4814 = vpack.c.bf16 %v4717, %v4685
    %v4815 = vpack.c.bf16 %v4718, %v4686
    %v4816 = vpack.c.bf16 %v4719, %v4687
    %v4817 = vpack.c.bf16 %v4752, %v4720
    %v4818 = vpack.c.bf16 %v4753, %v4721
    %v4819 = vpack.c.bf16 %v4754, %v4722
    %v4820 = vpack.c.bf16 %v4755, %v4723
    %v4821 = vpack.c.bf16 %v4756, %v4724
    %v4822 = vpack.c.bf16 %v4757, %v4725
    %v4823 = vpack.c.bf16 %v4758, %v4726
    %v4824 = vpack.c.bf16 %v4759, %v4727
    %v4825 = vpack.c.bf16 %v4760, %v4728
    %v4826 = vpack.c.bf16 %v4761, %v4729
    %v4827 = vpack.c.bf16 %v4762, %v4730
    %v4828 = vpack.c.bf16 %v4763, %v4731
    %v4829 = vpack.c.bf16 %v4764, %v4732
    %v4830 = vpack.c.bf16 %v4765, %v4733
    %v4831 = vpack.c.bf16 %v4766, %v4734
    %v4832 = vpack.c.bf16 %v4767, %v4735
    %v4833 = vpack.c.bf16 %v4768, %v4736
    %v4834 = vpack.c.bf16 %v4769, %v4737
    %v4835 = vpack.c.bf16 %v4770, %v4738
    %v4836 = vpack.c.bf16 %v4771, %v4739
    %v4837 = vpack.c.bf16 %v4772, %v4740
    %v4838 = vpack.c.bf16 %v4773, %v4741
    %v4839 = vpack.c.bf16 %v4774, %v4742
    %v4840 = vpack.c.bf16 %v4775, %v4743
    %v4841 = vpack.c.bf16 %v4776, %v4744
    %v4842 = vpack.c.bf16 %v4777, %v4745
    %v4843 = vpack.c.bf16 %v4778, %v4746
    %v4844 = vpack.c.bf16 %v4779, %v4747
    %v4845 = vpack.c.bf16 %v4780, %v4748
    %v4846 = vpack.c.bf16 %v4781, %v4749
    %v4847 = vpack.c.bf16 %v4782, %v4750
    %v4848 = vpack.c.bf16 %v4783, %v4751
    %v4849 = vrot.slane %v4366, 3
    %v4852 = vsel %vm2339, %v4784, 0
    %4854 = vmatprep.subr.bf16.mxu0 %v4786
    %4855 = vmatpush1.bf16.msra.mxu0 %v4785
    %4856 = vmatprep.subr.bf16.mxu0 %v4818
    %4857 = vmatpush1.bf16.msra.mxu0 %v4817
    %4858 = vmatprep.subr.bf16.mxu0 0
    %4859 = vmatpush1.bf16.msra.mxu0 0
    %4860 = vmatprep.subr.bf16.mxu0 0
    %4861 = vmatpush1.bf16.msra.mxu0 0
    %4862 = vmatprep.subr.bf16.mxu0 0
    %4863 = vmatpush1.bf16.msra.mxu0 0
    %4864 = vmatprep.subr.bf16.mxu0 0
    %4865 = vmatpush1.bf16.msra.mxu0 0
    %4866 = vmatprep.subr.bf16.mxu0 0
    %4867 = vmatpush1.bf16.msra.mxu0 0
    %4868 = vmatprep.subr.bf16.mxu0 0
    %4869 = vmatpush1.bf16.msra.mxu0 0
    %4870 = vmatprep.subr.bf16.mxu0 0
    %4871 = vmatpush1.bf16.msra.mxu0 0
    %4872 = vmatprep.subr.bf16.mxu0 0
    %4873 = vmatpush1.bf16.msra.mxu0 0
    %4874 = vmatprep.subr.bf16.mxu0 0
    %4875 = vmatpush1.bf16.msra.mxu0 0
    %4876 = vmatprep.subr.bf16.mxu0 0
    %4877 = vmatpush1.bf16.msra.mxu0 0
    %4878 = vmatprep.subr.bf16.mxu0 0
    %4879 = vmatpush1.bf16.msra.mxu0 0
    %4880 = vmatprep.subr.bf16.mxu0 0
    %4881 = vmatpush1.bf16.msra.mxu0 0
    %4882 = vmatprep.subr.bf16.mxu0 0
    %4883 = vmatpush1.bf16.msra.mxu0 0
    %4884 = vmatprep.subr.bf16.mxu0 0
    %4885 = vmatpush1.bf16.msra.mxu0 0
    %4886 = vmatprep.mubr.bf16.mxu0 0
    %4887 = vmatmul.mubr.bf16.gmra.mrb[0].mxu0 %v4852
    %v4888 = vpop.f32.mrb[0].mxu0
    %v4889 = vadd.f32 %v4849, %v4888
    %v4890 = vpop.f32.mrb[0].mxu0
    %v4891 = vadd.f32 %v4849, %v4890
    %v4892 = vpop.f32.mrb[0].mxu0
    %v4893 = vpop.f32.mrb[0].mxu0
    %4894 = vdwg.mxu0
    %4895 = vmatprep.subr.bf16.mxu0 %v4788
    %4896 = vmatpush1.bf16.msra.mxu0 %v4787
    %4897 = vmatprep.subr.bf16.mxu0 %v4820
    %4898 = vmatpush1.bf16.msra.mxu0 %v4819
    %4899 = vmatprep.subr.bf16.mxu0 0
    %4900 = vmatpush1.bf16.msra.mxu0 0
    %4901 = vmatprep.subr.bf16.mxu0 0
    %4902 = vmatpush1.bf16.msra.mxu0 0
    %4903 = vmatprep.subr.bf16.mxu0 0
    %4904 = vmatpush1.bf16.msra.mxu0 0
    %4905 = vmatprep.subr.bf16.mxu0 0
    %4906 = vmatpush1.bf16.msra.mxu0 0
    %4907 = vmatprep.subr.bf16.mxu0 0
    %4908 = vmatpush1.bf16.msra.mxu0 0
    %4909 = vmatprep.subr.bf16.mxu0 0
    %4910 = vmatpush1.bf16.msra.mxu0 0
    %4911 = vmatprep.subr.bf16.mxu0 0
    %4912 = vmatpush1.bf16.msra.mxu0 0
    %4913 = vmatprep.subr.bf16.mxu0 0
    %4914 = vmatpush1.bf16.msra.mxu0 0
    %4915 = vmatprep.subr.bf16.mxu0 0
    %4916 = vmatpush1.bf16.msra.mxu0 0
    %4917 = vmatprep.subr.bf16.mxu0 0
    %4918 = vmatpush1.bf16.msra.mxu0 0
    %4919 = vmatprep.subr.bf16.mxu0 0
    %4920 = vmatpush1.bf16.msra.mxu0 0
    %4921 = vmatprep.subr.bf16.mxu0 0
    %4922 = vmatpush1.bf16.msra.mxu0 0
    %4923 = vmatprep.subr.bf16.mxu0 0
    %4924 = vmatpush1.bf16.msra.mxu0 0
    %4925 = vmatprep.subr.bf16.mxu0 0
    %4926 = vmatpush1.bf16.msra.mxu0 0
    %4927 = vmatprep.mubr.bf16.mxu0 0
    %4928 = vmatmul.mubr.bf16.gmra.mrb[0].mxu0 %v4852
    %v4929 = vpop.f32.mrb[0].mxu0
    %v4930 = vadd.f32 %v4849, %v4929
    %v4931 = vpop.f32.mrb[0].mxu0
    %v4932 = vadd.f32 %v4849, %v4931
    %v4933 = vpop.f32.mrb[0].mxu0
    %v4934 = vpop.f32.mrb[0].mxu0
    %4935 = vdwg.mxu0
    %4936 = vmatprep.subr.bf16.mxu0 %v4790
    %4937 = vmatpush1.bf16.msra.mxu0 %v4789
    %4938 = vmatprep.subr.bf16.mxu0 %v4822
    %4939 = vmatpush1.bf16.msra.mxu0 %v4821
    %4940 = vmatprep.subr.bf16.mxu0 0
    %4941 = vmatpush1.bf16.msra.mxu0 0
    %4942 = vmatprep.subr.bf16.mxu0 0
    %4943 = vmatpush1.bf16.msra.mxu0 0
    %4944 = vmatprep.subr.bf16.mxu0 0
    %4945 = vmatpush1.bf16.msra.mxu0 0
    %4946 = vmatprep.subr.bf16.mxu0 0
    %4947 = vmatpush1.bf16.msra.mxu0 0
    %4948 = vmatprep.subr.bf16.mxu0 0
    %4949 = vmatpush1.bf16.msra.mxu0 0
    %4950 = vmatprep.subr.bf16.mxu0 0
    %4951 = vmatpush1.bf16.msra.mxu0 0
    %4952 = vmatprep.subr.bf16.mxu0 0
    %4953 = vmatpush1.bf16.msra.mxu0 0
    %4954 = vmatprep.subr.bf16.mxu0 0
    %4955 = vmatpush1.bf16.msra.mxu0 0
    %4956 = vmatprep.subr.bf16.mxu0 0
    %4957 = vmatpush1.bf16.msra.mxu0 0
    %4958 = vmatprep.subr.bf16.mxu0 0
    %4959 = vmatpush1.bf16.msra.mxu0 0
    %4960 = vmatprep.subr.bf16.mxu0 0
    %4961 = vmatpush1.bf16.msra.mxu0 0
    %4962 = vmatprep.subr.bf16.mxu0 0
    %4963 = vmatpush1.bf16.msra.mxu0 0
    %4964 = vmatprep.subr.bf16.mxu0 0
    %4965 = vmatpush1.bf16.msra.mxu0 0
    %4966 = vmatprep.subr.bf16.mxu0 0
    %4967 = vmatpush1.bf16.msra.mxu0 0
    %4968 = vmatprep.mubr.bf16.mxu0 0
    %4969 = vmatmul.mubr.bf16.gmra.mrb[0].mxu0 %v4852
    %v4970 = vpop.f32.mrb[0].mxu0
    %v4971 = vadd.f32 %v4849, %v4970
    %v4972 = vpop.f32.mrb[0].mxu0
    %v4973 = vadd.f32 %v4849, %v4972
    %v4974 = vpop.f32.mrb[0].mxu0
    %v4975 = vpop.f32.mrb[0].mxu0
    %4976 = vdwg.mxu0
    %4977 = vmatprep.subr.bf16.mxu0 %v4792
    %4978 = vmatpush1.bf16.msra.mxu0 %v4791
    %4979 = vmatprep.subr.bf16.mxu0 %v4824
    %4980 = vmatpush1.bf16.msra.mxu0 %v4823
    %4981 = vmatprep.subr.bf16.mxu0 0
    %4982 = vmatpush1.bf16.msra.mxu0 0
    %4983 = vmatprep.subr.bf16.mxu0 0
    %4984 = vmatpush1.bf16.msra.mxu0 0
    %4985 = vmatprep.subr.bf16.mxu0 0
    %4986 = vmatpush1.bf16.msra.mxu0 0
    %4987 = vmatprep.subr.bf16.mxu0 0
    %4988 = vmatpush1.bf16.msra.mxu0 0
    %4989 = vmatprep.subr.bf16.mxu0 0
    %4990 = vmatpush1.bf16.msra.mxu0 0
    %4991 = vmatprep.subr.bf16.mxu0 0
    %4992 = vmatpush1.bf16.msra.mxu0 0
    %4993 = vmatprep.subr.bf16.mxu0 0
    %4994 = vmatpush1.bf16.msra.mxu0 0
    %4995 = vmatprep.subr.bf16.mxu0 0
    %4996 = vmatpush1.bf16.msra.mxu0 0
    %4997 = vmatprep.subr.bf16.mxu0 0
    %4998 = vmatpush1.bf16.msra.mxu0 0
    %4999 = vmatprep.subr.bf16.mxu0 0
    %5000 = vmatpush1.bf16.msra.mxu0 0
    %5001 = vmatprep.subr.bf16.mxu0 0
    %5002 = vmatpush1.bf16.msra.mxu0 0
    %5003 = vmatprep.subr.bf16.mxu0 0
    %5004 = vmatpush1.bf16.msra.mxu0 0
    %5005 = vmatprep.subr.bf16.mxu0 0
    %5006 = vmatpush1.bf16.msra.mxu0 0
    %5007 = vmatprep.subr.bf16.mxu0 0
    %5008 = vmatpush1.bf16.msra.mxu0 0
    %5009 = vmatprep.mubr.bf16.mxu0 0
    %5010 = vmatmul.mubr.bf16.gmra.mrb[0].mxu0 %v4852
    %v5011 = vpop.f32.mrb[0].mxu0
    %v5012 = vadd.f32 %v4849, %v5011
    %v5013 = vpop.f32.mrb[0].mxu0
    %v5014 = vadd.f32 %v4849, %v5013
    %v5015 = vpop.f32.mrb[0].mxu0
    %v5016 = vpop.f32.mrb[0].mxu0
    %5017 = vdwg.mxu0
    %5018 = vmatprep.subr.bf16.mxu0 %v4794
    %5019 = vmatpush1.bf16.msra.mxu0 %v4793
    %5020 = vmatprep.subr.bf16.mxu0 %v4826
    %5021 = vmatpush1.bf16.msra.mxu0 %v4825
    %5022 = vmatprep.subr.bf16.mxu0 0
    %5023 = vmatpush1.bf16.msra.mxu0 0
    %5024 = vmatprep.subr.bf16.mxu0 0
    %5025 = vmatpush1.bf16.msra.mxu0 0
    %5026 = vmatprep.subr.bf16.mxu0 0
    %5027 = vmatpush1.bf16.msra.mxu0 0
    %5028 = vmatprep.subr.bf16.mxu0 0
    %5029 = vmatpush1.bf16.msra.mxu0 0
    %5030 = vmatprep.subr.bf16.mxu0 0
    %5031 = vmatpush1.bf16.msra.mxu0 0
    %5032 = vmatprep.subr.bf16.mxu0 0
    %5033 = vmatpush1.bf16.msra.mxu0 0
    %5034 = vmatprep.subr.bf16.mxu0 0
    %5035 = vmatpush1.bf16.msra.mxu0 0
    %5036 = vmatprep.subr.bf16.mxu0 0
    %5037 = vmatpush1.bf16.msra.mxu0 0
    %5038 = vmatprep.subr.bf16.mxu0 0
    %5039 = vmatpush1.bf16.msra.mxu0 0
    %5040 = vmatprep.subr.bf16.mxu0 0
    %5041 = vmatpush1.bf16.msra.mxu0 0
    %5042 = vmatprep.subr.bf16.mxu0 0
    %5043 = vmatpush1.bf16.msra.mxu0 0
    %5044 = vmatprep.subr.bf16.mxu0 0
    %5045 = vmatpush1.bf16.msra.mxu0 0
    %5046 = vmatprep.subr.bf16.mxu0 0
    %5047 = vmatpush1.bf16.msra.mxu0 0
    %5048 = vmatprep.subr.bf16.mxu0 0
    %5049 = vmatpush1.bf16.msra.mxu0 0
    %5050 = vmatprep.mubr.bf16.mxu0 0
    %5051 = vmatmul.mubr.bf16.gmra.mrb[0].mxu0 %v4852
    %v5052 = vpop.f32.mrb[0].mxu0
    %v5053 = vadd.f32 %v4849, %v5052
    %v5054 = vpop.f32.mrb[0].mxu0
    %v5055 = vadd.f32 %v4849, %v5054
    %v5056 = vpop.f32.mrb[0].mxu0
    %v5057 = vpop.f32.mrb[0].mxu0
    %5058 = vdwg.mxu0
    %5059 = vmatprep.subr.bf16.mxu0 %v4796
    %5060 = vmatpush1.bf16.msra.mxu0 %v4795
    %5061 = vmatprep.subr.bf16.mxu0 %v4828
    %5062 = vmatpush1.bf16.msra.mxu0 %v4827
    %5063 = vmatprep.subr.bf16.mxu0 0
    %5064 = vmatpush1.bf16.msra.mxu0 0
    %5065 = vmatprep.subr.bf16.mxu0 0
    %5066 = vmatpush1.bf16.msra.mxu0 0
    %5067 = vmatprep.subr.bf16.mxu0 0
    %5068 = vmatpush1.bf16.msra.mxu0 0
    %5069 = vmatprep.subr.bf16.mxu0 0
    %5070 = vmatpush1.bf16.msra.mxu0 0
    %5071 = vmatprep.subr.bf16.mxu0 0
    %5072 = vmatpush1.bf16.msra.mxu0 0
    %5073 = vmatprep.subr.bf16.mxu0 0
    %5074 = vmatpush1.bf16.msra.mxu0 0
    %5075 = vmatprep.subr.bf16.mxu0 0
    %5076 = vmatpush1.bf16.msra.mxu0 0
    %5077 = vmatprep.subr.bf16.mxu0 0
    %5078 = vmatpush1.bf16.msra.mxu0 0
    %5079 = vmatprep.subr.bf16.mxu0 0
    %5080 = vmatpush1.bf16.msra.mxu0 0
    %5081 = vmatprep.subr.bf16.mxu0 0
    %5082 = vmatpush1.bf16.msra.mxu0 0
    %5083 = vmatprep.subr.bf16.mxu0 0
    %5084 = vmatpush1.bf16.msra.mxu0 0
    %5085 = vmatprep.subr.bf16.mxu0 0
    %5086 = vmatpush1.bf16.msra.mxu0 0
    %5087 = vmatprep.subr.bf16.mxu0 0
    %5088 = vmatpush1.bf16.msra.mxu0 0
    %5089 = vmatprep.subr.bf16.mxu0 0
    %5090 = vmatpush1.bf16.msra.mxu0 0
    %5091 = vmatprep.mubr.bf16.mxu0 0
    %5092 = vmatmul.mubr.bf16.gmra.mrb[0].mxu0 %v4852
    %v5093 = vpop.f32.mrb[0].mxu0
    %v5094 = vadd.f32 %v4849, %v5093
    %v5095 = vpop.f32.mrb[0].mxu0
    %v5096 = vadd.f32 %v4849, %v5095
    %v5097 = vpop.f32.mrb[0].mxu0
    %v5098 = vpop.f32.mrb[0].mxu0
    %5099 = vdwg.mxu0
    %5100 = vmatprep.subr.bf16.mxu0 %v4798
    %5101 = vmatpush1.bf16.msra.mxu0 %v4797
    %5102 = vmatprep.subr.bf16.mxu0 %v4830
    %5103 = vmatpush1.bf16.msra.mxu0 %v4829
    %5104 = vmatprep.subr.bf16.mxu0 0
    %5105 = vmatpush1.bf16.msra.mxu0 0
    %5106 = vmatprep.subr.bf16.mxu0 0
    %5107 = vmatpush1.bf16.msra.mxu0 0
    %5108 = vmatprep.subr.bf16.mxu0 0
    %5109 = vmatpush1.bf16.msra.mxu0 0
    %5110 = vmatprep.subr.bf16.mxu0 0
    %5111 = vmatpush1.bf16.msra.mxu0 0
    %5112 = vmatprep.subr.bf16.mxu0 0
    %5113 = vmatpush1.bf16.msra.mxu0 0
    %5114 = vmatprep.subr.bf16.mxu0 0
    %5115 = vmatpush1.bf16.msra.mxu0 0
    %5116 = vmatprep.subr.bf16.mxu0 0
    %5117 = vmatpush1.bf16.msra.mxu0 0
    %5118 = vmatprep.subr.bf16.mxu0 0
    %5119 = vmatpush1.bf16.msra.mxu0 0
    %5120 = vmatprep.subr.bf16.mxu0 0
    %5121 = vmatpush1.bf16.msra.mxu0 0
    %5122 = vmatprep.subr.bf16.mxu0 0
    %5123 = vmatpush1.bf16.msra.mxu0 0
    %5124 = vmatprep.subr.bf16.mxu0 0
    %5125 = vmatpush1.bf16.msra.mxu0 0
    %5126 = vmatprep.subr.bf16.mxu0 0
    %5127 = vmatpush1.bf16.msra.mxu0 0
    %5128 = vmatprep.subr.bf16.mxu0 0
    %5129 = vmatpush1.bf16.msra.mxu0 0
    %5130 = vmatprep.subr.bf16.mxu0 0
    %5131 = vmatpush1.bf16.msra.mxu0 0
    %5132 = vmatprep.mubr.bf16.mxu0 0
    %5133 = vmatmul.mubr.bf16.gmra.mrb[0].mxu0 %v4852
    %v5134 = vpop.f32.mrb[0].mxu0
    %v5135 = vadd.f32 %v4849, %v5134
    %v5136 = vpop.f32.mrb[0].mxu0
    %v5137 = vadd.f32 %v4849, %v5136
    %v5138 = vpop.f32.mrb[0].mxu0
    %v5139 = vpop.f32.mrb[0].mxu0
    %5140 = vdwg.mxu0
    %5141 = vmatprep.subr.bf16.mxu0 %v4800
    %5142 = vmatpush1.bf16.msra.mxu0 %v4799
    %5143 = vmatprep.subr.bf16.mxu0 %v4832
    %5144 = vmatpush1.bf16.msra.mxu0 %v4831
    %5145 = vmatprep.subr.bf16.mxu0 0
    %5146 = vmatpush1.bf16.msra.mxu0 0
    %5147 = vmatprep.subr.bf16.mxu0 0
    %5148 = vmatpush1.bf16.msra.mxu0 0
    %5149 = vmatprep.subr.bf16.mxu0 0
    %5150 = vmatpush1.bf16.msra.mxu0 0
    %5151 = vmatprep.subr.bf16.mxu0 0
    %5152 = vmatpush1.bf16.msra.mxu0 0
    %5153 = vmatprep.subr.bf16.mxu0 0
    %5154 = vmatpush1.bf16.msra.mxu0 0
    %5155 = vmatprep.subr.bf16.mxu0 0
    %5156 = vmatpush1.bf16.msra.mxu0 0
    %5157 = vmatprep.subr.bf16.mxu0 0
    %5158 = vmatpush1.bf16.msra.mxu0 0
    %5159 = vmatprep.subr.bf16.mxu0 0
    %5160 = vmatpush1.bf16.msra.mxu0 0
    %5161 = vmatprep.subr.bf16.mxu0 0
    %5162 = vmatpush1.bf16.msra.mxu0 0
    %5163 = vmatprep.subr.bf16.mxu0 0
    %5164 = vmatpush1.bf16.msra.mxu0 0
    %5165 = vmatprep.subr.bf16.mxu0 0
    %5166 = vmatpush1.bf16.msra.mxu0 0
    %5167 = vmatprep.subr.bf16.mxu0 0
    %5168 = vmatpush1.bf16.msra.mxu0 0
    %5169 = vmatprep.subr.bf16.mxu0 0
    %5170 = vmatpush1.bf16.msra.mxu0 0
    %5171 = vmatprep.subr.bf16.mxu0 0
    %5172 = vmatpush1.bf16.msra.mxu0 0
    %5173 = vmatprep.mubr.bf16.mxu0 0
    %5174 = vmatmul.mubr.bf16.gmra.mrb[0].mxu0 %v4852
    %v5175 = vpop.f32.mrb[0].mxu0
    %v5176 = vadd.f32 %v4849, %v5175
    %v5177 = vpop.f32.mrb[0].mxu0
    %v5178 = vadd.f32 %v4849, %v5177
    %v5179 = vpop.f32.mrb[0].mxu0
    %v5180 = vpop.f32.mrb[0].mxu0
    %5181 = vdwg.mxu0
    %5182 = vmatprep.subr.bf16.mxu0 %v4802
    %5183 = vmatpush1.bf16.msra.mxu0 %v4801
    %5184 = vmatprep.subr.bf16.mxu0 %v4834
    %5185 = vmatpush1.bf16.msra.mxu0 %v4833
    %5186 = vmatprep.subr.bf16.mxu0 0
    %5187 = vmatpush1.bf16.msra.mxu0 0
    %5188 = vmatprep.subr.bf16.mxu0 0
    %5189 = vmatpush1.bf16.msra.mxu0 0
    %5190 = vmatprep.subr.bf16.mxu0 0
    %5191 = vmatpush1.bf16.msra.mxu0 0
    %5192 = vmatprep.subr.bf16.mxu0 0
    %5193 = vmatpush1.bf16.msra.mxu0 0
    %5194 = vmatprep.subr.bf16.mxu0 0
    %5195 = vmatpush1.bf16.msra.mxu0 0
    %5196 = vmatprep.subr.bf16.mxu0 0
    %5197 = vmatpush1.bf16.msra.mxu0 0
    %5198 = vmatprep.subr.bf16.mxu0 0
    %5199 = vmatpush1.bf16.msra.mxu0 0
    %5200 = vmatprep.subr.bf16.mxu0 0
    %5201 = vmatpush1.bf16.msra.mxu0 0
    %5202 = vmatprep.subr.bf16.mxu0 0
    %5203 = vmatpush1.bf16.msra.mxu0 0
    %5204 = vmatprep.subr.bf16.mxu0 0
    %5205 = vmatpush1.bf16.msra.mxu0 0
    %5206 = vmatprep.subr.bf16.mxu0 0
    %5207 = vmatpush1.bf16.msra.mxu0 0
    %5208 = vmatprep.subr.bf16.mxu0 0
    %5209 = vmatpush1.bf16.msra.mxu0 0
    %5210 = vmatprep.subr.bf16.mxu0 0
    %5211 = vmatpush1.bf16.msra.mxu0 0
    %5212 = vmatprep.subr.bf16.mxu0 0
    %5213 = vmatpush1.bf16.msra.mxu0 0
    %5214 = vmatprep.mubr.bf16.mxu0 0
    %5215 = vmatmul.mubr.bf16.gmra.mrb[0].mxu0 %v4852
    %v5216 = vpop.f32.mrb[0].mxu0
    %v5217 = vadd.f32 %v4849, %v5216
    %v5218 = vpop.f32.mrb[0].mxu0
    %v5219 = vadd.f32 %v4849, %v5218
    %v5220 = vpop.f32.mrb[0].mxu0
    %v5221 = vpop.f32.mrb[0].mxu0
    %5222 = vdwg.mxu0
    %5223 = vmatprep.subr.bf16.mxu0 %v4804
    %5224 = vmatpush1.bf16.msra.mxu0 %v4803
    %5225 = vmatprep.subr.bf16.mxu0 %v4836
    %5226 = vmatpush1.bf16.msra.mxu0 %v4835
    %5227 = vmatprep.subr.bf16.mxu0 0
    %5228 = vmatpush1.bf16.msra.mxu0 0
    %5229 = vmatprep.subr.bf16.mxu0 0
    %5230 = vmatpush1.bf16.msra.mxu0 0
    %5231 = vmatprep.subr.bf16.mxu0 0
    %5232 = vmatpush1.bf16.msra.mxu0 0
    %5233 = vmatprep.subr.bf16.mxu0 0
    %5234 = vmatpush1.bf16.msra.mxu0 0
    %5235 = vmatprep.subr.bf16.mxu0 0
    %5236 = vmatpush1.bf16.msra.mxu0 0
    %5237 = vmatprep.subr.bf16.mxu0 0
    %5238 = vmatpush1.bf16.msra.mxu0 0
    %5239 = vmatprep.subr.bf16.mxu0 0
    %5240 = vmatpush1.bf16.msra.mxu0 0
    %5241 = vmatprep.subr.bf16.mxu0 0
    %5242 = vmatpush1.bf16.msra.mxu0 0
    %5243 = vmatprep.subr.bf16.mxu0 0
    %5244 = vmatpush1.bf16.msra.mxu0 0
    %5245 = vmatprep.subr.bf16.mxu0 0
    %5246 = vmatpush1.bf16.msra.mxu0 0
    %5247 = vmatprep.subr.bf16.mxu0 0
    %5248 = vmatpush1.bf16.msra.mxu0 0
    %5249 = vmatprep.subr.bf16.mxu0 0
    %5250 = vmatpush1.bf16.msra.mxu0 0
    %5251 = vmatprep.subr.bf16.mxu0 0
    %5252 = vmatpush1.bf16.msra.mxu0 0
    %5253 = vmatprep.subr.bf16.mxu0 0
    %5254 = vmatpush1.bf16.msra.mxu0 0
    %5255 = vmatprep.mubr.bf16.mxu0 0
    %5256 = vmatmul.mubr.bf16.gmra.mrb[0].mxu0 %v4852
    %v5257 = vpop.f32.mrb[0].mxu0
    %v5258 = vadd.f32 %v4849, %v5257
    %v5259 = vpop.f32.mrb[0].mxu0
    %v5260 = vadd.f32 %v4849, %v5259
    %v5261 = vpop.f32.mrb[0].mxu0
    %v5262 = vpop.f32.mrb[0].mxu0
    %5263 = vdwg.mxu0
    %5264 = vmatprep.subr.bf16.mxu0 %v4806
    %5265 = vmatpush1.bf16.msra.mxu0 %v4805
    %5266 = vmatprep.subr.bf16.mxu0 %v4838
    %5267 = vmatpush1.bf16.msra.mxu0 %v4837
    %5268 = vmatprep.subr.bf16.mxu0 0
    %5269 = vmatpush1.bf16.msra.mxu0 0
    %5270 = vmatprep.subr.bf16.mxu0 0
    %5271 = vmatpush1.bf16.msra.mxu0 0
    %5272 = vmatprep.subr.bf16.mxu0 0
    %5273 = vmatpush1.bf16.msra.mxu0 0
    %5274 = vmatprep.subr.bf16.mxu0 0
    %5275 = vmatpush1.bf16.msra.mxu0 0
    %5276 = vmatprep.subr.bf16.mxu0 0
    %5277 = vmatpush1.bf16.msra.mxu0 0
    %5278 = vmatprep.subr.bf16.mxu0 0
    %5279 = vmatpush1.bf16.msra.mxu0 0
    %5280 = vmatprep.subr.bf16.mxu0 0
    %5281 = vmatpush1.bf16.msra.mxu0 0
    %5282 = vmatprep.subr.bf16.mxu0 0
    %5283 = vmatpush1.bf16.msra.mxu0 0
    %5284 = vmatprep.subr.bf16.mxu0 0
    %5285 = vmatpush1.bf16.msra.mxu0 0
    %5286 = vmatprep.subr.bf16.mxu0 0
    %5287 = vmatpush1.bf16.msra.mxu0 0
    %5288 = vmatprep.subr.bf16.mxu0 0
    %5289 = vmatpush1.bf16.msra.mxu0 0
    %5290 = vmatprep.subr.bf16.mxu0 0
    %5291 = vmatpush1.bf16.msra.mxu0 0
    %5292 = vmatprep.subr.bf16.mxu0 0
    %5293 = vmatpush1.bf16.msra.mxu0 0
    %5294 = vmatprep.subr.bf16.mxu0 0
    %5295 = vmatpush1.bf16.msra.mxu0 0
    %5296 = vmatprep.mubr.bf16.mxu0 0
    %5297 = vmatmul.mubr.bf16.gmra.mrb[0].mxu0 %v4852
    %v5298 = vpop.f32.mrb[0].mxu0
    %v5299 = vadd.f32 %v4849, %v5298
    %v5300 = vpop.f32.mrb[0].mxu0
    %v5301 = vadd.f32 %v4849, %v5300
    %v5302 = vpop.f32.mrb[0].mxu0
    %v5303 = vpop.f32.mrb[0].mxu0
    %5304 = vdwg.mxu0
    %5305 = vmatprep.subr.bf16.mxu0 %v4808
    %5306 = vmatpush1.bf16.msra.mxu0 %v4807
    %5307 = vmatprep.subr.bf16.mxu0 %v4840
    %5308 = vmatpush1.bf16.msra.mxu0 %v4839
    %5309 = vmatprep.subr.bf16.mxu0 0
    %5310 = vmatpush1.bf16.msra.mxu0 0
    %5311 = vmatprep.subr.bf16.mxu0 0
    %5312 = vmatpush1.bf16.msra.mxu0 0
    %5313 = vmatprep.subr.bf16.mxu0 0
    %5314 = vmatpush1.bf16.msra.mxu0 0
    %5315 = vmatprep.subr.bf16.mxu0 0
    %5316 = vmatpush1.bf16.msra.mxu0 0
    %5317 = vmatprep.subr.bf16.mxu0 0
    %5318 = vmatpush1.bf16.msra.mxu0 0
    %5319 = vmatprep.subr.bf16.mxu0 0
    %5320 = vmatpush1.bf16.msra.mxu0 0
    %5321 = vmatprep.subr.bf16.mxu0 0
    %5322 = vmatpush1.bf16.msra.mxu0 0
    %5323 = vmatprep.subr.bf16.mxu0 0
    %5324 = vmatpush1.bf16.msra.mxu0 0
    %5325 = vmatprep.subr.bf16.mxu0 0
    %5326 = vmatpush1.bf16.msra.mxu0 0
    %5327 = vmatprep.subr.bf16.mxu0 0
    %5328 = vmatpush1.bf16.msra.mxu0 0
    %5329 = vmatprep.subr.bf16.mxu0 0
    %5330 = vmatpush1.bf16.msra.mxu0 0
    %5331 = vmatprep.subr.bf16.mxu0 0
    %5332 = vmatpush1.bf16.msra.mxu0 0
    %5333 = vmatprep.subr.bf16.mxu0 0
    %5334 = vmatpush1.bf16.msra.mxu0 0
    %5335 = vmatprep.subr.bf16.mxu0 0
    %5336 = vmatpush1.bf16.msra.mxu0 0
    %5337 = vmatprep.mubr.bf16.mxu0 0
    %5338 = vmatmul.mubr.bf16.gmra.mrb[0].mxu0 %v4852
    %v5339 = vpop.f32.mrb[0].mxu0
    %v5340 = vadd.f32 %v4849, %v5339
    %v5341 = vpop.f32.mrb[0].mxu0
    %v5342 = vadd.f32 %v4849, %v5341
    %v5343 = vpop.f32.mrb[0].mxu0
    %v5344 = vpop.f32.mrb[0].mxu0
    %5345 = vdwg.mxu0
    %5346 = vmatprep.subr.bf16.mxu0 %v4810
    %5347 = vmatpush1.bf16.msra.mxu0 %v4809
    %5348 = vmatprep.subr.bf16.mxu0 %v4842
    %5349 = vmatpush1.bf16.msra.mxu0 %v4841
    %5350 = vmatprep.subr.bf16.mxu0 0
    %5351 = vmatpush1.bf16.msra.mxu0 0
    %5352 = vmatprep.subr.bf16.mxu0 0
    %5353 = vmatpush1.bf16.msra.mxu0 0
    %5354 = vmatprep.subr.bf16.mxu0 0
    %5355 = vmatpush1.bf16.msra.mxu0 0
    %5356 = vmatprep.subr.bf16.mxu0 0
    %5357 = vmatpush1.bf16.msra.mxu0 0
    %5358 = vmatprep.subr.bf16.mxu0 0
    %5359 = vmatpush1.bf16.msra.mxu0 0
    %5360 = vmatprep.subr.bf16.mxu0 0
    %5361 = vmatpush1.bf16.msra.mxu0 0
    %5362 = vmatprep.subr.bf16.mxu0 0
    %5363 = vmatpush1.bf16.msra.mxu0 0
    %5364 = vmatprep.subr.bf16.mxu0 0
    %5365 = vmatpush1.bf16.msra.mxu0 0
    %5366 = vmatprep.subr.bf16.mxu0 0
    %5367 = vmatpush1.bf16.msra.mxu0 0
    %5368 = vmatprep.subr.bf16.mxu0 0
    %5369 = vmatpush1.bf16.msra.mxu0 0
    %5370 = vmatprep.subr.bf16.mxu0 0
    %5371 = vmatpush1.bf16.msra.mxu0 0
    %5372 = vmatprep.subr.bf16.mxu0 0
    %5373 = vmatpush1.bf16.msra.mxu0 0
    %5374 = vmatprep.subr.bf16.mxu0 0
    %5375 = vmatpush1.bf16.msra.mxu0 0
    %5376 = vmatprep.subr.bf16.mxu0 0
    %5377 = vmatpush1.bf16.msra.mxu0 0
    %5378 = vmatprep.mubr.bf16.mxu0 0
    %5379 = vmatmul.mubr.bf16.gmra.mrb[0].mxu0 %v4852
    %v5380 = vpop.f32.mrb[0].mxu0
    %v5381 = vadd.f32 %v4849, %v5380
    %v5382 = vpop.f32.mrb[0].mxu0
    %v5383 = vadd.f32 %v4849, %v5382
    %v5384 = vpop.f32.mrb[0].mxu0
    %v5385 = vpop.f32.mrb[0].mxu0
    %5386 = vdwg.mxu0
    %5387 = vmatprep.subr.bf16.mxu0 %v4812
    %5388 = vmatpush1.bf16.msra.mxu0 %v4811
    %5389 = vmatprep.subr.bf16.mxu0 %v4844
    %5390 = vmatpush1.bf16.msra.mxu0 %v4843
    %5391 = vmatprep.subr.bf16.mxu0 0
    %5392 = vmatpush1.bf16.msra.mxu0 0
    %5393 = vmatprep.subr.bf16.mxu0 0
    %5394 = vmatpush1.bf16.msra.mxu0 0
    %5395 = vmatprep.subr.bf16.mxu0 0
    %5396 = vmatpush1.bf16.msra.mxu0 0
    %5397 = vmatprep.subr.bf16.mxu0 0
    %5398 = vmatpush1.bf16.msra.mxu0 0
    %5399 = vmatprep.subr.bf16.mxu0 0
    %5400 = vmatpush1.bf16.msra.mxu0 0
    %5401 = vmatprep.subr.bf16.mxu0 0
    %5402 = vmatpush1.bf16.msra.mxu0 0
    %5403 = vmatprep.subr.bf16.mxu0 0
    %5404 = vmatpush1.bf16.msra.mxu0 0
    %5405 = vmatprep.subr.bf16.mxu0 0
    %5406 = vmatpush1.bf16.msra.mxu0 0
    %5407 = vmatprep.subr.bf16.mxu0 0
    %5408 = vmatpush1.bf16.msra.mxu0 0
    %5409 = vmatprep.subr.bf16.mxu0 0
    %5410 = vmatpush1.bf16.msra.mxu0 0
    %5411 = vmatprep.subr.bf16.mxu0 0
    %5412 = vmatpush1.bf16.msra.mxu0 0
    %5413 = vmatprep.subr.bf16.mxu0 0
    %5414 = vmatpush1.bf16.msra.mxu0 0
    %5415 = vmatprep.subr.bf16.mxu0 0
    %5416 = vmatpush1.bf16.msra.mxu0 0
    %5417 = vmatprep.subr.bf16.mxu0 0
    %5418 = vmatpush1.bf16.msra.mxu0 0
    %5419 = vmatprep.mubr.bf16.mxu0 0
    %5420 = vmatmul.mubr.bf16.gmra.mrb[0].mxu0 %v4852
    %v5421 = vpop.f32.mrb[0].mxu0
    %v5422 = vadd.f32 %v4849, %v5421
    %v5423 = vpop.f32.mrb[0].mxu0
    %v5424 = vadd.f32 %v4849, %v5423
    %v5425 = vpop.f32.mrb[0].mxu0
    %v5426 = vpop.f32.mrb[0].mxu0
    %5427 = vdwg.mxu0
    %5428 = vmatprep.subr.bf16.mxu0 %v4814
    %5429 = vmatpush1.bf16.msra.mxu0 %v4813
    %5430 = vmatprep.subr.bf16.mxu0 %v4846
    %5431 = vmatpush1.bf16.msra.mxu0 %v4845
    %5432 = vmatprep.subr.bf16.mxu0 0
    %5433 = vmatpush1.bf16.msra.mxu0 0
    %5434 = vmatprep.subr.bf16.mxu0 0
    %5435 = vmatpush1.bf16.msra.mxu0 0
    %5436 = vmatprep.subr.bf16.mxu0 0
    %5437 = vmatpush1.bf16.msra.mxu0 0
    %5438 = vmatprep.subr.bf16.mxu0 0
    %5439 = vmatpush1.bf16.msra.mxu0 0
    %5440 = vmatprep.subr.bf16.mxu0 0
    %5441 = vmatpush1.bf16.msra.mxu0 0
    %5442 = vmatprep.subr.bf16.mxu0 0
    %5443 = vmatpush1.bf16.msra.mxu0 0
    %5444 = vmatprep.subr.bf16.mxu0 0
    %5445 = vmatpush1.bf16.msra.mxu0 0
    %5446 = vmatprep.subr.bf16.mxu0 0
    %5447 = vmatpush1.bf16.msra.mxu0 0
    %5448 = vmatprep.subr.bf16.mxu0 0
    %5449 = vmatpush1.bf16.msra.mxu0 0
    %5450 = vmatprep.subr.bf16.mxu0 0
    %5451 = vmatpush1.bf16.msra.mxu0 0
    %5452 = vmatprep.subr.bf16.mxu0 0
    %5453 = vmatpush1.bf16.msra.mxu0 0
    %5454 = vmatprep.subr.bf16.mxu0 0
    %5455 = vmatpush1.bf16.msra.mxu0 0
    %5456 = vmatprep.subr.bf16.mxu0 0
    %5457 = vmatpush1.bf16.msra.mxu0 0
    %5458 = vmatprep.subr.bf16.mxu0 0
    %5459 = vmatpush1.bf16.msra.mxu0 0
    %5460 = vmatprep.mubr.bf16.mxu0 0
    %5461 = vmatmul.mubr.bf16.gmra.mrb[0].mxu0 %v4852
    %v5462 = vpop.f32.mrb[0].mxu0
    %v5463 = vadd.f32 %v4849, %v5462
    %v5464 = vpop.f32.mrb[0].mxu0
    %v5465 = vadd.f32 %v4849, %v5464
    %v5466 = vpop.f32.mrb[0].mxu0
    %v5467 = vpop.f32.mrb[0].mxu0
    %5468 = vdwg.mxu0
    %5469 = vmatprep.subr.bf16.mxu0 %v4816
    %5470 = vmatpush1.bf16.msra.mxu0 %v4815
    %5471 = vmatprep.subr.bf16.mxu0 %v4848
    %5472 = vmatpush1.bf16.msra.mxu0 %v4847
    %5473 = vmatprep.subr.bf16.mxu0 0
    %5474 = vmatpush1.bf16.msra.mxu0 0
    %5475 = vmatprep.subr.bf16.mxu0 0
    %5476 = vmatpush1.bf16.msra.mxu0 0
    %5477 = vmatprep.subr.bf16.mxu0 0
    %5478 = vmatpush1.bf16.msra.mxu0 0
    %5479 = vmatprep.subr.bf16.mxu0 0
    %5480 = vmatpush1.bf16.msra.mxu0 0
    %5481 = vmatprep.subr.bf16.mxu0 0
    %5482 = vmatpush1.bf16.msra.mxu0 0
    %5483 = vmatprep.subr.bf16.mxu0 0
    %5484 = vmatpush1.bf16.msra.mxu0 0
    %5485 = vmatprep.subr.bf16.mxu0 0
    %5486 = vmatpush1.bf16.msra.mxu0 0
    %5487 = vmatprep.subr.bf16.mxu0 0
    %5488 = vmatpush1.bf16.msra.mxu0 0
    %5489 = vmatprep.subr.bf16.mxu0 0
    %5490 = vmatpush1.bf16.msra.mxu0 0
    %5491 = vmatprep.subr.bf16.mxu0 0
    %5492 = vmatpush1.bf16.msra.mxu0 0
    %5493 = vmatprep.subr.bf16.mxu0 0
    %5494 = vmatpush1.bf16.msra.mxu0 0
    %5495 = vmatprep.subr.bf16.mxu0 0
    %5496 = vmatpush1.bf16.msra.mxu0 0
    %5497 = vmatprep.subr.bf16.mxu0 0
    %5498 = vmatpush1.bf16.msra.mxu0 0
    %5499 = vmatprep.subr.bf16.mxu0 0
    %5500 = vmatpush1.bf16.msra.mxu0 0
    %5501 = vmatprep.mubr.bf16.mxu0 0
    %5502 = vmatmul.mubr.bf16.gmra.mrb[0].mxu0 %v4852
    %v5503 = vpop.f32.mrb[0].mxu0
    %v5504 = vadd.f32 %v4849, %v5503
    %v5505 = vpop.f32.mrb[0].mxu0
    %v5506 = vadd.f32 %v4849, %v5505
    %v5507 = vpop.f32.mrb[0].mxu0
    %v5508 = vpop.f32.mrb[0].mxu0
    %5509 = vdwg.mxu0
    %v5510 = vxor.u32 %v4889, 2147483648
    %v5511 = vxor.u32 %v4891, 2147483648
    %v5512 = vxor.u32 %v4930, 2147483648
    %v5513 = vxor.u32 %v4932, 2147483648
    %v5514 = vxor.u32 %v4971, 2147483648
    %v5515 = vxor.u32 %v4973, 2147483648
    %v5516 = vxor.u32 %v5012, 2147483648
    %v5517 = vxor.u32 %v5014, 2147483648
    %v5518 = vxor.u32 %v5053, 2147483648
    %v5519 = vxor.u32 %v5055, 2147483648
    %v5520 = vxor.u32 %v5094, 2147483648
    %v5521 = vxor.u32 %v5096, 2147483648
    %v5522 = vxor.u32 %v5135, 2147483648
    %v5523 = vxor.u32 %v5137, 2147483648
    %v5524 = vxor.u32 %v5176, 2147483648
    %v5525 = vxor.u32 %v5178, 2147483648
    %v5526 = vxor.u32 %v5217, 2147483648
    %v5527 = vxor.u32 %v5219, 2147483648
    %v5528 = vxor.u32 %v5258, 2147483648
    %v5529 = vxor.u32 %v5260, 2147483648
    %v5530 = vxor.u32 %v5299, 2147483648
    %v5531 = vxor.u32 %v5301, 2147483648
    %v5532 = vxor.u32 %v5340, 2147483648
    %v5533 = vxor.u32 %v5342, 2147483648
    %v5534 = vxor.u32 %v5381, 2147483648
    %v5535 = vxor.u32 %v5383, 2147483648
    %v5536 = vxor.u32 %v5422, 2147483648
    %v5537 = vxor.u32 %v5424, 2147483648
    %v5538 = vxor.u32 %v5463, 2147483648
    %v5539 = vxor.u32 %v5465, 2147483648
    %v5540 = vxor.u32 %v5504, 2147483648
    %v5541 = vxor.u32 %v5506, 2147483648
    %v5542 = vmul.f32 %v5510, 1.442695
    %v5543 = vpow.pop %v5542
    %v5544 = vmul.f32 %v5511, 1.442695
    %v5545 = vpow.pop %v5544
    %v5546 = vmul.f32 %v5512, 1.442695
    %v5547 = vpow.pop %v5546
    %v5548 = vmul.f32 %v5513, 1.442695
    %v5549 = vpow.pop %v5548
    %v5550 = vmul.f32 %v5514, 1.442695
    %v5551 = vpow.pop %v5550
    %v5552 = vmul.f32 %v5515, 1.442695
    %v5553 = vpow.pop %v5552
    %v5554 = vmul.f32 %v5516, 1.442695
    %v5555 = vpow.pop %v5554
    %v5556 = vmul.f32 %v5517, 1.442695
    %v5557 = vpow.pop %v5556
    %v5558 = vmul.f32 %v5518, 1.442695
    %v5559 = vpow.pop %v5558
    %v5560 = vmul.f32 %v5519, 1.442695
    %v5561 = vpow.pop %v5560
    %v5562 = vmul.f32 %v5520, 1.442695
    %v5563 = vpow.pop %v5562
    %v5564 = vmul.f32 %v5521, 1.442695
    %v5565 = vpow.pop %v5564
    %v5566 = vmul.f32 %v5522, 1.442695
    %v5567 = vpow.pop %v5566
    %v5568 = vmul.f32 %v5523, 1.442695
    %v5569 = vpow.pop %v5568
    %v5570 = vmul.f32 %v5524, 1.442695
    %v5571 = vpow.pop %v5570
    %v5572 = vmul.f32 %v5525, 1.442695
    %v5573 = vpow.pop %v5572
    %v5574 = vmul.f32 %v5526, 1.442695
    %v5575 = vpow.pop %v5574
    %v5576 = vmul.f32 %v5527, 1.442695
    %v5577 = vpow.pop %v5576
    %v5578 = vmul.f32 %v5528, 1.442695
    %v5579 = vpow.pop %v5578
    %v5580 = vmul.f32 %v5529, 1.442695
    %v5581 = vpow.pop %v5580
    %v5582 = vmul.f32 %v5530, 1.442695
    %v5583 = vpow.pop %v5582
    %v5584 = vmul.f32 %v5531, 1.442695
    %v5585 = vpow.pop %v5584
    %v5586 = vmul.f32 %v5532, 1.442695
    %v5587 = vpow.pop %v5586
    %v5588 = vmul.f32 %v5533, 1.442695
    %v5589 = vpow.pop %v5588
    %v5590 = vmul.f32 %v5534, 1.442695
    %v5591 = vpow.pop %v5590
    %v5592 = vmul.f32 %v5535, 1.442695
    %v5593 = vpow.pop %v5592
    %v5594 = vmul.f32 %v5536, 1.442695
    %v5595 = vpow.pop %v5594
    %v5596 = vmul.f32 %v5537, 1.442695
    %v5597 = vpow.pop %v5596
    %v5598 = vmul.f32 %v5538, 1.442695
    %v5599 = vpow.pop %v5598
    %v5600 = vmul.f32 %v5539, 1.442695
    %v5601 = vpow.pop %v5600
    %v5602 = vmul.f32 %v5540, 1.442695
    %v5603 = vpow.pop %v5602
    %v5604 = vmul.f32 %v5541, 1.442695
    %v5605 = vpow.pop %v5604
    %v5606 = vadd.f32 %v5543, 1.0
    %v5607 = vadd.f32 %v5545, 1.0
    %v5608 = vadd.f32 %v5547, 1.0
    %v5609 = vadd.f32 %v5549, 1.0
    %v5610 = vadd.f32 %v5551, 1.0
    %v5611 = vadd.f32 %v5553, 1.0
    %v5612 = vadd.f32 %v5555, 1.0
    %v5613 = vadd.f32 %v5557, 1.0
    %v5614 = vadd.f32 %v5559, 1.0
    %v5615 = vadd.f32 %v5561, 1.0
    %v5616 = vadd.f32 %v5563, 1.0
    %v5617 = vadd.f32 %v5565, 1.0
    %v5618 = vadd.f32 %v5567, 1.0
    %v5619 = vadd.f32 %v5569, 1.0
    %v5620 = vadd.f32 %v5571, 1.0
    %v5621 = vadd.f32 %v5573, 1.0
    %v5622 = vadd.f32 %v5575, 1.0
    %v5623 = vadd.f32 %v5577, 1.0
    %v5624 = vadd.f32 %v5579, 1.0
    %v5625 = vadd.f32 %v5581, 1.0
    %v5626 = vadd.f32 %v5583, 1.0
    %v5627 = vadd.f32 %v5585, 1.0
    %v5628 = vadd.f32 %v5587, 1.0
    %v5629 = vadd.f32 %v5589, 1.0
    %v5630 = vadd.f32 %v5591, 1.0
    %v5631 = vadd.f32 %v5593, 1.0
    %v5632 = vadd.f32 %v5595, 1.0
    %v5633 = vadd.f32 %v5597, 1.0
    %v5634 = vadd.f32 %v5599, 1.0
    %v5635 = vadd.f32 %v5601, 1.0
    %v5636 = vadd.f32 %v5603, 1.0
    %v5637 = vadd.f32 %v5605, 1.0
    %v5638 = vrcp.pop %v5606
    %v5639 = vmul.f32 1.0, %v5638
    %v5640 = vrcp.pop %v5607
    %v5641 = vmul.f32 1.0, %v5640
    %v5642 = vrcp.pop %v5608
    %v5643 = vmul.f32 1.0, %v5642
    %v5644 = vrcp.pop %v5609
    %v5645 = vmul.f32 1.0, %v5644
    %v5646 = vrcp.pop %v5610
    %v5647 = vmul.f32 1.0, %v5646
    %v5648 = vrcp.pop %v5611
    %v5649 = vmul.f32 1.0, %v5648
    %v5650 = vrcp.pop %v5612
    %v5651 = vmul.f32 1.0, %v5650
    %v5652 = vrcp.pop %v5613
    %v5653 = vmul.f32 1.0, %v5652
    %v5654 = vrcp.pop %v5614
    %v5655 = vmul.f32 1.0, %v5654
    %v5656 = vrcp.pop %v5615
    %v5657 = vmul.f32 1.0, %v5656
    %v5658 = vrcp.pop %v5616
    %v5659 = vmul.f32 1.0, %v5658
    %v5660 = vrcp.pop %v5617
    %v5661 = vmul.f32 1.0, %v5660
    %v5662 = vrcp.pop %v5618
    %v5663 = vmul.f32 1.0, %v5662
    %v5664 = vrcp.pop %v5619
    %v5665 = vmul.f32 1.0, %v5664
    %v5666 = vrcp.pop %v5620
    %v5667 = vmul.f32 1.0, %v5666
    %v5668 = vrcp.pop %v5621
    %v5669 = vmul.f32 1.0, %v5668
    %v5670 = vrcp.pop %v5622
    %v5671 = vmul.f32 1.0, %v5670
    %v5672 = vrcp.pop %v5623
    %v5673 = vmul.f32 1.0, %v5672
    %v5674 = vrcp.pop %v5624
    %v5675 = vmul.f32 1.0, %v5674
    %v5676 = vrcp.pop %v5625
    %v5677 = vmul.f32 1.0, %v5676
    %v5678 = vrcp.pop %v5626
    %v5679 = vmul.f32 1.0, %v5678
    %v5680 = vrcp.pop %v5627
    %v5681 = vmul.f32 1.0, %v5680
    %v5682 = vrcp.pop %v5628
    %v5683 = vmul.f32 1.0, %v5682
    %v5684 = vrcp.pop %v5629
    %v5685 = vmul.f32 1.0, %v5684
    %v5686 = vrcp.pop %v5630
    %v5687 = vmul.f32 1.0, %v5686
    %v5688 = vrcp.pop %v5631
    %v5689 = vmul.f32 1.0, %v5688
    %v5690 = vrcp.pop %v5632
    %v5691 = vmul.f32 1.0, %v5690
    %v5692 = vrcp.pop %v5633
    %v5693 = vmul.f32 1.0, %v5692
    %v5694 = vrcp.pop %v5634
    %v5695 = vmul.f32 1.0, %v5694
    %v5696 = vrcp.pop %v5635
    %v5697 = vmul.f32 1.0, %v5696
    %v5698 = vrcp.pop %v5636
    %v5699 = vmul.f32 1.0, %v5698
    %v5700 = vrcp.pop %v5637
    %v5701 = vmul.f32 1.0, %v5700
    %v5706 = vrot.slane %v4368, 5
    %v5707 = vrot.slane %v4369, 5
    %v5708 = vrot.slane %v4370, 5
    %v5709 = vrot.slane %v4371, 5
    %v5714 = vmul.f32 %v46, %v5706
    %v5715 = vmul.f32 %v47, %v5707
    %v5716 = vmul.f32 %v48, %v5708
    %v5717 = vmul.f32 %v49, %v5709
    %v5722 = vrot.slane %v5714, 3
    %v5723 = vrot.slane %v5715, 3
    %v5724 = vrot.slane %v5716, 3
    %v5725 = vrot.slane %v5717, 3
    %v5730 = vsel %vm126, %v5722, 0.0
    %v5731 = vrot.slane %v5730, 4
    %v5732 = vadd.f32 %v5730, %v5731
    %v5733 = vrot.slane %v5732, 2
    %v5734 = vadd.f32 %v5732, %v5733
    %v5735 = vrot.slane %v5734, 1
    %v5736 = vadd.f32 %v5734, %v5735
    %v5737 = vsel %vm126, %v5723, 0.0
    %v5738 = vrot.slane %v5737, 4
    %v5739 = vadd.f32 %v5737, %v5738
    %v5740 = vrot.slane %v5739, 2
    %v5741 = vadd.f32 %v5739, %v5740
    %v5742 = vrot.slane %v5741, 1
    %v5743 = vadd.f32 %v5741, %v5742
    %v5744 = vsel %vm126, %v5724, 0.0
    %v5745 = vrot.slane %v5744, 4
    %v5746 = vadd.f32 %v5744, %v5745
    %v5747 = vrot.slane %v5746, 2
    %v5748 = vadd.f32 %v5746, %v5747
    %v5749 = vrot.slane %v5748, 1
    %v5750 = vadd.f32 %v5748, %v5749
    %v5751 = vsel %vm126, %v5725, 0.0
    %v5752 = vrot.slane %v5751, 4
    %v5753 = vadd.f32 %v5751, %v5752
    %v5754 = vrot.slane %v5753, 2
    %v5755 = vadd.f32 %v5753, %v5754
    %v5756 = vrot.slane %v5755, 1
    %v5757 = vadd.f32 %v5755, %v5756
    %v5762 = vrot.slane %v4372, 5
    %v5763 = vrot.slane %v4373, 5
    %v5764 = vrot.slane %v4374, 5
    %v5765 = vrot.slane %v4375, 5
    %v5770 = vmul.f32 %v46, %v5762
    %v5771 = vmul.f32 %v47, %v5763
    %v5772 = vmul.f32 %v48, %v5764
    %v5773 = vmul.f32 %v49, %v5765
    %v5778 = vrot.slane %v5770, 3
    %v5779 = vrot.slane %v5771, 3
    %v5780 = vrot.slane %v5772, 3
    %v5781 = vrot.slane %v5773, 3
    %v5786 = vsel %vm126, %v5778, 0.0
    %v5787 = vrot.slane %v5786, 4
    %v5788 = vadd.f32 %v5786, %v5787
    %v5789 = vrot.slane %v5788, 2
    %v5790 = vadd.f32 %v5788, %v5789
    %v5791 = vrot.slane %v5790, 1
    %v5792 = vadd.f32 %v5790, %v5791
    %v5793 = vsel %vm126, %v5779, 0.0
    %v5794 = vrot.slane %v5793, 4
    %v5795 = vadd.f32 %v5793, %v5794
    %v5796 = vrot.slane %v5795, 2
    %v5797 = vadd.f32 %v5795, %v5796
    %v5798 = vrot.slane %v5797, 1
    %v5799 = vadd.f32 %v5797, %v5798
    %v5800 = vsel %vm126, %v5780, 0.0
    %v5801 = vrot.slane %v5800, 4
    %v5802 = vadd.f32 %v5800, %v5801
    %v5803 = vrot.slane %v5802, 2
    %v5804 = vadd.f32 %v5802, %v5803
    %v5805 = vrot.slane %v5804, 1
    %v5806 = vadd.f32 %v5804, %v5805
    %v5807 = vsel %vm126, %v5781, 0.0
    %v5808 = vrot.slane %v5807, 4
    %v5809 = vadd.f32 %v5807, %v5808
    %v5810 = vrot.slane %v5809, 2
    %v5811 = vadd.f32 %v5809, %v5810
    %v5812 = vrot.slane %v5811, 1
    %v5813 = vadd.f32 %v5811, %v5812
    %v5818 = vrot.slane %v4376, 5
    %v5819 = vrot.slane %v4377, 5
    %v5820 = vrot.slane %v4378, 5
    %v5821 = vrot.slane %v4379, 5
    %v5826 = vmul.f32 %v46, %v5818
    %v5827 = vmul.f32 %v47, %v5819
    %v5828 = vmul.f32 %v48, %v5820
    %v5829 = vmul.f32 %v49, %v5821
    %v5834 = vrot.slane %v5826, 3
    %v5835 = vrot.slane %v5827, 3
    %v5836 = vrot.slane %v5828, 3
    %v5837 = vrot.slane %v5829, 3
    %v5842 = vsel %vm126, %v5834, 0.0
    %v5843 = vrot.slane %v5842, 4
    %v5844 = vadd.f32 %v5842, %v5843
    %v5845 = vrot.slane %v5844, 2
    %v5846 = vadd.f32 %v5844, %v5845
    %v5847 = vrot.slane %v5846, 1
    %v5848 = vadd.f32 %v5846, %v5847
    %v5849 = vsel %vm126, %v5835, 0.0
    %v5850 = vrot.slane %v5849, 4
    %v5851 = vadd.f32 %v5849, %v5850
    %v5852 = vrot.slane %v5851, 2
    %v5853 = vadd.f32 %v5851, %v5852
    %v5854 = vrot.slane %v5853, 1
    %v5855 = vadd.f32 %v5853, %v5854
    %v5856 = vsel %vm126, %v5836, 0.0
    %v5857 = vrot.slane %v5856, 4
    %v5858 = vadd.f32 %v5856, %v5857
    %v5859 = vrot.slane %v5858, 2
    %v5860 = vadd.f32 %v5858, %v5859
    %v5861 = vrot.slane %v5860, 1
    %v5862 = vadd.f32 %v5860, %v5861
    %v5863 = vsel %vm126, %v5837, 0.0
    %v5864 = vrot.slane %v5863, 4
    %v5865 = vadd.f32 %v5863, %v5864
    %v5866 = vrot.slane %v5865, 2
    %v5867 = vadd.f32 %v5865, %v5866
    %v5868 = vrot.slane %v5867, 1
    %v5869 = vadd.f32 %v5867, %v5868
    %v5874 = vrot.slane %v4380, 5
    %v5875 = vrot.slane %v4381, 5
    %v5876 = vrot.slane %v4382, 5
    %v5877 = vrot.slane %v4383, 5
    %v5882 = vmul.f32 %v46, %v5874
    %v5883 = vmul.f32 %v47, %v5875
    %v5884 = vmul.f32 %v48, %v5876
    %v5885 = vmul.f32 %v49, %v5877
    %v5890 = vrot.slane %v5882, 3
    %v5891 = vrot.slane %v5883, 3
    %v5892 = vrot.slane %v5884, 3
    %v5893 = vrot.slane %v5885, 3
    %v5898 = vsel %vm126, %v5890, 0.0
    %v5899 = vrot.slane %v5898, 4
    %v5900 = vadd.f32 %v5898, %v5899
    %v5901 = vrot.slane %v5900, 2
    %v5902 = vadd.f32 %v5900, %v5901
    %v5903 = vrot.slane %v5902, 1
    %v5904 = vadd.f32 %v5902, %v5903
    %v5905 = vsel %vm126, %v5891, 0.0
    %v5906 = vrot.slane %v5905, 4
    %v5907 = vadd.f32 %v5905, %v5906
    %v5908 = vrot.slane %v5907, 2
    %v5909 = vadd.f32 %v5907, %v5908
    %v5910 = vrot.slane %v5909, 1
    %v5911 = vadd.f32 %v5909, %v5910
    %v5912 = vsel %vm126, %v5892, 0.0
    %v5913 = vrot.slane %v5912, 4
    %v5914 = vadd.f32 %v5912, %v5913
    %v5915 = vrot.slane %v5914, 2
    %v5916 = vadd.f32 %v5914, %v5915
    %v5917 = vrot.slane %v5916, 1
    %v5918 = vadd.f32 %v5916, %v5917
    %v5919 = vsel %vm126, %v5893, 0.0
    %v5920 = vrot.slane %v5919, 4
    %v5921 = vadd.f32 %v5919, %v5920
    %v5922 = vrot.slane %v5921, 2
    %v5923 = vadd.f32 %v5921, %v5922
    %v5924 = vrot.slane %v5923, 1
    %v5925 = vadd.f32 %v5923, %v5924
    %v5930 = vrot.slane %v4384, 5
    %v5931 = vrot.slane %v4385, 5
    %v5932 = vrot.slane %v4386, 5
    %v5933 = vrot.slane %v4387, 5
    %v5938 = vmul.f32 %v46, %v5930
    %v5939 = vmul.f32 %v47, %v5931
    %v5940 = vmul.f32 %v48, %v5932
    %v5941 = vmul.f32 %v49, %v5933
    %v5946 = vrot.slane %v5938, 3
    %v5947 = vrot.slane %v5939, 3
    %v5948 = vrot.slane %v5940, 3
    %v5949 = vrot.slane %v5941, 3
    %v5954 = vsel %vm126, %v5946, 0.0
    %v5955 = vrot.slane %v5954, 4
    %v5956 = vadd.f32 %v5954, %v5955
    %v5957 = vrot.slane %v5956, 2
    %v5958 = vadd.f32 %v5956, %v5957
    %v5959 = vrot.slane %v5958, 1
    %v5960 = vadd.f32 %v5958, %v5959
    %v5961 = vsel %vm126, %v5947, 0.0
    %v5962 = vrot.slane %v5961, 4
    %v5963 = vadd.f32 %v5961, %v5962
    %v5964 = vrot.slane %v5963, 2
    %v5965 = vadd.f32 %v5963, %v5964
    %v5966 = vrot.slane %v5965, 1
    %v5967 = vadd.f32 %v5965, %v5966
    %v5968 = vsel %vm126, %v5948, 0.0
    %v5969 = vrot.slane %v5968, 4
    %v5970 = vadd.f32 %v5968, %v5969
    %v5971 = vrot.slane %v5970, 2
    %v5972 = vadd.f32 %v5970, %v5971
    %v5973 = vrot.slane %v5972, 1
    %v5974 = vadd.f32 %v5972, %v5973
    %v5975 = vsel %vm126, %v5949, 0.0
    %v5976 = vrot.slane %v5975, 4
    %v5977 = vadd.f32 %v5975, %v5976
    %v5978 = vrot.slane %v5977, 2
    %v5979 = vadd.f32 %v5977, %v5978
    %v5980 = vrot.slane %v5979, 1
    %v5981 = vadd.f32 %v5979, %v5980
    %v5986 = vrot.slane %v4388, 5
    %v5987 = vrot.slane %v4389, 5
    %v5988 = vrot.slane %v4390, 5
    %v5989 = vrot.slane %v4391, 5
    %v5994 = vmul.f32 %v46, %v5986
    %v5995 = vmul.f32 %v47, %v5987
    %v5996 = vmul.f32 %v48, %v5988
    %v5997 = vmul.f32 %v49, %v5989
    %v6002 = vrot.slane %v5994, 3
    %v6003 = vrot.slane %v5995, 3
    %v6004 = vrot.slane %v5996, 3
    %v6005 = vrot.slane %v5997, 3
    %v6010 = vsel %vm126, %v6002, 0.0
    %v6011 = vrot.slane %v6010, 4
    %v6012 = vadd.f32 %v6010, %v6011
    %v6013 = vrot.slane %v6012, 2
    %v6014 = vadd.f32 %v6012, %v6013
    %v6015 = vrot.slane %v6014, 1
    %v6016 = vadd.f32 %v6014, %v6015
    %v6017 = vsel %vm126, %v6003, 0.0
    %v6018 = vrot.slane %v6017, 4
    %v6019 = vadd.f32 %v6017, %v6018
    %v6020 = vrot.slane %v6019, 2
    %v6021 = vadd.f32 %v6019, %v6020
    %v6022 = vrot.slane %v6021, 1
    %v6023 = vadd.f32 %v6021, %v6022
    %v6024 = vsel %vm126, %v6004, 0.0
    %v6025 = vrot.slane %v6024, 4
    %v6026 = vadd.f32 %v6024, %v6025
    %v6027 = vrot.slane %v6026, 2
    %v6028 = vadd.f32 %v6026, %v6027
    %v6029 = vrot.slane %v6028, 1
    %v6030 = vadd.f32 %v6028, %v6029
    %v6031 = vsel %vm126, %v6005, 0.0
    %v6032 = vrot.slane %v6031, 4
    %v6033 = vadd.f32 %v6031, %v6032
    %v6034 = vrot.slane %v6033, 2
    %v6035 = vadd.f32 %v6033, %v6034
    %v6036 = vrot.slane %v6035, 1
    %v6037 = vadd.f32 %v6035, %v6036
    %v6042 = vrot.slane %v4392, 5
    %v6043 = vrot.slane %v4393, 5
    %v6044 = vrot.slane %v4394, 5
    %v6045 = vrot.slane %v4395, 5
    %v6050 = vmul.f32 %v46, %v6042
    %v6051 = vmul.f32 %v47, %v6043
    %v6052 = vmul.f32 %v48, %v6044
    %v6053 = vmul.f32 %v49, %v6045
    %v6058 = vrot.slane %v6050, 3
    %v6059 = vrot.slane %v6051, 3
    %v6060 = vrot.slane %v6052, 3
    %v6061 = vrot.slane %v6053, 3
    %v6066 = vsel %vm126, %v6058, 0.0
    %v6067 = vrot.slane %v6066, 4
    %v6068 = vadd.f32 %v6066, %v6067
    %v6069 = vrot.slane %v6068, 2
    %v6070 = vadd.f32 %v6068, %v6069
    %v6071 = vrot.slane %v6070, 1
    %v6072 = vadd.f32 %v6070, %v6071
    %v6073 = vsel %vm126, %v6059, 0.0
    %v6074 = vrot.slane %v6073, 4
    %v6075 = vadd.f32 %v6073, %v6074
    %v6076 = vrot.slane %v6075, 2
    %v6077 = vadd.f32 %v6075, %v6076
    %v6078 = vrot.slane %v6077, 1
    %v6079 = vadd.f32 %v6077, %v6078
    %v6080 = vsel %vm126, %v6060, 0.0
    %v6081 = vrot.slane %v6080, 4
    %v6082 = vadd.f32 %v6080, %v6081
    %v6083 = vrot.slane %v6082, 2
    %v6084 = vadd.f32 %v6082, %v6083
    %v6085 = vrot.slane %v6084, 1
    %v6086 = vadd.f32 %v6084, %v6085
    %v6087 = vsel %vm126, %v6061, 0.0
    %v6088 = vrot.slane %v6087, 4
    %v6089 = vadd.f32 %v6087, %v6088
    %v6090 = vrot.slane %v6089, 2
    %v6091 = vadd.f32 %v6089, %v6090
    %v6092 = vrot.slane %v6091, 1
    %v6093 = vadd.f32 %v6091, %v6092
    %v6098 = vrot.slane %v4396, 5
    %v6099 = vrot.slane %v4397, 5
    %v6100 = vrot.slane %v4398, 5
    %v6101 = vrot.slane %v4399, 5
    %v6106 = vmul.f32 %v46, %v6098
    %v6107 = vmul.f32 %v47, %v6099
    %v6108 = vmul.f32 %v48, %v6100
    %v6109 = vmul.f32 %v49, %v6101
    %v6114 = vrot.slane %v6106, 3
    %v6115 = vrot.slane %v6107, 3
    %v6116 = vrot.slane %v6108, 3
    %v6117 = vrot.slane %v6109, 3
    %v6122 = vsel %vm126, %v6114, 0.0
    %v6123 = vrot.slane %v6122, 4
    %v6124 = vadd.f32 %v6122, %v6123
    %v6125 = vrot.slane %v6124, 2
    %v6126 = vadd.f32 %v6124, %v6125
    %v6127 = vrot.slane %v6126, 1
    %v6128 = vadd.f32 %v6126, %v6127
    %v6129 = vsel %vm126, %v6115, 0.0
    %v6130 = vrot.slane %v6129, 4
    %v6131 = vadd.f32 %v6129, %v6130
    %v6132 = vrot.slane %v6131, 2
    %v6133 = vadd.f32 %v6131, %v6132
    %v6134 = vrot.slane %v6133, 1
    %v6135 = vadd.f32 %v6133, %v6134
    %v6136 = vsel %vm126, %v6116, 0.0
    %v6137 = vrot.slane %v6136, 4
    %v6138 = vadd.f32 %v6136, %v6137
    %v6139 = vrot.slane %v6138, 2
    %v6140 = vadd.f32 %v6138, %v6139
    %v6141 = vrot.slane %v6140, 1
    %v6142 = vadd.f32 %v6140, %v6141
    %v6143 = vsel %vm126, %v6117, 0.0
    %v6144 = vrot.slane %v6143, 4
    %v6145 = vadd.f32 %v6143, %v6144
    %v6146 = vrot.slane %v6145, 2
    %v6147 = vadd.f32 %v6145, %v6146
    %v6148 = vrot.slane %v6147, 1
    %v6149 = vadd.f32 %v6147, %v6148
    %vm6150 = vcmask 1040384
    %v6151 = vsel %vm6150, %v5736, %v5792
    %v6152 = vsel %vm6150, %v5743, %v5799
    %v6153 = vsel %vm6150, %v5750, %v5806
    %v6154 = vsel %vm6150, %v5757, %v5813
    %vm6155 = vcmask 1041408
    %v6156 = vsel %vm6155, %v6151, %v5848
    %v6157 = vsel %vm6155, %v6152, %v5855
    %v6158 = vsel %vm6155, %v6153, %v5862
    %v6159 = vsel %vm6155, %v6154, %v5869
    %v6160 = vsel %vm126, %v6156, %v5904
    %v6161 = vsel %vm126, %v6157, %v5911
    %v6162 = vsel %vm126, %v6158, %v5918
    %v6163 = vsel %vm126, %v6159, %v5925
    %v6164 = vsel %vm672, %v6160, %v5960
    %v6165 = vsel %vm672, %v6161, %v5967
    %v6166 = vsel %vm672, %v6162, %v5974
    %v6167 = vsel %vm672, %v6163, %v5981
    %vm6168 = vcmask 1044480
    %v6169 = vsel %vm6168, %v6164, %v6016
    %v6170 = vsel %vm6168, %v6165, %v6023
    %v6171 = vsel %vm6168, %v6166, %v6030
    %v6172 = vsel %vm6168, %v6167, %v6037
    %vm6173 = vcmask 1045504
    %v6174 = vsel %vm6173, %v6169, %v6072
    %v6175 = vsel %vm6173, %v6170, %v6079
    %v6176 = vsel %vm6173, %v6171, %v6086
    %v6177 = vsel %vm6173, %v6172, %v6093
    %vm6178 = vcmask 1046528
    %v6179 = vsel %vm6178, %v6174, %v6128
    %v6180 = vsel %vm6178, %v6175, %v6135
    %v6181 = vsel %vm6178, %v6176, %v6142
    %v6182 = vsel %vm6178, %v6177, %v6149
    %v6187 = vrot.slane %v4335, 7
    %v6188 = vrot.slane %v4336, 7
    %v6189 = vrot.slane %v4337, 7
    %v6190 = vrot.slane %v4338, 7
    %v6199 = vrot.slane %v4339, 6
    %v6200 = vrot.slane %v4340, 6
    %v6201 = vrot.slane %v4341, 6
    %v6202 = vrot.slane %v4342, 6
    %v6211 = vrot.slane %v4343, 5
    %v6212 = vrot.slane %v4344, 5
    %v6213 = vrot.slane %v4345, 5
    %v6214 = vrot.slane %v4346, 5
    %v6223 = vrot.slane %v4347, 4
    %v6224 = vrot.slane %v4348, 4
    %v6225 = vrot.slane %v4349, 4
    %v6226 = vrot.slane %v4350, 4
    %v6235 = vrot.slane %v4351, 3
    %v6236 = vrot.slane %v4352, 3
    %v6237 = vrot.slane %v4353, 3
    %v6238 = vrot.slane %v4354, 3
    %v6247 = vrot.slane %v4355, 2
    %v6248 = vrot.slane %v4356, 2
    %v6249 = vrot.slane %v4357, 2
    %v6250 = vrot.slane %v4358, 2
    %v6259 = vrot.slane %v4359, 1
    %v6260 = vrot.slane %v4360, 1
    %v6261 = vrot.slane %v4361, 1
    %v6262 = vrot.slane %v4362, 1
    %v6267 = vsel %vm6150, %v4331, %v6187
    %v6268 = vsel %vm6150, %v4332, %v6188
    %v6269 = vsel %vm6150, %v4333, %v6189
    %v6270 = vsel %vm6150, %v4334, %v6190
    %v6271 = vsel %vm6155, %v6267, %v6199
    %v6272 = vsel %vm6155, %v6268, %v6200
    %v6273 = vsel %vm6155, %v6269, %v6201
    %v6274 = vsel %vm6155, %v6270, %v6202
    %v6275 = vsel %vm126, %v6271, %v6211
    %v6276 = vsel %vm126, %v6272, %v6212
    %v6277 = vsel %vm126, %v6273, %v6213
    %v6278 = vsel %vm126, %v6274, %v6214
    %v6279 = vsel %vm672, %v6275, %v6223
    %v6280 = vsel %vm672, %v6276, %v6224
    %v6281 = vsel %vm672, %v6277, %v6225
    %v6282 = vsel %vm672, %v6278, %v6226
    %v6283 = vsel %vm6168, %v6279, %v6235
    %v6284 = vsel %vm6168, %v6280, %v6236
    %v6285 = vsel %vm6168, %v6281, %v6237
    %v6286 = vsel %vm6168, %v6282, %v6238
    %v6287 = vsel %vm6173, %v6283, %v6247
    %v6288 = vsel %vm6173, %v6284, %v6248
    %v6289 = vsel %vm6173, %v6285, %v6249
    %v6290 = vsel %vm6173, %v6286, %v6250
    %v6291 = vsel %vm6178, %v6287, %v6259
    %v6292 = vsel %vm6178, %v6288, %v6260
    %v6293 = vsel %vm6178, %v6289, %v6261
    %v6294 = vsel %vm6178, %v6290, %v6262
    %v6295 = vsub.f32 0.0, %v6179
    %v6296 = vsub.f32 0.0, %v6180
    %v6297 = vsub.f32 0.0, %v6181
    %v6298 = vsub.f32 0.0, %v6182
    %v6299 = vmul.f32 %v6295, 0.5
    %v6300 = vmul.f32 %v6296, 0.5
    %v6301 = vmul.f32 %v6297, 0.5
    %v6302 = vmul.f32 %v6298, 0.5
    %v6303 = vadd.f32 %v6299, 0.5
    %v6304 = vadd.f32 %v6300, 0.5
    %v6305 = vadd.f32 %v6301, 0.5
    %v6306 = vadd.f32 %v6302, 0.5
    %v6307 = vmax.f32 %v6303, 0.0
    %v6308 = vmax.f32 %v6304, 0.0
    %v6309 = vmax.f32 %v6305, 0.0
    %v6310 = vmax.f32 %v6306, 0.0
    %s6311 = ssub.f32 1.0, %s44
    %v6312 = vstv %s6311
    %v6313 = vmul.f32 %v6307, %v6312
    %v6314 = vmul.f32 %v6308, %v6312
    %v6315 = vmul.f32 %v6309, %v6312
    %v6316 = vmul.f32 %v6310, %v6312
    %v6317 = vmax.f32 %v6295, 0.0
    %v6318 = vmax.f32 %v6296, 0.0
    %v6319 = vmax.f32 %v6297, 0.0
    %v6320 = vmax.f32 %v6298, 0.0
    %v6321 = vstv %s44
    %v6322 = vmul.f32 %v6317, %v6321
    %v6323 = vmul.f32 %v6318, %v6321
    %v6324 = vmul.f32 %v6319, %v6321
    %v6325 = vmul.f32 %v6320, %v6321
    %v6326 = vadd.f32 %v6313, %v6322
    %v6327 = vadd.f32 %v6314, %v6323
    %v6328 = vadd.f32 %v6315, %v6324
    %v6329 = vadd.f32 %v6316, %v6325
    %v6330 = vsub.f32 0.0, %v6326
    %v6331 = vsub.f32 0.0, %v6327
    %v6332 = vsub.f32 0.0, %v6328
    %v6333 = vsub.f32 0.0, %v6329
    %v6334 = vlaneseq
    %v6335 = vshrl.u32 %v6334, 7
    %v6336 = vsub.s32 7, %v6335
    %v6337 = vrot.slane %v70, %v6336
    %v6338 = vlaneseq
    %v6339 = vshrl.u32 %v6338, 7
    %v6340 = vsub.s32 7, %v6339
    %v6341 = vrot.slane %v71, %v6340
    %v6342 = vlaneseq
    %v6343 = vshrl.u32 %v6342, 7
    %v6344 = vsub.s32 7, %v6343
    %v6345 = vrot.slane %v72, %v6344
    %v6346 = vlaneseq
    %v6347 = vshrl.u32 %v6346, 7
    %v6348 = vsub.s32 7, %v6347
    %v6349 = vrot.slane %v73, %v6348
    %v6350 = vmul.f32 %v6330, %v6337
    %v6351 = vmul.f32 %v6331, %v6341
    %v6352 = vmul.f32 %v6332, %v6345
    %v6353 = vmul.f32 %v6333, %v6349
    %v6354 = vsub.f32 %v6291, %v6350
    %v6355 = vsub.f32 %v6292, %v6351
    %v6356 = vsub.f32 %v6293, %v6352
    %v6357 = vsub.f32 %v6294, %v6353
    %v6358 = vxor.u32 %v6354, 2147483648
    %v6359 = vxor.u32 %v6355, 2147483648
    %v6360 = vxor.u32 %v6356, 2147483648
    %v6361 = vxor.u32 %v6357, 2147483648
    %v6362 = vmul.f32 %v6358, 1.442695
    %v6363 = vpow.pop %v6362
    %v6364 = vmul.f32 %v6359, 1.442695
    %v6365 = vpow.pop %v6364
    %v6366 = vmul.f32 %v6360, 1.442695
    %v6367 = vpow.pop %v6366
    %v6368 = vmul.f32 %v6361, 1.442695
    %v6369 = vpow.pop %v6368
    %v6370 = vadd.f32 %v6363, 1.0
    %v6371 = vadd.f32 %v6365, 1.0
    %v6372 = vadd.f32 %v6367, 1.0
    %v6373 = vadd.f32 %v6369, 1.0
    %v6374 = vrcp.pop %v6370
    %v6375 = vmul.f32 1.0, %v6374
    %v6376 = vrcp.pop %v6371
    %v6377 = vmul.f32 1.0, %v6376
    %v6378 = vrcp.pop %v6372
    %v6379 = vmul.f32 1.0, %v6378
    %v6380 = vrcp.pop %v6373
    %v6381 = vmul.f32 1.0, %v6380
    %v6382 = vadd.f32 %v6291, %v6350
    %v6383 = vadd.f32 %v6292, %v6351
    %v6384 = vadd.f32 %v6293, %v6352
    %v6385 = vadd.f32 %v6294, %v6353
    %v6386 = vxor.u32 %v6382, 2147483648
    %v6387 = vxor.u32 %v6383, 2147483648
    %v6388 = vxor.u32 %v6384, 2147483648
    %v6389 = vxor.u32 %v6385, 2147483648
    %v6390 = vmul.f32 %v6386, 1.442695
    %v6391 = vpow.pop %v6390
    %v6392 = vmul.f32 %v6387, 1.442695
    %v6393 = vpow.pop %v6392
    %v6394 = vmul.f32 %v6388, 1.442695
    %v6395 = vpow.pop %v6394
    %v6396 = vmul.f32 %v6389, 1.442695
    %v6397 = vpow.pop %v6396
    %v6398 = vadd.f32 %v6391, 1.0
    %v6399 = vadd.f32 %v6393, 1.0
    %v6400 = vadd.f32 %v6395, 1.0
    %v6401 = vadd.f32 %v6397, 1.0
    %v6402 = vrcp.pop %v6398
    %v6403 = vmul.f32 1.0, %v6402
    %v6404 = vrcp.pop %v6399
    %v6405 = vmul.f32 1.0, %v6404
    %v6406 = vrcp.pop %v6400
    %v6407 = vmul.f32 1.0, %v6406
    %v6408 = vrcp.pop %v6401
    %v6409 = vmul.f32 1.0, %v6408
    %v6410 = vsub.f32 %v6375, %v6403
    %v6411 = vsub.f32 %v6377, %v6405
    %v6412 = vsub.f32 %v6379, %v6407
    %v6413 = vsub.f32 %v6381, %v6409
    %v6414 = vadd.f32 %v6410, 1e-05
    %v6415 = vadd.f32 %v6411, 1e-05
    %v6416 = vadd.f32 %v6412, 1e-05
    %v6417 = vadd.f32 %v6413, 1e-05
    %v6418 = vadd.f32 %v6375, 1e-05
    %v6419 = vadd.f32 %v6377, 1e-05
    %v6420 = vadd.f32 %v6379, 1e-05
    %v6421 = vadd.f32 %v6381, 1e-05
    %v6422 = vrcp.pop %v6418
    %v6423 = vmul.f32 %v6414, %v6422
    %v6424 = vrcp.pop %v6419
    %v6425 = vmul.f32 %v6415, %v6424
    %v6426 = vrcp.pop %v6420
    %v6427 = vmul.f32 %v6416, %v6426
    %v6428 = vrcp.pop %v6421
    %v6429 = vmul.f32 %v6417, %v6428
    %v6430 = vmax.f32 %v6423, 0.0
    %v6431 = vmax.f32 %v6425, 0.0
    %v6432 = vmax.f32 %v6427, 0.0
    %v6433 = vmax.f32 %v6429, 0.0
    %v6434 = vmin.f32 %v6430, 1.0
    %v6435 = vmin.f32 %v6431, 1.0
    %v6436 = vmin.f32 %v6432, 1.0
    %v6437 = vmin.f32 %v6433, 1.0
    %v6438 = vlaneseq
    %v6439 = vshrl.u32 %v6438, 7
    %v6440 = vsub.s32 0, %v6439
    %v6441 = vrot.slane %v6434, %v6440
    %v6442 = vlaneseq
    %v6443 = vshrl.u32 %v6442, 7
    %v6444 = vsub.s32 0, %v6443
    %v6445 = vrot.slane %v6435, %v6444
    %v6446 = vlaneseq
    %v6447 = vshrl.u32 %v6446, 7
    %v6448 = vsub.s32 0, %v6447
    %v6449 = vrot.slane %v6436, %v6448
    %v6450 = vlaneseq
    %v6451 = vshrl.u32 %v6450, 7
    %v6452 = vsub.s32 0, %v6451
    %v6453 = vrot.slane %v6437, %v6452
    %v6454 = vmul.f32 %v6441, %v5639
    %v6455 = vmul.f32 %v6445, %v5641
    %v6456 = vmul.f32 %v6449, %v5643
    %v6457 = vmul.f32 %v6453, %v5645
    %v6458 = vadd.f32 %v6454, 0.0
    %v6459 = vadd.f32 %v6455, 0.0
    %v6460 = vadd.f32 %v6456, 0.0
    %v6461 = vadd.f32 %v6457, 0.0
    %v6462 = vadd.f32 %v6434, 0.0
    %v6463 = vadd.f32 %v6435, 0.0
    %v6464 = vadd.f32 %v6436, 0.0
    %v6465 = vadd.f32 %v6437, 0.0
    %v6466 = vsub.f32 1.0, %v6434
    %v6467 = vsub.f32 1.0, %v6435
    %v6468 = vsub.f32 1.0, %v6436
    %v6469 = vsub.f32 1.0, %v6437
    %v6474 = vrot.slane %v6434, 1
    %v6475 = vrot.slane %v6435, 1
    %v6476 = vrot.slane %v6436, 1
    %v6477 = vrot.slane %v6437, 1
    %v6482 = vmul.f32 %v6466, %v6474
    %v6483 = vmul.f32 %v6467, %v6475
    %v6484 = vmul.f32 %v6468, %v6476
    %v6485 = vmul.f32 %v6469, %v6477
    %v6486 = vlaneseq
    %v6487 = vshrl.u32 %v6486, 7
    %v6488 = vsub.s32 0, %v6487
    %v6489 = vrot.slane %v6482, %v6488
    %v6490 = vlaneseq
    %v6491 = vshrl.u32 %v6490, 7
    %v6492 = vsub.s32 0, %v6491
    %v6493 = vrot.slane %v6483, %v6492
    %v6494 = vlaneseq
    %v6495 = vshrl.u32 %v6494, 7
    %v6496 = vsub.s32 0, %v6495
    %v6497 = vrot.slane %v6484, %v6496
    %v6498 = vlaneseq
    %v6499 = vshrl.u32 %v6498, 7
    %v6500 = vsub.s32 0, %v6499
    %v6501 = vrot.slane %v6485, %v6500
    %v6502 = vmul.f32 %v6489, %v5647
    %v6503 = vmul.f32 %v6493, %v5649
    %v6504 = vmul.f32 %v6497, %v5651
    %v6505 = vmul.f32 %v6501, %v5653
    %v6506 = vadd.f32 %v6458, %v6502
    %v6507 = vadd.f32 %v6459, %v6503
    %v6508 = vadd.f32 %v6460, %v6504
    %v6509 = vadd.f32 %v6461, %v6505
    %v6510 = vadd.f32 %v6462, %v6482
    %v6511 = vadd.f32 %v6463, %v6483
    %v6512 = vadd.f32 %v6464, %v6484
    %v6513 = vadd.f32 %v6465, %v6485
    %v6518 = vrot.slane %v6466, 1
    %v6519 = vrot.slane %v6467, 1
    %v6520 = vrot.slane %v6468, 1
    %v6521 = vrot.slane %v6469, 1
    %v6526 = vmul.f32 %v6466, %v6518
    %v6527 = vmul.f32 %v6467, %v6519
    %v6528 = vmul.f32 %v6468, %v6520
    %v6529 = vmul.f32 %v6469, %v6521
    %v6530 = vrot.slane %v6434, 2
    %v6531 = vrot.slane %v6435, 2
    %v6532 = vrot.slane %v6436, 2
    %v6533 = vrot.slane %v6437, 2
    %v6538 = vmul.f32 %v6526, %v6530
    %v6539 = vmul.f32 %v6527, %v6531
    %v6540 = vmul.f32 %v6528, %v6532
    %v6541 = vmul.f32 %v6529, %v6533
    %v6542 = vlaneseq
    %v6543 = vshrl.u32 %v6542, 7
    %v6544 = vsub.s32 0, %v6543
    %v6545 = vrot.slane %v6538, %v6544
    %v6546 = vlaneseq
    %v6547 = vshrl.u32 %v6546, 7
    %v6548 = vsub.s32 0, %v6547
    %v6549 = vrot.slane %v6539, %v6548
    %v6550 = vlaneseq
    %v6551 = vshrl.u32 %v6550, 7
    %v6552 = vsub.s32 0, %v6551
    %v6553 = vrot.slane %v6540, %v6552
    %v6554 = vlaneseq
    %v6555 = vshrl.u32 %v6554, 7
    %v6556 = vsub.s32 0, %v6555
    %v6557 = vrot.slane %v6541, %v6556
    %v6558 = vmul.f32 %v6545, %v5655
    %v6559 = vmul.f32 %v6549, %v5657
    %v6560 = vmul.f32 %v6553, %v5659
    %v6561 = vmul.f32 %v6557, %v5661
    %v6562 = vadd.f32 %v6506, %v6558
    %v6563 = vadd.f32 %v6507, %v6559
    %v6564 = vadd.f32 %v6508, %v6560
    %v6565 = vadd.f32 %v6509, %v6561
    %v6566 = vadd.f32 %v6510, %v6538
    %v6567 = vadd.f32 %v6511, %v6539
    %v6568 = vadd.f32 %v6512, %v6540
    %v6569 = vadd.f32 %v6513, %v6541
    %v6570 = vrot.slane %v6466, 2
    %v6571 = vrot.slane %v6467, 2
    %v6572 = vrot.slane %v6468, 2
    %v6573 = vrot.slane %v6469, 2
    %v6578 = vmul.f32 %v6526, %v6570
    %v6579 = vmul.f32 %v6527, %v6571
    %v6580 = vmul.f32 %v6528, %v6572
    %v6581 = vmul.f32 %v6529, %v6573
    %v6582 = vrot.slane %v6434, 3
    %v6583 = vrot.slane %v6435, 3
    %v6584 = vrot.slane %v6436, 3
    %v6585 = vrot.slane %v6437, 3
    %v6590 = vmul.f32 %v6578, %v6582
    %v6591 = vmul.f32 %v6579, %v6583
    %v6592 = vmul.f32 %v6580, %v6584
    %v6593 = vmul.f32 %v6581, %v6585
    %v6594 = vlaneseq
    %v6595 = vshrl.u32 %v6594, 7
    %v6596 = vsub.s32 0, %v6595
    %v6597 = vrot.slane %v6590, %v6596
    %v6598 = vlaneseq
    %v6599 = vshrl.u32 %v6598, 7
    %v6600 = vsub.s32 0, %v6599
    %v6601 = vrot.slane %v6591, %v6600
    %v6602 = vlaneseq
    %v6603 = vshrl.u32 %v6602, 7
    %v6604 = vsub.s32 0, %v6603
    %v6605 = vrot.slane %v6592, %v6604
    %v6606 = vlaneseq
    %v6607 = vshrl.u32 %v6606, 7
    %v6608 = vsub.s32 0, %v6607
    %v6609 = vrot.slane %v6593, %v6608
    %v6610 = vmul.f32 %v6597, %v5663
    %v6611 = vmul.f32 %v6601, %v5665
    %v6612 = vmul.f32 %v6605, %v5667
    %v6613 = vmul.f32 %v6609, %v5669
    %v6614 = vadd.f32 %v6562, %v6610
    %v6615 = vadd.f32 %v6563, %v6611
    %v6616 = vadd.f32 %v6564, %v6612
    %v6617 = vadd.f32 %v6565, %v6613
    %v6618 = vadd.f32 %v6566, %v6590
    %v6619 = vadd.f32 %v6567, %v6591
    %v6620 = vadd.f32 %v6568, %v6592
    %v6621 = vadd.f32 %v6569, %v6593
    %v6622 = vrot.slane %v6466, 3
    %v6623 = vrot.slane %v6467, 3
    %v6624 = vrot.slane %v6468, 3
    %v6625 = vrot.slane %v6469, 3
    %v6630 = vmul.f32 %v6578, %v6622
    %v6631 = vmul.f32 %v6579, %v6623
    %v6632 = vmul.f32 %v6580, %v6624
    %v6633 = vmul.f32 %v6581, %v6625
    %v6634 = vrot.slane %v6434, 4
    %v6635 = vrot.slane %v6435, 4
    %v6636 = vrot.slane %v6436, 4
    %v6637 = vrot.slane %v6437, 4
    %v6642 = vmul.f32 %v6630, %v6634
    %v6643 = vmul.f32 %v6631, %v6635
    %v6644 = vmul.f32 %v6632, %v6636
    %v6645 = vmul.f32 %v6633, %v6637
    %v6646 = vlaneseq
    %v6647 = vshrl.u32 %v6646, 7
    %v6648 = vsub.s32 0, %v6647
    %v6649 = vrot.slane %v6642, %v6648
    %v6650 = vlaneseq
    %v6651 = vshrl.u32 %v6650, 7
    %v6652 = vsub.s32 0, %v6651
    %v6653 = vrot.slane %v6643, %v6652
    %v6654 = vlaneseq
    %v6655 = vshrl.u32 %v6654, 7
    %v6656 = vsub.s32 0, %v6655
    %v6657 = vrot.slane %v6644, %v6656
    %v6658 = vlaneseq
    %v6659 = vshrl.u32 %v6658, 7
    %v6660 = vsub.s32 0, %v6659
    %v6661 = vrot.slane %v6645, %v6660
    %v6662 = vmul.f32 %v6649, %v5671
    %v6663 = vmul.f32 %v6653, %v5673
    %v6664 = vmul.f32 %v6657, %v5675
    %v6665 = vmul.f32 %v6661, %v5677
    %v6666 = vadd.f32 %v6614, %v6662
    %v6667 = vadd.f32 %v6615, %v6663
    %v6668 = vadd.f32 %v6616, %v6664
    %v6669 = vadd.f32 %v6617, %v6665
    %v6670 = vadd.f32 %v6618, %v6642
    %v6671 = vadd.f32 %v6619, %v6643
    %v6672 = vadd.f32 %v6620, %v6644
    %v6673 = vadd.f32 %v6621, %v6645
    %v6674 = vrot.slane %v6466, 4
    %v6675 = vrot.slane %v6467, 4
    %v6676 = vrot.slane %v6468, 4
    %v6677 = vrot.slane %v6469, 4
    %v6682 = vmul.f32 %v6630, %v6674
    %v6683 = vmul.f32 %v6631, %v6675
    %v6684 = vmul.f32 %v6632, %v6676
    %v6685 = vmul.f32 %v6633, %v6677
    %v6686 = vrot.slane %v6434, 5
    %v6687 = vrot.slane %v6435, 5
    %v6688 = vrot.slane %v6436, 5
    %v6689 = vrot.slane %v6437, 5
    %v6694 = vmul.f32 %v6682, %v6686
    %v6695 = vmul.f32 %v6683, %v6687
    %v6696 = vmul.f32 %v6684, %v6688
    %v6697 = vmul.f32 %v6685, %v6689
    %v6698 = vlaneseq
    %v6699 = vshrl.u32 %v6698, 7
    %v6700 = vsub.s32 0, %v6699
    %v6701 = vrot.slane %v6694, %v6700
    %v6702 = vlaneseq
    %v6703 = vshrl.u32 %v6702, 7
    %v6704 = vsub.s32 0, %v6703
    %v6705 = vrot.slane %v6695, %v6704
    %v6706 = vlaneseq
    %v6707 = vshrl.u32 %v6706, 7
    %v6708 = vsub.s32 0, %v6707
    %v6709 = vrot.slane %v6696, %v6708
    %v6710 = vlaneseq
    %v6711 = vshrl.u32 %v6710, 7
    %v6712 = vsub.s32 0, %v6711
    %v6713 = vrot.slane %v6697, %v6712
    %v6714 = vmul.f32 %v6701, %v5679
    %v6715 = vmul.f32 %v6705, %v5681
    %v6716 = vmul.f32 %v6709, %v5683
    %v6717 = vmul.f32 %v6713, %v5685
    %v6718 = vadd.f32 %v6666, %v6714
    %v6719 = vadd.f32 %v6667, %v6715
    %v6720 = vadd.f32 %v6668, %v6716
    %v6721 = vadd.f32 %v6669, %v6717
    %v6722 = vadd.f32 %v6670, %v6694
    %v6723 = vadd.f32 %v6671, %v6695
    %v6724 = vadd.f32 %v6672, %v6696
    %v6725 = vadd.f32 %v6673, %v6697
    %v6726 = vrot.slane %v6466, 5
    %v6727 = vrot.slane %v6467, 5
    %v6728 = vrot.slane %v6468, 5
    %v6729 = vrot.slane %v6469, 5
    %v6734 = vmul.f32 %v6682, %v6726
    %v6735 = vmul.f32 %v6683, %v6727
    %v6736 = vmul.f32 %v6684, %v6728
    %v6737 = vmul.f32 %v6685, %v6729
    %v6738 = vrot.slane %v6434, 6
    %v6739 = vrot.slane %v6435, 6
    %v6740 = vrot.slane %v6436, 6
    %v6741 = vrot.slane %v6437, 6
    %v6746 = vmul.f32 %v6734, %v6738
    %v6747 = vmul.f32 %v6735, %v6739
    %v6748 = vmul.f32 %v6736, %v6740
    %v6749 = vmul.f32 %v6737, %v6741
    %v6750 = vlaneseq
    %v6751 = vshrl.u32 %v6750, 7
    %v6752 = vsub.s32 0, %v6751
    %v6753 = vrot.slane %v6746, %v6752
    %v6754 = vlaneseq
    %v6755 = vshrl.u32 %v6754, 7
    %v6756 = vsub.s32 0, %v6755
    %v6757 = vrot.slane %v6747, %v6756
    %v6758 = vlaneseq
    %v6759 = vshrl.u32 %v6758, 7
    %v6760 = vsub.s32 0, %v6759
    %v6761 = vrot.slane %v6748, %v6760
    %v6762 = vlaneseq
    %v6763 = vshrl.u32 %v6762, 7
    %v6764 = vsub.s32 0, %v6763
    %v6765 = vrot.slane %v6749, %v6764
    %v6766 = vmul.f32 %v6753, %v5687
    %v6767 = vmul.f32 %v6757, %v5689
    %v6768 = vmul.f32 %v6761, %v5691
    %v6769 = vmul.f32 %v6765, %v5693
    %v6770 = vadd.f32 %v6718, %v6766
    %v6771 = vadd.f32 %v6719, %v6767
    %v6772 = vadd.f32 %v6720, %v6768
    %v6773 = vadd.f32 %v6721, %v6769
    %v6774 = vadd.f32 %v6722, %v6746
    %v6775 = vadd.f32 %v6723, %v6747
    %v6776 = vadd.f32 %v6724, %v6748
    %v6777 = vadd.f32 %v6725, %v6749
    %v6778 = vrot.slane %v6466, 6
    %v6779 = vrot.slane %v6467, 6
    %v6780 = vrot.slane %v6468, 6
    %v6781 = vrot.slane %v6469, 6
    %v6786 = vmul.f32 %v6734, %v6778
    %v6787 = vmul.f32 %v6735, %v6779
    %v6788 = vmul.f32 %v6736, %v6780
    %v6789 = vmul.f32 %v6737, %v6781
    %v6790 = vrot.slane %v6434, 7
    %v6791 = vrot.slane %v6435, 7
    %v6792 = vrot.slane %v6436, 7
    %v6793 = vrot.slane %v6437, 7
    %v6798 = vmul.f32 %v6786, %v6790
    %v6799 = vmul.f32 %v6787, %v6791
    %v6800 = vmul.f32 %v6788, %v6792
    %v6801 = vmul.f32 %v6789, %v6793
    %v6802 = vlaneseq
    %v6803 = vshrl.u32 %v6802, 7
    %v6804 = vsub.s32 0, %v6803
    %v6805 = vrot.slane %v6798, %v6804
    %v6806 = vlaneseq
    %v6807 = vshrl.u32 %v6806, 7
    %v6808 = vsub.s32 0, %v6807
    %v6809 = vrot.slane %v6799, %v6808
    %v6810 = vlaneseq
    %v6811 = vshrl.u32 %v6810, 7
    %v6812 = vsub.s32 0, %v6811
    %v6813 = vrot.slane %v6800, %v6812
    %v6814 = vlaneseq
    %v6815 = vshrl.u32 %v6814, 7
    %v6816 = vsub.s32 0, %v6815
    %v6817 = vrot.slane %v6801, %v6816
    %v6818 = vmul.f32 %v6805, %v5695
    %v6819 = vmul.f32 %v6809, %v5697
    %v6820 = vmul.f32 %v6813, %v5699
    %v6821 = vmul.f32 %v6817, %v5701
    %v6822 = vadd.f32 %v6770, %v6818
    %v6823 = vadd.f32 %v6771, %v6819
    %v6824 = vadd.f32 %v6772, %v6820
    %v6825 = vadd.f32 %v6773, %v6821
    %v6826 = vadd.f32 %v6774, %v6798
    %v6827 = vadd.f32 %v6775, %v6799
    %v6828 = vadd.f32 %v6776, %v6800
    %v6829 = vadd.f32 %v6777, %v6801
    %v6830 = vsub.f32 1.0, %v6826
    %v6831 = vsub.f32 1.0, %v6827
    %v6832 = vsub.f32 1.0, %v6828
    %v6833 = vsub.f32 1.0, %v6829
    %v6834 = vlaneseq
    %v6835 = vshrl.u32 %v6834, 7
    %v6836 = vsub.s32 0, %v6835
    %v6837 = vrot.slane %v6830, %v6836
    %v6838 = vlaneseq
    %v6839 = vshrl.u32 %v6838, 7
    %v6840 = vsub.s32 0, %v6839
    %v6841 = vrot.slane %v6831, %v6840
    %v6842 = vlaneseq
    %v6843 = vshrl.u32 %v6842, 7
    %v6844 = vsub.s32 0, %v6843
    %v6845 = vrot.slane %v6832, %v6844
    %v6846 = vlaneseq
    %v6847 = vshrl.u32 %v6846, 7
    %v6848 = vsub.s32 0, %v6847
    %v6849 = vrot.slane %v6833, %v6848
    %6851 = vset.pattern.permute.xlu0 0
    %6852 = vperm.xlu0 %6851, %v4329
    %v6853 = vpop.permute.xlu0 %6852
    %v6855 = vmul.f32 %v6837, %v4366
    %v6856 = vmul.f32 %v6841, %v4366
    %v6857 = vmul.f32 %v6845, %v4366
    %v6858 = vmul.f32 %v6849, %v4366
    %v6859 = vmul.f32 %v6837, %v6853
    %v6860 = vmul.f32 %v6841, %v6853
    %v6861 = vmul.f32 %v6845, %v6853
    %v6862 = vmul.f32 %v6849, %v6853
    %v6871 = vrot.slane %v6855, 6
    %v6872 = vrot.slane %v6859, 6
    %v6873 = vsel %vm6155, %v6871, %v6872
    %v6874 = vrot.slane %v6856, 6
    %v6875 = vrot.slane %v6860, 6
    %v6876 = vsel %vm6155, %v6874, %v6875
    %v6877 = vrot.slane %v6857, 6
    %v6878 = vrot.slane %v6861, 6
    %v6879 = vsel %vm6155, %v6877, %v6878
    %v6880 = vrot.slane %v6858, 6
    %v6881 = vrot.slane %v6862, 6
    %v6882 = vsel %vm6155, %v6880, %v6881
    %v6887 = vadd.f32 %v6822, %v6873
    %v6888 = vadd.f32 %v6823, %v6876
    %v6889 = vadd.f32 %v6824, %v6879
    %v6890 = vadd.f32 %v6825, %v6882
    %v6895 = vcombine.low %v6887, %v6888
    %v6896 = vcombine.low %v6889, %v6890
    %6899 = vst [vmem:[#allocation5] sm:$0x77] %v6895
    %6900 = vst [vmem:[#allocation5 + $0x8] sm:$0x77] %v6896
    // Predicated region
    $region38: #{tpu_custom_call.1} parent=1 // pred_check
      _
    $region39: #{tpu_custom_call.1} parent=1 // pred_check_branch
      %6902 = sbr.rel (0) target = $region41
    $region40: #{tpu_custom_call.1} parent=1 // pred_region
      %s6904 = ssub.s32 256, 256
      %6905 = vsyncadd [#allocation3], %s6904
      %s6907 = sshll.u32 [#allocation5], 4
      %s6908 = int_to_ptr.vmem [resolvable:$true] %s6907
      %6910 = dma.vmem_to_hbm [thread:$0]  %s6908, 256, %s8, [#allocation3]
    $region41: #{tpu_custom_call.1} parent=1 // pred_fallthru
      _
    // Predicated region
    $region42: #{tpu_custom_call.1} parent=1 // pred_check
      _
    $region43: #{tpu_custom_call.1} parent=1 // pred_check_branch
      %6912 = sbr.rel (0) target = $region45
    $region44: #{tpu_custom_call.1} parent=1 // pred_region
      %6913 = dma.done [#allocation3], 256
    $region45: #{tpu_custom_call.1} parent=1 // pred_fallthru
      _
    %6914 = vsyncpa [#allocation3], 1
    %6915 = vsyncpa [#allocation4], 1

</llo_original>
